<compile_context>
chip_gen: v7x
topology: tpu7x:2x2x1
jax: 0.10.0
libtpu: 0.0.40
codegen_flags: <defaults>
</compile_context>

<pallas_src>
import numpy as np
import jax
import jax.numpy as jnp
from jax.experimental import pallas as pl
from jax.experimental.pallas import tpu as pltpu

# ---- static network geometry (LeNet-ish MNIST CNN) -------------------------
C1, OW1, W1P = 6, 26, 32        # conv1: 6 ch, 26x26 out, width padded to 32
PW1, P1P = 13, 16               # pool1: 13x13, width padded to 16
C2, OW2, W2P = 16, 11, 16       # conv2: 16 ch, 11x11 out, width padded to 16
PW2, P2P = 5, 8                 # pool2: 5x5, width padded to 8
A1L, P1L, A2L, P2L = C1 * W1P, C1 * P1P, C2 * W2P, C2 * P2P   # 192, 96, 256, 128
FC1, FC2, NCLS = 120, 84, 10


# -----------------------------------------------------------------------------
# Fused kernel: TB images per grid step.
#   slabs: rows = (spatial_row * TB + image), lanes = channel*block_width + col
# -----------------------------------------------------------------------------
def _lenet_kernel(x_ref, m1_ref, b1_ref, se1_ref, so1_ref,
                  m2_ref, b2_ref, se2_ref, so2_ref,
                  w1s_ref, fb1_ref, w2_ref, fb2_ref, w3_ref, fb3_ref,
                  o_ref):
    f32, bf16 = jnp.float32, jnp.bfloat16
    TB = x_ref.shape[0] // 28

    x = x_ref[...].astype(bf16)                                  # (28*TB, 28)

    # ---- conv1 (1->6, 3x3, valid): 3 row-shifted aligned slabs x banded weights
    a1 = jnp.dot(x[0:26 * TB], m1_ref[0], preferred_element_type=f32)
    a1 = a1 + jnp.dot(x[TB:27 * TB], m1_ref[1], preferred_element_type=f32)
    a1 = a1 + jnp.dot(x[2 * TB:28 * TB], m1_ref[2], preferred_element_type=f32)
    a1 = jnp.maximum(a1 + b1_ref[...], 0.0)                      # (26*TB, 192)

    # ---- max_pool2d(2,2): row-pair max (VPU) + even/odd lane pick (MXU) + max
    rm1 = jnp.maximum(a1[0:25 * TB], a1[TB:26 * TB])             # (25*TB, 192)
    r1 = jnp.concatenate(
        [rm1[2 * ph * TB:(2 * ph + 1) * TB] for ph in range(PW1)], axis=0)
    p1 = jnp.maximum(jnp.dot(r1, se1_ref[...], preferred_element_type=f32),
                     jnp.dot(r1, so1_ref[...], preferred_element_type=f32))
    # p1: (13*TB, 96), lanes = ci*16 + pw (pw < 13), padded lanes exactly 0

    # ---- conv2 (6->16, 3x3, valid)
    p1b = p1.astype(bf16)
    a2 = jnp.dot(p1b[0:11 * TB], m2_ref[0], preferred_element_type=f32)
    a2 = a2 + jnp.dot(p1b[TB:12 * TB], m2_ref[1], preferred_element_type=f32)
    a2 = a2 + jnp.dot(p1b[2 * TB:13 * TB], m2_ref[2], preferred_element_type=f32)
    a2 = jnp.maximum(a2 + b2_ref[...], 0.0)                      # (11*TB, 256)

    # ---- max_pool2d(2,2) (floor mode: row/col 10 dropped)
    rm2 = jnp.maximum(a2[0:10 * TB], a2[TB:11 * TB])             # (10*TB, 256)
    r2 = jnp.concatenate(
        [rm2[2 * ph * TB:(2 * ph + 1) * TB] for ph in range(PW2)], axis=0)
    q = jnp.maximum(jnp.dot(r2, se2_ref[...], preferred_element_type=f32),
                    jnp.dot(r2, so2_ref[...], preferred_element_type=f32))
    # q: (5*TB, 128), lanes = co*8 + pw (pw < 5)

    # ---- fc1: PyTorch (C,H,W) flatten folded into 5 row-slab dots (M = TB)
    qb = q.astype(bf16)
    h1 = fb1_ref[...] + jnp.dot(qb[0:TB], w1s_ref[0], preferred_element_type=f32)
    for ph in range(1, PW2):
        h1 = h1 + jnp.dot(qb[ph * TB:(ph + 1) * TB], w1s_ref[ph],
                          preferred_element_type=f32)
    h1 = jnp.maximum(h1, 0.0)                                    # (TB, 120)

    h2 = jnp.maximum(
        jnp.dot(h1.astype(bf16), w2_ref[...], preferred_element_type=f32)
        + fb2_ref[...], 0.0)                                     # (TB, 84)
    logits = (jnp.dot(h2.astype(bf16), w3_ref[...], preferred_element_type=f32)
              + fb3_ref[...])                                    # (TB, 10)

    # ---- log_softmax (f32)
    z = logits - jnp.max(logits, axis=-1, keepdims=True)
    o_ref[...] = z - jnp.log(jnp.sum(jnp.exp(z), axis=-1, keepdims=True))


# -----------------------------------------------------------------------------
# One-time host-side repacking of the PyTorch-layout parameters.
# -----------------------------------------------------------------------------
def prepare_params(p):
    w1 = np.asarray(p["conv1_w"], np.float32)     # (6, 1, 3, 3)
    b1 = np.asarray(p["conv1_b"], np.float32)
    w2 = np.asarray(p["conv2_w"], np.float32)     # (16, 6, 3, 3)
    b2 = np.asarray(p["conv2_b"], np.float32)
    f1w = np.asarray(p["fc1_w"], np.float32)      # (120, 400)
    f2w = np.asarray(p["fc2_w"], np.float32)      # (84, 120)
    f3w = np.asarray(p["fc3_w"], np.float32)      # (10, 84)

    # conv1 banded block weights: m1[i][iw, co*32+ow] = w1[co,0,i,iw-ow]
    m1 = np.zeros((3, 28, A1L), np.float32)
    for i in range(3):
        for co in range(C1):
            for ow in range(OW1):
                for j in range(3):
                    m1[i, ow + j, co * W1P + ow] = w1[co, 0, i, j]
    b1row = np.zeros((1, A1L), np.float32)
    for co in range(C1):
        b1row[0, co * W1P:co * W1P + OW1] = b1[co]

    # pool1 even/odd lane selectors (192 -> 96); stay inside each channel block
    se1 = np.zeros((A1L, P1L), np.float32)
    so1 = np.zeros((A1L, P1L), np.float32)
    for c in range(C1):
        for pw in range(PW1):
            se1[c * W1P + 2 * pw, c * P1P + pw] = 1.0
            so1[c * W1P + 2 * pw + 1, c * P1P + pw] = 1.0

    # conv2 banded block weights: m2[i][ci*16+iw, co*16+ow] = w2[co,ci,i,iw-ow]
    m2 = np.zeros((3, P1L, A2L), np.float32)
    for i in range(3):
        for co in range(C2):
            for ci in range(C1):
                for ow in range(OW2):
                    for j in range(3):
                        m2[i, ci * P1P + ow + j, co * W2P + ow] = w2[co, ci, i, j]
    b2row = np.zeros((1, A2L), np.float32)
    for co in range(C2):
        b2row[0, co * W2P:co * W2P + OW2] = b2[co]

    # pool2 even/odd lane selectors (256 -> 128)
    se2 = np.zeros((A2L, P2L), np.float32)
    so2 = np.zeros((A2L, P2L), np.float32)
    for c in range(C2):
        for pw in range(PW2):
            se2[c * W2P + 2 * pw, c * P2P + pw] = 1.0
            so2[c * W2P + 2 * pw + 1, c * P2P + pw] = 1.0

    # fc1 split per pooled row ph; PyTorch flatten order is (c, ph, pw)
    w1s = np.zeros((PW2, P2L, FC1), np.float32)
    for ph in range(PW2):
        for c in range(C2):
            for pw in range(PW2):
                w1s[ph, c * P2P + pw, :] = f1w[:, c * 25 + ph * 5 + pw]

    bf16 = jnp.bfloat16
    return dict(
        m1=jnp.asarray(m1, bf16), b1row=jnp.asarray(b1row),
        se1=jnp.asarray(se1), so1=jnp.asarray(so1),
        m2=jnp.asarray(m2, bf16), b2row=jnp.asarray(b2row),
        se2=jnp.asarray(se2), so2=jnp.asarray(so2),
        w1s=jnp.asarray(w1s, bf16),
        fb1=jnp.asarray(np.asarray(p["fc1_b"], np.float32)[None, :]),
        w2p=jnp.asarray(f2w.T, bf16),
        fb2=jnp.asarray(np.asarray(p["fc2_b"], np.float32)[None, :]),
        w3p=jnp.asarray(f3w.T, bf16),
        fb3=jnp.asarray(np.asarray(p["fc3_b"], np.float32)[None, :]),
    )


def forward(prep, x, tb=32):
    """x: (B, 1, 28, 28) float32 NCHW -> (B, 10) log-probabilities."""
    assert tb % 8 == 0, "tb must be a multiple of 8 for aligned sublane slabs"
    B = x.shape[0]
    xf = x.reshape(B, 28, 28).astype(jnp.float32)

    nblk = -(-B // tb)
    Bp = nblk * tb
    if Bp != B:
        xf = jnp.pad(xf, ((0, Bp - B), (0, 0), (0, 0)))

    # rows inside each TB-block ordered (row, image): index = ih*tb + b
    xs = (xf.reshape(nblk, tb, 28, 28)
             .transpose(0, 2, 1, 3)
             .reshape(nblk * 28 * tb, 28))

    shared = (prep["m1"], prep["b1row"], prep["se1"], prep["so1"],
              prep["m2"], prep["b2row"], prep["se2"], prep["so2"],
              prep["w1s"], prep["fb1"], prep["w2p"], prep["fb2"],
              prep["w3p"], prep["fb3"])

    def shared_spec(a):
        return pl.BlockSpec(a.shape, lambda k, nd=a.ndim: (0,) * nd)

    out = pl.pallas_call(
        _lenet_kernel,
        out_shape=jax.ShapeDtypeStruct((Bp, NCLS), jnp.float32),
        grid=(nblk,),
        in_specs=[pl.BlockSpec((28 * tb, 28), lambda k: (k, 0))] +
                 [shared_spec(a) for a in shared],
        out_specs=pl.BlockSpec((tb, NCLS), lambda k: (k, 0)),
        compiler_params=pltpu.CompilerParams(
            dimension_semantics=("parallel",)),
    )(xs, *shared)
    return out[:B]


# -----------------------------------------------------------------------------
# Parameters + pure-JAX reference
# -----------------------------------------------------------------------------
def init_params(key):
    ks = jax.random.split(key, 10)

    def u(k, shape, fan_in):
        bound = 1.0 / jnp.sqrt(jnp.float32(fan_in))
        return jax.random.uniform(k, shape, jnp.float32, -bound, bound)

    return {
        "conv1_w": u(ks[0], (6, 1, 3, 3), 9),
        "conv1_b": u(ks[1], (6,), 9),
        "conv2_w": u(ks[2], (16, 6, 3, 3), 54),
        "conv2_b": u(ks[3], (16,), 54),
        "fc1_w": u(ks[4], (120, 400), 400),
        "fc1_b": u(ks[5], (120,), 400),
        "fc2_w": u(ks[6], (84, 120), 120),
        "fc2_b": u(ks[7], (84,), 120),
        "fc3_w": u(ks[8], (10, 84), 84),
        "fc3_b": u(ks[9], (10,), 84),
    }


def forward_ref(params, x):
    x = jax.nn.relu(
        jax.lax.conv_general_dilated(x, params["conv1_w"], (1, 1), "VALID",
                                     dimension_numbers=("NCHW", "OIHW", "NCHW"))
        + params["conv1_b"][None, :, None, None])
    x = jax.lax.reduce_window(x, -jnp.inf, jax.lax.max, (1, 1, 2, 2), (1, 1, 2, 2), "VALID")
    x = jax.nn.relu(
        jax.lax.conv_general_dilated(x, params["conv2_w"], (1, 1), "VALID",
                                     dimension_numbers=("NCHW", "OIHW", "NCHW"))
        + params["conv2_b"][None, :, None, None])
    x = jax.lax.reduce_window(x, -jnp.inf, jax.lax.max, (1, 1, 2, 2), (1, 1, 2, 2), "VALID")
    x = x.reshape(x.shape[0], 400)
    x = jax.nn.relu(x @ params["fc1_w"].T + params["fc1_b"])
    x = jax.nn.relu(x @ params["fc2_w"].T + params["fc2_b"])
    x = x @ params["fc3_w"].T + params["fc3_b"]
    return jax.nn.log_softmax(x, axis=1)


if __name__ == "__main__":
    key = jax.random.PRNGKey(0)
    pkey, xkey = jax.random.split(key)
    params = init_params(pkey)
    prep = prepare_params(params)          # one-time weight repacking (bf16 MXU operands)

    B, TB = 64, 32                         # 2 grid steps -> exercises megacore sharding
    x = jax.random.normal(xkey, (B, 1, 28, 28), dtype=jnp.float32)

    fwd = jax.jit(forward, static_argnames=("tb",))
    out = jax.block_until_ready(fwd(prep, x, tb=TB))

    assert out.shape == (B, 10), out.shape
    # log_softmax rows must logsumexp to ~0
    assert jnp.allclose(jax.nn.logsumexp(out, axis=1), 0.0, atol=1e-4)
    # cross-check against pure-f32 JAX reference (bf16 MXU error << 5e-2)
    ref = jax.block_until_ready(jax.jit(forward_ref)(params, x))
    err = float(jnp.max(jnp.abs(out - ref)))
    assert err < 5e-2, err

    print("KERNEL_OK")
</pallas_src>

<mosaic_0001>
module attributes {stable_mosaic.version = 11 : i64} {
  func.func @_lenet_kernel(%arg0: i32, %arg1: memref<896x28xf32, #tpu.memory_space<vmem>>, %arg2: memref<3x28x192xbf16, #tpu.memory_space<vmem>>, %arg3: memref<1x192xf32, #tpu.memory_space<vmem>>, %arg4: memref<192x96xf32, #tpu.memory_space<vmem>>, %arg5: memref<192x96xf32, #tpu.memory_space<vmem>>, %arg6: memref<3x96x256xbf16, #tpu.memory_space<vmem>>, %arg7: memref<1x256xf32, #tpu.memory_space<vmem>>, %arg8: memref<256x128xf32, #tpu.memory_space<vmem>>, %arg9: memref<256x128xf32, #tpu.memory_space<vmem>>, %arg10: memref<5x128x120xbf16, #tpu.memory_space<vmem>>, %arg11: memref<1x120xf32, #tpu.memory_space<vmem>>, %arg12: memref<120x84xbf16, #tpu.memory_space<vmem>>, %arg13: memref<1x84xf32, #tpu.memory_space<vmem>>, %arg14: memref<84x10xbf16, #tpu.memory_space<vmem>>, %arg15: memref<1x10xf32, #tpu.memory_space<vmem>>, %arg16: memref<32x10xf32, #tpu.memory_space<vmem>>) attributes {dimension_semantics = [#tpu.dimension_semantics<parallel>], iteration_bounds = array<i64: 2>, scalar_prefetch = 0 : i64, scratch_operands = 0 : i64, tpu.core_type = #tpu.core_type<tc>, window_params = [{transform_indices = @transform_0, window_bounds = array<i64: 896, 28>}, {pipeline_mode = #tpu.pipeline_mode<synchronous>, transform_indices = @transform_1, window_bounds = array<i64: 3, 28, 192>}, {pipeline_mode = #tpu.pipeline_mode<synchronous>, transform_indices = @transform_2, window_bounds = array<i64: 1, 192>}, {pipeline_mode = #tpu.pipeline_mode<synchronous>, transform_indices = @transform_3, window_bounds = array<i64: 192, 96>}, {pipeline_mode = #tpu.pipeline_mode<synchronous>, transform_indices = @transform_4, window_bounds = array<i64: 192, 96>}, {pipeline_mode = #tpu.pipeline_mode<synchronous>, transform_indices = @transform_5, window_bounds = array<i64: 3, 96, 256>}, {pipeline_mode = #tpu.pipeline_mode<synchronous>, transform_indices = @transform_6, window_bounds = array<i64: 1, 256>}, {pipeline_mode = #tpu.pipeline_mode<synchronous>, transform_indices = @transform_7, window_bounds = array<i64: 256, 128>}, {pipeline_mode = #tpu.pipeline_mode<synchronous>, transform_indices = @transform_8, window_bounds = array<i64: 256, 128>}, {pipeline_mode = #tpu.pipeline_mode<synchronous>, transform_indices = @transform_9, window_bounds = array<i64: 5, 128, 120>}, {pipeline_mode = #tpu.pipeline_mode<synchronous>, transform_indices = @transform_10, window_bounds = array<i64: 1, 120>}, {pipeline_mode = #tpu.pipeline_mode<synchronous>, transform_indices = @transform_11, window_bounds = array<i64: 120, 84>}, {pipeline_mode = #tpu.pipeline_mode<synchronous>, transform_indices = @transform_12, window_bounds = array<i64: 1, 84>}, {pipeline_mode = #tpu.pipeline_mode<synchronous>, transform_indices = @transform_13, window_bounds = array<i64: 84, 10>}, {pipeline_mode = #tpu.pipeline_mode<synchronous>, transform_indices = @transform_14, window_bounds = array<i64: 1, 10>}, {transform_indices = @transform_15, window_bounds = array<i64: 32, 10>}]} {
    %c0 = arith.constant 0 : index
    %c0_0 = arith.constant 0 : index
    %0 = vector.load %arg1[%c0, %c0_0] : memref<896x28xf32, #tpu.memory_space<vmem>>, vector<896x28xf32>
    %1 = arith.truncf %0 : vector<896x28xf32> to vector<896x28xbf16>
    %2 = vector.extract_strided_slice %1 {offsets = [0, 0], sizes = [832, 28], strides = [1, 1]} : vector<896x28xbf16> to vector<832x28xbf16>
    %c0_1 = arith.constant 0 : index
    %c0_2 = arith.constant 0 : index
    %c0_3 = arith.constant 0 : index
    %3 = vector.load %arg2[%c0_1, %c0_2, %c0_3] : memref<3x28x192xbf16, #tpu.memory_space<vmem>>, vector<1x28x192xbf16>
    %4 = vector.shape_cast %3 : vector<1x28x192xbf16> to vector<28x192xbf16>
    %cst = arith.constant dense<0.000000e+00> : vector<832x192xf32>
    %5 = tpu.matmul %2, %4, %cst {dimension_numbers = #tpu.dot_dimension_numbers<[1], [0], [0], [1], [0, 0, 1, 1], [], []>} : vector<832x28xbf16>, vector<28x192xbf16>, vector<832x192xf32> -> vector<832x192xf32>
    %6 = vector.extract_strided_slice %1 {offsets = [32, 0], sizes = [832, 28], strides = [1, 1]} : vector<896x28xbf16> to vector<832x28xbf16>
    %c1 = arith.constant 1 : index
    %c0_4 = arith.constant 0 : index
    %c0_5 = arith.constant 0 : index
    %7 = vector.load %arg2[%c1, %c0_4, %c0_5] : memref<3x28x192xbf16, #tpu.memory_space<vmem>>, vector<1x28x192xbf16>
    %8 = vector.shape_cast %7 : vector<1x28x192xbf16> to vector<28x192xbf16>
    %cst_6 = arith.constant dense<0.000000e+00> : vector<832x192xf32>
    %9 = tpu.matmul %6, %8, %cst_6 {dimension_numbers = #tpu.dot_dimension_numbers<[1], [0], [0], [1], [0, 0, 1, 1], [], []>} : vector<832x28xbf16>, vector<28x192xbf16>, vector<832x192xf32> -> vector<832x192xf32>
    %10 = arith.addf %5, %9 : vector<832x192xf32>
    %11 = vector.extract_strided_slice %1 {offsets = [64, 0], sizes = [832, 28], strides = [1, 1]} : vector<896x28xbf16> to vector<832x28xbf16>
    %c2 = arith.constant 2 : index
    %c0_7 = arith.constant 0 : index
    %c0_8 = arith.constant 0 : index
    %12 = vector.load %arg2[%c2, %c0_7, %c0_8] : memref<3x28x192xbf16, #tpu.memory_space<vmem>>, vector<1x28x192xbf16>
    %13 = vector.shape_cast %12 : vector<1x28x192xbf16> to vector<28x192xbf16>
    %cst_9 = arith.constant dense<0.000000e+00> : vector<832x192xf32>
    %14 = tpu.matmul %11, %13, %cst_9 {dimension_numbers = #tpu.dot_dimension_numbers<[1], [0], [0], [1], [0, 0, 1, 1], [], []>} : vector<832x28xbf16>, vector<28x192xbf16>, vector<832x192xf32> -> vector<832x192xf32>
    %15 = arith.addf %10, %14 : vector<832x192xf32>
    %c0_10 = arith.constant 0 : index
    %c0_11 = arith.constant 0 : index
    %16 = vector.load %arg3[%c0_10, %c0_11] : memref<1x192xf32, #tpu.memory_space<vmem>>, vector<1x192xf32>
    %17 = vector.broadcast %16 : vector<1x192xf32> to vector<832x192xf32>
    %18 = arith.addf %15, %17 : vector<832x192xf32>
    %cst_12 = arith.constant 0.000000e+00 : f32
    %19 = vector.broadcast %cst_12 : f32 to vector<832x192xf32>
    %20 = arith.maximumf %18, %19 : vector<832x192xf32>
    %21 = vector.extract_strided_slice %20 {offsets = [0, 0], sizes = [800, 192], strides = [1, 1]} : vector<832x192xf32> to vector<800x192xf32>
    %22 = vector.extract_strided_slice %20 {offsets = [32, 0], sizes = [800, 192], strides = [1, 1]} : vector<832x192xf32> to vector<800x192xf32>
    %23 = arith.maximumf %21, %22 : vector<800x192xf32>
    %24 = vector.extract_strided_slice %23 {offsets = [0, 0], sizes = [32, 192], strides = [1, 1]} : vector<800x192xf32> to vector<32x192xf32>
    %25 = vector.extract_strided_slice %23 {offsets = [64, 0], sizes = [32, 192], strides = [1, 1]} : vector<800x192xf32> to vector<32x192xf32>
    %26 = vector.extract_strided_slice %23 {offsets = [128, 0], sizes = [32, 192], strides = [1, 1]} : vector<800x192xf32> to vector<32x192xf32>
    %27 = vector.extract_strided_slice %23 {offsets = [192, 0], sizes = [32, 192], strides = [1, 1]} : vector<800x192xf32> to vector<32x192xf32>
    %28 = vector.extract_strided_slice %23 {offsets = [256, 0], sizes = [32, 192], strides = [1, 1]} : vector<800x192xf32> to vector<32x192xf32>
    %29 = vector.extract_strided_slice %23 {offsets = [320, 0], sizes = [32, 192], strides = [1, 1]} : vector<800x192xf32> to vector<32x192xf32>
    %30 = vector.extract_strided_slice %23 {offsets = [384, 0], sizes = [32, 192], strides = [1, 1]} : vector<800x192xf32> to vector<32x192xf32>
    %31 = vector.extract_strided_slice %23 {offsets = [448, 0], sizes = [32, 192], strides = [1, 1]} : vector<800x192xf32> to vector<32x192xf32>
    %32 = vector.extract_strided_slice %23 {offsets = [512, 0], sizes = [32, 192], strides = [1, 1]} : vector<800x192xf32> to vector<32x192xf32>
    %33 = vector.extract_strided_slice %23 {offsets = [576, 0], sizes = [32, 192], strides = [1, 1]} : vector<800x192xf32> to vector<32x192xf32>
    %34 = vector.extract_strided_slice %23 {offsets = [640, 0], sizes = [32, 192], strides = [1, 1]} : vector<800x192xf32> to vector<32x192xf32>
    %35 = vector.extract_strided_slice %23 {offsets = [704, 0], sizes = [32, 192], strides = [1, 1]} : vector<800x192xf32> to vector<32x192xf32>
    %36 = vector.extract_strided_slice %23 {offsets = [768, 0], sizes = [32, 192], strides = [1, 1]} : vector<800x192xf32> to vector<32x192xf32>
    %37 = tpu.concatenate %24, %25, %26, %27, %28, %29, %30, %31, %32, %33, %34, %35, %36 in 0 : vector<32x192xf32>, vector<32x192xf32>, vector<32x192xf32>, vector<32x192xf32>, vector<32x192xf32>, vector<32x192xf32>, vector<32x192xf32>, vector<32x192xf32>, vector<32x192xf32>, vector<32x192xf32>, vector<32x192xf32>, vector<32x192xf32>, vector<32x192xf32> -> vector<416x192xf32>
    %c0_13 = arith.constant 0 : index
    %c0_14 = arith.constant 0 : index
    %38 = vector.load %arg4[%c0_13, %c0_14] : memref<192x96xf32, #tpu.memory_space<vmem>>, vector<192x96xf32>
    %cst_15 = arith.constant dense<0.000000e+00> : vector<416x96xf32>
    %39 = tpu.matmul %37, %38, %cst_15 {dimension_numbers = #tpu.dot_dimension_numbers<[1], [0], [0], [1], [0, 0, 1, 1], [], []>} : vector<416x192xf32>, vector<192x96xf32>, vector<416x96xf32> -> vector<416x96xf32>
    %c0_16 = arith.constant 0 : index
    %c0_17 = arith.constant 0 : index
    %40 = vector.load %arg5[%c0_16, %c0_17] : memref<192x96xf32, #tpu.memory_space<vmem>>, vector<192x96xf32>
    %cst_18 = arith.constant dense<0.000000e+00> : vector<416x96xf32>
    %41 = tpu.matmul %37, %40, %cst_18 {dimension_numbers = #tpu.dot_dimension_numbers<[1], [0], [0], [1], [0, 0, 1, 1], [], []>} : vector<416x192xf32>, vector<192x96xf32>, vector<416x96xf32> -> vector<416x96xf32>
    %42 = arith.maximumf %39, %41 : vector<416x96xf32>
    %43 = arith.truncf %42 : vector<416x96xf32> to vector<416x96xbf16>
    %44 = vector.extract_strided_slice %43 {offsets = [0, 0], sizes = [352, 96], strides = [1, 1]} : vector<416x96xbf16> to vector<352x96xbf16>
    %c0_19 = arith.constant 0 : index
    %c0_20 = arith.constant 0 : index
    %c0_21 = arith.constant 0 : index
    %45 = vector.load %arg6[%c0_19, %c0_20, %c0_21] : memref<3x96x256xbf16, #tpu.memory_space<vmem>>, vector<1x96x256xbf16>
    %46 = vector.shape_cast %45 : vector<1x96x256xbf16> to vector<96x256xbf16>
    %cst_22 = arith.constant dense<0.000000e+00> : vector<352x256xf32>
    %47 = tpu.matmul %44, %46, %cst_22 {dimension_numbers = #tpu.dot_dimension_numbers<[1], [0], [0], [1], [0, 0, 1, 1], [], []>} : vector<352x96xbf16>, vector<96x256xbf16>, vector<352x256xf32> -> vector<352x256xf32>
    %48 = vector.extract_strided_slice %43 {offsets = [32, 0], sizes = [352, 96], strides = [1, 1]} : vector<416x96xbf16> to vector<352x96xbf16>
    %c1_23 = arith.constant 1 : index
    %c0_24 = arith.constant 0 : index
    %c0_25 = arith.constant 0 : index
    %49 = vector.load %arg6[%c1_23, %c0_24, %c0_25] : memref<3x96x256xbf16, #tpu.memory_space<vmem>>, vector<1x96x256xbf16>
    %50 = vector.shape_cast %49 : vector<1x96x256xbf16> to vector<96x256xbf16>
    %cst_26 = arith.constant dense<0.000000e+00> : vector<352x256xf32>
    %51 = tpu.matmul %48, %50, %cst_26 {dimension_numbers = #tpu.dot_dimension_numbers<[1], [0], [0], [1], [0, 0, 1, 1], [], []>} : vector<352x96xbf16>, vector<96x256xbf16>, vector<352x256xf32> -> vector<352x256xf32>
    %52 = arith.addf %47, %51 : vector<352x256xf32>
    %53 = vector.extract_strided_slice %43 {offsets = [64, 0], sizes = [352, 96], strides = [1, 1]} : vector<416x96xbf16> to vector<352x96xbf16>
    %c2_27 = arith.constant 2 : index
    %c0_28 = arith.constant 0 : index
    %c0_29 = arith.constant 0 : index
    %54 = vector.load %arg6[%c2_27, %c0_28, %c0_29] : memref<3x96x256xbf16, #tpu.memory_space<vmem>>, vector<1x96x256xbf16>
    %55 = vector.shape_cast %54 : vector<1x96x256xbf16> to vector<96x256xbf16>
    %cst_30 = arith.constant dense<0.000000e+00> : vector<352x256xf32>
    %56 = tpu.matmul %53, %55, %cst_30 {dimension_numbers = #tpu.dot_dimension_numbers<[1], [0], [0], [1], [0, 0, 1, 1], [], []>} : vector<352x96xbf16>, vector<96x256xbf16>, vector<352x256xf32> -> vector<352x256xf32>
    %57 = arith.addf %52, %56 : vector<352x256xf32>
    %c0_31 = arith.constant 0 : index
    %c0_32 = arith.constant 0 : index
    %58 = vector.load %arg7[%c0_31, %c0_32] : memref<1x256xf32, #tpu.memory_space<vmem>>, vector<1x256xf32>
    %59 = vector.broadcast %58 : vector<1x256xf32> to vector<352x256xf32>
    %60 = arith.addf %57, %59 : vector<352x256xf32>
    %cst_33 = arith.constant 0.000000e+00 : f32
    %61 = vector.broadcast %cst_33 : f32 to vector<352x256xf32>
    %62 = arith.maximumf %60, %61 : vector<352x256xf32>
    %63 = vector.extract_strided_slice %62 {offsets = [0, 0], sizes = [320, 256], strides = [1, 1]} : vector<352x256xf32> to vector<320x256xf32>
    %64 = vector.extract_strided_slice %62 {offsets = [32, 0], sizes = [320, 256], strides = [1, 1]} : vector<352x256xf32> to vector<320x256xf32>
    %65 = arith.maximumf %63, %64 : vector<320x256xf32>
    %66 = vector.extract_strided_slice %65 {offsets = [0, 0], sizes = [32, 256], strides = [1, 1]} : vector<320x256xf32> to vector<32x256xf32>
    %67 = vector.extract_strided_slice %65 {offsets = [64, 0], sizes = [32, 256], strides = [1, 1]} : vector<320x256xf32> to vector<32x256xf32>
    %68 = vector.extract_strided_slice %65 {offsets = [128, 0], sizes = [32, 256], strides = [1, 1]} : vector<320x256xf32> to vector<32x256xf32>
    %69 = vector.extract_strided_slice %65 {offsets = [192, 0], sizes = [32, 256], strides = [1, 1]} : vector<320x256xf32> to vector<32x256xf32>
    %70 = vector.extract_strided_slice %65 {offsets = [256, 0], sizes = [32, 256], strides = [1, 1]} : vector<320x256xf32> to vector<32x256xf32>
    %71 = tpu.concatenate %66, %67, %68, %69, %70 in 0 : vector<32x256xf32>, vector<32x256xf32>, vector<32x256xf32>, vector<32x256xf32>, vector<32x256xf32> -> vector<160x256xf32>
    %c0_34 = arith.constant 0 : index
    %c0_35 = arith.constant 0 : index
    %72 = vector.load %arg8[%c0_34, %c0_35] : memref<256x128xf32, #tpu.memory_space<vmem>>, vector<256x128xf32>
    %cst_36 = arith.constant dense<0.000000e+00> : vector<160x128xf32>
    %73 = tpu.matmul %71, %72, %cst_36 {dimension_numbers = #tpu.dot_dimension_numbers<[1], [0], [0], [1], [0, 0, 1, 1], [], []>} : vector<160x256xf32>, vector<256x128xf32>, vector<160x128xf32> -> vector<160x128xf32>
    %c0_37 = arith.constant 0 : index
    %c0_38 = arith.constant 0 : index
    %74 = vector.load %arg9[%c0_37, %c0_38] : memref<256x128xf32, #tpu.memory_space<vmem>>, vector<256x128xf32>
    %cst_39 = arith.constant dense<0.000000e+00> : vector<160x128xf32>
    %75 = tpu.matmul %71, %74, %cst_39 {dimension_numbers = #tpu.dot_dimension_numbers<[1], [0], [0], [1], [0, 0, 1, 1], [], []>} : vector<160x256xf32>, vector<256x128xf32>, vector<160x128xf32> -> vector<160x128xf32>
    %76 = arith.maximumf %73, %75 : vector<160x128xf32>
    %77 = arith.truncf %76 : vector<160x128xf32> to vector<160x128xbf16>
    %c0_40 = arith.constant 0 : index
    %c0_41 = arith.constant 0 : index
    %78 = vector.load %arg11[%c0_40, %c0_41] : memref<1x120xf32, #tpu.memory_space<vmem>>, vector<1x120xf32>
    %79 = vector.extract_strided_slice %77 {offsets = [0, 0], sizes = [32, 128], strides = [1, 1]} : vector<160x128xbf16> to vector<32x128xbf16>
    %c0_42 = arith.constant 0 : index
    %c0_43 = arith.constant 0 : index
    %c0_44 = arith.constant 0 : index
    %80 = vector.load %arg10[%c0_42, %c0_43, %c0_44] : memref<5x128x120xbf16, #tpu.memory_space<vmem>>, vector<1x128x120xbf16>
    %81 = vector.shape_cast %80 : vector<1x128x120xbf16> to vector<128x120xbf16>
    %cst_45 = arith.constant dense<0.000000e+00> : vector<32x120xf32>
    %82 = tpu.matmul %79, %81, %cst_45 {dimension_numbers = #tpu.dot_dimension_numbers<[1], [0], [0], [1], [0, 0, 1, 1], [], []>} : vector<32x128xbf16>, vector<128x120xbf16>, vector<32x120xf32> -> vector<32x120xf32>
    %83 = vector.broadcast %78 : vector<1x120xf32> to vector<32x120xf32>
    %84 = arith.addf %83, %82 : vector<32x120xf32>
    %85 = vector.extract_strided_slice %77 {offsets = [32, 0], sizes = [32, 128], strides = [1, 1]} : vector<160x128xbf16> to vector<32x128xbf16>
    %c1_46 = arith.constant 1 : index
    %c0_47 = arith.constant 0 : index
    %c0_48 = arith.constant 0 : index
    %86 = vector.load %arg10[%c1_46, %c0_47, %c0_48] : memref<5x128x120xbf16, #tpu.memory_space<vmem>>, vector<1x128x120xbf16>
    %87 = vector.shape_cast %86 : vector<1x128x120xbf16> to vector<128x120xbf16>
    %cst_49 = arith.constant dense<0.000000e+00> : vector<32x120xf32>
    %88 = tpu.matmul %85, %87, %cst_49 {dimension_numbers = #tpu.dot_dimension_numbers<[1], [0], [0], [1], [0, 0, 1, 1], [], []>} : vector<32x128xbf16>, vector<128x120xbf16>, vector<32x120xf32> -> vector<32x120xf32>
    %89 = arith.addf %84, %88 : vector<32x120xf32>
    %90 = vector.extract_strided_slice %77 {offsets = [64, 0], sizes = [32, 128], strides = [1, 1]} : vector<160x128xbf16> to vector<32x128xbf16>
    %c2_50 = arith.constant 2 : index
    %c0_51 = arith.constant 0 : index
    %c0_52 = arith.constant 0 : index
    %91 = vector.load %arg10[%c2_50, %c0_51, %c0_52] : memref<5x128x120xbf16, #tpu.memory_space<vmem>>, vector<1x128x120xbf16>
    %92 = vector.shape_cast %91 : vector<1x128x120xbf16> to vector<128x120xbf16>
    %cst_53 = arith.constant dense<0.000000e+00> : vector<32x120xf32>
    %93 = tpu.matmul %90, %92, %cst_53 {dimension_numbers = #tpu.dot_dimension_numbers<[1], [0], [0], [1], [0, 0, 1, 1], [], []>} : vector<32x128xbf16>, vector<128x120xbf16>, vector<32x120xf32> -> vector<32x120xf32>
    %94 = arith.addf %89, %93 : vector<32x120xf32>
    %95 = vector.extract_strided_slice %77 {offsets = [96, 0], sizes = [32, 128], strides = [1, 1]} : vector<160x128xbf16> to vector<32x128xbf16>
    %c3 = arith.constant 3 : index
    %c0_54 = arith.constant 0 : index
    %c0_55 = arith.constant 0 : index
    %96 = vector.load %arg10[%c3, %c0_54, %c0_55] : memref<5x128x120xbf16, #tpu.memory_space<vmem>>, vector<1x128x120xbf16>
    %97 = vector.shape_cast %96 : vector<1x128x120xbf16> to vector<128x120xbf16>
    %cst_56 = arith.constant dense<0.000000e+00> : vector<32x120xf32>
    %98 = tpu.matmul %95, %97, %cst_56 {dimension_numbers = #tpu.dot_dimension_numbers<[1], [0], [0], [1], [0, 0, 1, 1], [], []>} : vector<32x128xbf16>, vector<128x120xbf16>, vector<32x120xf32> -> vector<32x120xf32>
    %99 = arith.addf %94, %98 : vector<32x120xf32>
    %100 = vector.extract_strided_slice %77 {offsets = [128, 0], sizes = [32, 128], strides = [1, 1]} : vector<160x128xbf16> to vector<32x128xbf16>
    %c4 = arith.constant 4 : index
    %c0_57 = arith.constant 0 : index
    %c0_58 = arith.constant 0 : index
    %101 = vector.load %arg10[%c4, %c0_57, %c0_58] : memref<5x128x120xbf16, #tpu.memory_space<vmem>>, vector<1x128x120xbf16>
    %102 = vector.shape_cast %101 : vector<1x128x120xbf16> to vector<128x120xbf16>
    %cst_59 = arith.constant dense<0.000000e+00> : vector<32x120xf32>
    %103 = tpu.matmul %100, %102, %cst_59 {dimension_numbers = #tpu.dot_dimension_numbers<[1], [0], [0], [1], [0, 0, 1, 1], [], []>} : vector<32x128xbf16>, vector<128x120xbf16>, vector<32x120xf32> -> vector<32x120xf32>
    %104 = arith.addf %99, %103 : vector<32x120xf32>
    %cst_60 = arith.constant 0.000000e+00 : f32
    %105 = vector.broadcast %cst_60 : f32 to vector<32x120xf32>
    %106 = arith.maximumf %104, %105 : vector<32x120xf32>
    %107 = arith.truncf %106 : vector<32x120xf32> to vector<32x120xbf16>
    %c0_61 = arith.constant 0 : index
    %c0_62 = arith.constant 0 : index
    %108 = vector.load %arg12[%c0_61, %c0_62] : memref<120x84xbf16, #tpu.memory_space<vmem>>, vector<120x84xbf16>
    %cst_63 = arith.constant dense<0.000000e+00> : vector<32x84xf32>
    %109 = tpu.matmul %107, %108, %cst_63 {dimension_numbers = #tpu.dot_dimension_numbers<[1], [0], [0], [1], [0, 0, 1, 1], [], []>} : vector<32x120xbf16>, vector<120x84xbf16>, vector<32x84xf32> -> vector<32x84xf32>
    %c0_64 = arith.constant 0 : index
    %c0_65 = arith.constant 0 : index
    %110 = vector.load %arg13[%c0_64, %c0_65] : memref<1x84xf32, #tpu.memory_space<vmem>>, vector<1x84xf32>
    %111 = vector.broadcast %110 : vector<1x84xf32> to vector<32x84xf32>
    %112 = arith.addf %109, %111 : vector<32x84xf32>
    %cst_66 = arith.constant 0.000000e+00 : f32
    %113 = vector.broadcast %cst_66 : f32 to vector<32x84xf32>
    %114 = arith.maximumf %112, %113 : vector<32x84xf32>
    %115 = arith.truncf %114 : vector<32x84xf32> to vector<32x84xbf16>
    %c0_67 = arith.constant 0 : index
    %c0_68 = arith.constant 0 : index
    %116 = vector.load %arg14[%c0_67, %c0_68] : memref<84x10xbf16, #tpu.memory_space<vmem>>, vector<84x10xbf16>
    %cst_69 = arith.constant dense<0.000000e+00> : vector<32x10xf32>
    %117 = tpu.matmul %115, %116, %cst_69 {dimension_numbers = #tpu.dot_dimension_numbers<[1], [0], [0], [1], [0, 0, 1, 1], [], []>} : vector<32x84xbf16>, vector<84x10xbf16>, vector<32x10xf32> -> vector<32x10xf32>
    %c0_70 = arith.constant 0 : index
    %c0_71 = arith.constant 0 : index
    %118 = vector.load %arg15[%c0_70, %c0_71] : memref<1x10xf32, #tpu.memory_space<vmem>>, vector<1x10xf32>
    %119 = vector.broadcast %118 : vector<1x10xf32> to vector<32x10xf32>
    %120 = arith.addf %117, %119 : vector<32x10xf32>
    %cst_72 = arith.constant dense<0xFF800000> : vector<32xf32>
    %121 = vector.multi_reduction <maximumf>, %120, %cst_72 [1] : vector<32x10xf32> to vector<32xf32>
    %122 = vector.shape_cast %121 : vector<32xf32> to vector<32x1xf32>
    %123 = vector.broadcast %122 : vector<32x1xf32> to vector<32x10xf32>
    %124 = arith.subf %120, %123 : vector<32x10xf32>
    %125 = math.exp %124 : vector<32x10xf32>
    %cst_73 = arith.constant dense<0.000000e+00> : vector<32xf32>
    %126 = vector.multi_reduction <add>, %125, %cst_73 [1] : vector<32x10xf32> to vector<32xf32>
    %127 = vector.shape_cast %126 : vector<32xf32> to vector<32x1xf32>
    %128 = math.log %127 : vector<32x1xf32>
    %129 = vector.broadcast %128 : vector<32x1xf32> to vector<32x10xf32>
    %130 = arith.subf %124, %129 : vector<32x10xf32>
    %c0_74 = arith.constant 0 : index
    %c0_75 = arith.constant 0 : index
    %131 = vector.load %arg16[%c0_74, %c0_75] : memref<32x10xf32, #tpu.memory_space<vmem>>, vector<32x10xf32>
    tpu.vector_store %arg16[%c0_74, %c0_75], %130 {strides = array<i32>} : memref<32x10xf32, #tpu.memory_space<vmem>>, vector<32x10xf32>,
    return
  }
  func.func @transform_0(%arg0: i32) -> (i32, i32) {
    %c0_i32 = arith.constant 0 : i32
    %c0_i32_0 = arith.constant 0 : i32
    return %arg0, %c0_i32 : i32, i32
  }
  func.func @transform_1(%arg0: i32) -> (i32, i32, i32) {
    %c0_i32 = arith.constant 0 : i32
    %c0_i32_0 = arith.constant 0 : i32
    %c0_i32_1 = arith.constant 0 : i32
    %c0_i32_2 = arith.constant 0 : i32
    return %c0_i32, %c0_i32_0, %c0_i32_1 : i32, i32, i32
  }
  func.func @transform_2(%arg0: i32) -> (i32, i32) {
    %c0_i32 = arith.constant 0 : i32
    %c0_i32_0 = arith.constant 0 : i32
    %c0_i32_1 = arith.constant 0 : i32
    return %c0_i32, %c0_i32_0 : i32, i32
  }
  func.func @transform_3(%arg0: i32) -> (i32, i32) {
    %c0_i32 = arith.constant 0 : i32
    %c0_i32_0 = arith.constant 0 : i32
    %c0_i32_1 = arith.constant 0 : i32
    return %c0_i32, %c0_i32_0 : i32, i32
  }
  func.func @transform_4(%arg0: i32) -> (i32, i32) {
    %c0_i32 = arith.constant 0 : i32
    %c0_i32_0 = arith.constant 0 : i32
    %c0_i32_1 = arith.constant 0 : i32
    return %c0_i32, %c0_i32_0 : i32, i32
  }
  func.func @transform_5(%arg0: i32) -> (i32, i32, i32) {
    %c0_i32 = arith.constant 0 : i32
    %c0_i32_0 = arith.constant 0 : i32
    %c0_i32_1 = arith.constant 0 : i32
    %c0_i32_2 = arith.constant 0 : i32
    return %c0_i32, %c0_i32_0, %c0_i32_1 : i32, i32, i32
  }
  func.func @transform_6(%arg0: i32) -> (i32, i32) {
    %c0_i32 = arith.constant 0 : i32
    %c0_i32_0 = arith.constant 0 : i32
    %c0_i32_1 = arith.constant 0 : i32
    return %c0_i32, %c0_i32_0 : i32, i32
  }
  func.func @transform_7(%arg0: i32) -> (i32, i32) {
    %c0_i32 = arith.constant 0 : i32
    %c0_i32_0 = arith.constant 0 : i32
    %c0_i32_1 = arith.constant 0 : i32
    return %c0_i32, %c0_i32_0 : i32, i32
  }
  func.func @transform_8(%arg0: i32) -> (i32, i32) {
    %c0_i32 = arith.constant 0 : i32
    %c0_i32_0 = arith.constant 0 : i32
    %c0_i32_1 = arith.constant 0 : i32
    return %c0_i32, %c0_i32_0 : i32, i32
  }
  func.func @transform_9(%arg0: i32) -> (i32, i32, i32) {
    %c0_i32 = arith.constant 0 : i32
    %c0_i32_0 = arith.constant 0 : i32
    %c0_i32_1 = arith.constant 0 : i32
    %c0_i32_2 = arith.constant 0 : i32
    return %c0_i32, %c0_i32_0, %c0_i32_1 : i32, i32, i32
  }
  func.func @transform_10(%arg0: i32) -> (i32, i32) {
    %c0_i32 = arith.constant 0 : i32
    %c0_i32_0 = arith.constant 0 : i32
    %c0_i32_1 = arith.constant 0 : i32
    return %c0_i32, %c0_i32_0 : i32, i32
  }
  func.func @transform_11(%arg0: i32) -> (i32, i32) {
    %c0_i32 = arith.constant 0 : i32
    %c0_i32_0 = arith.constant 0 : i32
    %c0_i32_1 = arith.constant 0 : i32
    return %c0_i32, %c0_i32_0 : i32, i32
  }
  func.func @transform_12(%arg0: i32) -> (i32, i32) {
    %c0_i32 = arith.constant 0 : i32
    %c0_i32_0 = arith.constant 0 : i32
    %c0_i32_1 = arith.constant 0 : i32
    return %c0_i32, %c0_i32_0 : i32, i32
  }
  func.func @transform_13(%arg0: i32) -> (i32, i32) {
    %c0_i32 = arith.constant 0 : i32
    %c0_i32_0 = arith.constant 0 : i32
    %c0_i32_1 = arith.constant 0 : i32
    return %c0_i32, %c0_i32_0 : i32, i32
  }
  func.func @transform_14(%arg0: i32) -> (i32, i32) {
    %c0_i32 = arith.constant 0 : i32
    %c0_i32_0 = arith.constant 0 : i32
    %c0_i32_1 = arith.constant 0 : i32
    return %c0_i32, %c0_i32_0 : i32, i32
  }
  func.func @transform_15(%arg0: i32) -> (i32, i32) {
    %c0_i32 = arith.constant 0 : i32
    %c0_i32_0 = arith.constant 0 : i32
    return %arg0, %c0_i32 : i32, i32
  }
}

</mosaic_0001>

<llo_original>
// kernel: forward.1
$region0: #{forward.1}
  #allocation0 [shape = 'u32[]', space=smem, size = 0x4, offset = 0x4, fixed_abs, tag = 'smem constant byte address 0x4 - core index']
  #allocation1 [shape = 'u32[144,128]{1,0:T(1,128)}', space=vmem, size = 0x12000, scoped, tag = 'internal scratch']
  %s0 = inlined_call_operand.vmem [shape: f32[1792,28], index: 0, kind: input, shape index: {}]
  %s1 = inlined_call_operand.vmem [shape: bf16[3,28,192], index: 1, kind: input, shape index: {}]
  %s2 = inlined_call_operand.vmem [shape: f32[1,192], index: 2, kind: input, shape index: {}]
  %s3 = inlined_call_operand.vmem [shape: f32[192,96], index: 3, kind: input, shape index: {}]
  %s4 = inlined_call_operand.vmem [shape: f32[192,96], index: 4, kind: input, shape index: {}]
  %s5 = inlined_call_operand.vmem [shape: bf16[3,96,256], index: 5, kind: input, shape index: {}]
  %s6 = inlined_call_operand.vmem [shape: f32[1,256], index: 6, kind: input, shape index: {}]
  %s7 = inlined_call_operand.vmem [shape: f32[256,128], index: 7, kind: input, shape index: {}]
  %s8 = inlined_call_operand.vmem [shape: f32[256,128], index: 8, kind: input, shape index: {}]
  %s9 = inlined_call_operand.vmem [shape: bf16[5,128,120], index: 9, kind: input, shape index: {}]
  %s10 = inlined_call_operand.vmem [shape: f32[1,120], index: 10, kind: input, shape index: {}]
  %s11 = inlined_call_operand.vmem [shape: bf16[120,84], index: 11, kind: input, shape index: {}]
  %s12 = inlined_call_operand.vmem [shape: f32[1,84], index: 12, kind: input, shape index: {}]
  %s13 = inlined_call_operand.vmem [shape: bf16[84,10], index: 13, kind: input, shape index: {}]
  %s14 = inlined_call_operand.vmem [shape: f32[1,10], index: 14, kind: input, shape index: {}]
  %s15 = inlined_call_operand.vmem [shape: f32[64,10], index: 15, kind: output, shape index: {}]
  %s16 = sld [smem:[#allocation0]]
  $region93: #{forward.1} parent=0
    _
  %s18 = ssub.s32 1, %s16
  %s19 = scalar_select 0, %s18, %s16
  loop: start=0, step=1, limit=4
  $region2: #{forward.1} parent=0 // loop_pre_header
    _
  $region3: #{forward.1} parent=0 // loop_header
    %s21 = sphi 0, %s25
    %p22 = scmp.ge.s32.totalorder %s21, 4
    %s31 = sphi 0, %s33
    %s34 = sphi 0, %s31
    %s35 = sphi 0, %s34
    %s51 = sphi 0, %s35
    %s55 = sphi 0, %s55
    %s57 = sphi 0, %s55
    %s58 = sphi 0, %s57
    %s72 = sphi 0, %s58
    %s76 = sphi 0, %s76
    %s78 = sphi 0, %s76
    %s79 = sphi 0, %s78
    %s93 = sphi 0, %s79
    %s97 = sphi 0, %s97
    %s99 = sphi 0, %s97
    %s100 = sphi 0, %s99
    %s114 = sphi 0, %s100
    %s118 = sphi 0, %s118
    %s120 = sphi 0, %s118
    %s121 = sphi 0, %s120
    %s135 = sphi 0, %s121
    %s139 = sphi 0, %s139
    %s141 = sphi 0, %s139
    %s142 = sphi 0, %s141
    %s156 = sphi 0, %s142
    %s160 = sphi 0, %s160
    %s162 = sphi 0, %s160
    %s163 = sphi 0, %s162
    %s177 = sphi 0, %s163
    %s181 = sphi 0, %s181
    %s183 = sphi 0, %s181
    %s184 = sphi 0, %s183
    %s198 = sphi 0, %s184
    %s202 = sphi 0, %s202
    %s204 = sphi 0, %s202
    %s205 = sphi 0, %s204
    %s219 = sphi 0, %s205
    %s223 = sphi 0, %s223
    %s225 = sphi 0, %s223
    %s226 = sphi 0, %s225
    %s240 = sphi 0, %s226
    %s244 = sphi 0, %s244
    %s246 = sphi 0, %s244
    %s247 = sphi 0, %s246
    %s261 = sphi 0, %s247
    %s265 = sphi 0, %s265
    %s267 = sphi 0, %s265
    %s268 = sphi 0, %s267
    %s282 = sphi 0, %s268
    %s286 = sphi 0, %s286
    %s288 = sphi 0, %s286
    %s289 = sphi 0, %s288
    %s303 = sphi 0, %s289
    %s307 = sphi 0, %s307
    %s309 = sphi 0, %s307
    %s310 = sphi 0, %s309
    %s324 = sphi 0, %s310
    %s328 = sphi 0, %s328
    %s330 = sphi 0, %s328
    %s331 = sphi 0, %s330
    %s345 = sphi 0, %s331
    %s351 = sphi 0, %s353
    %s354 = sphi 0, %s351
    %s355 = sphi 0, %s354
    %s371 = sphi 0, %s355
  $region4: #{forward.1} parent=0 // loop_header_branch
    %24 = sbr.rel (%p22) target = $region8
  $region5: #{forward.1} parent=0 // loop_body
    %s26 = ssub.s32 %s21, 1
    %s27 = ssub.s32 %s21, 2
    %s28 = sadd.s32 %s21, 1
    %s29 = ssub.s32 %s21, %s28
    %p30 = scmp.eq.s32.totalorder %s29, 0
    %s32 = sadd.s32 %s31, 1
    %s33 = scalar_select %p30, %s31, %s32
    %p36 = pneg %p30
    %p37 = scmp.eq.s32.totalorder %s21, 1
    %p38 = por %p36, %p37
    %p39 = scmp.ne.s32.totalorder %s31, %s34
    %p40 = scmp.eq.s32.totalorder %s21, 0
    %p41 = por %p39, %p40
    %p42 = scmp.ne.s32.totalorder %s31, %s34
    %p43 = scmp.eq.s32.totalorder %s26, 1
    %p44 = por %p42, %p43
    %p45 = scmp.ne.s32.totalorder %s34, %s35
    %p46 = scmp.eq.s32.totalorder %s26, 0
    %p47 = por %p45, %p46
    %p48 = scmp.ne.s32.totalorder %s34, %s35
    %p49 = scmp.eq.s32.totalorder %s27, 1
    %p50 = por %p48, %p49
    %p52 = scmp.ne.s32.totalorder %s35, %s51
    %p53 = scmp.eq.s32.totalorder %s27, 0
    %p54 = por %p52, %p53
    %s56 = sadd.s32 %s55, 1
    %p59 = scmp.eq.s32.totalorder %s21, 1
    %p60 = scmp.ne.s32.totalorder %s55, %s57
    %p61 = scmp.eq.s32.totalorder %s21, 0
    %p62 = por %p60, %p61
    %p63 = scmp.ne.s32.totalorder %s55, %s57
    %p64 = scmp.eq.s32.totalorder %s26, 1
    %p65 = por %p63, %p64
    %p66 = scmp.ne.s32.totalorder %s57, %s58
    %p67 = scmp.eq.s32.totalorder %s26, 0
    %p68 = por %p66, %p67
    %p69 = scmp.ne.s32.totalorder %s57, %s58
    %p70 = scmp.eq.s32.totalorder %s27, 1
    %p71 = por %p69, %p70
    %p73 = scmp.ne.s32.totalorder %s58, %s72
    %p74 = scmp.eq.s32.totalorder %s27, 0
    %p75 = por %p73, %p74
    %s77 = sadd.s32 %s76, 1
    %p80 = scmp.eq.s32.totalorder %s21, 1
    %p81 = scmp.ne.s32.totalorder %s76, %s78
    %p82 = scmp.eq.s32.totalorder %s21, 0
    %p83 = por %p81, %p82
    %p84 = scmp.ne.s32.totalorder %s76, %s78
    %p85 = scmp.eq.s32.totalorder %s26, 1
    %p86 = por %p84, %p85
    %p87 = scmp.ne.s32.totalorder %s78, %s79
    %p88 = scmp.eq.s32.totalorder %s26, 0
    %p89 = por %p87, %p88
    %p90 = scmp.ne.s32.totalorder %s78, %s79
    %p91 = scmp.eq.s32.totalorder %s27, 1
    %p92 = por %p90, %p91
    %p94 = scmp.ne.s32.totalorder %s79, %s93
    %p95 = scmp.eq.s32.totalorder %s27, 0
    %p96 = por %p94, %p95
    %s98 = sadd.s32 %s97, 1
    %p101 = scmp.eq.s32.totalorder %s21, 1
    %p102 = scmp.ne.s32.totalorder %s97, %s99
    %p103 = scmp.eq.s32.totalorder %s21, 0
    %p104 = por %p102, %p103
    %p105 = scmp.ne.s32.totalorder %s97, %s99
    %p106 = scmp.eq.s32.totalorder %s26, 1
    %p107 = por %p105, %p106
    %p108 = scmp.ne.s32.totalorder %s99, %s100
    %p109 = scmp.eq.s32.totalorder %s26, 0
    %p110 = por %p108, %p109
    %p111 = scmp.ne.s32.totalorder %s99, %s100
    %p112 = scmp.eq.s32.totalorder %s27, 1
    %p113 = por %p111, %p112
    %p115 = scmp.ne.s32.totalorder %s100, %s114
    %p116 = scmp.eq.s32.totalorder %s27, 0
    %p117 = por %p115, %p116
    %s119 = sadd.s32 %s118, 1
    %p122 = scmp.eq.s32.totalorder %s21, 1
    %p123 = scmp.ne.s32.totalorder %s118, %s120
    %p124 = scmp.eq.s32.totalorder %s21, 0
    %p125 = por %p123, %p124
    %p126 = scmp.ne.s32.totalorder %s118, %s120
    %p127 = scmp.eq.s32.totalorder %s26, 1
    %p128 = por %p126, %p127
    %p129 = scmp.ne.s32.totalorder %s120, %s121
    %p130 = scmp.eq.s32.totalorder %s26, 0
    %p131 = por %p129, %p130
    %p132 = scmp.ne.s32.totalorder %s120, %s121
    %p133 = scmp.eq.s32.totalorder %s27, 1
    %p134 = por %p132, %p133
    %p136 = scmp.ne.s32.totalorder %s121, %s135
    %p137 = scmp.eq.s32.totalorder %s27, 0
    %p138 = por %p136, %p137
    %s140 = sadd.s32 %s139, 1
    %p143 = scmp.eq.s32.totalorder %s21, 1
    %p144 = scmp.ne.s32.totalorder %s139, %s141
    %p145 = scmp.eq.s32.totalorder %s21, 0
    %p146 = por %p144, %p145
    %p147 = scmp.ne.s32.totalorder %s139, %s141
    %p148 = scmp.eq.s32.totalorder %s26, 1
    %p149 = por %p147, %p148
    %p150 = scmp.ne.s32.totalorder %s141, %s142
    %p151 = scmp.eq.s32.totalorder %s26, 0
    %p152 = por %p150, %p151
    %p153 = scmp.ne.s32.totalorder %s141, %s142
    %p154 = scmp.eq.s32.totalorder %s27, 1
    %p155 = por %p153, %p154
    %p157 = scmp.ne.s32.totalorder %s142, %s156
    %p158 = scmp.eq.s32.totalorder %s27, 0
    %p159 = por %p157, %p158
    %s161 = sadd.s32 %s160, 1
    %p164 = scmp.eq.s32.totalorder %s21, 1
    %p165 = scmp.ne.s32.totalorder %s160, %s162
    %p166 = scmp.eq.s32.totalorder %s21, 0
    %p167 = por %p165, %p166
    %p168 = scmp.ne.s32.totalorder %s160, %s162
    %p169 = scmp.eq.s32.totalorder %s26, 1
    %p170 = por %p168, %p169
    %p171 = scmp.ne.s32.totalorder %s162, %s163
    %p172 = scmp.eq.s32.totalorder %s26, 0
    %p173 = por %p171, %p172
    %p174 = scmp.ne.s32.totalorder %s162, %s163
    %p175 = scmp.eq.s32.totalorder %s27, 1
    %p176 = por %p174, %p175
    %p178 = scmp.ne.s32.totalorder %s163, %s177
    %p179 = scmp.eq.s32.totalorder %s27, 0
    %p180 = por %p178, %p179
    %s182 = sadd.s32 %s181, 1
    %p185 = scmp.eq.s32.totalorder %s21, 1
    %p186 = scmp.ne.s32.totalorder %s181, %s183
    %p187 = scmp.eq.s32.totalorder %s21, 0
    %p188 = por %p186, %p187
    %p189 = scmp.ne.s32.totalorder %s181, %s183
    %p190 = scmp.eq.s32.totalorder %s26, 1
    %p191 = por %p189, %p190
    %p192 = scmp.ne.s32.totalorder %s183, %s184
    %p193 = scmp.eq.s32.totalorder %s26, 0
    %p194 = por %p192, %p193
    %p195 = scmp.ne.s32.totalorder %s183, %s184
    %p196 = scmp.eq.s32.totalorder %s27, 1
    %p197 = por %p195, %p196
    %p199 = scmp.ne.s32.totalorder %s184, %s198
    %p200 = scmp.eq.s32.totalorder %s27, 0
    %p201 = por %p199, %p200
    %s203 = sadd.s32 %s202, 1
    %p206 = scmp.eq.s32.totalorder %s21, 1
    %p207 = scmp.ne.s32.totalorder %s202, %s204
    %p208 = scmp.eq.s32.totalorder %s21, 0
    %p209 = por %p207, %p208
    %p210 = scmp.ne.s32.totalorder %s202, %s204
    %p211 = scmp.eq.s32.totalorder %s26, 1
    %p212 = por %p210, %p211
    %p213 = scmp.ne.s32.totalorder %s204, %s205
    %p214 = scmp.eq.s32.totalorder %s26, 0
    %p215 = por %p213, %p214
    %p216 = scmp.ne.s32.totalorder %s204, %s205
    %p217 = scmp.eq.s32.totalorder %s27, 1
    %p218 = por %p216, %p217
    %p220 = scmp.ne.s32.totalorder %s205, %s219
    %p221 = scmp.eq.s32.totalorder %s27, 0
    %p222 = por %p220, %p221
    %s224 = sadd.s32 %s223, 1
    %p227 = scmp.eq.s32.totalorder %s21, 1
    %p228 = scmp.ne.s32.totalorder %s223, %s225
    %p229 = scmp.eq.s32.totalorder %s21, 0
    %p230 = por %p228, %p229
    %p231 = scmp.ne.s32.totalorder %s223, %s225
    %p232 = scmp.eq.s32.totalorder %s26, 1
    %p233 = por %p231, %p232
    %p234 = scmp.ne.s32.totalorder %s225, %s226
    %p235 = scmp.eq.s32.totalorder %s26, 0
    %p236 = por %p234, %p235
    %p237 = scmp.ne.s32.totalorder %s225, %s226
    %p238 = scmp.eq.s32.totalorder %s27, 1
    %p239 = por %p237, %p238
    %p241 = scmp.ne.s32.totalorder %s226, %s240
    %p242 = scmp.eq.s32.totalorder %s27, 0
    %p243 = por %p241, %p242
    %s245 = sadd.s32 %s244, 1
    %p248 = scmp.eq.s32.totalorder %s21, 1
    %p249 = scmp.ne.s32.totalorder %s244, %s246
    %p250 = scmp.eq.s32.totalorder %s21, 0
    %p251 = por %p249, %p250
    %p252 = scmp.ne.s32.totalorder %s244, %s246
    %p253 = scmp.eq.s32.totalorder %s26, 1
    %p254 = por %p252, %p253
    %p255 = scmp.ne.s32.totalorder %s246, %s247
    %p256 = scmp.eq.s32.totalorder %s26, 0
    %p257 = por %p255, %p256
    %p258 = scmp.ne.s32.totalorder %s246, %s247
    %p259 = scmp.eq.s32.totalorder %s27, 1
    %p260 = por %p258, %p259
    %p262 = scmp.ne.s32.totalorder %s247, %s261
    %p263 = scmp.eq.s32.totalorder %s27, 0
    %p264 = por %p262, %p263
    %s266 = sadd.s32 %s265, 1
    %p269 = scmp.eq.s32.totalorder %s21, 1
    %p270 = scmp.ne.s32.totalorder %s265, %s267
    %p271 = scmp.eq.s32.totalorder %s21, 0
    %p272 = por %p270, %p271
    %p273 = scmp.ne.s32.totalorder %s265, %s267
    %p274 = scmp.eq.s32.totalorder %s26, 1
    %p275 = por %p273, %p274
    %p276 = scmp.ne.s32.totalorder %s267, %s268
    %p277 = scmp.eq.s32.totalorder %s26, 0
    %p278 = por %p276, %p277
    %p279 = scmp.ne.s32.totalorder %s267, %s268
    %p280 = scmp.eq.s32.totalorder %s27, 1
    %p281 = por %p279, %p280
    %p283 = scmp.ne.s32.totalorder %s268, %s282
    %p284 = scmp.eq.s32.totalorder %s27, 0
    %p285 = por %p283, %p284
    %s287 = sadd.s32 %s286, 1
    %p290 = scmp.eq.s32.totalorder %s21, 1
    %p291 = scmp.ne.s32.totalorder %s286, %s288
    %p292 = scmp.eq.s32.totalorder %s21, 0
    %p293 = por %p291, %p292
    %p294 = scmp.ne.s32.totalorder %s286, %s288
    %p295 = scmp.eq.s32.totalorder %s26, 1
    %p296 = por %p294, %p295
    %p297 = scmp.ne.s32.totalorder %s288, %s289
    %p298 = scmp.eq.s32.totalorder %s26, 0
    %p299 = por %p297, %p298
    %p300 = scmp.ne.s32.totalorder %s288, %s289
    %p301 = scmp.eq.s32.totalorder %s27, 1
    %p302 = por %p300, %p301
    %p304 = scmp.ne.s32.totalorder %s289, %s303
    %p305 = scmp.eq.s32.totalorder %s27, 0
    %p306 = por %p304, %p305
    %s308 = sadd.s32 %s307, 1
    %p311 = scmp.eq.s32.totalorder %s21, 1
    %p312 = scmp.ne.s32.totalorder %s307, %s309
    %p313 = scmp.eq.s32.totalorder %s21, 0
    %p314 = por %p312, %p313
    %p315 = scmp.ne.s32.totalorder %s307, %s309
    %p316 = scmp.eq.s32.totalorder %s26, 1
    %p317 = por %p315, %p316
    %p318 = scmp.ne.s32.totalorder %s309, %s310
    %p319 = scmp.eq.s32.totalorder %s26, 0
    %p320 = por %p318, %p319
    %p321 = scmp.ne.s32.totalorder %s309, %s310
    %p322 = scmp.eq.s32.totalorder %s27, 1
    %p323 = por %p321, %p322
    %p325 = scmp.ne.s32.totalorder %s310, %s324
    %p326 = scmp.eq.s32.totalorder %s27, 0
    %p327 = por %p325, %p326
    %s329 = sadd.s32 %s328, 1
    %p332 = scmp.eq.s32.totalorder %s21, 1
    %p333 = scmp.ne.s32.totalorder %s328, %s330
    %p334 = scmp.eq.s32.totalorder %s21, 0
    %p335 = por %p333, %p334
    %p336 = scmp.ne.s32.totalorder %s328, %s330
    %p337 = scmp.eq.s32.totalorder %s26, 1
    %p338 = por %p336, %p337
    %p339 = scmp.ne.s32.totalorder %s330, %s331
    %p340 = scmp.eq.s32.totalorder %s26, 0
    %p341 = por %p339, %p340
    %p342 = scmp.ne.s32.totalorder %s330, %s331
    %p343 = scmp.eq.s32.totalorder %s27, 1
    %p344 = por %p342, %p343
    %p346 = scmp.ne.s32.totalorder %s331, %s345
    %p347 = scmp.eq.s32.totalorder %s27, 0
    %p348 = por %p346, %p347
    %s349 = ssub.s32 %s21, %s28
    %p350 = scmp.eq.s32.totalorder %s349, 0
    %s352 = sadd.s32 %s351, 1
    %s353 = scalar_select %p350, %s351, %s352
    %p356 = pneg %p350
    %p357 = scmp.eq.s32.totalorder %s21, 1
    %p358 = por %p356, %p357
    %p359 = scmp.ne.s32.totalorder %s351, %s354
    %p360 = scmp.eq.s32.totalorder %s21, 0
    %p361 = por %p359, %p360
    %p362 = scmp.ne.s32.totalorder %s351, %s354
    %p363 = scmp.eq.s32.totalorder %s26, 1
    %p364 = por %p362, %p363
    %p365 = scmp.ne.s32.totalorder %s354, %s355
    %p366 = scmp.eq.s32.totalorder %s26, 0
    %p367 = por %p365, %p366
    %p368 = scmp.ne.s32.totalorder %s354, %s355
    %p369 = scmp.eq.s32.totalorder %s27, 1
    %p370 = por %p368, %p369
    %p372 = scmp.ne.s32.totalorder %s355, %s371
    %p373 = scmp.eq.s32.totalorder %s27, 0
    %p374 = por %p372, %p373
    %p375 = scmp.le.s32.totalorder 1, %s21
    %p376 = scmp.lt.s32.totalorder %s21, 3
    %p377 = pnand %p375, %p376
    %p378 = pneg %p377
    // Predicated region
    $region9: #{forward.1} parent=5 // pred_check
      _
    $region10: #{forward.1} parent=5 // pred_check_branch
      %380 = sbr.rel (%p377) target = $region12
    $region11: #{forward.1} parent=5 // pred_region
      %s381 = ssub.s32 %s21, 1
      // Predicated region
      $region13: #{forward.1} parent=11 // pred_check
        %p382 = pneg %p68
      $region14: #{forward.1} parent=11 // pred_check_branch
        %384 = sbr.rel (%p382) target = $region16
      $region15: #{forward.1} parent=11 // pred_region
        _
      $region16: #{forward.1} parent=11 // pred_fallthru
        _
      // Predicated region
      $region17: #{forward.1} parent=11 // pred_check
        %p385 = pneg %p89
      $region18: #{forward.1} parent=11 // pred_check_branch
        %387 = sbr.rel (%p385) target = $region20
      $region19: #{forward.1} parent=11 // pred_region
        _
      $region20: #{forward.1} parent=11 // pred_fallthru
        _
      // Predicated region
      $region21: #{forward.1} parent=11 // pred_check
        %p388 = pneg %p110
      $region22: #{forward.1} parent=11 // pred_check_branch
        %390 = sbr.rel (%p388) target = $region24
      $region23: #{forward.1} parent=11 // pred_region
        _
      $region24: #{forward.1} parent=11 // pred_fallthru
        _
      // Predicated region
      $region25: #{forward.1} parent=11 // pred_check
        %p391 = pneg %p131
      $region26: #{forward.1} parent=11 // pred_check_branch
        %393 = sbr.rel (%p391) target = $region28
      $region27: #{forward.1} parent=11 // pred_region
        _
      $region28: #{forward.1} parent=11 // pred_fallthru
        _
      // Predicated region
      $region29: #{forward.1} parent=11 // pred_check
        %p394 = pneg %p152
      $region30: #{forward.1} parent=11 // pred_check_branch
        %396 = sbr.rel (%p394) target = $region32
      $region31: #{forward.1} parent=11 // pred_region
        _
      $region32: #{forward.1} parent=11 // pred_fallthru
        _
      // Predicated region
      $region33: #{forward.1} parent=11 // pred_check
        %p397 = pneg %p173
      $region34: #{forward.1} parent=11 // pred_check_branch
        %399 = sbr.rel (%p397) target = $region36
      $region35: #{forward.1} parent=11 // pred_region
        _
      $region36: #{forward.1} parent=11 // pred_fallthru
        _
      // Predicated region
      $region37: #{forward.1} parent=11 // pred_check
        %p400 = pneg %p194
      $region38: #{forward.1} parent=11 // pred_check_branch
        %402 = sbr.rel (%p400) target = $region40
      $region39: #{forward.1} parent=11 // pred_region
        _
      $region40: #{forward.1} parent=11 // pred_fallthru
        _
      // Predicated region
      $region41: #{forward.1} parent=11 // pred_check
        %p403 = pneg %p215
      $region42: #{forward.1} parent=11 // pred_check_branch
        %405 = sbr.rel (%p403) target = $region44
      $region43: #{forward.1} parent=11 // pred_region
        _
      $region44: #{forward.1} parent=11 // pred_fallthru
        _
      // Predicated region
      $region45: #{forward.1} parent=11 // pred_check
        %p406 = pneg %p236
      $region46: #{forward.1} parent=11 // pred_check_branch
        %408 = sbr.rel (%p406) target = $region48
      $region47: #{forward.1} parent=11 // pred_region
        _
      $region48: #{forward.1} parent=11 // pred_fallthru
        _
      // Predicated region
      $region49: #{forward.1} parent=11 // pred_check
        %p409 = pneg %p257
      $region50: #{forward.1} parent=11 // pred_check_branch
        %411 = sbr.rel (%p409) target = $region52
      $region51: #{forward.1} parent=11 // pred_region
        _
      $region52: #{forward.1} parent=11 // pred_fallthru
        _
      // Predicated region
      $region53: #{forward.1} parent=11 // pred_check
        %p412 = pneg %p278
      $region54: #{forward.1} parent=11 // pred_check_branch
        %414 = sbr.rel (%p412) target = $region56
      $region55: #{forward.1} parent=11 // pred_region
        _
      $region56: #{forward.1} parent=11 // pred_fallthru
        _
      // Predicated region
      $region57: #{forward.1} parent=11 // pred_check
        %p415 = pneg %p299
      $region58: #{forward.1} parent=11 // pred_check_branch
        %417 = sbr.rel (%p415) target = $region60
      $region59: #{forward.1} parent=11 // pred_region
        _
      $region60: #{forward.1} parent=11 // pred_fallthru
        _
      // Predicated region
      $region61: #{forward.1} parent=11 // pred_check
        %p418 = pneg %p320
      $region62: #{forward.1} parent=11 // pred_check_branch
        %420 = sbr.rel (%p418) target = $region64
      $region63: #{forward.1} parent=11 // pred_region
        _
      $region64: #{forward.1} parent=11 // pred_fallthru
        _
      // Predicated region
      $region65: #{forward.1} parent=11 // pred_check
        %p421 = pneg %p341
      $region66: #{forward.1} parent=11 // pred_check_branch
        %423 = sbr.rel (%p421) target = $region68
      $region67: #{forward.1} parent=11 // pred_region
        _
      $region68: #{forward.1} parent=11 // pred_fallthru
        _
    $region12: #{forward.1} parent=5 // pred_fallthru
      _
    %p424 = scmp.lt.s32.totalorder %s21, 2
    // Predicated region
    $region69: #{forward.1} parent=5 // pred_check
      %p425 = pneg %p424
    $region70: #{forward.1} parent=5 // pred_check_branch
      %427 = sbr.rel (%p425) target = $region72
    $region71: #{forward.1} parent=5 // pred_region
      // Predicated region
      $region73: #{forward.1} parent=71 // pred_check
        %p428 = pneg %p41
      $region74: #{forward.1} parent=71 // pred_check_branch
        %430 = sbr.rel (%p428) target = $region76
      $region75: #{forward.1} parent=71 // pred_region
        %s431 = smul.u32 112, %s21
        %p432 = scmp.lt.s32.totalorder %s431, 223
        %s433 = scalar_select %p432, %s431, 223
        %s434 = smul.addr %s433, 8
        %s435 = scalar_lea.vmem %s0, %s434
        %s436 = smul.u32 112, %s21
      $region76: #{forward.1} parent=71 // pred_fallthru
        _
    $region72: #{forward.1} parent=5 // pred_fallthru
      _
    %p437 = scmp.le.s32.totalorder 1, %s21
    %p438 = scmp.lt.s32.totalorder %s21, 3
    %p439 = pnand %p437, %p438
    %p440 = pneg %p439
    // Predicated region
    $region77: #{forward.1} parent=5 // pred_check
      _
    $region78: #{forward.1} parent=5 // pred_check_branch
      %442 = sbr.rel (%p439) target = $region80
    $region79: #{forward.1} parent=5 // pred_region
      %s443 = ssub.s32 %s21, 1
      %s444 = smul.u32 112, %s26
      %p445 = scmp.lt.s32.totalorder %s444, 223
      %s446 = scalar_select %p445, %s444, 223
      %s447 = smul.addr %s446, 8
      %s448 = scalar_lea.vmem %s0, %s447
      %p449 = pneg %p47
      %p450 = pneg %p44
      %p451 = pneg %p68
      %p452 = pneg %p65
      %p453 = pneg %p89
      %p454 = pneg %p86
      %p455 = pneg %p110
      %p456 = pneg %p107
      %p457 = pneg %p131
      %p458 = pneg %p128
      %p459 = pneg %p152
      %p460 = pneg %p149
      %p461 = pneg %p173
      %p462 = pneg %p170
      %p463 = pneg %p194
      %p464 = pneg %p191
      %p465 = pneg %p215
      %p466 = pneg %p212
      %p467 = pneg %p236
      %p468 = pneg %p233
      %p469 = pneg %p257
      %p470 = pneg %p254
      %p471 = pneg %p278
      %p472 = pneg %p275
      %p473 = pneg %p299
      %p474 = pneg %p296
      %p475 = pneg %p320
      %p476 = pneg %p317
      %p477 = pneg %p341
      %p478 = pneg %p338
      %p479 = pneg %p367
      %p480 = pneg %p364
      %s481 = smul.u32 4, %s26
      %p482 = scmp.lt.s32.totalorder %s481, 7
      %s483 = scalar_select %p482, %s481, 7
      %s484 = smul.addr %s483, 8
      %s485 = scalar_lea.vmem %s15, %s484
      %s486 = smul.u32 112, %s26
      %p487 = scmp.lt.s32.totalorder %s486, 223
      %s488 = scalar_select %p487, %s486, 223
      %s489 = smul.addr %s488, 8
      %s490 = scalar_lea.vmem %s0, %s489
      %s491 = smul.u32 112, %s26
      %s492 = smul.u32 4, %s26
      %p493 = scmp.lt.s32.totalorder %s492, 7
      %s494 = scalar_select %p493, %s492, 7
      %s495 = smul.addr %s494, 8
      %s496 = scalar_lea.vmem %s15, %s495
      %s497 = smul.u32 4, %s26
      %v499 = vld [vmem:[%s490] sm:$0xff]
      %v500 = vld [vmem:[%s490 + $0x8] sm:$0xff]
      %v501 = vld [vmem:[%s490 + $0x10] sm:$0xff]
      %v502 = vld [vmem:[%s490 + $0x18] sm:$0xff]
      %v503 = vld [vmem:[%s490 + $0x20] sm:$0xff]
      %v504 = vld [vmem:[%s490 + $0x28] sm:$0xff]
      %v505 = vld [vmem:[%s490 + $0x30] sm:$0xff]
      %v506 = vld [vmem:[%s490 + $0x38] sm:$0xff]
      %v507 = vld [vmem:[%s490 + $0x40] sm:$0xff]
      %v508 = vld [vmem:[%s490 + $0x48] sm:$0xff]
      %v509 = vld [vmem:[%s490 + $0x50] sm:$0xff]
      %v510 = vld [vmem:[%s490 + $0x58] sm:$0xff]
      %v511 = vld [vmem:[%s490 + $0x60] sm:$0xff]
      %v512 = vld [vmem:[%s490 + $0x68] sm:$0xff]
      %v513 = vld [vmem:[%s490 + $0x70] sm:$0xff]
      %v514 = vld [vmem:[%s490 + $0x78] sm:$0xff]
      %v515 = vld [vmem:[%s490 + $0x80] sm:$0xff]
      %v516 = vld [vmem:[%s490 + $0x88] sm:$0xff]
      %v517 = vld [vmem:[%s490 + $0x90] sm:$0xff]
      %v518 = vld [vmem:[%s490 + $0x98] sm:$0xff]
      %v519 = vld [vmem:[%s490 + $0xa0] sm:$0xff]
      %v520 = vld [vmem:[%s490 + $0xa8] sm:$0xff]
      %v521 = vld [vmem:[%s490 + $0xb0] sm:$0xff]
      %v522 = vld [vmem:[%s490 + $0xb8] sm:$0xff]
      %v523 = vld [vmem:[%s490 + $0xc0] sm:$0xff]
      %v524 = vld [vmem:[%s490 + $0xc8] sm:$0xff]
      %v525 = vld [vmem:[%s490 + $0xd0] sm:$0xff]
      %v526 = vld [vmem:[%s490 + $0xd8] sm:$0xff]
      %v527 = vld [vmem:[%s490 + $0xe0] sm:$0xff]
      %v528 = vld [vmem:[%s490 + $0xe8] sm:$0xff]
      %v529 = vld [vmem:[%s490 + $0xf0] sm:$0xff]
      %v530 = vld [vmem:[%s490 + $0xf8] sm:$0xff]
      %v531 = vld [vmem:[%s490 + $0x100] sm:$0xff]
      %v532 = vld [vmem:[%s490 + $0x108] sm:$0xff]
      %v533 = vld [vmem:[%s490 + $0x110] sm:$0xff]
      %v534 = vld [vmem:[%s490 + $0x118] sm:$0xff]
      %v535 = vld [vmem:[%s490 + $0x120] sm:$0xff]
      %v536 = vld [vmem:[%s490 + $0x128] sm:$0xff]
      %v537 = vld [vmem:[%s490 + $0x130] sm:$0xff]
      %v538 = vld [vmem:[%s490 + $0x138] sm:$0xff]
      %v539 = vld [vmem:[%s490 + $0x140] sm:$0xff]
      %v540 = vld [vmem:[%s490 + $0x148] sm:$0xff]
      %v541 = vld [vmem:[%s490 + $0x150] sm:$0xff]
      %v542 = vld [vmem:[%s490 + $0x158] sm:$0xff]
      %v543 = vld [vmem:[%s490 + $0x160] sm:$0xff]
      %v544 = vld [vmem:[%s490 + $0x168] sm:$0xff]
      %v545 = vld [vmem:[%s490 + $0x170] sm:$0xff]
      %v546 = vld [vmem:[%s490 + $0x178] sm:$0xff]
      %v547 = vld [vmem:[%s490 + $0x180] sm:$0xff]
      %v548 = vld [vmem:[%s490 + $0x188] sm:$0xff]
      %v549 = vld [vmem:[%s490 + $0x190] sm:$0xff]
      %v550 = vld [vmem:[%s490 + $0x198] sm:$0xff]
      %v551 = vld [vmem:[%s490 + $0x1a0] sm:$0xff]
      %v552 = vld [vmem:[%s490 + $0x1a8] sm:$0xff]
      %v553 = vld [vmem:[%s490 + $0x1b0] sm:$0xff]
      %v554 = vld [vmem:[%s490 + $0x1b8] sm:$0xff]
      %v555 = vld [vmem:[%s490 + $0x1c0] sm:$0xff]
      %v556 = vld [vmem:[%s490 + $0x1c8] sm:$0xff]
      %v557 = vld [vmem:[%s490 + $0x1d0] sm:$0xff]
      %v558 = vld [vmem:[%s490 + $0x1d8] sm:$0xff]
      %v559 = vld [vmem:[%s490 + $0x1e0] sm:$0xff]
      %v560 = vld [vmem:[%s490 + $0x1e8] sm:$0xff]
      %v561 = vld [vmem:[%s490 + $0x1f0] sm:$0xff]
      %v562 = vld [vmem:[%s490 + $0x1f8] sm:$0xff]
      %v563 = vld [vmem:[%s490 + $0x200] sm:$0xff]
      %v564 = vld [vmem:[%s490 + $0x208] sm:$0xff]
      %v565 = vld [vmem:[%s490 + $0x210] sm:$0xff]
      %v566 = vld [vmem:[%s490 + $0x218] sm:$0xff]
      %v567 = vld [vmem:[%s490 + $0x220] sm:$0xff]
      %v568 = vld [vmem:[%s490 + $0x228] sm:$0xff]
      %v569 = vld [vmem:[%s490 + $0x230] sm:$0xff]
      %v570 = vld [vmem:[%s490 + $0x238] sm:$0xff]
      %v571 = vld [vmem:[%s490 + $0x240] sm:$0xff]
      %v572 = vld [vmem:[%s490 + $0x248] sm:$0xff]
      %v573 = vld [vmem:[%s490 + $0x250] sm:$0xff]
      %v574 = vld [vmem:[%s490 + $0x258] sm:$0xff]
      %v575 = vld [vmem:[%s490 + $0x260] sm:$0xff]
      %v576 = vld [vmem:[%s490 + $0x268] sm:$0xff]
      %v577 = vld [vmem:[%s490 + $0x270] sm:$0xff]
      %v578 = vld [vmem:[%s490 + $0x278] sm:$0xff]
      %v579 = vld [vmem:[%s490 + $0x280] sm:$0xff]
      %v580 = vld [vmem:[%s490 + $0x288] sm:$0xff]
      %v581 = vld [vmem:[%s490 + $0x290] sm:$0xff]
      %v582 = vld [vmem:[%s490 + $0x298] sm:$0xff]
      %v583 = vld [vmem:[%s490 + $0x2a0] sm:$0xff]
      %v584 = vld [vmem:[%s490 + $0x2a8] sm:$0xff]
      %v585 = vld [vmem:[%s490 + $0x2b0] sm:$0xff]
      %v586 = vld [vmem:[%s490 + $0x2b8] sm:$0xff]
      %v587 = vld [vmem:[%s490 + $0x2c0] sm:$0xff]
      %v588 = vld [vmem:[%s490 + $0x2c8] sm:$0xff]
      %v589 = vld [vmem:[%s490 + $0x2d0] sm:$0xff]
      %v590 = vld [vmem:[%s490 + $0x2d8] sm:$0xff]
      %v591 = vld [vmem:[%s490 + $0x2e0] sm:$0xff]
      %v592 = vld [vmem:[%s490 + $0x2e8] sm:$0xff]
      %v593 = vld [vmem:[%s490 + $0x2f0] sm:$0xff]
      %v594 = vld [vmem:[%s490 + $0x2f8] sm:$0xff]
      %v595 = vld [vmem:[%s490 + $0x300] sm:$0xff]
      %v596 = vld [vmem:[%s490 + $0x308] sm:$0xff]
      %v597 = vld [vmem:[%s490 + $0x310] sm:$0xff]
      %v598 = vld [vmem:[%s490 + $0x318] sm:$0xff]
      %v599 = vld [vmem:[%s490 + $0x320] sm:$0xff]
      %v600 = vld [vmem:[%s490 + $0x328] sm:$0xff]
      %v601 = vld [vmem:[%s490 + $0x330] sm:$0xff]
      %v602 = vld [vmem:[%s490 + $0x338] sm:$0xff]
      %v603 = vld [vmem:[%s490 + $0x340] sm:$0xff]
      %v604 = vld [vmem:[%s490 + $0x348] sm:$0xff]
      %v605 = vld [vmem:[%s490 + $0x350] sm:$0xff]
      %v606 = vld [vmem:[%s490 + $0x358] sm:$0xff]
      %v607 = vld [vmem:[%s490 + $0x360] sm:$0xff]
      %v608 = vld [vmem:[%s490 + $0x368] sm:$0xff]
      %v609 = vld [vmem:[%s490 + $0x370] sm:$0xff]
      %v610 = vld [vmem:[%s490 + $0x378] sm:$0xff]
      %v611 = vpack.c.bf16 %v500, %v499
      %v612 = vpack.c.bf16 %v502, %v501
      %v613 = vpack.c.bf16 %v504, %v503
      %v614 = vpack.c.bf16 %v506, %v505
      %v615 = vpack.c.bf16 %v508, %v507
      %v616 = vpack.c.bf16 %v510, %v509
      %v617 = vpack.c.bf16 %v512, %v511
      %v618 = vpack.c.bf16 %v514, %v513
      %v619 = vpack.c.bf16 %v516, %v515
      %v620 = vpack.c.bf16 %v518, %v517
      %v621 = vpack.c.bf16 %v520, %v519
      %v622 = vpack.c.bf16 %v522, %v521
      %v623 = vpack.c.bf16 %v524, %v523
      %v624 = vpack.c.bf16 %v526, %v525
      %v625 = vpack.c.bf16 %v528, %v527
      %v626 = vpack.c.bf16 %v530, %v529
      %v627 = vpack.c.bf16 %v532, %v531
      %v628 = vpack.c.bf16 %v534, %v533
      %v629 = vpack.c.bf16 %v536, %v535
      %v630 = vpack.c.bf16 %v538, %v537
      %v631 = vpack.c.bf16 %v540, %v539
      %v632 = vpack.c.bf16 %v542, %v541
      %v633 = vpack.c.bf16 %v544, %v543
      %v634 = vpack.c.bf16 %v546, %v545
      %v635 = vpack.c.bf16 %v548, %v547
      %v636 = vpack.c.bf16 %v550, %v549
      %v637 = vpack.c.bf16 %v552, %v551
      %v638 = vpack.c.bf16 %v554, %v553
      %v639 = vpack.c.bf16 %v556, %v555
      %v640 = vpack.c.bf16 %v558, %v557
      %v641 = vpack.c.bf16 %v560, %v559
      %v642 = vpack.c.bf16 %v562, %v561
      %v643 = vpack.c.bf16 %v564, %v563
      %v644 = vpack.c.bf16 %v566, %v565
      %v645 = vpack.c.bf16 %v568, %v567
      %v646 = vpack.c.bf16 %v570, %v569
      %v647 = vpack.c.bf16 %v572, %v571
      %v648 = vpack.c.bf16 %v574, %v573
      %v649 = vpack.c.bf16 %v576, %v575
      %v650 = vpack.c.bf16 %v578, %v577
      %v651 = vpack.c.bf16 %v580, %v579
      %v652 = vpack.c.bf16 %v582, %v581
      %v653 = vpack.c.bf16 %v584, %v583
      %v654 = vpack.c.bf16 %v586, %v585
      %v655 = vpack.c.bf16 %v588, %v587
      %v656 = vpack.c.bf16 %v590, %v589
      %v657 = vpack.c.bf16 %v592, %v591
      %v658 = vpack.c.bf16 %v594, %v593
      %v659 = vpack.c.bf16 %v596, %v595
      %v660 = vpack.c.bf16 %v598, %v597
      %v661 = vpack.c.bf16 %v600, %v599
      %v662 = vpack.c.bf16 %v602, %v601
      %v663 = vpack.c.bf16 %v604, %v603
      %v664 = vpack.c.bf16 %v606, %v605
      %v665 = vpack.c.bf16 %v608, %v607
      %v666 = vpack.c.bf16 %v610, %v609
      %v667 = vld [vmem:[%s1] sm:$0xff]
      %v668 = vld [vmem:[%s1 + $0x8] sm:$0xff]
      %v669 = vld [vmem:[%s1 + $0x10] sm:$0xff]
      %v670 = vld [vmem:[%s1 + $0x18] sm:$0x33]
      %s671 = scalar_lea.vmem %s1, 32
      %v672 = vld [vmem:[%s671] sm:$0xff]
      %v673 = vld [vmem:[%s671 + $0x8] sm:$0xff]
      %v674 = vld [vmem:[%s671 + $0x10] sm:$0xff]
      %v675 = vld [vmem:[%s671 + $0x18] sm:$0x33]
      %v680 = vunpack.c.l.b16 %v672
      %v681 = vunpack.c.h.b16 %v672
      %v682 = vunpack.c.l.b16 %v673
      %v683 = vunpack.c.h.b16 %v673
      %v684 = vunpack.c.l.b16 %v674
      %v685 = vunpack.c.h.b16 %v674
      %v686 = vunpack.c.l.b16 %v675
      %v687 = vunpack.c.h.b16 %v675
      %v688 = vpack.c.b16 %v682, %v680
      %v689 = vpack.c.b16 %v683, %v681
      %v690 = vpack.c.b16 %v686, %v684
      %v691 = vpack.c.b16 %v687, %v685
      %vm694 = vcmask 228352
      %v696 = vsel %vm694, %v613, 0
      %v699 = vsel %vm694, %v614, 0
      %v702 = vsel %vm694, %v615, 0
      %v705 = vsel %vm694, %v616, 0
      %v708 = vsel %vm694, %v617, 0
      %v711 = vsel %vm694, %v618, 0
      %v714 = vsel %vm694, %v619, 0
      %v717 = vsel %vm694, %v620, 0
      %v720 = vsel %vm694, %v621, 0
      %v723 = vsel %vm694, %v622, 0
      %v726 = vsel %vm694, %v623, 0
      %v729 = vsel %vm694, %v624, 0
      %v732 = vsel %vm694, %v625, 0
      %v735 = vsel %vm694, %v626, 0
      %v738 = vsel %vm694, %v627, 0
      %v741 = vsel %vm694, %v628, 0
      %v744 = vsel %vm694, %v629, 0
      %v747 = vsel %vm694, %v630, 0
      %v750 = vsel %vm694, %v631, 0
      %v753 = vsel %vm694, %v632, 0
      %v756 = vsel %vm694, %v633, 0
      %v759 = vsel %vm694, %v634, 0
      %v762 = vsel %vm694, %v635, 0
      %v765 = vsel %vm694, %v636, 0
      %v768 = vsel %vm694, %v637, 0
      %v771 = vsel %vm694, %v638, 0
      %v774 = vsel %vm694, %v639, 0
      %v777 = vsel %vm694, %v640, 0
      %v780 = vsel %vm694, %v641, 0
      %v783 = vsel %vm694, %v642, 0
      %v786 = vsel %vm694, %v643, 0
      %v789 = vsel %vm694, %v644, 0
      %v792 = vsel %vm694, %v645, 0
      %v795 = vsel %vm694, %v646, 0
      %v798 = vsel %vm694, %v647, 0
      %v801 = vsel %vm694, %v648, 0
      %v804 = vsel %vm694, %v649, 0
      %v807 = vsel %vm694, %v650, 0
      %v810 = vsel %vm694, %v651, 0
      %v813 = vsel %vm694, %v652, 0
      %v816 = vsel %vm694, %v653, 0
      %v819 = vsel %vm694, %v654, 0
      %v822 = vsel %vm694, %v655, 0
      %v825 = vsel %vm694, %v656, 0
      %v828 = vsel %vm694, %v657, 0
      %v831 = vsel %vm694, %v658, 0
      %v834 = vsel %vm694, %v659, 0
      %v837 = vsel %vm694, %v660, 0
      %v840 = vsel %vm694, %v661, 0
      %v843 = vsel %vm694, %v662, 0
      %v846 = vsel %vm694, %v663, 0
      %v849 = vsel %vm694, %v664, 0
      %vm851 = vcmask 1045504
      %v853 = vsel %vm851, %v690, 0
      %v856 = vsel %vm851, %v691, 0
      %858 = vmatprep.subr.bf16.mxu0 %v689
      %859 = vmatpush1.bf16.msra.mxu0 %v688
      %860 = vmatprep.subr.bf16.mxu0 %v856
      %861 = vmatpush1.bf16.msra.mxu0 %v853
      %862 = vmatprep.subr.bf16.mxu0 0
      %863 = vmatpush1.bf16.msra.mxu0 0
      %864 = vmatprep.subr.bf16.mxu0 0
      %865 = vmatpush1.bf16.msra.mxu0 0
      %866 = vmatprep.subr.bf16.mxu0 0
      %867 = vmatpush1.bf16.msra.mxu0 0
      %868 = vmatprep.subr.bf16.mxu0 0
      %869 = vmatpush1.bf16.msra.mxu0 0
      %870 = vmatprep.subr.bf16.mxu0 0
      %871 = vmatpush1.bf16.msra.mxu0 0
      %872 = vmatprep.subr.bf16.mxu0 0
      %873 = vmatpush1.bf16.msra.mxu0 0
      %874 = vmatprep.subr.bf16.mxu0 0
      %875 = vmatpush1.bf16.msra.mxu0 0
      %876 = vmatprep.subr.bf16.mxu0 0
      %877 = vmatpush1.bf16.msra.mxu0 0
      %878 = vmatprep.subr.bf16.mxu0 0
      %879 = vmatpush1.bf16.msra.mxu0 0
      %880 = vmatprep.subr.bf16.mxu0 0
      %881 = vmatpush1.bf16.msra.mxu0 0
      %882 = vmatprep.subr.bf16.mxu0 0
      %883 = vmatpush1.bf16.msra.mxu0 0
      %884 = vmatprep.subr.bf16.mxu0 0
      %885 = vmatpush1.bf16.msra.mxu0 0
      %886 = vmatprep.subr.bf16.mxu0 0
      %887 = vmatpush1.bf16.msra.mxu0 0
      %888 = vmatprep.subr.bf16.mxu0 0
      %889 = vmatpush1.bf16.msra.mxu0 0
      %890 = vmatprep.mubr.bf16.mxu0 0
      %891 = vmatmul.mubr.bf16.gmra.mrb[0].mxu0 %v696
      %v892 = vpop.f32.mrb[0].mxu0
      %v893 = vadd.f32 0.0, %v892
      %v894 = vpop.f32.mrb[0].mxu0
      %v895 = vadd.f32 0.0, %v894
      %v896 = vpop.f32.mrb[0].mxu0
      %v897 = vadd.f32 0.0, %v896
      %v898 = vpop.f32.mrb[0].mxu0
      %v899 = vadd.f32 0.0, %v898
      %900 = vmatprep.mubr.bf16.mxu0 0
      %901 = vmatmul.mubr.bf16.gmra.mrb[0].mxu0 %v699
      %v902 = vpop.f32.mrb[0].mxu0
      %v903 = vadd.f32 0.0, %v902
      %v904 = vpop.f32.mrb[0].mxu0
      %v905 = vadd.f32 0.0, %v904
      %v906 = vpop.f32.mrb[0].mxu0
      %v907 = vadd.f32 0.0, %v906
      %v908 = vpop.f32.mrb[0].mxu0
      %v909 = vadd.f32 0.0, %v908
      %910 = vmatprep.mubr.bf16.mxu0 0
      %911 = vmatmul.mubr.bf16.gmra.mrb[0].mxu0 %v702
      %v912 = vpop.f32.mrb[0].mxu0
      %v913 = vadd.f32 0.0, %v912
      %v914 = vpop.f32.mrb[0].mxu0
      %v915 = vadd.f32 0.0, %v914
      %v916 = vpop.f32.mrb[0].mxu0
      %v917 = vadd.f32 0.0, %v916
      %v918 = vpop.f32.mrb[0].mxu0
      %v919 = vadd.f32 0.0, %v918
      %920 = vmatprep.mubr.bf16.mxu0 0
      %921 = vmatmul.mubr.bf16.gmra.mrb[0].mxu0 %v705
      %v922 = vpop.f32.mrb[0].mxu0
      %v923 = vadd.f32 0.0, %v922
      %v924 = vpop.f32.mrb[0].mxu0
      %v925 = vadd.f32 0.0, %v924
      %v926 = vpop.f32.mrb[0].mxu0
      %v927 = vadd.f32 0.0, %v926
      %v928 = vpop.f32.mrb[0].mxu0
      %v929 = vadd.f32 0.0, %v928
      %930 = vmatprep.mubr.bf16.mxu0 0
      %931 = vmatmul.mubr.bf16.gmra.mrb[0].mxu0 %v708
      %v932 = vpop.f32.mrb[0].mxu0
      %v933 = vadd.f32 0.0, %v932
      %v934 = vpop.f32.mrb[0].mxu0
      %v935 = vadd.f32 0.0, %v934
      %v936 = vpop.f32.mrb[0].mxu0
      %v937 = vadd.f32 0.0, %v936
      %v938 = vpop.f32.mrb[0].mxu0
      %v939 = vadd.f32 0.0, %v938
      %940 = vmatprep.mubr.bf16.mxu0 0
      %941 = vmatmul.mubr.bf16.gmra.mrb[0].mxu0 %v711
      %v942 = vpop.f32.mrb[0].mxu0
      %v943 = vadd.f32 0.0, %v942
      %v944 = vpop.f32.mrb[0].mxu0
      %v945 = vadd.f32 0.0, %v944
      %v946 = vpop.f32.mrb[0].mxu0
      %v947 = vadd.f32 0.0, %v946
      %v948 = vpop.f32.mrb[0].mxu0
      %v949 = vadd.f32 0.0, %v948
      %950 = vmatprep.mubr.bf16.mxu0 0
      %951 = vmatmul.mubr.bf16.gmra.mrb[0].mxu0 %v714
      %v952 = vpop.f32.mrb[0].mxu0
      %v953 = vadd.f32 0.0, %v952
      %v954 = vpop.f32.mrb[0].mxu0
      %v955 = vadd.f32 0.0, %v954
      %v956 = vpop.f32.mrb[0].mxu0
      %v957 = vadd.f32 0.0, %v956
      %v958 = vpop.f32.mrb[0].mxu0
      %v959 = vadd.f32 0.0, %v958
      %960 = vmatprep.mubr.bf16.mxu0 0
      %961 = vmatmul.mubr.bf16.gmra.mrb[0].mxu0 %v717
      %v962 = vpop.f32.mrb[0].mxu0
      %v963 = vadd.f32 0.0, %v962
      %v964 = vpop.f32.mrb[0].mxu0
      %v965 = vadd.f32 0.0, %v964
      %v966 = vpop.f32.mrb[0].mxu0
      %v967 = vadd.f32 0.0, %v966
      %v968 = vpop.f32.mrb[0].mxu0
      %v969 = vadd.f32 0.0, %v968
      %970 = vmatprep.mubr.bf16.mxu0 0
      %971 = vmatmul.mubr.bf16.gmra.mrb[0].mxu0 %v720
      %v972 = vpop.f32.mrb[0].mxu0
      %v973 = vadd.f32 0.0, %v972
      %v974 = vpop.f32.mrb[0].mxu0
      %v975 = vadd.f32 0.0, %v974
      %v976 = vpop.f32.mrb[0].mxu0
      %v977 = vadd.f32 0.0, %v976
      %v978 = vpop.f32.mrb[0].mxu0
      %v979 = vadd.f32 0.0, %v978
      %980 = vmatprep.mubr.bf16.mxu0 0
      %981 = vmatmul.mubr.bf16.gmra.mrb[0].mxu0 %v723
      %v982 = vpop.f32.mrb[0].mxu0
      %v983 = vadd.f32 0.0, %v982
      %v984 = vpop.f32.mrb[0].mxu0
      %v985 = vadd.f32 0.0, %v984
      %v986 = vpop.f32.mrb[0].mxu0
      %v987 = vadd.f32 0.0, %v986
      %v988 = vpop.f32.mrb[0].mxu0
      %v989 = vadd.f32 0.0, %v988
      %990 = vmatprep.mubr.bf16.mxu0 0
      %991 = vmatmul.mubr.bf16.gmra.mrb[0].mxu0 %v726
      %v992 = vpop.f32.mrb[0].mxu0
      %v993 = vadd.f32 0.0, %v992
      %v994 = vpop.f32.mrb[0].mxu0
      %v995 = vadd.f32 0.0, %v994
      %v996 = vpop.f32.mrb[0].mxu0
      %v997 = vadd.f32 0.0, %v996
      %v998 = vpop.f32.mrb[0].mxu0
      %v999 = vadd.f32 0.0, %v998
      %1000 = vmatprep.mubr.bf16.mxu0 0
      %1001 = vmatmul.mubr.bf16.gmra.mrb[0].mxu0 %v729
      %v1002 = vpop.f32.mrb[0].mxu0
      %v1003 = vadd.f32 0.0, %v1002
      %v1004 = vpop.f32.mrb[0].mxu0
      %v1005 = vadd.f32 0.0, %v1004
      %v1006 = vpop.f32.mrb[0].mxu0
      %v1007 = vadd.f32 0.0, %v1006
      %v1008 = vpop.f32.mrb[0].mxu0
      %v1009 = vadd.f32 0.0, %v1008
      %1010 = vmatprep.mubr.bf16.mxu0 0
      %1011 = vmatmul.mubr.bf16.gmra.mrb[0].mxu0 %v732
      %v1012 = vpop.f32.mrb[0].mxu0
      %v1013 = vadd.f32 0.0, %v1012
      %v1014 = vpop.f32.mrb[0].mxu0
      %v1015 = vadd.f32 0.0, %v1014
      %v1016 = vpop.f32.mrb[0].mxu0
      %v1017 = vadd.f32 0.0, %v1016
      %v1018 = vpop.f32.mrb[0].mxu0
      %v1019 = vadd.f32 0.0, %v1018
      %1020 = vmatprep.mubr.bf16.mxu0 0
      %1021 = vmatmul.mubr.bf16.gmra.mrb[0].mxu0 %v735
      %v1022 = vpop.f32.mrb[0].mxu0
      %v1023 = vadd.f32 0.0, %v1022
      %v1024 = vpop.f32.mrb[0].mxu0
      %v1025 = vadd.f32 0.0, %v1024
      %v1026 = vpop.f32.mrb[0].mxu0
      %v1027 = vadd.f32 0.0, %v1026
      %v1028 = vpop.f32.mrb[0].mxu0
      %v1029 = vadd.f32 0.0, %v1028
      %1030 = vmatprep.mubr.bf16.mxu0 0
      %1031 = vmatmul.mubr.bf16.gmra.mrb[0].mxu0 %v738
      %v1032 = vpop.f32.mrb[0].mxu0
      %v1033 = vadd.f32 0.0, %v1032
      %v1034 = vpop.f32.mrb[0].mxu0
      %v1035 = vadd.f32 0.0, %v1034
      %v1036 = vpop.f32.mrb[0].mxu0
      %v1037 = vadd.f32 0.0, %v1036
      %v1038 = vpop.f32.mrb[0].mxu0
      %v1039 = vadd.f32 0.0, %v1038
      %1040 = vmatprep.mubr.bf16.mxu0 0
      %1041 = vmatmul.mubr.bf16.gmra.mrb[0].mxu0 %v741
      %v1042 = vpop.f32.mrb[0].mxu0
      %v1043 = vadd.f32 0.0, %v1042
      %v1044 = vpop.f32.mrb[0].mxu0
      %v1045 = vadd.f32 0.0, %v1044
      %v1046 = vpop.f32.mrb[0].mxu0
      %v1047 = vadd.f32 0.0, %v1046
      %v1048 = vpop.f32.mrb[0].mxu0
      %v1049 = vadd.f32 0.0, %v1048
      %1050 = vmatprep.mubr.bf16.mxu0 0
      %1051 = vmatmul.mubr.bf16.gmra.mrb[0].mxu0 %v744
      %v1052 = vpop.f32.mrb[0].mxu0
      %v1053 = vadd.f32 0.0, %v1052
      %v1054 = vpop.f32.mrb[0].mxu0
      %v1055 = vadd.f32 0.0, %v1054
      %v1056 = vpop.f32.mrb[0].mxu0
      %v1057 = vadd.f32 0.0, %v1056
      %v1058 = vpop.f32.mrb[0].mxu0
      %v1059 = vadd.f32 0.0, %v1058
      %1060 = vmatprep.mubr.bf16.mxu0 0
      %1061 = vmatmul.mubr.bf16.gmra.mrb[0].mxu0 %v747
      %v1062 = vpop.f32.mrb[0].mxu0
      %v1063 = vadd.f32 0.0, %v1062
      %v1064 = vpop.f32.mrb[0].mxu0
      %v1065 = vadd.f32 0.0, %v1064
      %v1066 = vpop.f32.mrb[0].mxu0
      %v1067 = vadd.f32 0.0, %v1066
      %v1068 = vpop.f32.mrb[0].mxu0
      %v1069 = vadd.f32 0.0, %v1068
      %1070 = vmatprep.mubr.bf16.mxu0 0
      %1071 = vmatmul.mubr.bf16.gmra.mrb[0].mxu0 %v750
      %v1072 = vpop.f32.mrb[0].mxu0
      %v1073 = vadd.f32 0.0, %v1072
      %v1074 = vpop.f32.mrb[0].mxu0
      %v1075 = vadd.f32 0.0, %v1074
      %v1076 = vpop.f32.mrb[0].mxu0
      %v1077 = vadd.f32 0.0, %v1076
      %v1078 = vpop.f32.mrb[0].mxu0
      %v1079 = vadd.f32 0.0, %v1078
      %1080 = vmatprep.mubr.bf16.mxu0 0
      %1081 = vmatmul.mubr.bf16.gmra.mrb[0].mxu0 %v753
      %v1082 = vpop.f32.mrb[0].mxu0
      %v1083 = vadd.f32 0.0, %v1082
      %v1084 = vpop.f32.mrb[0].mxu0
      %v1085 = vadd.f32 0.0, %v1084
      %v1086 = vpop.f32.mrb[0].mxu0
      %v1087 = vadd.f32 0.0, %v1086
      %v1088 = vpop.f32.mrb[0].mxu0
      %v1089 = vadd.f32 0.0, %v1088
      %1090 = vmatprep.mubr.bf16.mxu0 0
      %1091 = vmatmul.mubr.bf16.gmra.mrb[0].mxu0 %v756
      %v1092 = vpop.f32.mrb[0].mxu0
      %v1093 = vadd.f32 0.0, %v1092
      %v1094 = vpop.f32.mrb[0].mxu0
      %v1095 = vadd.f32 0.0, %v1094
      %v1096 = vpop.f32.mrb[0].mxu0
      %v1097 = vadd.f32 0.0, %v1096
      %v1098 = vpop.f32.mrb[0].mxu0
      %v1099 = vadd.f32 0.0, %v1098
      %1100 = vmatprep.mubr.bf16.mxu0 0
      %1101 = vmatmul.mubr.bf16.gmra.mrb[0].mxu0 %v759
      %v1102 = vpop.f32.mrb[0].mxu0
      %v1103 = vadd.f32 0.0, %v1102
      %v1104 = vpop.f32.mrb[0].mxu0
      %v1105 = vadd.f32 0.0, %v1104
      %v1106 = vpop.f32.mrb[0].mxu0
      %v1107 = vadd.f32 0.0, %v1106
      %v1108 = vpop.f32.mrb[0].mxu0
      %v1109 = vadd.f32 0.0, %v1108
      %1110 = vmatprep.mubr.bf16.mxu0 0
      %1111 = vmatmul.mubr.bf16.gmra.mrb[0].mxu0 %v762
      %v1112 = vpop.f32.mrb[0].mxu0
      %v1113 = vadd.f32 0.0, %v1112
      %v1114 = vpop.f32.mrb[0].mxu0
      %v1115 = vadd.f32 0.0, %v1114
      %v1116 = vpop.f32.mrb[0].mxu0
      %v1117 = vadd.f32 0.0, %v1116
      %v1118 = vpop.f32.mrb[0].mxu0
      %v1119 = vadd.f32 0.0, %v1118
      %1120 = vmatprep.mubr.bf16.mxu0 0
      %1121 = vmatmul.mubr.bf16.gmra.mrb[0].mxu0 %v765
      %v1122 = vpop.f32.mrb[0].mxu0
      %v1123 = vadd.f32 0.0, %v1122
      %v1124 = vpop.f32.mrb[0].mxu0
      %v1125 = vadd.f32 0.0, %v1124
      %v1126 = vpop.f32.mrb[0].mxu0
      %v1127 = vadd.f32 0.0, %v1126
      %v1128 = vpop.f32.mrb[0].mxu0
      %v1129 = vadd.f32 0.0, %v1128
      %1130 = vmatprep.mubr.bf16.mxu0 0
      %1131 = vmatmul.mubr.bf16.gmra.mrb[0].mxu0 %v768
      %v1132 = vpop.f32.mrb[0].mxu0
      %v1133 = vadd.f32 0.0, %v1132
      %v1134 = vpop.f32.mrb[0].mxu0
      %v1135 = vadd.f32 0.0, %v1134
      %v1136 = vpop.f32.mrb[0].mxu0
      %v1137 = vadd.f32 0.0, %v1136
      %v1138 = vpop.f32.mrb[0].mxu0
      %v1139 = vadd.f32 0.0, %v1138
      %1140 = vmatprep.mubr.bf16.mxu0 0
      %1141 = vmatmul.mubr.bf16.gmra.mrb[0].mxu0 %v771
      %v1142 = vpop.f32.mrb[0].mxu0
      %v1143 = vadd.f32 0.0, %v1142
      %v1144 = vpop.f32.mrb[0].mxu0
      %v1145 = vadd.f32 0.0, %v1144
      %v1146 = vpop.f32.mrb[0].mxu0
      %v1147 = vadd.f32 0.0, %v1146
      %v1148 = vpop.f32.mrb[0].mxu0
      %v1149 = vadd.f32 0.0, %v1148
      %1150 = vmatprep.mubr.bf16.mxu0 0
      %1151 = vmatmul.mubr.bf16.gmra.mrb[0].mxu0 %v774
      %v1152 = vpop.f32.mrb[0].mxu0
      %v1153 = vadd.f32 0.0, %v1152
      %v1154 = vpop.f32.mrb[0].mxu0
      %v1155 = vadd.f32 0.0, %v1154
      %v1156 = vpop.f32.mrb[0].mxu0
      %v1157 = vadd.f32 0.0, %v1156
      %v1158 = vpop.f32.mrb[0].mxu0
      %v1159 = vadd.f32 0.0, %v1158
      %1160 = vmatprep.mubr.bf16.mxu0 0
      %1161 = vmatmul.mubr.bf16.gmra.mrb[0].mxu0 %v777
      %v1162 = vpop.f32.mrb[0].mxu0
      %v1163 = vadd.f32 0.0, %v1162
      %v1164 = vpop.f32.mrb[0].mxu0
      %v1165 = vadd.f32 0.0, %v1164
      %v1166 = vpop.f32.mrb[0].mxu0
      %v1167 = vadd.f32 0.0, %v1166
      %v1168 = vpop.f32.mrb[0].mxu0
      %v1169 = vadd.f32 0.0, %v1168
      %1170 = vmatprep.mubr.bf16.mxu0 0
      %1171 = vmatmul.mubr.bf16.gmra.mrb[0].mxu0 %v780
      %v1172 = vpop.f32.mrb[0].mxu0
      %v1173 = vadd.f32 0.0, %v1172
      %v1174 = vpop.f32.mrb[0].mxu0
      %v1175 = vadd.f32 0.0, %v1174
      %v1176 = vpop.f32.mrb[0].mxu0
      %v1177 = vadd.f32 0.0, %v1176
      %v1178 = vpop.f32.mrb[0].mxu0
      %v1179 = vadd.f32 0.0, %v1178
      %1180 = vmatprep.mubr.bf16.mxu0 0
      %1181 = vmatmul.mubr.bf16.gmra.mrb[0].mxu0 %v783
      %v1182 = vpop.f32.mrb[0].mxu0
      %v1183 = vadd.f32 0.0, %v1182
      %v1184 = vpop.f32.mrb[0].mxu0
      %v1185 = vadd.f32 0.0, %v1184
      %v1186 = vpop.f32.mrb[0].mxu0
      %v1187 = vadd.f32 0.0, %v1186
      %v1188 = vpop.f32.mrb[0].mxu0
      %v1189 = vadd.f32 0.0, %v1188
      %1190 = vmatprep.mubr.bf16.mxu0 0
      %1191 = vmatmul.mubr.bf16.gmra.mrb[0].mxu0 %v786
      %v1192 = vpop.f32.mrb[0].mxu0
      %v1193 = vadd.f32 0.0, %v1192
      %v1194 = vpop.f32.mrb[0].mxu0
      %v1195 = vadd.f32 0.0, %v1194
      %v1196 = vpop.f32.mrb[0].mxu0
      %v1197 = vadd.f32 0.0, %v1196
      %v1198 = vpop.f32.mrb[0].mxu0
      %v1199 = vadd.f32 0.0, %v1198
      %1200 = vmatprep.mubr.bf16.mxu0 0
      %1201 = vmatmul.mubr.bf16.gmra.mrb[0].mxu0 %v789
      %v1202 = vpop.f32.mrb[0].mxu0
      %v1203 = vadd.f32 0.0, %v1202
      %v1204 = vpop.f32.mrb[0].mxu0
      %v1205 = vadd.f32 0.0, %v1204
      %v1206 = vpop.f32.mrb[0].mxu0
      %v1207 = vadd.f32 0.0, %v1206
      %v1208 = vpop.f32.mrb[0].mxu0
      %v1209 = vadd.f32 0.0, %v1208
      %1210 = vmatprep.mubr.bf16.mxu0 0
      %1211 = vmatmul.mubr.bf16.gmra.mrb[0].mxu0 %v792
      %v1212 = vpop.f32.mrb[0].mxu0
      %v1213 = vadd.f32 0.0, %v1212
      %v1214 = vpop.f32.mrb[0].mxu0
      %v1215 = vadd.f32 0.0, %v1214
      %v1216 = vpop.f32.mrb[0].mxu0
      %v1217 = vadd.f32 0.0, %v1216
      %v1218 = vpop.f32.mrb[0].mxu0
      %v1219 = vadd.f32 0.0, %v1218
      %1220 = vmatprep.mubr.bf16.mxu0 0
      %1221 = vmatmul.mubr.bf16.gmra.mrb[0].mxu0 %v795
      %v1222 = vpop.f32.mrb[0].mxu0
      %v1223 = vadd.f32 0.0, %v1222
      %v1224 = vpop.f32.mrb[0].mxu0
      %v1225 = vadd.f32 0.0, %v1224
      %v1226 = vpop.f32.mrb[0].mxu0
      %v1227 = vadd.f32 0.0, %v1226
      %v1228 = vpop.f32.mrb[0].mxu0
      %v1229 = vadd.f32 0.0, %v1228
      %1230 = vmatprep.mubr.bf16.mxu0 0
      %1231 = vmatmul.mubr.bf16.gmra.mrb[0].mxu0 %v798
      %v1232 = vpop.f32.mrb[0].mxu0
      %v1233 = vadd.f32 0.0, %v1232
      %v1234 = vpop.f32.mrb[0].mxu0
      %v1235 = vadd.f32 0.0, %v1234
      %v1236 = vpop.f32.mrb[0].mxu0
      %v1237 = vadd.f32 0.0, %v1236
      %v1238 = vpop.f32.mrb[0].mxu0
      %v1239 = vadd.f32 0.0, %v1238
      %1240 = vmatprep.mubr.bf16.mxu0 0
      %1241 = vmatmul.mubr.bf16.gmra.mrb[0].mxu0 %v801
      %v1242 = vpop.f32.mrb[0].mxu0
      %v1243 = vadd.f32 0.0, %v1242
      %v1244 = vpop.f32.mrb[0].mxu0
      %v1245 = vadd.f32 0.0, %v1244
      %v1246 = vpop.f32.mrb[0].mxu0
      %v1247 = vadd.f32 0.0, %v1246
      %v1248 = vpop.f32.mrb[0].mxu0
      %v1249 = vadd.f32 0.0, %v1248
      %1250 = vmatprep.mubr.bf16.mxu0 0
      %1251 = vmatmul.mubr.bf16.gmra.mrb[0].mxu0 %v804
      %v1252 = vpop.f32.mrb[0].mxu0
      %v1253 = vadd.f32 0.0, %v1252
      %v1254 = vpop.f32.mrb[0].mxu0
      %v1255 = vadd.f32 0.0, %v1254
      %v1256 = vpop.f32.mrb[0].mxu0
      %v1257 = vadd.f32 0.0, %v1256
      %v1258 = vpop.f32.mrb[0].mxu0
      %v1259 = vadd.f32 0.0, %v1258
      %1260 = vmatprep.mubr.bf16.mxu0 0
      %1261 = vmatmul.mubr.bf16.gmra.mrb[0].mxu0 %v807
      %v1262 = vpop.f32.mrb[0].mxu0
      %v1263 = vadd.f32 0.0, %v1262
      %v1264 = vpop.f32.mrb[0].mxu0
      %v1265 = vadd.f32 0.0, %v1264
      %v1266 = vpop.f32.mrb[0].mxu0
      %v1267 = vadd.f32 0.0, %v1266
      %v1268 = vpop.f32.mrb[0].mxu0
      %v1269 = vadd.f32 0.0, %v1268
      %1270 = vmatprep.mubr.bf16.mxu0 0
      %1271 = vmatmul.mubr.bf16.gmra.mrb[0].mxu0 %v810
      %v1272 = vpop.f32.mrb[0].mxu0
      %v1273 = vadd.f32 0.0, %v1272
      %v1274 = vpop.f32.mrb[0].mxu0
      %v1275 = vadd.f32 0.0, %v1274
      %v1276 = vpop.f32.mrb[0].mxu0
      %v1277 = vadd.f32 0.0, %v1276
      %v1278 = vpop.f32.mrb[0].mxu0
      %v1279 = vadd.f32 0.0, %v1278
      %1280 = vmatprep.mubr.bf16.mxu0 0
      %1281 = vmatmul.mubr.bf16.gmra.mrb[0].mxu0 %v813
      %v1282 = vpop.f32.mrb[0].mxu0
      %v1283 = vadd.f32 0.0, %v1282
      %v1284 = vpop.f32.mrb[0].mxu0
      %v1285 = vadd.f32 0.0, %v1284
      %v1286 = vpop.f32.mrb[0].mxu0
      %v1287 = vadd.f32 0.0, %v1286
      %v1288 = vpop.f32.mrb[0].mxu0
      %v1289 = vadd.f32 0.0, %v1288
      %1290 = vmatprep.mubr.bf16.mxu0 0
      %1291 = vmatmul.mubr.bf16.gmra.mrb[0].mxu0 %v816
      %v1292 = vpop.f32.mrb[0].mxu0
      %v1293 = vadd.f32 0.0, %v1292
      %v1294 = vpop.f32.mrb[0].mxu0
      %v1295 = vadd.f32 0.0, %v1294
      %v1296 = vpop.f32.mrb[0].mxu0
      %v1297 = vadd.f32 0.0, %v1296
      %v1298 = vpop.f32.mrb[0].mxu0
      %v1299 = vadd.f32 0.0, %v1298
      %1300 = vmatprep.mubr.bf16.mxu0 0
      %1301 = vmatmul.mubr.bf16.gmra.mrb[0].mxu0 %v819
      %v1302 = vpop.f32.mrb[0].mxu0
      %v1303 = vadd.f32 0.0, %v1302
      %v1304 = vpop.f32.mrb[0].mxu0
      %v1305 = vadd.f32 0.0, %v1304
      %v1306 = vpop.f32.mrb[0].mxu0
      %v1307 = vadd.f32 0.0, %v1306
      %v1308 = vpop.f32.mrb[0].mxu0
      %v1309 = vadd.f32 0.0, %v1308
      %1310 = vmatprep.mubr.bf16.mxu0 0
      %1311 = vmatmul.mubr.bf16.gmra.mrb[0].mxu0 %v822
      %v1312 = vpop.f32.mrb[0].mxu0
      %v1313 = vadd.f32 0.0, %v1312
      %v1314 = vpop.f32.mrb[0].mxu0
      %v1315 = vadd.f32 0.0, %v1314
      %v1316 = vpop.f32.mrb[0].mxu0
      %v1317 = vadd.f32 0.0, %v1316
      %v1318 = vpop.f32.mrb[0].mxu0
      %v1319 = vadd.f32 0.0, %v1318
      %1320 = vmatprep.mubr.bf16.mxu0 0
      %1321 = vmatmul.mubr.bf16.gmra.mrb[0].mxu0 %v825
      %v1322 = vpop.f32.mrb[0].mxu0
      %v1323 = vadd.f32 0.0, %v1322
      %v1324 = vpop.f32.mrb[0].mxu0
      %v1325 = vadd.f32 0.0, %v1324
      %v1326 = vpop.f32.mrb[0].mxu0
      %v1327 = vadd.f32 0.0, %v1326
      %v1328 = vpop.f32.mrb[0].mxu0
      %v1329 = vadd.f32 0.0, %v1328
      %1330 = vmatprep.mubr.bf16.mxu0 0
      %1331 = vmatmul.mubr.bf16.gmra.mrb[0].mxu0 %v828
      %v1332 = vpop.f32.mrb[0].mxu0
      %v1333 = vadd.f32 0.0, %v1332
      %v1334 = vpop.f32.mrb[0].mxu0
      %v1335 = vadd.f32 0.0, %v1334
      %v1336 = vpop.f32.mrb[0].mxu0
      %v1337 = vadd.f32 0.0, %v1336
      %v1338 = vpop.f32.mrb[0].mxu0
      %v1339 = vadd.f32 0.0, %v1338
      %1340 = vmatprep.mubr.bf16.mxu0 0
      %1341 = vmatmul.mubr.bf16.gmra.mrb[0].mxu0 %v831
      %v1342 = vpop.f32.mrb[0].mxu0
      %v1343 = vadd.f32 0.0, %v1342
      %v1344 = vpop.f32.mrb[0].mxu0
      %v1345 = vadd.f32 0.0, %v1344
      %v1346 = vpop.f32.mrb[0].mxu0
      %v1347 = vadd.f32 0.0, %v1346
      %v1348 = vpop.f32.mrb[0].mxu0
      %v1349 = vadd.f32 0.0, %v1348
      %1350 = vmatprep.mubr.bf16.mxu0 0
      %1351 = vmatmul.mubr.bf16.gmra.mrb[0].mxu0 %v834
      %v1352 = vpop.f32.mrb[0].mxu0
      %v1353 = vadd.f32 0.0, %v1352
      %v1354 = vpop.f32.mrb[0].mxu0
      %v1355 = vadd.f32 0.0, %v1354
      %v1356 = vpop.f32.mrb[0].mxu0
      %v1357 = vadd.f32 0.0, %v1356
      %v1358 = vpop.f32.mrb[0].mxu0
      %v1359 = vadd.f32 0.0, %v1358
      %1360 = vmatprep.mubr.bf16.mxu0 0
      %1361 = vmatmul.mubr.bf16.gmra.mrb[0].mxu0 %v837
      %v1362 = vpop.f32.mrb[0].mxu0
      %v1363 = vadd.f32 0.0, %v1362
      %v1364 = vpop.f32.mrb[0].mxu0
      %v1365 = vadd.f32 0.0, %v1364
      %v1366 = vpop.f32.mrb[0].mxu0
      %v1367 = vadd.f32 0.0, %v1366
      %v1368 = vpop.f32.mrb[0].mxu0
      %v1369 = vadd.f32 0.0, %v1368
      %1370 = vmatprep.mubr.bf16.mxu0 0
      %1371 = vmatmul.mubr.bf16.gmra.mrb[0].mxu0 %v840
      %v1372 = vpop.f32.mrb[0].mxu0
      %v1373 = vadd.f32 0.0, %v1372
      %v1374 = vpop.f32.mrb[0].mxu0
      %v1375 = vadd.f32 0.0, %v1374
      %v1376 = vpop.f32.mrb[0].mxu0
      %v1377 = vadd.f32 0.0, %v1376
      %v1378 = vpop.f32.mrb[0].mxu0
      %v1379 = vadd.f32 0.0, %v1378
      %1380 = vmatprep.mubr.bf16.mxu0 0
      %1381 = vmatmul.mubr.bf16.gmra.mrb[0].mxu0 %v843
      %v1382 = vpop.f32.mrb[0].mxu0
      %v1383 = vadd.f32 0.0, %v1382
      %v1384 = vpop.f32.mrb[0].mxu0
      %v1385 = vadd.f32 0.0, %v1384
      %v1386 = vpop.f32.mrb[0].mxu0
      %v1387 = vadd.f32 0.0, %v1386
      %v1388 = vpop.f32.mrb[0].mxu0
      %v1389 = vadd.f32 0.0, %v1388
      %1390 = vmatprep.mubr.bf16.mxu0 0
      %1391 = vmatmul.mubr.bf16.gmra.mrb[0].mxu0 %v846
      %v1392 = vpop.f32.mrb[0].mxu0
      %v1393 = vadd.f32 0.0, %v1392
      %v1394 = vpop.f32.mrb[0].mxu0
      %v1395 = vadd.f32 0.0, %v1394
      %v1396 = vpop.f32.mrb[0].mxu0
      %v1397 = vadd.f32 0.0, %v1396
      %v1398 = vpop.f32.mrb[0].mxu0
      %v1399 = vadd.f32 0.0, %v1398
      %1400 = vmatprep.mubr.bf16.mxu0 0
      %1401 = vmatmul.mubr.bf16.gmra.mrb[0].mxu0 %v849
      %v1402 = vpop.f32.mrb[0].mxu0
      %v1403 = vadd.f32 0.0, %v1402
      %v1404 = vpop.f32.mrb[0].mxu0
      %v1405 = vadd.f32 0.0, %v1404
      %v1406 = vpop.f32.mrb[0].mxu0
      %v1407 = vadd.f32 0.0, %v1406
      %v1408 = vpop.f32.mrb[0].mxu0
      %v1409 = vadd.f32 0.0, %v1408
      %1410 = vdwg.mxu0
      %v1415 = vunpack.c.l.b16 %v667
      %v1416 = vunpack.c.h.b16 %v667
      %v1417 = vunpack.c.l.b16 %v668
      %v1418 = vunpack.c.h.b16 %v668
      %v1419 = vunpack.c.l.b16 %v669
      %v1420 = vunpack.c.h.b16 %v669
      %v1421 = vunpack.c.l.b16 %v670
      %v1422 = vunpack.c.h.b16 %v670
      %v1423 = vpack.c.b16 %v1417, %v1415
      %v1424 = vpack.c.b16 %v1418, %v1416
      %v1425 = vpack.c.b16 %v1421, %v1419
      %v1426 = vpack.c.b16 %v1422, %v1420
      %v1430 = vsel %vm694, %v611, 0
      %v1433 = vsel %vm694, %v612, 0
      %v1436 = vsel %vm851, %v1425, 0
      %v1439 = vsel %vm851, %v1426, 0
      %1441 = vmatprep.subr.bf16.mxu0 %v1424
      %1442 = vmatpush1.bf16.msra.mxu0 %v1423
      %1443 = vmatprep.subr.bf16.mxu0 %v1439
      %1444 = vmatpush1.bf16.msra.mxu0 %v1436
      %1445 = vmatprep.subr.bf16.mxu0 0
      %1446 = vmatpush1.bf16.msra.mxu0 0
      %1447 = vmatprep.subr.bf16.mxu0 0
      %1448 = vmatpush1.bf16.msra.mxu0 0
      %1449 = vmatprep.subr.bf16.mxu0 0
      %1450 = vmatpush1.bf16.msra.mxu0 0
      %1451 = vmatprep.subr.bf16.mxu0 0
      %1452 = vmatpush1.bf16.msra.mxu0 0
      %1453 = vmatprep.subr.bf16.mxu0 0
      %1454 = vmatpush1.bf16.msra.mxu0 0
      %1455 = vmatprep.subr.bf16.mxu0 0
      %1456 = vmatpush1.bf16.msra.mxu0 0
      %1457 = vmatprep.subr.bf16.mxu0 0
      %1458 = vmatpush1.bf16.msra.mxu0 0
      %1459 = vmatprep.subr.bf16.mxu0 0
      %1460 = vmatpush1.bf16.msra.mxu0 0
      %1461 = vmatprep.subr.bf16.mxu0 0
      %1462 = vmatpush1.bf16.msra.mxu0 0
      %1463 = vmatprep.subr.bf16.mxu0 0
      %1464 = vmatpush1.bf16.msra.mxu0 0
      %1465 = vmatprep.subr.bf16.mxu0 0
      %1466 = vmatpush1.bf16.msra.mxu0 0
      %1467 = vmatprep.subr.bf16.mxu0 0
      %1468 = vmatpush1.bf16.msra.mxu0 0
      %1469 = vmatprep.subr.bf16.mxu0 0
      %1470 = vmatpush1.bf16.msra.mxu0 0
      %1471 = vmatprep.subr.bf16.mxu0 0
      %1472 = vmatpush1.bf16.msra.mxu0 0
      %1473 = vmatprep.mubr.bf16.mxu0 0
      %1474 = vmatmul.mubr.bf16.gmra.mrb[0].mxu0 %v1430
      %v1475 = vpop.f32.mrb[0].mxu0
      %v1476 = vadd.f32 %v893, %v1475
      %v1477 = vpop.f32.mrb[0].mxu0
      %v1478 = vadd.f32 %v895, %v1477
      %v1479 = vpop.f32.mrb[0].mxu0
      %v1480 = vadd.f32 %v897, %v1479
      %v1481 = vpop.f32.mrb[0].mxu0
      %v1482 = vadd.f32 %v899, %v1481
      %1483 = vmatprep.mubr.bf16.mxu0 0
      %1484 = vmatmul.mubr.bf16.gmra.mrb[0].mxu0 %v1433
      %v1485 = vpop.f32.mrb[0].mxu0
      %v1486 = vadd.f32 %v903, %v1485
      %v1487 = vpop.f32.mrb[0].mxu0
      %v1488 = vadd.f32 %v905, %v1487
      %v1489 = vpop.f32.mrb[0].mxu0
      %v1490 = vadd.f32 %v907, %v1489
      %v1491 = vpop.f32.mrb[0].mxu0
      %v1492 = vadd.f32 %v909, %v1491
      %1493 = vmatprep.mubr.bf16.mxu0 0
      %1494 = vmatmul.mubr.bf16.gmra.mrb[0].mxu0 %v696
      %v1495 = vpop.f32.mrb[0].mxu0
      %v1496 = vadd.f32 %v913, %v1495
      %v1497 = vpop.f32.mrb[0].mxu0
      %v1498 = vadd.f32 %v915, %v1497
      %v1499 = vpop.f32.mrb[0].mxu0
      %v1500 = vadd.f32 %v917, %v1499
      %v1501 = vpop.f32.mrb[0].mxu0
      %v1502 = vadd.f32 %v919, %v1501
      %1503 = vmatprep.mubr.bf16.mxu0 0
      %1504 = vmatmul.mubr.bf16.gmra.mrb[0].mxu0 %v699
      %v1505 = vpop.f32.mrb[0].mxu0
      %v1506 = vadd.f32 %v923, %v1505
      %v1507 = vpop.f32.mrb[0].mxu0
      %v1508 = vadd.f32 %v925, %v1507
      %v1509 = vpop.f32.mrb[0].mxu0
      %v1510 = vadd.f32 %v927, %v1509
      %v1511 = vpop.f32.mrb[0].mxu0
      %v1512 = vadd.f32 %v929, %v1511
      %1513 = vmatprep.mubr.bf16.mxu0 0
      %1514 = vmatmul.mubr.bf16.gmra.mrb[0].mxu0 %v702
      %v1515 = vpop.f32.mrb[0].mxu0
      %v1516 = vadd.f32 %v933, %v1515
      %v1517 = vpop.f32.mrb[0].mxu0
      %v1518 = vadd.f32 %v935, %v1517
      %v1519 = vpop.f32.mrb[0].mxu0
      %v1520 = vadd.f32 %v937, %v1519
      %v1521 = vpop.f32.mrb[0].mxu0
      %v1522 = vadd.f32 %v939, %v1521
      %1523 = vmatprep.mubr.bf16.mxu0 0
      %1524 = vmatmul.mubr.bf16.gmra.mrb[0].mxu0 %v705
      %v1525 = vpop.f32.mrb[0].mxu0
      %v1526 = vadd.f32 %v943, %v1525
      %v1527 = vpop.f32.mrb[0].mxu0
      %v1528 = vadd.f32 %v945, %v1527
      %v1529 = vpop.f32.mrb[0].mxu0
      %v1530 = vadd.f32 %v947, %v1529
      %v1531 = vpop.f32.mrb[0].mxu0
      %v1532 = vadd.f32 %v949, %v1531
      %1533 = vmatprep.mubr.bf16.mxu0 0
      %1534 = vmatmul.mubr.bf16.gmra.mrb[0].mxu0 %v708
      %v1535 = vpop.f32.mrb[0].mxu0
      %v1536 = vadd.f32 %v953, %v1535
      %v1537 = vpop.f32.mrb[0].mxu0
      %v1538 = vadd.f32 %v955, %v1537
      %v1539 = vpop.f32.mrb[0].mxu0
      %v1540 = vadd.f32 %v957, %v1539
      %v1541 = vpop.f32.mrb[0].mxu0
      %v1542 = vadd.f32 %v959, %v1541
      %1543 = vmatprep.mubr.bf16.mxu0 0
      %1544 = vmatmul.mubr.bf16.gmra.mrb[0].mxu0 %v711
      %v1545 = vpop.f32.mrb[0].mxu0
      %v1546 = vadd.f32 %v963, %v1545
      %v1547 = vpop.f32.mrb[0].mxu0
      %v1548 = vadd.f32 %v965, %v1547
      %v1549 = vpop.f32.mrb[0].mxu0
      %v1550 = vadd.f32 %v967, %v1549
      %v1551 = vpop.f32.mrb[0].mxu0
      %v1552 = vadd.f32 %v969, %v1551
      %1553 = vmatprep.mubr.bf16.mxu0 0
      %1554 = vmatmul.mubr.bf16.gmra.mrb[0].mxu0 %v714
      %v1555 = vpop.f32.mrb[0].mxu0
      %v1556 = vadd.f32 %v973, %v1555
      %v1557 = vpop.f32.mrb[0].mxu0
      %v1558 = vadd.f32 %v975, %v1557
      %v1559 = vpop.f32.mrb[0].mxu0
      %v1560 = vadd.f32 %v977, %v1559
      %v1561 = vpop.f32.mrb[0].mxu0
      %v1562 = vadd.f32 %v979, %v1561
      %1563 = vmatprep.mubr.bf16.mxu0 0
      %1564 = vmatmul.mubr.bf16.gmra.mrb[0].mxu0 %v717
      %v1565 = vpop.f32.mrb[0].mxu0
      %v1566 = vadd.f32 %v983, %v1565
      %v1567 = vpop.f32.mrb[0].mxu0
      %v1568 = vadd.f32 %v985, %v1567
      %v1569 = vpop.f32.mrb[0].mxu0
      %v1570 = vadd.f32 %v987, %v1569
      %v1571 = vpop.f32.mrb[0].mxu0
      %v1572 = vadd.f32 %v989, %v1571
      %1573 = vmatprep.mubr.bf16.mxu0 0
      %1574 = vmatmul.mubr.bf16.gmra.mrb[0].mxu0 %v720
      %v1575 = vpop.f32.mrb[0].mxu0
      %v1576 = vadd.f32 %v993, %v1575
      %v1577 = vpop.f32.mrb[0].mxu0
      %v1578 = vadd.f32 %v995, %v1577
      %v1579 = vpop.f32.mrb[0].mxu0
      %v1580 = vadd.f32 %v997, %v1579
      %v1581 = vpop.f32.mrb[0].mxu0
      %v1582 = vadd.f32 %v999, %v1581
      %1583 = vmatprep.mubr.bf16.mxu0 0
      %1584 = vmatmul.mubr.bf16.gmra.mrb[0].mxu0 %v723
      %v1585 = vpop.f32.mrb[0].mxu0
      %v1586 = vadd.f32 %v1003, %v1585
      %v1587 = vpop.f32.mrb[0].mxu0
      %v1588 = vadd.f32 %v1005, %v1587
      %v1589 = vpop.f32.mrb[0].mxu0
      %v1590 = vadd.f32 %v1007, %v1589
      %v1591 = vpop.f32.mrb[0].mxu0
      %v1592 = vadd.f32 %v1009, %v1591
      %1593 = vmatprep.mubr.bf16.mxu0 0
      %1594 = vmatmul.mubr.bf16.gmra.mrb[0].mxu0 %v726
      %v1595 = vpop.f32.mrb[0].mxu0
      %v1596 = vadd.f32 %v1013, %v1595
      %v1597 = vpop.f32.mrb[0].mxu0
      %v1598 = vadd.f32 %v1015, %v1597
      %v1599 = vpop.f32.mrb[0].mxu0
      %v1600 = vadd.f32 %v1017, %v1599
      %v1601 = vpop.f32.mrb[0].mxu0
      %v1602 = vadd.f32 %v1019, %v1601
      %1603 = vmatprep.mubr.bf16.mxu0 0
      %1604 = vmatmul.mubr.bf16.gmra.mrb[0].mxu0 %v729
      %v1605 = vpop.f32.mrb[0].mxu0
      %v1606 = vadd.f32 %v1023, %v1605
      %v1607 = vpop.f32.mrb[0].mxu0
      %v1608 = vadd.f32 %v1025, %v1607
      %v1609 = vpop.f32.mrb[0].mxu0
      %v1610 = vadd.f32 %v1027, %v1609
      %v1611 = vpop.f32.mrb[0].mxu0
      %v1612 = vadd.f32 %v1029, %v1611
      %1613 = vmatprep.mubr.bf16.mxu0 0
      %1614 = vmatmul.mubr.bf16.gmra.mrb[0].mxu0 %v732
      %v1615 = vpop.f32.mrb[0].mxu0
      %v1616 = vadd.f32 %v1033, %v1615
      %v1617 = vpop.f32.mrb[0].mxu0
      %v1618 = vadd.f32 %v1035, %v1617
      %v1619 = vpop.f32.mrb[0].mxu0
      %v1620 = vadd.f32 %v1037, %v1619
      %v1621 = vpop.f32.mrb[0].mxu0
      %v1622 = vadd.f32 %v1039, %v1621
      %1623 = vmatprep.mubr.bf16.mxu0 0
      %1624 = vmatmul.mubr.bf16.gmra.mrb[0].mxu0 %v735
      %v1625 = vpop.f32.mrb[0].mxu0
      %v1626 = vadd.f32 %v1043, %v1625
      %v1627 = vpop.f32.mrb[0].mxu0
      %v1628 = vadd.f32 %v1045, %v1627
      %v1629 = vpop.f32.mrb[0].mxu0
      %v1630 = vadd.f32 %v1047, %v1629
      %v1631 = vpop.f32.mrb[0].mxu0
      %v1632 = vadd.f32 %v1049, %v1631
      %1633 = vmatprep.mubr.bf16.mxu0 0
      %1634 = vmatmul.mubr.bf16.gmra.mrb[0].mxu0 %v738
      %v1635 = vpop.f32.mrb[0].mxu0
      %v1636 = vadd.f32 %v1053, %v1635
      %v1637 = vpop.f32.mrb[0].mxu0
      %v1638 = vadd.f32 %v1055, %v1637
      %v1639 = vpop.f32.mrb[0].mxu0
      %v1640 = vadd.f32 %v1057, %v1639
      %v1641 = vpop.f32.mrb[0].mxu0
      %v1642 = vadd.f32 %v1059, %v1641
      %1643 = vmatprep.mubr.bf16.mxu0 0
      %1644 = vmatmul.mubr.bf16.gmra.mrb[0].mxu0 %v741
      %v1645 = vpop.f32.mrb[0].mxu0
      %v1646 = vadd.f32 %v1063, %v1645
      %v1647 = vpop.f32.mrb[0].mxu0
      %v1648 = vadd.f32 %v1065, %v1647
      %v1649 = vpop.f32.mrb[0].mxu0
      %v1650 = vadd.f32 %v1067, %v1649
      %v1651 = vpop.f32.mrb[0].mxu0
      %v1652 = vadd.f32 %v1069, %v1651
      %1653 = vmatprep.mubr.bf16.mxu0 0
      %1654 = vmatmul.mubr.bf16.gmra.mrb[0].mxu0 %v744
      %v1655 = vpop.f32.mrb[0].mxu0
      %v1656 = vadd.f32 %v1073, %v1655
      %v1657 = vpop.f32.mrb[0].mxu0
      %v1658 = vadd.f32 %v1075, %v1657
      %v1659 = vpop.f32.mrb[0].mxu0
      %v1660 = vadd.f32 %v1077, %v1659
      %v1661 = vpop.f32.mrb[0].mxu0
      %v1662 = vadd.f32 %v1079, %v1661
      %1663 = vmatprep.mubr.bf16.mxu0 0
      %1664 = vmatmul.mubr.bf16.gmra.mrb[0].mxu0 %v747
      %v1665 = vpop.f32.mrb[0].mxu0
      %v1666 = vadd.f32 %v1083, %v1665
      %v1667 = vpop.f32.mrb[0].mxu0
      %v1668 = vadd.f32 %v1085, %v1667
      %v1669 = vpop.f32.mrb[0].mxu0
      %v1670 = vadd.f32 %v1087, %v1669
      %v1671 = vpop.f32.mrb[0].mxu0
      %v1672 = vadd.f32 %v1089, %v1671
      %1673 = vmatprep.mubr.bf16.mxu0 0
      %1674 = vmatmul.mubr.bf16.gmra.mrb[0].mxu0 %v750
      %v1675 = vpop.f32.mrb[0].mxu0
      %v1676 = vadd.f32 %v1093, %v1675
      %v1677 = vpop.f32.mrb[0].mxu0
      %v1678 = vadd.f32 %v1095, %v1677
      %v1679 = vpop.f32.mrb[0].mxu0
      %v1680 = vadd.f32 %v1097, %v1679
      %v1681 = vpop.f32.mrb[0].mxu0
      %v1682 = vadd.f32 %v1099, %v1681
      %1683 = vmatprep.mubr.bf16.mxu0 0
      %1684 = vmatmul.mubr.bf16.gmra.mrb[0].mxu0 %v753
      %v1685 = vpop.f32.mrb[0].mxu0
      %v1686 = vadd.f32 %v1103, %v1685
      %v1687 = vpop.f32.mrb[0].mxu0
      %v1688 = vadd.f32 %v1105, %v1687
      %v1689 = vpop.f32.mrb[0].mxu0
      %v1690 = vadd.f32 %v1107, %v1689
      %v1691 = vpop.f32.mrb[0].mxu0
      %v1692 = vadd.f32 %v1109, %v1691
      %1693 = vmatprep.mubr.bf16.mxu0 0
      %1694 = vmatmul.mubr.bf16.gmra.mrb[0].mxu0 %v756
      %v1695 = vpop.f32.mrb[0].mxu0
      %v1696 = vadd.f32 %v1113, %v1695
      %v1697 = vpop.f32.mrb[0].mxu0
      %v1698 = vadd.f32 %v1115, %v1697
      %v1699 = vpop.f32.mrb[0].mxu0
      %v1700 = vadd.f32 %v1117, %v1699
      %v1701 = vpop.f32.mrb[0].mxu0
      %v1702 = vadd.f32 %v1119, %v1701
      %1703 = vmatprep.mubr.bf16.mxu0 0
      %1704 = vmatmul.mubr.bf16.gmra.mrb[0].mxu0 %v759
      %v1705 = vpop.f32.mrb[0].mxu0
      %v1706 = vadd.f32 %v1123, %v1705
      %v1707 = vpop.f32.mrb[0].mxu0
      %v1708 = vadd.f32 %v1125, %v1707
      %v1709 = vpop.f32.mrb[0].mxu0
      %v1710 = vadd.f32 %v1127, %v1709
      %v1711 = vpop.f32.mrb[0].mxu0
      %v1712 = vadd.f32 %v1129, %v1711
      %1713 = vmatprep.mubr.bf16.mxu0 0
      %1714 = vmatmul.mubr.bf16.gmra.mrb[0].mxu0 %v762
      %v1715 = vpop.f32.mrb[0].mxu0
      %v1716 = vadd.f32 %v1133, %v1715
      %v1717 = vpop.f32.mrb[0].mxu0
      %v1718 = vadd.f32 %v1135, %v1717
      %v1719 = vpop.f32.mrb[0].mxu0
      %v1720 = vadd.f32 %v1137, %v1719
      %v1721 = vpop.f32.mrb[0].mxu0
      %v1722 = vadd.f32 %v1139, %v1721
      %1723 = vmatprep.mubr.bf16.mxu0 0
      %1724 = vmatmul.mubr.bf16.gmra.mrb[0].mxu0 %v765
      %v1725 = vpop.f32.mrb[0].mxu0
      %v1726 = vadd.f32 %v1143, %v1725
      %v1727 = vpop.f32.mrb[0].mxu0
      %v1728 = vadd.f32 %v1145, %v1727
      %v1729 = vpop.f32.mrb[0].mxu0
      %v1730 = vadd.f32 %v1147, %v1729
      %v1731 = vpop.f32.mrb[0].mxu0
      %v1732 = vadd.f32 %v1149, %v1731
      %1733 = vmatprep.mubr.bf16.mxu0 0
      %1734 = vmatmul.mubr.bf16.gmra.mrb[0].mxu0 %v768
      %v1735 = vpop.f32.mrb[0].mxu0
      %v1736 = vadd.f32 %v1153, %v1735
      %v1737 = vpop.f32.mrb[0].mxu0
      %v1738 = vadd.f32 %v1155, %v1737
      %v1739 = vpop.f32.mrb[0].mxu0
      %v1740 = vadd.f32 %v1157, %v1739
      %v1741 = vpop.f32.mrb[0].mxu0
      %v1742 = vadd.f32 %v1159, %v1741
      %1743 = vmatprep.mubr.bf16.mxu0 0
      %1744 = vmatmul.mubr.bf16.gmra.mrb[0].mxu0 %v771
      %v1745 = vpop.f32.mrb[0].mxu0
      %v1746 = vadd.f32 %v1163, %v1745
      %v1747 = vpop.f32.mrb[0].mxu0
      %v1748 = vadd.f32 %v1165, %v1747
      %v1749 = vpop.f32.mrb[0].mxu0
      %v1750 = vadd.f32 %v1167, %v1749
      %v1751 = vpop.f32.mrb[0].mxu0
      %v1752 = vadd.f32 %v1169, %v1751
      %1753 = vmatprep.mubr.bf16.mxu0 0
      %1754 = vmatmul.mubr.bf16.gmra.mrb[0].mxu0 %v774
      %v1755 = vpop.f32.mrb[0].mxu0
      %v1756 = vadd.f32 %v1173, %v1755
      %v1757 = vpop.f32.mrb[0].mxu0
      %v1758 = vadd.f32 %v1175, %v1757
      %v1759 = vpop.f32.mrb[0].mxu0
      %v1760 = vadd.f32 %v1177, %v1759
      %v1761 = vpop.f32.mrb[0].mxu0
      %v1762 = vadd.f32 %v1179, %v1761
      %1763 = vmatprep.mubr.bf16.mxu0 0
      %1764 = vmatmul.mubr.bf16.gmra.mrb[0].mxu0 %v777
      %v1765 = vpop.f32.mrb[0].mxu0
      %v1766 = vadd.f32 %v1183, %v1765
      %v1767 = vpop.f32.mrb[0].mxu0
      %v1768 = vadd.f32 %v1185, %v1767
      %v1769 = vpop.f32.mrb[0].mxu0
      %v1770 = vadd.f32 %v1187, %v1769
      %v1771 = vpop.f32.mrb[0].mxu0
      %v1772 = vadd.f32 %v1189, %v1771
      %1773 = vmatprep.mubr.bf16.mxu0 0
      %1774 = vmatmul.mubr.bf16.gmra.mrb[0].mxu0 %v780
      %v1775 = vpop.f32.mrb[0].mxu0
      %v1776 = vadd.f32 %v1193, %v1775
      %v1777 = vpop.f32.mrb[0].mxu0
      %v1778 = vadd.f32 %v1195, %v1777
      %v1779 = vpop.f32.mrb[0].mxu0
      %v1780 = vadd.f32 %v1197, %v1779
      %v1781 = vpop.f32.mrb[0].mxu0
      %v1782 = vadd.f32 %v1199, %v1781
      %1783 = vmatprep.mubr.bf16.mxu0 0
      %1784 = vmatmul.mubr.bf16.gmra.mrb[0].mxu0 %v783
      %v1785 = vpop.f32.mrb[0].mxu0
      %v1786 = vadd.f32 %v1203, %v1785
      %v1787 = vpop.f32.mrb[0].mxu0
      %v1788 = vadd.f32 %v1205, %v1787
      %v1789 = vpop.f32.mrb[0].mxu0
      %v1790 = vadd.f32 %v1207, %v1789
      %v1791 = vpop.f32.mrb[0].mxu0
      %v1792 = vadd.f32 %v1209, %v1791
      %1793 = vmatprep.mubr.bf16.mxu0 0
      %1794 = vmatmul.mubr.bf16.gmra.mrb[0].mxu0 %v786
      %v1795 = vpop.f32.mrb[0].mxu0
      %v1796 = vadd.f32 %v1213, %v1795
      %v1797 = vpop.f32.mrb[0].mxu0
      %v1798 = vadd.f32 %v1215, %v1797
      %v1799 = vpop.f32.mrb[0].mxu0
      %v1800 = vadd.f32 %v1217, %v1799
      %v1801 = vpop.f32.mrb[0].mxu0
      %v1802 = vadd.f32 %v1219, %v1801
      %1803 = vmatprep.mubr.bf16.mxu0 0
      %1804 = vmatmul.mubr.bf16.gmra.mrb[0].mxu0 %v789
      %v1805 = vpop.f32.mrb[0].mxu0
      %v1806 = vadd.f32 %v1223, %v1805
      %v1807 = vpop.f32.mrb[0].mxu0
      %v1808 = vadd.f32 %v1225, %v1807
      %v1809 = vpop.f32.mrb[0].mxu0
      %v1810 = vadd.f32 %v1227, %v1809
      %v1811 = vpop.f32.mrb[0].mxu0
      %v1812 = vadd.f32 %v1229, %v1811
      %1813 = vmatprep.mubr.bf16.mxu0 0
      %1814 = vmatmul.mubr.bf16.gmra.mrb[0].mxu0 %v792
      %v1815 = vpop.f32.mrb[0].mxu0
      %v1816 = vadd.f32 %v1233, %v1815
      %v1817 = vpop.f32.mrb[0].mxu0
      %v1818 = vadd.f32 %v1235, %v1817
      %v1819 = vpop.f32.mrb[0].mxu0
      %v1820 = vadd.f32 %v1237, %v1819
      %v1821 = vpop.f32.mrb[0].mxu0
      %v1822 = vadd.f32 %v1239, %v1821
      %1823 = vmatprep.mubr.bf16.mxu0 0
      %1824 = vmatmul.mubr.bf16.gmra.mrb[0].mxu0 %v795
      %v1825 = vpop.f32.mrb[0].mxu0
      %v1826 = vadd.f32 %v1243, %v1825
      %v1827 = vpop.f32.mrb[0].mxu0
      %v1828 = vadd.f32 %v1245, %v1827
      %v1829 = vpop.f32.mrb[0].mxu0
      %v1830 = vadd.f32 %v1247, %v1829
      %v1831 = vpop.f32.mrb[0].mxu0
      %v1832 = vadd.f32 %v1249, %v1831
      %1833 = vmatprep.mubr.bf16.mxu0 0
      %1834 = vmatmul.mubr.bf16.gmra.mrb[0].mxu0 %v798
      %v1835 = vpop.f32.mrb[0].mxu0
      %v1836 = vadd.f32 %v1253, %v1835
      %v1837 = vpop.f32.mrb[0].mxu0
      %v1838 = vadd.f32 %v1255, %v1837
      %v1839 = vpop.f32.mrb[0].mxu0
      %v1840 = vadd.f32 %v1257, %v1839
      %v1841 = vpop.f32.mrb[0].mxu0
      %v1842 = vadd.f32 %v1259, %v1841
      %1843 = vmatprep.mubr.bf16.mxu0 0
      %1844 = vmatmul.mubr.bf16.gmra.mrb[0].mxu0 %v801
      %v1845 = vpop.f32.mrb[0].mxu0
      %v1846 = vadd.f32 %v1263, %v1845
      %v1847 = vpop.f32.mrb[0].mxu0
      %v1848 = vadd.f32 %v1265, %v1847
      %v1849 = vpop.f32.mrb[0].mxu0
      %v1850 = vadd.f32 %v1267, %v1849
      %v1851 = vpop.f32.mrb[0].mxu0
      %v1852 = vadd.f32 %v1269, %v1851
      %1853 = vmatprep.mubr.bf16.mxu0 0
      %1854 = vmatmul.mubr.bf16.gmra.mrb[0].mxu0 %v804
      %v1855 = vpop.f32.mrb[0].mxu0
      %v1856 = vadd.f32 %v1273, %v1855
      %v1857 = vpop.f32.mrb[0].mxu0
      %v1858 = vadd.f32 %v1275, %v1857
      %v1859 = vpop.f32.mrb[0].mxu0
      %v1860 = vadd.f32 %v1277, %v1859
      %v1861 = vpop.f32.mrb[0].mxu0
      %v1862 = vadd.f32 %v1279, %v1861
      %1863 = vmatprep.mubr.bf16.mxu0 0
      %1864 = vmatmul.mubr.bf16.gmra.mrb[0].mxu0 %v807
      %v1865 = vpop.f32.mrb[0].mxu0
      %v1866 = vadd.f32 %v1283, %v1865
      %v1867 = vpop.f32.mrb[0].mxu0
      %v1868 = vadd.f32 %v1285, %v1867
      %v1869 = vpop.f32.mrb[0].mxu0
      %v1870 = vadd.f32 %v1287, %v1869
      %v1871 = vpop.f32.mrb[0].mxu0
      %v1872 = vadd.f32 %v1289, %v1871
      %1873 = vmatprep.mubr.bf16.mxu0 0
      %1874 = vmatmul.mubr.bf16.gmra.mrb[0].mxu0 %v810
      %v1875 = vpop.f32.mrb[0].mxu0
      %v1876 = vadd.f32 %v1293, %v1875
      %v1877 = vpop.f32.mrb[0].mxu0
      %v1878 = vadd.f32 %v1295, %v1877
      %v1879 = vpop.f32.mrb[0].mxu0
      %v1880 = vadd.f32 %v1297, %v1879
      %v1881 = vpop.f32.mrb[0].mxu0
      %v1882 = vadd.f32 %v1299, %v1881
      %1883 = vmatprep.mubr.bf16.mxu0 0
      %1884 = vmatmul.mubr.bf16.gmra.mrb[0].mxu0 %v813
      %v1885 = vpop.f32.mrb[0].mxu0
      %v1886 = vadd.f32 %v1303, %v1885
      %v1887 = vpop.f32.mrb[0].mxu0
      %v1888 = vadd.f32 %v1305, %v1887
      %v1889 = vpop.f32.mrb[0].mxu0
      %v1890 = vadd.f32 %v1307, %v1889
      %v1891 = vpop.f32.mrb[0].mxu0
      %v1892 = vadd.f32 %v1309, %v1891
      %1893 = vmatprep.mubr.bf16.mxu0 0
      %1894 = vmatmul.mubr.bf16.gmra.mrb[0].mxu0 %v816
      %v1895 = vpop.f32.mrb[0].mxu0
      %v1896 = vadd.f32 %v1313, %v1895
      %v1897 = vpop.f32.mrb[0].mxu0
      %v1898 = vadd.f32 %v1315, %v1897
      %v1899 = vpop.f32.mrb[0].mxu0
      %v1900 = vadd.f32 %v1317, %v1899
      %v1901 = vpop.f32.mrb[0].mxu0
      %v1902 = vadd.f32 %v1319, %v1901
      %1903 = vmatprep.mubr.bf16.mxu0 0
      %1904 = vmatmul.mubr.bf16.gmra.mrb[0].mxu0 %v819
      %v1905 = vpop.f32.mrb[0].mxu0
      %v1906 = vadd.f32 %v1323, %v1905
      %v1907 = vpop.f32.mrb[0].mxu0
      %v1908 = vadd.f32 %v1325, %v1907
      %v1909 = vpop.f32.mrb[0].mxu0
      %v1910 = vadd.f32 %v1327, %v1909
      %v1911 = vpop.f32.mrb[0].mxu0
      %v1912 = vadd.f32 %v1329, %v1911
      %1913 = vmatprep.mubr.bf16.mxu0 0
      %1914 = vmatmul.mubr.bf16.gmra.mrb[0].mxu0 %v822
      %v1915 = vpop.f32.mrb[0].mxu0
      %v1916 = vadd.f32 %v1333, %v1915
      %v1917 = vpop.f32.mrb[0].mxu0
      %v1918 = vadd.f32 %v1335, %v1917
      %v1919 = vpop.f32.mrb[0].mxu0
      %v1920 = vadd.f32 %v1337, %v1919
      %v1921 = vpop.f32.mrb[0].mxu0
      %v1922 = vadd.f32 %v1339, %v1921
      %1923 = vmatprep.mubr.bf16.mxu0 0
      %1924 = vmatmul.mubr.bf16.gmra.mrb[0].mxu0 %v825
      %v1925 = vpop.f32.mrb[0].mxu0
      %v1926 = vadd.f32 %v1343, %v1925
      %v1927 = vpop.f32.mrb[0].mxu0
      %v1928 = vadd.f32 %v1345, %v1927
      %v1929 = vpop.f32.mrb[0].mxu0
      %v1930 = vadd.f32 %v1347, %v1929
      %v1931 = vpop.f32.mrb[0].mxu0
      %v1932 = vadd.f32 %v1349, %v1931
      %1933 = vmatprep.mubr.bf16.mxu0 0
      %1934 = vmatmul.mubr.bf16.gmra.mrb[0].mxu0 %v828
      %v1935 = vpop.f32.mrb[0].mxu0
      %v1936 = vadd.f32 %v1353, %v1935
      %v1937 = vpop.f32.mrb[0].mxu0
      %v1938 = vadd.f32 %v1355, %v1937
      %v1939 = vpop.f32.mrb[0].mxu0
      %v1940 = vadd.f32 %v1357, %v1939
      %v1941 = vpop.f32.mrb[0].mxu0
      %v1942 = vadd.f32 %v1359, %v1941
      %1943 = vmatprep.mubr.bf16.mxu0 0
      %1944 = vmatmul.mubr.bf16.gmra.mrb[0].mxu0 %v831
      %v1945 = vpop.f32.mrb[0].mxu0
      %v1946 = vadd.f32 %v1363, %v1945
      %v1947 = vpop.f32.mrb[0].mxu0
      %v1948 = vadd.f32 %v1365, %v1947
      %v1949 = vpop.f32.mrb[0].mxu0
      %v1950 = vadd.f32 %v1367, %v1949
      %v1951 = vpop.f32.mrb[0].mxu0
      %v1952 = vadd.f32 %v1369, %v1951
      %1953 = vmatprep.mubr.bf16.mxu0 0
      %1954 = vmatmul.mubr.bf16.gmra.mrb[0].mxu0 %v834
      %v1955 = vpop.f32.mrb[0].mxu0
      %v1956 = vadd.f32 %v1373, %v1955
      %v1957 = vpop.f32.mrb[0].mxu0
      %v1958 = vadd.f32 %v1375, %v1957
      %v1959 = vpop.f32.mrb[0].mxu0
      %v1960 = vadd.f32 %v1377, %v1959
      %v1961 = vpop.f32.mrb[0].mxu0
      %v1962 = vadd.f32 %v1379, %v1961
      %1963 = vmatprep.mubr.bf16.mxu0 0
      %1964 = vmatmul.mubr.bf16.gmra.mrb[0].mxu0 %v837
      %v1965 = vpop.f32.mrb[0].mxu0
      %v1966 = vadd.f32 %v1383, %v1965
      %v1967 = vpop.f32.mrb[0].mxu0
      %v1968 = vadd.f32 %v1385, %v1967
      %v1969 = vpop.f32.mrb[0].mxu0
      %v1970 = vadd.f32 %v1387, %v1969
      %v1971 = vpop.f32.mrb[0].mxu0
      %v1972 = vadd.f32 %v1389, %v1971
      %1973 = vmatprep.mubr.bf16.mxu0 0
      %1974 = vmatmul.mubr.bf16.gmra.mrb[0].mxu0 %v840
      %v1975 = vpop.f32.mrb[0].mxu0
      %v1976 = vadd.f32 %v1393, %v1975
      %v1977 = vpop.f32.mrb[0].mxu0
      %v1978 = vadd.f32 %v1395, %v1977
      %v1979 = vpop.f32.mrb[0].mxu0
      %v1980 = vadd.f32 %v1397, %v1979
      %v1981 = vpop.f32.mrb[0].mxu0
      %v1982 = vadd.f32 %v1399, %v1981
      %1983 = vmatprep.mubr.bf16.mxu0 0
      %1984 = vmatmul.mubr.bf16.gmra.mrb[0].mxu0 %v843
      %v1985 = vpop.f32.mrb[0].mxu0
      %v1986 = vadd.f32 %v1403, %v1985
      %v1987 = vpop.f32.mrb[0].mxu0
      %v1988 = vadd.f32 %v1405, %v1987
      %v1989 = vpop.f32.mrb[0].mxu0
      %v1990 = vadd.f32 %v1407, %v1989
      %v1991 = vpop.f32.mrb[0].mxu0
      %v1992 = vadd.f32 %v1409, %v1991
      %1993 = vdwg.mxu0
      %s1994 = scalar_lea.vmem %s1, 64
      %v1995 = vld [vmem:[%s1994] sm:$0xff]
      %v1996 = vld [vmem:[%s1994 + $0x8] sm:$0xff]
      %v1997 = vld [vmem:[%s1994 + $0x10] sm:$0xff]
      %v1998 = vld [vmem:[%s1994 + $0x18] sm:$0x33]
      %v2003 = vunpack.c.l.b16 %v1995
      %v2004 = vunpack.c.h.b16 %v1995
      %v2005 = vunpack.c.l.b16 %v1996
      %v2006 = vunpack.c.h.b16 %v1996
      %v2007 = vunpack.c.l.b16 %v1997
      %v2008 = vunpack.c.h.b16 %v1997
      %v2009 = vunpack.c.l.b16 %v1998
      %v2010 = vunpack.c.h.b16 %v1998
      %v2011 = vpack.c.b16 %v2005, %v2003
      %v2012 = vpack.c.b16 %v2006, %v2004
      %v2013 = vpack.c.b16 %v2009, %v2007
      %v2014 = vpack.c.b16 %v2010, %v2008
      %v2018 = vsel %vm694, %v665, 0
      %v2021 = vsel %vm694, %v666, 0
      %v2024 = vsel %vm851, %v2013, 0
      %v2027 = vsel %vm851, %v2014, 0
      %2029 = vmatprep.subr.bf16.mxu0 %v2012
      %2030 = vmatpush1.bf16.msra.mxu0 %v2011
      %2031 = vmatprep.subr.bf16.mxu0 %v2027
      %2032 = vmatpush1.bf16.msra.mxu0 %v2024
      %2033 = vmatprep.subr.bf16.mxu0 0
      %2034 = vmatpush1.bf16.msra.mxu0 0
      %2035 = vmatprep.subr.bf16.mxu0 0
      %2036 = vmatpush1.bf16.msra.mxu0 0
      %2037 = vmatprep.subr.bf16.mxu0 0
      %2038 = vmatpush1.bf16.msra.mxu0 0
      %2039 = vmatprep.subr.bf16.mxu0 0
      %2040 = vmatpush1.bf16.msra.mxu0 0
      %2041 = vmatprep.subr.bf16.mxu0 0
      %2042 = vmatpush1.bf16.msra.mxu0 0
      %2043 = vmatprep.subr.bf16.mxu0 0
      %2044 = vmatpush1.bf16.msra.mxu0 0
      %2045 = vmatprep.subr.bf16.mxu0 0
      %2046 = vmatpush1.bf16.msra.mxu0 0
      %2047 = vmatprep.subr.bf16.mxu0 0
      %2048 = vmatpush1.bf16.msra.mxu0 0
      %2049 = vmatprep.subr.bf16.mxu0 0
      %2050 = vmatpush1.bf16.msra.mxu0 0
      %2051 = vmatprep.subr.bf16.mxu0 0
      %2052 = vmatpush1.bf16.msra.mxu0 0
      %2053 = vmatprep.subr.bf16.mxu0 0
      %2054 = vmatpush1.bf16.msra.mxu0 0
      %2055 = vmatprep.subr.bf16.mxu0 0
      %2056 = vmatpush1.bf16.msra.mxu0 0
      %2057 = vmatprep.subr.bf16.mxu0 0
      %2058 = vmatpush1.bf16.msra.mxu0 0
      %2059 = vmatprep.subr.bf16.mxu0 0
      %2060 = vmatpush1.bf16.msra.mxu0 0
      %2061 = vmatprep.mubr.bf16.mxu0 0
      %2062 = vmatmul.mubr.bf16.gmra.mrb[0].mxu0 %v702
      %v2063 = vpop.f32.mrb[0].mxu0
      %v2064 = vadd.f32 0.0, %v2063
      %v2065 = vpop.f32.mrb[0].mxu0
      %v2066 = vadd.f32 0.0, %v2065
      %v2067 = vpop.f32.mrb[0].mxu0
      %v2068 = vadd.f32 0.0, %v2067
      %v2069 = vpop.f32.mrb[0].mxu0
      %v2070 = vadd.f32 0.0, %v2069
      %2071 = vmatprep.mubr.bf16.mxu0 0
      %2072 = vmatmul.mubr.bf16.gmra.mrb[0].mxu0 %v705
      %v2073 = vpop.f32.mrb[0].mxu0
      %v2074 = vadd.f32 0.0, %v2073
      %v2075 = vpop.f32.mrb[0].mxu0
      %v2076 = vadd.f32 0.0, %v2075
      %v2077 = vpop.f32.mrb[0].mxu0
      %v2078 = vadd.f32 0.0, %v2077
      %v2079 = vpop.f32.mrb[0].mxu0
      %v2080 = vadd.f32 0.0, %v2079
      %2081 = vmatprep.mubr.bf16.mxu0 0
      %2082 = vmatmul.mubr.bf16.gmra.mrb[0].mxu0 %v708
      %v2083 = vpop.f32.mrb[0].mxu0
      %v2084 = vadd.f32 0.0, %v2083
      %v2085 = vpop.f32.mrb[0].mxu0
      %v2086 = vadd.f32 0.0, %v2085
      %v2087 = vpop.f32.mrb[0].mxu0
      %v2088 = vadd.f32 0.0, %v2087
      %v2089 = vpop.f32.mrb[0].mxu0
      %v2090 = vadd.f32 0.0, %v2089
      %2091 = vmatprep.mubr.bf16.mxu0 0
      %2092 = vmatmul.mubr.bf16.gmra.mrb[0].mxu0 %v711
      %v2093 = vpop.f32.mrb[0].mxu0
      %v2094 = vadd.f32 0.0, %v2093
      %v2095 = vpop.f32.mrb[0].mxu0
      %v2096 = vadd.f32 0.0, %v2095
      %v2097 = vpop.f32.mrb[0].mxu0
      %v2098 = vadd.f32 0.0, %v2097
      %v2099 = vpop.f32.mrb[0].mxu0
      %v2100 = vadd.f32 0.0, %v2099
      %2101 = vmatprep.mubr.bf16.mxu0 0
      %2102 = vmatmul.mubr.bf16.gmra.mrb[0].mxu0 %v714
      %v2103 = vpop.f32.mrb[0].mxu0
      %v2104 = vadd.f32 0.0, %v2103
      %v2105 = vpop.f32.mrb[0].mxu0
      %v2106 = vadd.f32 0.0, %v2105
      %v2107 = vpop.f32.mrb[0].mxu0
      %v2108 = vadd.f32 0.0, %v2107
      %v2109 = vpop.f32.mrb[0].mxu0
      %v2110 = vadd.f32 0.0, %v2109
      %2111 = vmatprep.mubr.bf16.mxu0 0
      %2112 = vmatmul.mubr.bf16.gmra.mrb[0].mxu0 %v717
      %v2113 = vpop.f32.mrb[0].mxu0
      %v2114 = vadd.f32 0.0, %v2113
      %v2115 = vpop.f32.mrb[0].mxu0
      %v2116 = vadd.f32 0.0, %v2115
      %v2117 = vpop.f32.mrb[0].mxu0
      %v2118 = vadd.f32 0.0, %v2117
      %v2119 = vpop.f32.mrb[0].mxu0
      %v2120 = vadd.f32 0.0, %v2119
      %2121 = vmatprep.mubr.bf16.mxu0 0
      %2122 = vmatmul.mubr.bf16.gmra.mrb[0].mxu0 %v720
      %v2123 = vpop.f32.mrb[0].mxu0
      %v2124 = vadd.f32 0.0, %v2123
      %v2125 = vpop.f32.mrb[0].mxu0
      %v2126 = vadd.f32 0.0, %v2125
      %v2127 = vpop.f32.mrb[0].mxu0
      %v2128 = vadd.f32 0.0, %v2127
      %v2129 = vpop.f32.mrb[0].mxu0
      %v2130 = vadd.f32 0.0, %v2129
      %2131 = vmatprep.mubr.bf16.mxu0 0
      %2132 = vmatmul.mubr.bf16.gmra.mrb[0].mxu0 %v723
      %v2133 = vpop.f32.mrb[0].mxu0
      %v2134 = vadd.f32 0.0, %v2133
      %v2135 = vpop.f32.mrb[0].mxu0
      %v2136 = vadd.f32 0.0, %v2135
      %v2137 = vpop.f32.mrb[0].mxu0
      %v2138 = vadd.f32 0.0, %v2137
      %v2139 = vpop.f32.mrb[0].mxu0
      %v2140 = vadd.f32 0.0, %v2139
      %2141 = vmatprep.mubr.bf16.mxu0 0
      %2142 = vmatmul.mubr.bf16.gmra.mrb[0].mxu0 %v726
      %v2143 = vpop.f32.mrb[0].mxu0
      %v2144 = vadd.f32 0.0, %v2143
      %v2145 = vpop.f32.mrb[0].mxu0
      %v2146 = vadd.f32 0.0, %v2145
      %v2147 = vpop.f32.mrb[0].mxu0
      %v2148 = vadd.f32 0.0, %v2147
      %v2149 = vpop.f32.mrb[0].mxu0
      %v2150 = vadd.f32 0.0, %v2149
      %2151 = vmatprep.mubr.bf16.mxu0 0
      %2152 = vmatmul.mubr.bf16.gmra.mrb[0].mxu0 %v729
      %v2153 = vpop.f32.mrb[0].mxu0
      %v2154 = vadd.f32 0.0, %v2153
      %v2155 = vpop.f32.mrb[0].mxu0
      %v2156 = vadd.f32 0.0, %v2155
      %v2157 = vpop.f32.mrb[0].mxu0
      %v2158 = vadd.f32 0.0, %v2157
      %v2159 = vpop.f32.mrb[0].mxu0
      %v2160 = vadd.f32 0.0, %v2159
      %2161 = vmatprep.mubr.bf16.mxu0 0
      %2162 = vmatmul.mubr.bf16.gmra.mrb[0].mxu0 %v732
      %v2163 = vpop.f32.mrb[0].mxu0
      %v2164 = vadd.f32 0.0, %v2163
      %v2165 = vpop.f32.mrb[0].mxu0
      %v2166 = vadd.f32 0.0, %v2165
      %v2167 = vpop.f32.mrb[0].mxu0
      %v2168 = vadd.f32 0.0, %v2167
      %v2169 = vpop.f32.mrb[0].mxu0
      %v2170 = vadd.f32 0.0, %v2169
      %2171 = vmatprep.mubr.bf16.mxu0 0
      %2172 = vmatmul.mubr.bf16.gmra.mrb[0].mxu0 %v735
      %v2173 = vpop.f32.mrb[0].mxu0
      %v2174 = vadd.f32 0.0, %v2173
      %v2175 = vpop.f32.mrb[0].mxu0
      %v2176 = vadd.f32 0.0, %v2175
      %v2177 = vpop.f32.mrb[0].mxu0
      %v2178 = vadd.f32 0.0, %v2177
      %v2179 = vpop.f32.mrb[0].mxu0
      %v2180 = vadd.f32 0.0, %v2179
      %2181 = vmatprep.mubr.bf16.mxu0 0
      %2182 = vmatmul.mubr.bf16.gmra.mrb[0].mxu0 %v738
      %v2183 = vpop.f32.mrb[0].mxu0
      %v2184 = vadd.f32 0.0, %v2183
      %v2185 = vpop.f32.mrb[0].mxu0
      %v2186 = vadd.f32 0.0, %v2185
      %v2187 = vpop.f32.mrb[0].mxu0
      %v2188 = vadd.f32 0.0, %v2187
      %v2189 = vpop.f32.mrb[0].mxu0
      %v2190 = vadd.f32 0.0, %v2189
      %2191 = vmatprep.mubr.bf16.mxu0 0
      %2192 = vmatmul.mubr.bf16.gmra.mrb[0].mxu0 %v741
      %v2193 = vpop.f32.mrb[0].mxu0
      %v2194 = vadd.f32 0.0, %v2193
      %v2195 = vpop.f32.mrb[0].mxu0
      %v2196 = vadd.f32 0.0, %v2195
      %v2197 = vpop.f32.mrb[0].mxu0
      %v2198 = vadd.f32 0.0, %v2197
      %v2199 = vpop.f32.mrb[0].mxu0
      %v2200 = vadd.f32 0.0, %v2199
      %2201 = vmatprep.mubr.bf16.mxu0 0
      %2202 = vmatmul.mubr.bf16.gmra.mrb[0].mxu0 %v744
      %v2203 = vpop.f32.mrb[0].mxu0
      %v2204 = vadd.f32 0.0, %v2203
      %v2205 = vpop.f32.mrb[0].mxu0
      %v2206 = vadd.f32 0.0, %v2205
      %v2207 = vpop.f32.mrb[0].mxu0
      %v2208 = vadd.f32 0.0, %v2207
      %v2209 = vpop.f32.mrb[0].mxu0
      %v2210 = vadd.f32 0.0, %v2209
      %2211 = vmatprep.mubr.bf16.mxu0 0
      %2212 = vmatmul.mubr.bf16.gmra.mrb[0].mxu0 %v747
      %v2213 = vpop.f32.mrb[0].mxu0
      %v2214 = vadd.f32 0.0, %v2213
      %v2215 = vpop.f32.mrb[0].mxu0
      %v2216 = vadd.f32 0.0, %v2215
      %v2217 = vpop.f32.mrb[0].mxu0
      %v2218 = vadd.f32 0.0, %v2217
      %v2219 = vpop.f32.mrb[0].mxu0
      %v2220 = vadd.f32 0.0, %v2219
      %2221 = vmatprep.mubr.bf16.mxu0 0
      %2222 = vmatmul.mubr.bf16.gmra.mrb[0].mxu0 %v750
      %v2223 = vpop.f32.mrb[0].mxu0
      %v2224 = vadd.f32 0.0, %v2223
      %v2225 = vpop.f32.mrb[0].mxu0
      %v2226 = vadd.f32 0.0, %v2225
      %v2227 = vpop.f32.mrb[0].mxu0
      %v2228 = vadd.f32 0.0, %v2227
      %v2229 = vpop.f32.mrb[0].mxu0
      %v2230 = vadd.f32 0.0, %v2229
      %2231 = vmatprep.mubr.bf16.mxu0 0
      %2232 = vmatmul.mubr.bf16.gmra.mrb[0].mxu0 %v753
      %v2233 = vpop.f32.mrb[0].mxu0
      %v2234 = vadd.f32 0.0, %v2233
      %v2235 = vpop.f32.mrb[0].mxu0
      %v2236 = vadd.f32 0.0, %v2235
      %v2237 = vpop.f32.mrb[0].mxu0
      %v2238 = vadd.f32 0.0, %v2237
      %v2239 = vpop.f32.mrb[0].mxu0
      %v2240 = vadd.f32 0.0, %v2239
      %2241 = vmatprep.mubr.bf16.mxu0 0
      %2242 = vmatmul.mubr.bf16.gmra.mrb[0].mxu0 %v756
      %v2243 = vpop.f32.mrb[0].mxu0
      %v2244 = vadd.f32 0.0, %v2243
      %v2245 = vpop.f32.mrb[0].mxu0
      %v2246 = vadd.f32 0.0, %v2245
      %v2247 = vpop.f32.mrb[0].mxu0
      %v2248 = vadd.f32 0.0, %v2247
      %v2249 = vpop.f32.mrb[0].mxu0
      %v2250 = vadd.f32 0.0, %v2249
      %2251 = vmatprep.mubr.bf16.mxu0 0
      %2252 = vmatmul.mubr.bf16.gmra.mrb[0].mxu0 %v759
      %v2253 = vpop.f32.mrb[0].mxu0
      %v2254 = vadd.f32 0.0, %v2253
      %v2255 = vpop.f32.mrb[0].mxu0
      %v2256 = vadd.f32 0.0, %v2255
      %v2257 = vpop.f32.mrb[0].mxu0
      %v2258 = vadd.f32 0.0, %v2257
      %v2259 = vpop.f32.mrb[0].mxu0
      %v2260 = vadd.f32 0.0, %v2259
      %2261 = vmatprep.mubr.bf16.mxu0 0
      %2262 = vmatmul.mubr.bf16.gmra.mrb[0].mxu0 %v762
      %v2263 = vpop.f32.mrb[0].mxu0
      %v2264 = vadd.f32 0.0, %v2263
      %v2265 = vpop.f32.mrb[0].mxu0
      %v2266 = vadd.f32 0.0, %v2265
      %v2267 = vpop.f32.mrb[0].mxu0
      %v2268 = vadd.f32 0.0, %v2267
      %v2269 = vpop.f32.mrb[0].mxu0
      %v2270 = vadd.f32 0.0, %v2269
      %2271 = vmatprep.mubr.bf16.mxu0 0
      %2272 = vmatmul.mubr.bf16.gmra.mrb[0].mxu0 %v765
      %v2273 = vpop.f32.mrb[0].mxu0
      %v2274 = vadd.f32 0.0, %v2273
      %v2275 = vpop.f32.mrb[0].mxu0
      %v2276 = vadd.f32 0.0, %v2275
      %v2277 = vpop.f32.mrb[0].mxu0
      %v2278 = vadd.f32 0.0, %v2277
      %v2279 = vpop.f32.mrb[0].mxu0
      %v2280 = vadd.f32 0.0, %v2279
      %2281 = vmatprep.mubr.bf16.mxu0 0
      %2282 = vmatmul.mubr.bf16.gmra.mrb[0].mxu0 %v768
      %v2283 = vpop.f32.mrb[0].mxu0
      %v2284 = vadd.f32 0.0, %v2283
      %v2285 = vpop.f32.mrb[0].mxu0
      %v2286 = vadd.f32 0.0, %v2285
      %v2287 = vpop.f32.mrb[0].mxu0
      %v2288 = vadd.f32 0.0, %v2287
      %v2289 = vpop.f32.mrb[0].mxu0
      %v2290 = vadd.f32 0.0, %v2289
      %2291 = vmatprep.mubr.bf16.mxu0 0
      %2292 = vmatmul.mubr.bf16.gmra.mrb[0].mxu0 %v771
      %v2293 = vpop.f32.mrb[0].mxu0
      %v2294 = vadd.f32 0.0, %v2293
      %v2295 = vpop.f32.mrb[0].mxu0
      %v2296 = vadd.f32 0.0, %v2295
      %v2297 = vpop.f32.mrb[0].mxu0
      %v2298 = vadd.f32 0.0, %v2297
      %v2299 = vpop.f32.mrb[0].mxu0
      %v2300 = vadd.f32 0.0, %v2299
      %2301 = vmatprep.mubr.bf16.mxu0 0
      %2302 = vmatmul.mubr.bf16.gmra.mrb[0].mxu0 %v774
      %v2303 = vpop.f32.mrb[0].mxu0
      %v2304 = vadd.f32 0.0, %v2303
      %v2305 = vpop.f32.mrb[0].mxu0
      %v2306 = vadd.f32 0.0, %v2305
      %v2307 = vpop.f32.mrb[0].mxu0
      %v2308 = vadd.f32 0.0, %v2307
      %v2309 = vpop.f32.mrb[0].mxu0
      %v2310 = vadd.f32 0.0, %v2309
      %2311 = vmatprep.mubr.bf16.mxu0 0
      %2312 = vmatmul.mubr.bf16.gmra.mrb[0].mxu0 %v777
      %v2313 = vpop.f32.mrb[0].mxu0
      %v2314 = vadd.f32 0.0, %v2313
      %v2315 = vpop.f32.mrb[0].mxu0
      %v2316 = vadd.f32 0.0, %v2315
      %v2317 = vpop.f32.mrb[0].mxu0
      %v2318 = vadd.f32 0.0, %v2317
      %v2319 = vpop.f32.mrb[0].mxu0
      %v2320 = vadd.f32 0.0, %v2319
      %2321 = vmatprep.mubr.bf16.mxu0 0
      %2322 = vmatmul.mubr.bf16.gmra.mrb[0].mxu0 %v780
      %v2323 = vpop.f32.mrb[0].mxu0
      %v2324 = vadd.f32 0.0, %v2323
      %v2325 = vpop.f32.mrb[0].mxu0
      %v2326 = vadd.f32 0.0, %v2325
      %v2327 = vpop.f32.mrb[0].mxu0
      %v2328 = vadd.f32 0.0, %v2327
      %v2329 = vpop.f32.mrb[0].mxu0
      %v2330 = vadd.f32 0.0, %v2329
      %2331 = vmatprep.mubr.bf16.mxu0 0
      %2332 = vmatmul.mubr.bf16.gmra.mrb[0].mxu0 %v783
      %v2333 = vpop.f32.mrb[0].mxu0
      %v2334 = vadd.f32 0.0, %v2333
      %v2335 = vpop.f32.mrb[0].mxu0
      %v2336 = vadd.f32 0.0, %v2335
      %v2337 = vpop.f32.mrb[0].mxu0
      %v2338 = vadd.f32 0.0, %v2337
      %v2339 = vpop.f32.mrb[0].mxu0
      %v2340 = vadd.f32 0.0, %v2339
      %2341 = vmatprep.mubr.bf16.mxu0 0
      %2342 = vmatmul.mubr.bf16.gmra.mrb[0].mxu0 %v786
      %v2343 = vpop.f32.mrb[0].mxu0
      %v2344 = vadd.f32 0.0, %v2343
      %v2345 = vpop.f32.mrb[0].mxu0
      %v2346 = vadd.f32 0.0, %v2345
      %v2347 = vpop.f32.mrb[0].mxu0
      %v2348 = vadd.f32 0.0, %v2347
      %v2349 = vpop.f32.mrb[0].mxu0
      %v2350 = vadd.f32 0.0, %v2349
      %2351 = vmatprep.mubr.bf16.mxu0 0
      %2352 = vmatmul.mubr.bf16.gmra.mrb[0].mxu0 %v789
      %v2353 = vpop.f32.mrb[0].mxu0
      %v2354 = vadd.f32 0.0, %v2353
      %v2355 = vpop.f32.mrb[0].mxu0
      %v2356 = vadd.f32 0.0, %v2355
      %v2357 = vpop.f32.mrb[0].mxu0
      %v2358 = vadd.f32 0.0, %v2357
      %v2359 = vpop.f32.mrb[0].mxu0
      %v2360 = vadd.f32 0.0, %v2359
      %2361 = vmatprep.mubr.bf16.mxu0 0
      %2362 = vmatmul.mubr.bf16.gmra.mrb[0].mxu0 %v792
      %v2363 = vpop.f32.mrb[0].mxu0
      %v2364 = vadd.f32 0.0, %v2363
      %v2365 = vpop.f32.mrb[0].mxu0
      %v2366 = vadd.f32 0.0, %v2365
      %v2367 = vpop.f32.mrb[0].mxu0
      %v2368 = vadd.f32 0.0, %v2367
      %v2369 = vpop.f32.mrb[0].mxu0
      %v2370 = vadd.f32 0.0, %v2369
      %2371 = vmatprep.mubr.bf16.mxu0 0
      %2372 = vmatmul.mubr.bf16.gmra.mrb[0].mxu0 %v795
      %v2373 = vpop.f32.mrb[0].mxu0
      %v2374 = vadd.f32 0.0, %v2373
      %v2375 = vpop.f32.mrb[0].mxu0
      %v2376 = vadd.f32 0.0, %v2375
      %v2377 = vpop.f32.mrb[0].mxu0
      %v2378 = vadd.f32 0.0, %v2377
      %v2379 = vpop.f32.mrb[0].mxu0
      %v2380 = vadd.f32 0.0, %v2379
      %2381 = vmatprep.mubr.bf16.mxu0 0
      %2382 = vmatmul.mubr.bf16.gmra.mrb[0].mxu0 %v798
      %v2383 = vpop.f32.mrb[0].mxu0
      %v2384 = vadd.f32 0.0, %v2383
      %v2385 = vpop.f32.mrb[0].mxu0
      %v2386 = vadd.f32 0.0, %v2385
      %v2387 = vpop.f32.mrb[0].mxu0
      %v2388 = vadd.f32 0.0, %v2387
      %v2389 = vpop.f32.mrb[0].mxu0
      %v2390 = vadd.f32 0.0, %v2389
      %2391 = vmatprep.mubr.bf16.mxu0 0
      %2392 = vmatmul.mubr.bf16.gmra.mrb[0].mxu0 %v801
      %v2393 = vpop.f32.mrb[0].mxu0
      %v2394 = vadd.f32 0.0, %v2393
      %v2395 = vpop.f32.mrb[0].mxu0
      %v2396 = vadd.f32 0.0, %v2395
      %v2397 = vpop.f32.mrb[0].mxu0
      %v2398 = vadd.f32 0.0, %v2397
      %v2399 = vpop.f32.mrb[0].mxu0
      %v2400 = vadd.f32 0.0, %v2399
      %2401 = vmatprep.mubr.bf16.mxu0 0
      %2402 = vmatmul.mubr.bf16.gmra.mrb[0].mxu0 %v804
      %v2403 = vpop.f32.mrb[0].mxu0
      %v2404 = vadd.f32 0.0, %v2403
      %v2405 = vpop.f32.mrb[0].mxu0
      %v2406 = vadd.f32 0.0, %v2405
      %v2407 = vpop.f32.mrb[0].mxu0
      %v2408 = vadd.f32 0.0, %v2407
      %v2409 = vpop.f32.mrb[0].mxu0
      %v2410 = vadd.f32 0.0, %v2409
      %2411 = vmatprep.mubr.bf16.mxu0 0
      %2412 = vmatmul.mubr.bf16.gmra.mrb[0].mxu0 %v807
      %v2413 = vpop.f32.mrb[0].mxu0
      %v2414 = vadd.f32 0.0, %v2413
      %v2415 = vpop.f32.mrb[0].mxu0
      %v2416 = vadd.f32 0.0, %v2415
      %v2417 = vpop.f32.mrb[0].mxu0
      %v2418 = vadd.f32 0.0, %v2417
      %v2419 = vpop.f32.mrb[0].mxu0
      %v2420 = vadd.f32 0.0, %v2419
      %2421 = vmatprep.mubr.bf16.mxu0 0
      %2422 = vmatmul.mubr.bf16.gmra.mrb[0].mxu0 %v810
      %v2423 = vpop.f32.mrb[0].mxu0
      %v2424 = vadd.f32 0.0, %v2423
      %v2425 = vpop.f32.mrb[0].mxu0
      %v2426 = vadd.f32 0.0, %v2425
      %v2427 = vpop.f32.mrb[0].mxu0
      %v2428 = vadd.f32 0.0, %v2427
      %v2429 = vpop.f32.mrb[0].mxu0
      %v2430 = vadd.f32 0.0, %v2429
      %2431 = vmatprep.mubr.bf16.mxu0 0
      %2432 = vmatmul.mubr.bf16.gmra.mrb[0].mxu0 %v813
      %v2433 = vpop.f32.mrb[0].mxu0
      %v2434 = vadd.f32 0.0, %v2433
      %v2435 = vpop.f32.mrb[0].mxu0
      %v2436 = vadd.f32 0.0, %v2435
      %v2437 = vpop.f32.mrb[0].mxu0
      %v2438 = vadd.f32 0.0, %v2437
      %v2439 = vpop.f32.mrb[0].mxu0
      %v2440 = vadd.f32 0.0, %v2439
      %2441 = vmatprep.mubr.bf16.mxu0 0
      %2442 = vmatmul.mubr.bf16.gmra.mrb[0].mxu0 %v816
      %v2443 = vpop.f32.mrb[0].mxu0
      %v2444 = vadd.f32 0.0, %v2443
      %v2445 = vpop.f32.mrb[0].mxu0
      %v2446 = vadd.f32 0.0, %v2445
      %v2447 = vpop.f32.mrb[0].mxu0
      %v2448 = vadd.f32 0.0, %v2447
      %v2449 = vpop.f32.mrb[0].mxu0
      %v2450 = vadd.f32 0.0, %v2449
      %2451 = vmatprep.mubr.bf16.mxu0 0
      %2452 = vmatmul.mubr.bf16.gmra.mrb[0].mxu0 %v819
      %v2453 = vpop.f32.mrb[0].mxu0
      %v2454 = vadd.f32 0.0, %v2453
      %v2455 = vpop.f32.mrb[0].mxu0
      %v2456 = vadd.f32 0.0, %v2455
      %v2457 = vpop.f32.mrb[0].mxu0
      %v2458 = vadd.f32 0.0, %v2457
      %v2459 = vpop.f32.mrb[0].mxu0
      %v2460 = vadd.f32 0.0, %v2459
      %2461 = vmatprep.mubr.bf16.mxu0 0
      %2462 = vmatmul.mubr.bf16.gmra.mrb[0].mxu0 %v822
      %v2463 = vpop.f32.mrb[0].mxu0
      %v2464 = vadd.f32 0.0, %v2463
      %v2465 = vpop.f32.mrb[0].mxu0
      %v2466 = vadd.f32 0.0, %v2465
      %v2467 = vpop.f32.mrb[0].mxu0
      %v2468 = vadd.f32 0.0, %v2467
      %v2469 = vpop.f32.mrb[0].mxu0
      %v2470 = vadd.f32 0.0, %v2469
      %2471 = vmatprep.mubr.bf16.mxu0 0
      %2472 = vmatmul.mubr.bf16.gmra.mrb[0].mxu0 %v825
      %v2473 = vpop.f32.mrb[0].mxu0
      %v2474 = vadd.f32 0.0, %v2473
      %v2475 = vpop.f32.mrb[0].mxu0
      %v2476 = vadd.f32 0.0, %v2475
      %v2477 = vpop.f32.mrb[0].mxu0
      %v2478 = vadd.f32 0.0, %v2477
      %v2479 = vpop.f32.mrb[0].mxu0
      %v2480 = vadd.f32 0.0, %v2479
      %2481 = vmatprep.mubr.bf16.mxu0 0
      %2482 = vmatmul.mubr.bf16.gmra.mrb[0].mxu0 %v828
      %v2483 = vpop.f32.mrb[0].mxu0
      %v2484 = vadd.f32 0.0, %v2483
      %v2485 = vpop.f32.mrb[0].mxu0
      %v2486 = vadd.f32 0.0, %v2485
      %v2487 = vpop.f32.mrb[0].mxu0
      %v2488 = vadd.f32 0.0, %v2487
      %v2489 = vpop.f32.mrb[0].mxu0
      %v2490 = vadd.f32 0.0, %v2489
      %2491 = vmatprep.mubr.bf16.mxu0 0
      %2492 = vmatmul.mubr.bf16.gmra.mrb[0].mxu0 %v831
      %v2493 = vpop.f32.mrb[0].mxu0
      %v2494 = vadd.f32 0.0, %v2493
      %v2495 = vpop.f32.mrb[0].mxu0
      %v2496 = vadd.f32 0.0, %v2495
      %v2497 = vpop.f32.mrb[0].mxu0
      %v2498 = vadd.f32 0.0, %v2497
      %v2499 = vpop.f32.mrb[0].mxu0
      %v2500 = vadd.f32 0.0, %v2499
      %2501 = vmatprep.mubr.bf16.mxu0 0
      %2502 = vmatmul.mubr.bf16.gmra.mrb[0].mxu0 %v834
      %v2503 = vpop.f32.mrb[0].mxu0
      %v2504 = vadd.f32 0.0, %v2503
      %v2505 = vpop.f32.mrb[0].mxu0
      %v2506 = vadd.f32 0.0, %v2505
      %v2507 = vpop.f32.mrb[0].mxu0
      %v2508 = vadd.f32 0.0, %v2507
      %v2509 = vpop.f32.mrb[0].mxu0
      %v2510 = vadd.f32 0.0, %v2509
      %2511 = vmatprep.mubr.bf16.mxu0 0
      %2512 = vmatmul.mubr.bf16.gmra.mrb[0].mxu0 %v837
      %v2513 = vpop.f32.mrb[0].mxu0
      %v2514 = vadd.f32 0.0, %v2513
      %v2515 = vpop.f32.mrb[0].mxu0
      %v2516 = vadd.f32 0.0, %v2515
      %v2517 = vpop.f32.mrb[0].mxu0
      %v2518 = vadd.f32 0.0, %v2517
      %v2519 = vpop.f32.mrb[0].mxu0
      %v2520 = vadd.f32 0.0, %v2519
      %2521 = vmatprep.mubr.bf16.mxu0 0
      %2522 = vmatmul.mubr.bf16.gmra.mrb[0].mxu0 %v840
      %v2523 = vpop.f32.mrb[0].mxu0
      %v2524 = vadd.f32 0.0, %v2523
      %v2525 = vpop.f32.mrb[0].mxu0
      %v2526 = vadd.f32 0.0, %v2525
      %v2527 = vpop.f32.mrb[0].mxu0
      %v2528 = vadd.f32 0.0, %v2527
      %v2529 = vpop.f32.mrb[0].mxu0
      %v2530 = vadd.f32 0.0, %v2529
      %2531 = vmatprep.mubr.bf16.mxu0 0
      %2532 = vmatmul.mubr.bf16.gmra.mrb[0].mxu0 %v843
      %v2533 = vpop.f32.mrb[0].mxu0
      %v2534 = vadd.f32 0.0, %v2533
      %v2535 = vpop.f32.mrb[0].mxu0
      %v2536 = vadd.f32 0.0, %v2535
      %v2537 = vpop.f32.mrb[0].mxu0
      %v2538 = vadd.f32 0.0, %v2537
      %v2539 = vpop.f32.mrb[0].mxu0
      %v2540 = vadd.f32 0.0, %v2539
      %2541 = vmatprep.mubr.bf16.mxu0 0
      %2542 = vmatmul.mubr.bf16.gmra.mrb[0].mxu0 %v846
      %v2543 = vpop.f32.mrb[0].mxu0
      %v2544 = vadd.f32 0.0, %v2543
      %v2545 = vpop.f32.mrb[0].mxu0
      %v2546 = vadd.f32 0.0, %v2545
      %v2547 = vpop.f32.mrb[0].mxu0
      %v2548 = vadd.f32 0.0, %v2547
      %v2549 = vpop.f32.mrb[0].mxu0
      %v2550 = vadd.f32 0.0, %v2549
      %2551 = vmatprep.mubr.bf16.mxu0 0
      %2552 = vmatmul.mubr.bf16.gmra.mrb[0].mxu0 %v849
      %v2553 = vpop.f32.mrb[0].mxu0
      %v2554 = vadd.f32 0.0, %v2553
      %v2555 = vpop.f32.mrb[0].mxu0
      %v2556 = vadd.f32 0.0, %v2555
      %v2557 = vpop.f32.mrb[0].mxu0
      %v2558 = vadd.f32 0.0, %v2557
      %v2559 = vpop.f32.mrb[0].mxu0
      %v2560 = vadd.f32 0.0, %v2559
      %2561 = vmatprep.mubr.bf16.mxu0 0
      %2562 = vmatmul.mubr.bf16.gmra.mrb[0].mxu0 %v2018
      %v2563 = vpop.f32.mrb[0].mxu0
      %v2564 = vadd.f32 0.0, %v2563
      %v2565 = vpop.f32.mrb[0].mxu0
      %v2566 = vadd.f32 0.0, %v2565
      %v2567 = vpop.f32.mrb[0].mxu0
      %v2568 = vadd.f32 0.0, %v2567
      %v2569 = vpop.f32.mrb[0].mxu0
      %v2570 = vadd.f32 0.0, %v2569
      %2571 = vmatprep.mubr.bf16.mxu0 0
      %2572 = vmatmul.mubr.bf16.gmra.mrb[0].mxu0 %v2021
      %v2573 = vpop.f32.mrb[0].mxu0
      %v2574 = vadd.f32 0.0, %v2573
      %v2575 = vpop.f32.mrb[0].mxu0
      %v2576 = vadd.f32 0.0, %v2575
      %v2577 = vpop.f32.mrb[0].mxu0
      %v2578 = vadd.f32 0.0, %v2577
      %v2579 = vpop.f32.mrb[0].mxu0
      %v2580 = vadd.f32 0.0, %v2579
      %2581 = vdwg.mxu0
      %v2582 = vadd.f32 %v1476, %v2064
      %v2583 = vadd.f32 %v1478, %v2066
      %v2584 = vadd.f32 %v1480, %v2068
      %v2585 = vadd.f32 %v1482, %v2070
      %v2586 = vadd.f32 %v1486, %v2074
      %v2587 = vadd.f32 %v1488, %v2076
      %v2588 = vadd.f32 %v1490, %v2078
      %v2589 = vadd.f32 %v1492, %v2080
      %v2590 = vadd.f32 %v1496, %v2084
      %v2591 = vadd.f32 %v1498, %v2086
      %v2592 = vadd.f32 %v1500, %v2088
      %v2593 = vadd.f32 %v1502, %v2090
      %v2594 = vadd.f32 %v1506, %v2094
      %v2595 = vadd.f32 %v1508, %v2096
      %v2596 = vadd.f32 %v1510, %v2098
      %v2597 = vadd.f32 %v1512, %v2100
      %v2598 = vadd.f32 %v1516, %v2104
      %v2599 = vadd.f32 %v1518, %v2106
      %v2600 = vadd.f32 %v1520, %v2108
      %v2601 = vadd.f32 %v1522, %v2110
      %v2602 = vadd.f32 %v1526, %v2114
      %v2603 = vadd.f32 %v1528, %v2116
      %v2604 = vadd.f32 %v1530, %v2118
      %v2605 = vadd.f32 %v1532, %v2120
      %v2606 = vadd.f32 %v1536, %v2124
      %v2607 = vadd.f32 %v1538, %v2126
      %v2608 = vadd.f32 %v1540, %v2128
      %v2609 = vadd.f32 %v1542, %v2130
      %v2610 = vadd.f32 %v1546, %v2134
      %v2611 = vadd.f32 %v1548, %v2136
      %v2612 = vadd.f32 %v1550, %v2138
      %v2613 = vadd.f32 %v1552, %v2140
      %v2614 = vadd.f32 %v1556, %v2144
      %v2615 = vadd.f32 %v1558, %v2146
      %v2616 = vadd.f32 %v1560, %v2148
      %v2617 = vadd.f32 %v1562, %v2150
      %v2618 = vadd.f32 %v1566, %v2154
      %v2619 = vadd.f32 %v1568, %v2156
      %v2620 = vadd.f32 %v1570, %v2158
      %v2621 = vadd.f32 %v1572, %v2160
      %v2622 = vadd.f32 %v1576, %v2164
      %v2623 = vadd.f32 %v1578, %v2166
      %v2624 = vadd.f32 %v1580, %v2168
      %v2625 = vadd.f32 %v1582, %v2170
      %v2626 = vadd.f32 %v1586, %v2174
      %v2627 = vadd.f32 %v1588, %v2176
      %v2628 = vadd.f32 %v1590, %v2178
      %v2629 = vadd.f32 %v1592, %v2180
      %v2630 = vadd.f32 %v1596, %v2184
      %v2631 = vadd.f32 %v1598, %v2186
      %v2632 = vadd.f32 %v1600, %v2188
      %v2633 = vadd.f32 %v1602, %v2190
      %v2634 = vadd.f32 %v1606, %v2194
      %v2635 = vadd.f32 %v1608, %v2196
      %v2636 = vadd.f32 %v1610, %v2198
      %v2637 = vadd.f32 %v1612, %v2200
      %v2638 = vadd.f32 %v1616, %v2204
      %v2639 = vadd.f32 %v1618, %v2206
      %v2640 = vadd.f32 %v1620, %v2208
      %v2641 = vadd.f32 %v1622, %v2210
      %v2642 = vadd.f32 %v1626, %v2214
      %v2643 = vadd.f32 %v1628, %v2216
      %v2644 = vadd.f32 %v1630, %v2218
      %v2645 = vadd.f32 %v1632, %v2220
      %v2646 = vadd.f32 %v1636, %v2224
      %v2647 = vadd.f32 %v1638, %v2226
      %v2648 = vadd.f32 %v1640, %v2228
      %v2649 = vadd.f32 %v1642, %v2230
      %v2650 = vadd.f32 %v1646, %v2234
      %v2651 = vadd.f32 %v1648, %v2236
      %v2652 = vadd.f32 %v1650, %v2238
      %v2653 = vadd.f32 %v1652, %v2240
      %v2654 = vadd.f32 %v1656, %v2244
      %v2655 = vadd.f32 %v1658, %v2246
      %v2656 = vadd.f32 %v1660, %v2248
      %v2657 = vadd.f32 %v1662, %v2250
      %v2658 = vadd.f32 %v1666, %v2254
      %v2659 = vadd.f32 %v1668, %v2256
      %v2660 = vadd.f32 %v1670, %v2258
      %v2661 = vadd.f32 %v1672, %v2260
      %v2662 = vadd.f32 %v1676, %v2264
      %v2663 = vadd.f32 %v1678, %v2266
      %v2664 = vadd.f32 %v1680, %v2268
      %v2665 = vadd.f32 %v1682, %v2270
      %v2666 = vadd.f32 %v1686, %v2274
      %v2667 = vadd.f32 %v1688, %v2276
      %v2668 = vadd.f32 %v1690, %v2278
      %v2669 = vadd.f32 %v1692, %v2280
      %v2670 = vadd.f32 %v1696, %v2284
      %v2671 = vadd.f32 %v1698, %v2286
      %v2672 = vadd.f32 %v1700, %v2288
      %v2673 = vadd.f32 %v1702, %v2290
      %v2674 = vadd.f32 %v1706, %v2294
      %v2675 = vadd.f32 %v1708, %v2296
      %v2676 = vadd.f32 %v1710, %v2298
      %v2677 = vadd.f32 %v1712, %v2300
      %v2678 = vadd.f32 %v1716, %v2304
      %v2679 = vadd.f32 %v1718, %v2306
      %v2680 = vadd.f32 %v1720, %v2308
      %v2681 = vadd.f32 %v1722, %v2310
      %v2682 = vadd.f32 %v1726, %v2314
      %v2683 = vadd.f32 %v1728, %v2316
      %v2684 = vadd.f32 %v1730, %v2318
      %v2685 = vadd.f32 %v1732, %v2320
      %v2686 = vadd.f32 %v1736, %v2324
      %v2687 = vadd.f32 %v1738, %v2326
      %v2688 = vadd.f32 %v1740, %v2328
      %v2689 = vadd.f32 %v1742, %v2330
      %v2690 = vadd.f32 %v1746, %v2334
      %v2691 = vadd.f32 %v1748, %v2336
      %v2692 = vadd.f32 %v1750, %v2338
      %v2693 = vadd.f32 %v1752, %v2340
      %v2694 = vadd.f32 %v1756, %v2344
      %v2695 = vadd.f32 %v1758, %v2346
      %v2696 = vadd.f32 %v1760, %v2348
      %v2697 = vadd.f32 %v1762, %v2350
      %v2698 = vadd.f32 %v1766, %v2354
      %v2699 = vadd.f32 %v1768, %v2356
      %v2700 = vadd.f32 %v1770, %v2358
      %v2701 = vadd.f32 %v1772, %v2360
      %v2702 = vadd.f32 %v1776, %v2364
      %v2703 = vadd.f32 %v1778, %v2366
      %v2704 = vadd.f32 %v1780, %v2368
      %v2705 = vadd.f32 %v1782, %v2370
      %v2706 = vadd.f32 %v1786, %v2374
      %v2707 = vadd.f32 %v1788, %v2376
      %v2708 = vadd.f32 %v1790, %v2378
      %v2709 = vadd.f32 %v1792, %v2380
      %v2710 = vadd.f32 %v1796, %v2384
      %v2711 = vadd.f32 %v1798, %v2386
      %v2712 = vadd.f32 %v1800, %v2388
      %v2713 = vadd.f32 %v1802, %v2390
      %v2714 = vadd.f32 %v1806, %v2394
      %v2715 = vadd.f32 %v1808, %v2396
      %v2716 = vadd.f32 %v1810, %v2398
      %v2717 = vadd.f32 %v1812, %v2400
      %v2718 = vadd.f32 %v1816, %v2404
      %v2719 = vadd.f32 %v1818, %v2406
      %v2720 = vadd.f32 %v1820, %v2408
      %v2721 = vadd.f32 %v1822, %v2410
      %v2722 = vadd.f32 %v1826, %v2414
      %v2723 = vadd.f32 %v1828, %v2416
      %v2724 = vadd.f32 %v1830, %v2418
      %v2725 = vadd.f32 %v1832, %v2420
      %v2726 = vadd.f32 %v1836, %v2424
      %v2727 = vadd.f32 %v1838, %v2426
      %v2728 = vadd.f32 %v1840, %v2428
      %v2729 = vadd.f32 %v1842, %v2430
      %v2730 = vadd.f32 %v1846, %v2434
      %v2731 = vadd.f32 %v1848, %v2436
      %v2732 = vadd.f32 %v1850, %v2438
      %v2733 = vadd.f32 %v1852, %v2440
      %v2734 = vadd.f32 %v1856, %v2444
      %v2735 = vadd.f32 %v1858, %v2446
      %v2736 = vadd.f32 %v1860, %v2448
      %v2737 = vadd.f32 %v1862, %v2450
      %v2738 = vadd.f32 %v1866, %v2454
      %v2739 = vadd.f32 %v1868, %v2456
      %v2740 = vadd.f32 %v1870, %v2458
      %v2741 = vadd.f32 %v1872, %v2460
      %v2742 = vadd.f32 %v1876, %v2464
      %v2743 = vadd.f32 %v1878, %v2466
      %v2744 = vadd.f32 %v1880, %v2468
      %v2745 = vadd.f32 %v1882, %v2470
      %v2746 = vadd.f32 %v1886, %v2474
      %v2747 = vadd.f32 %v1888, %v2476
      %v2748 = vadd.f32 %v1890, %v2478
      %v2749 = vadd.f32 %v1892, %v2480
      %v2750 = vadd.f32 %v1896, %v2484
      %v2751 = vadd.f32 %v1898, %v2486
      %v2752 = vadd.f32 %v1900, %v2488
      %v2753 = vadd.f32 %v1902, %v2490
      %v2754 = vadd.f32 %v1906, %v2494
      %v2755 = vadd.f32 %v1908, %v2496
      %v2756 = vadd.f32 %v1910, %v2498
      %v2757 = vadd.f32 %v1912, %v2500
      %v2758 = vadd.f32 %v1916, %v2504
      %v2759 = vadd.f32 %v1918, %v2506
      %v2760 = vadd.f32 %v1920, %v2508
      %v2761 = vadd.f32 %v1922, %v2510
      %v2762 = vadd.f32 %v1926, %v2514
      %v2763 = vadd.f32 %v1928, %v2516
      %v2764 = vadd.f32 %v1930, %v2518
      %v2765 = vadd.f32 %v1932, %v2520
      %v2766 = vadd.f32 %v1936, %v2524
      %v2767 = vadd.f32 %v1938, %v2526
      %v2768 = vadd.f32 %v1940, %v2528
      %v2769 = vadd.f32 %v1942, %v2530
      %v2770 = vadd.f32 %v1946, %v2534
      %v2771 = vadd.f32 %v1948, %v2536
      %v2772 = vadd.f32 %v1950, %v2538
      %v2773 = vadd.f32 %v1952, %v2540
      %v2774 = vadd.f32 %v1956, %v2544
      %v2775 = vadd.f32 %v1958, %v2546
      %v2776 = vadd.f32 %v1960, %v2548
      %v2777 = vadd.f32 %v1962, %v2550
      %v2778 = vadd.f32 %v1966, %v2554
      %v2779 = vadd.f32 %v1968, %v2556
      %v2780 = vadd.f32 %v1970, %v2558
      %v2781 = vadd.f32 %v1972, %v2560
      %v2782 = vadd.f32 %v1976, %v2564
      %v2783 = vadd.f32 %v1978, %v2566
      %v2784 = vadd.f32 %v1980, %v2568
      %v2785 = vadd.f32 %v1982, %v2570
      %v2786 = vadd.f32 %v1986, %v2574
      %v2787 = vadd.f32 %v1988, %v2576
      %v2788 = vadd.f32 %v1990, %v2578
      %v2789 = vadd.f32 %v1992, %v2580
      %v2790 = vld [vmem:[%s2] sm:$0x3]
      %v2792 = vlaneseq
      %v2793 = vshrl.u32 %v2792, 7
      %v2794 = vsub.s32 0, %v2793
      %v2795 = vrot.slane %v2790, %v2794
      %v2796 = vlaneseq
      %v2797 = vshrl.u32 %v2796, 7
      %v2798 = vsub.s32 1, %v2797
      %v2799 = vrot.slane %v2790, %v2798
      %v2802 = vadd.f32 %v2582, %v2795
      %v2803 = vadd.f32 %v2583, %v2799
      %v2804 = vadd.f32 %v2584, %v2795
      %v2805 = vadd.f32 %v2585, %v2799
      %v2806 = vadd.f32 %v2586, %v2795
      %v2807 = vadd.f32 %v2587, %v2799
      %v2808 = vadd.f32 %v2588, %v2795
      %v2809 = vadd.f32 %v2589, %v2799
      %v2810 = vadd.f32 %v2590, %v2795
      %v2811 = vadd.f32 %v2591, %v2799
      %v2812 = vadd.f32 %v2592, %v2795
      %v2813 = vadd.f32 %v2593, %v2799
      %v2814 = vadd.f32 %v2594, %v2795
      %v2815 = vadd.f32 %v2595, %v2799
      %v2816 = vadd.f32 %v2596, %v2795
      %v2817 = vadd.f32 %v2597, %v2799
      %v2818 = vadd.f32 %v2598, %v2795
      %v2819 = vadd.f32 %v2599, %v2799
      %v2820 = vadd.f32 %v2600, %v2795
      %v2821 = vadd.f32 %v2601, %v2799
      %v2822 = vadd.f32 %v2602, %v2795
      %v2823 = vadd.f32 %v2603, %v2799
      %v2824 = vadd.f32 %v2604, %v2795
      %v2825 = vadd.f32 %v2605, %v2799
      %v2826 = vadd.f32 %v2606, %v2795
      %v2827 = vadd.f32 %v2607, %v2799
      %v2828 = vadd.f32 %v2608, %v2795
      %v2829 = vadd.f32 %v2609, %v2799
      %v2830 = vadd.f32 %v2610, %v2795
      %v2831 = vadd.f32 %v2611, %v2799
      %v2832 = vadd.f32 %v2612, %v2795
      %v2833 = vadd.f32 %v2613, %v2799
      %v2834 = vadd.f32 %v2614, %v2795
      %v2835 = vadd.f32 %v2615, %v2799
      %v2836 = vadd.f32 %v2616, %v2795
      %v2837 = vadd.f32 %v2617, %v2799
      %v2838 = vadd.f32 %v2618, %v2795
      %v2839 = vadd.f32 %v2619, %v2799
      %v2840 = vadd.f32 %v2620, %v2795
      %v2841 = vadd.f32 %v2621, %v2799
      %v2842 = vadd.f32 %v2622, %v2795
      %v2843 = vadd.f32 %v2623, %v2799
      %v2844 = vadd.f32 %v2624, %v2795
      %v2845 = vadd.f32 %v2625, %v2799
      %v2846 = vadd.f32 %v2626, %v2795
      %v2847 = vadd.f32 %v2627, %v2799
      %v2848 = vadd.f32 %v2628, %v2795
      %v2849 = vadd.f32 %v2629, %v2799
      %v2850 = vadd.f32 %v2630, %v2795
      %v2851 = vadd.f32 %v2631, %v2799
      %v2852 = vadd.f32 %v2632, %v2795
      %v2853 = vadd.f32 %v2633, %v2799
      %v2854 = vadd.f32 %v2634, %v2795
      %v2855 = vadd.f32 %v2635, %v2799
      %v2856 = vadd.f32 %v2636, %v2795
      %v2857 = vadd.f32 %v2637, %v2799
      %v2858 = vadd.f32 %v2638, %v2795
      %v2859 = vadd.f32 %v2639, %v2799
      %v2860 = vadd.f32 %v2640, %v2795
      %v2861 = vadd.f32 %v2641, %v2799
      %v2862 = vadd.f32 %v2642, %v2795
      %v2863 = vadd.f32 %v2643, %v2799
      %v2864 = vadd.f32 %v2644, %v2795
      %v2865 = vadd.f32 %v2645, %v2799
      %v2866 = vadd.f32 %v2646, %v2795
      %v2867 = vadd.f32 %v2647, %v2799
      %v2868 = vadd.f32 %v2648, %v2795
      %v2869 = vadd.f32 %v2649, %v2799
      %v2870 = vadd.f32 %v2650, %v2795
      %v2871 = vadd.f32 %v2651, %v2799
      %v2872 = vadd.f32 %v2652, %v2795
      %v2873 = vadd.f32 %v2653, %v2799
      %v2874 = vadd.f32 %v2654, %v2795
      %v2875 = vadd.f32 %v2655, %v2799
      %v2876 = vadd.f32 %v2656, %v2795
      %v2877 = vadd.f32 %v2657, %v2799
      %v2878 = vadd.f32 %v2658, %v2795
      %v2879 = vadd.f32 %v2659, %v2799
      %v2880 = vadd.f32 %v2660, %v2795
      %v2881 = vadd.f32 %v2661, %v2799
      %v2882 = vadd.f32 %v2662, %v2795
      %v2883 = vadd.f32 %v2663, %v2799
      %v2884 = vadd.f32 %v2664, %v2795
      %v2885 = vadd.f32 %v2665, %v2799
      %v2886 = vadd.f32 %v2666, %v2795
      %v2887 = vadd.f32 %v2667, %v2799
      %v2888 = vadd.f32 %v2668, %v2795
      %v2889 = vadd.f32 %v2669, %v2799
      %v2890 = vadd.f32 %v2670, %v2795
      %v2891 = vadd.f32 %v2671, %v2799
      %v2892 = vadd.f32 %v2672, %v2795
      %v2893 = vadd.f32 %v2673, %v2799
      %v2894 = vadd.f32 %v2674, %v2795
      %v2895 = vadd.f32 %v2675, %v2799
      %v2896 = vadd.f32 %v2676, %v2795
      %v2897 = vadd.f32 %v2677, %v2799
      %v2898 = vadd.f32 %v2678, %v2795
      %v2899 = vadd.f32 %v2679, %v2799
      %v2900 = vadd.f32 %v2680, %v2795
      %v2901 = vadd.f32 %v2681, %v2799
      %v2902 = vadd.f32 %v2682, %v2795
      %v2903 = vadd.f32 %v2683, %v2799
      %v2904 = vadd.f32 %v2684, %v2795
      %v2905 = vadd.f32 %v2685, %v2799
      %v2906 = vadd.f32 %v2686, %v2795
      %v2907 = vadd.f32 %v2687, %v2799
      %v2908 = vadd.f32 %v2688, %v2795
      %v2909 = vadd.f32 %v2689, %v2799
      %v2910 = vadd.f32 %v2690, %v2795
      %v2911 = vadd.f32 %v2691, %v2799
      %v2912 = vadd.f32 %v2692, %v2795
      %v2913 = vadd.f32 %v2693, %v2799
      %v2914 = vadd.f32 %v2694, %v2795
      %v2915 = vadd.f32 %v2695, %v2799
      %v2916 = vadd.f32 %v2696, %v2795
      %v2917 = vadd.f32 %v2697, %v2799
      %v2918 = vadd.f32 %v2698, %v2795
      %v2919 = vadd.f32 %v2699, %v2799
      %v2920 = vadd.f32 %v2700, %v2795
      %v2921 = vadd.f32 %v2701, %v2799
      %v2922 = vadd.f32 %v2702, %v2795
      %v2923 = vadd.f32 %v2703, %v2799
      %v2924 = vadd.f32 %v2704, %v2795
      %v2925 = vadd.f32 %v2705, %v2799
      %v2926 = vadd.f32 %v2706, %v2795
      %v2927 = vadd.f32 %v2707, %v2799
      %v2928 = vadd.f32 %v2708, %v2795
      %v2929 = vadd.f32 %v2709, %v2799
      %v2930 = vadd.f32 %v2710, %v2795
      %v2931 = vadd.f32 %v2711, %v2799
      %v2932 = vadd.f32 %v2712, %v2795
      %v2933 = vadd.f32 %v2713, %v2799
      %v2934 = vadd.f32 %v2714, %v2795
      %v2935 = vadd.f32 %v2715, %v2799
      %v2936 = vadd.f32 %v2716, %v2795
      %v2937 = vadd.f32 %v2717, %v2799
      %v2938 = vadd.f32 %v2718, %v2795
      %v2939 = vadd.f32 %v2719, %v2799
      %v2940 = vadd.f32 %v2720, %v2795
      %v2941 = vadd.f32 %v2721, %v2799
      %v2942 = vadd.f32 %v2722, %v2795
      %v2943 = vadd.f32 %v2723, %v2799
      %v2944 = vadd.f32 %v2724, %v2795
      %v2945 = vadd.f32 %v2725, %v2799
      %v2946 = vadd.f32 %v2726, %v2795
      %v2947 = vadd.f32 %v2727, %v2799
      %v2948 = vadd.f32 %v2728, %v2795
      %v2949 = vadd.f32 %v2729, %v2799
      %v2950 = vadd.f32 %v2730, %v2795
      %v2951 = vadd.f32 %v2731, %v2799
      %v2952 = vadd.f32 %v2732, %v2795
      %v2953 = vadd.f32 %v2733, %v2799
      %v2954 = vadd.f32 %v2734, %v2795
      %v2955 = vadd.f32 %v2735, %v2799
      %v2956 = vadd.f32 %v2736, %v2795
      %v2957 = vadd.f32 %v2737, %v2799
      %v2958 = vadd.f32 %v2738, %v2795
      %v2959 = vadd.f32 %v2739, %v2799
      %v2960 = vadd.f32 %v2740, %v2795
      %v2961 = vadd.f32 %v2741, %v2799
      %v2962 = vadd.f32 %v2742, %v2795
      %v2963 = vadd.f32 %v2743, %v2799
      %v2964 = vadd.f32 %v2744, %v2795
      %v2965 = vadd.f32 %v2745, %v2799
      %v2966 = vadd.f32 %v2746, %v2795
      %v2967 = vadd.f32 %v2747, %v2799
      %v2968 = vadd.f32 %v2748, %v2795
      %v2969 = vadd.f32 %v2749, %v2799
      %v2970 = vadd.f32 %v2750, %v2795
      %v2971 = vadd.f32 %v2751, %v2799
      %v2972 = vadd.f32 %v2752, %v2795
      %v2973 = vadd.f32 %v2753, %v2799
      %v2974 = vadd.f32 %v2754, %v2795
      %v2975 = vadd.f32 %v2755, %v2799
      %v2976 = vadd.f32 %v2756, %v2795
      %v2977 = vadd.f32 %v2757, %v2799
      %v2978 = vadd.f32 %v2758, %v2795
      %v2979 = vadd.f32 %v2759, %v2799
      %v2980 = vadd.f32 %v2760, %v2795
      %v2981 = vadd.f32 %v2761, %v2799
      %v2982 = vadd.f32 %v2762, %v2795
      %v2983 = vadd.f32 %v2763, %v2799
      %v2984 = vadd.f32 %v2764, %v2795
      %v2985 = vadd.f32 %v2765, %v2799
      %v2986 = vadd.f32 %v2766, %v2795
      %v2987 = vadd.f32 %v2767, %v2799
      %v2988 = vadd.f32 %v2768, %v2795
      %v2989 = vadd.f32 %v2769, %v2799
      %v2990 = vadd.f32 %v2770, %v2795
      %v2991 = vadd.f32 %v2771, %v2799
      %v2992 = vadd.f32 %v2772, %v2795
      %v2993 = vadd.f32 %v2773, %v2799
      %v2994 = vadd.f32 %v2774, %v2795
      %v2995 = vadd.f32 %v2775, %v2799
      %v2996 = vadd.f32 %v2776, %v2795
      %v2997 = vadd.f32 %v2777, %v2799
      %v2998 = vadd.f32 %v2778, %v2795
      %v2999 = vadd.f32 %v2779, %v2799
      %v3000 = vadd.f32 %v2780, %v2795
      %v3001 = vadd.f32 %v2781, %v2799
      %v3002 = vadd.f32 %v2782, %v2795
      %v3003 = vadd.f32 %v2783, %v2799
      %v3004 = vadd.f32 %v2784, %v2795
      %v3005 = vadd.f32 %v2785, %v2799
      %v3006 = vadd.f32 %v2786, %v2795
      %v3007 = vadd.f32 %v2787, %v2799
      %v3008 = vadd.f32 %v2788, %v2795
      %v3009 = vadd.f32 %v2789, %v2799
      %v3010 = vmax.f32 %v2802, 0.0
      %v3011 = vmax.f32 %v2803, 0.0
      %v3012 = vmax.f32 %v2804, 0.0
      %v3013 = vmax.f32 %v2805, 0.0
      %v3014 = vmax.f32 %v2806, 0.0
      %v3015 = vmax.f32 %v2807, 0.0
      %v3016 = vmax.f32 %v2808, 0.0
      %v3017 = vmax.f32 %v2809, 0.0
      %v3018 = vmax.f32 %v2810, 0.0
      %v3019 = vmax.f32 %v2811, 0.0
      %v3020 = vmax.f32 %v2812, 0.0
      %v3021 = vmax.f32 %v2813, 0.0
      %v3022 = vmax.f32 %v2814, 0.0
      %v3023 = vmax.f32 %v2815, 0.0
      %v3024 = vmax.f32 %v2816, 0.0
      %v3025 = vmax.f32 %v2817, 0.0
      %v3026 = vmax.f32 %v2818, 0.0
      %v3027 = vmax.f32 %v2819, 0.0
      %v3028 = vmax.f32 %v2820, 0.0
      %v3029 = vmax.f32 %v2821, 0.0
      %v3030 = vmax.f32 %v2822, 0.0
      %v3031 = vmax.f32 %v2823, 0.0
      %v3032 = vmax.f32 %v2824, 0.0
      %v3033 = vmax.f32 %v2825, 0.0
      %v3034 = vmax.f32 %v2826, 0.0
      %v3035 = vmax.f32 %v2827, 0.0
      %v3036 = vmax.f32 %v2828, 0.0
      %v3037 = vmax.f32 %v2829, 0.0
      %v3038 = vmax.f32 %v2830, 0.0
      %v3039 = vmax.f32 %v2831, 0.0
      %v3040 = vmax.f32 %v2832, 0.0
      %v3041 = vmax.f32 %v2833, 0.0
      %v3042 = vmax.f32 %v2834, 0.0
      %v3043 = vmax.f32 %v2835, 0.0
      %v3044 = vmax.f32 %v2836, 0.0
      %v3045 = vmax.f32 %v2837, 0.0
      %v3046 = vmax.f32 %v2838, 0.0
      %v3047 = vmax.f32 %v2839, 0.0
      %v3048 = vmax.f32 %v2840, 0.0
      %v3049 = vmax.f32 %v2841, 0.0
      %v3050 = vmax.f32 %v2842, 0.0
      %v3051 = vmax.f32 %v2843, 0.0
      %v3052 = vmax.f32 %v2844, 0.0
      %v3053 = vmax.f32 %v2845, 0.0
      %v3054 = vmax.f32 %v2846, 0.0
      %v3055 = vmax.f32 %v2847, 0.0
      %v3056 = vmax.f32 %v2848, 0.0
      %v3057 = vmax.f32 %v2849, 0.0
      %v3058 = vmax.f32 %v2850, 0.0
      %v3059 = vmax.f32 %v2851, 0.0
      %v3060 = vmax.f32 %v2852, 0.0
      %v3061 = vmax.f32 %v2853, 0.0
      %v3062 = vmax.f32 %v2854, 0.0
      %v3063 = vmax.f32 %v2855, 0.0
      %v3064 = vmax.f32 %v2856, 0.0
      %v3065 = vmax.f32 %v2857, 0.0
      %v3066 = vmax.f32 %v2858, 0.0
      %v3067 = vmax.f32 %v2859, 0.0
      %v3068 = vmax.f32 %v2860, 0.0
      %v3069 = vmax.f32 %v2861, 0.0
      %v3070 = vmax.f32 %v2862, 0.0
      %v3071 = vmax.f32 %v2863, 0.0
      %v3072 = vmax.f32 %v2864, 0.0
      %v3073 = vmax.f32 %v2865, 0.0
      %v3074 = vmax.f32 %v2866, 0.0
      %v3075 = vmax.f32 %v2867, 0.0
      %v3076 = vmax.f32 %v2868, 0.0
      %v3077 = vmax.f32 %v2869, 0.0
      %v3078 = vmax.f32 %v2870, 0.0
      %v3079 = vmax.f32 %v2871, 0.0
      %v3080 = vmax.f32 %v2872, 0.0
      %v3081 = vmax.f32 %v2873, 0.0
      %v3082 = vmax.f32 %v2874, 0.0
      %v3083 = vmax.f32 %v2875, 0.0
      %v3084 = vmax.f32 %v2876, 0.0
      %v3085 = vmax.f32 %v2877, 0.0
      %v3086 = vmax.f32 %v2878, 0.0
      %v3087 = vmax.f32 %v2879, 0.0
      %v3088 = vmax.f32 %v2880, 0.0
      %v3089 = vmax.f32 %v2881, 0.0
      %v3090 = vmax.f32 %v2882, 0.0
      %v3091 = vmax.f32 %v2883, 0.0
      %v3092 = vmax.f32 %v2884, 0.0
      %v3093 = vmax.f32 %v2885, 0.0
      %v3094 = vmax.f32 %v2886, 0.0
      %v3095 = vmax.f32 %v2887, 0.0
      %v3096 = vmax.f32 %v2888, 0.0
      %v3097 = vmax.f32 %v2889, 0.0
      %v3098 = vmax.f32 %v2890, 0.0
      %v3099 = vmax.f32 %v2891, 0.0
      %v3100 = vmax.f32 %v2892, 0.0
      %v3101 = vmax.f32 %v2893, 0.0
      %v3102 = vmax.f32 %v2894, 0.0
      %v3103 = vmax.f32 %v2895, 0.0
      %v3104 = vmax.f32 %v2896, 0.0
      %v3105 = vmax.f32 %v2897, 0.0
      %v3106 = vmax.f32 %v2898, 0.0
      %v3107 = vmax.f32 %v2899, 0.0
      %v3108 = vmax.f32 %v2900, 0.0
      %v3109 = vmax.f32 %v2901, 0.0
      %v3110 = vmax.f32 %v2902, 0.0
      %v3111 = vmax.f32 %v2903, 0.0
      %v3112 = vmax.f32 %v2904, 0.0
      %v3113 = vmax.f32 %v2905, 0.0
      %v3114 = vmax.f32 %v2906, 0.0
      %v3115 = vmax.f32 %v2907, 0.0
      %v3116 = vmax.f32 %v2908, 0.0
      %v3117 = vmax.f32 %v2909, 0.0
      %v3118 = vmax.f32 %v2910, 0.0
      %v3119 = vmax.f32 %v2911, 0.0
      %v3120 = vmax.f32 %v2912, 0.0
      %v3121 = vmax.f32 %v2913, 0.0
      %v3122 = vmax.f32 %v2914, 0.0
      %v3123 = vmax.f32 %v2915, 0.0
      %v3124 = vmax.f32 %v2916, 0.0
      %v3125 = vmax.f32 %v2917, 0.0
      %v3126 = vmax.f32 %v2918, 0.0
      %v3127 = vmax.f32 %v2919, 0.0
      %v3128 = vmax.f32 %v2920, 0.0
      %v3129 = vmax.f32 %v2921, 0.0
      %v3130 = vmax.f32 %v2922, 0.0
      %v3131 = vmax.f32 %v2923, 0.0
      %v3132 = vmax.f32 %v2924, 0.0
      %v3133 = vmax.f32 %v2925, 0.0
      %v3134 = vmax.f32 %v2926, 0.0
      %v3135 = vmax.f32 %v2927, 0.0
      %v3136 = vmax.f32 %v2928, 0.0
      %v3137 = vmax.f32 %v2929, 0.0
      %v3138 = vmax.f32 %v2930, 0.0
      %v3139 = vmax.f32 %v2931, 0.0
      %v3140 = vmax.f32 %v2932, 0.0
      %v3141 = vmax.f32 %v2933, 0.0
      %v3142 = vmax.f32 %v2934, 0.0
      %v3143 = vmax.f32 %v2935, 0.0
      %v3144 = vmax.f32 %v2936, 0.0
      %v3145 = vmax.f32 %v2937, 0.0
      %v3146 = vmax.f32 %v2938, 0.0
      %v3147 = vmax.f32 %v2939, 0.0
      %v3148 = vmax.f32 %v2940, 0.0
      %v3149 = vmax.f32 %v2941, 0.0
      %v3150 = vmax.f32 %v2942, 0.0
      %v3151 = vmax.f32 %v2943, 0.0
      %v3152 = vmax.f32 %v2944, 0.0
      %v3153 = vmax.f32 %v2945, 0.0
      %v3154 = vmax.f32 %v2946, 0.0
      %v3155 = vmax.f32 %v2947, 0.0
      %v3156 = vmax.f32 %v2948, 0.0
      %v3157 = vmax.f32 %v2949, 0.0
      %v3158 = vmax.f32 %v2950, 0.0
      %v3159 = vmax.f32 %v2951, 0.0
      %v3160 = vmax.f32 %v2952, 0.0
      %v3161 = vmax.f32 %v2953, 0.0
      %v3162 = vmax.f32 %v2954, 0.0
      %v3163 = vmax.f32 %v2955, 0.0
      %v3164 = vmax.f32 %v2956, 0.0
      %v3165 = vmax.f32 %v2957, 0.0
      %v3166 = vmax.f32 %v2958, 0.0
      %v3167 = vmax.f32 %v2959, 0.0
      %v3168 = vmax.f32 %v2960, 0.0
      %v3169 = vmax.f32 %v2961, 0.0
      %v3170 = vmax.f32 %v2962, 0.0
      %v3171 = vmax.f32 %v2963, 0.0
      %v3172 = vmax.f32 %v2964, 0.0
      %v3173 = vmax.f32 %v2965, 0.0
      %v3174 = vmax.f32 %v2966, 0.0
      %v3175 = vmax.f32 %v2967, 0.0
      %v3176 = vmax.f32 %v2968, 0.0
      %v3177 = vmax.f32 %v2969, 0.0
      %v3178 = vmax.f32 %v2970, 0.0
      %v3179 = vmax.f32 %v2971, 0.0
      %v3180 = vmax.f32 %v2972, 0.0
      %v3181 = vmax.f32 %v2973, 0.0
      %v3182 = vmax.f32 %v2974, 0.0
      %v3183 = vmax.f32 %v2975, 0.0
      %v3184 = vmax.f32 %v2976, 0.0
      %v3185 = vmax.f32 %v2977, 0.0
      %v3186 = vmax.f32 %v2978, 0.0
      %v3187 = vmax.f32 %v2979, 0.0
      %v3188 = vmax.f32 %v2980, 0.0
      %v3189 = vmax.f32 %v2981, 0.0
      %v3190 = vmax.f32 %v2982, 0.0
      %v3191 = vmax.f32 %v2983, 0.0
      %v3192 = vmax.f32 %v2984, 0.0
      %v3193 = vmax.f32 %v2985, 0.0
      %v3194 = vmax.f32 %v2986, 0.0
      %v3195 = vmax.f32 %v2987, 0.0
      %v3196 = vmax.f32 %v2988, 0.0
      %v3197 = vmax.f32 %v2989, 0.0
      %v3198 = vmax.f32 %v2990, 0.0
      %v3199 = vmax.f32 %v2991, 0.0
      %v3200 = vmax.f32 %v2992, 0.0
      %v3201 = vmax.f32 %v2993, 0.0
      %v3202 = vmax.f32 %v2994, 0.0
      %v3203 = vmax.f32 %v2995, 0.0
      %v3204 = vmax.f32 %v2996, 0.0
      %v3205 = vmax.f32 %v2997, 0.0
      %v3206 = vmax.f32 %v2998, 0.0
      %v3207 = vmax.f32 %v2999, 0.0
      %v3208 = vmax.f32 %v3000, 0.0
      %v3209 = vmax.f32 %v3001, 0.0
      %v3210 = vmax.f32 %v3002, 0.0
      %v3211 = vmax.f32 %v3003, 0.0
      %v3212 = vmax.f32 %v3004, 0.0
      %v3213 = vmax.f32 %v3005, 0.0
      %v3214 = vmax.f32 %v3006, 0.0
      %v3215 = vmax.f32 %v3007, 0.0
      %v3216 = vmax.f32 %v3008, 0.0
      %v3217 = vmax.f32 %v3009, 0.0
      %v3218 = vmax.f32 %v3010, %v3018
      %v3219 = vmax.f32 %v3011, %v3019
      %v3220 = vmax.f32 %v3012, %v3020
      %v3221 = vmax.f32 %v3013, %v3021
      %v3222 = vmax.f32 %v3014, %v3022
      %v3223 = vmax.f32 %v3015, %v3023
      %v3224 = vmax.f32 %v3016, %v3024
      %v3225 = vmax.f32 %v3017, %v3025
      %v3226 = vmax.f32 %v3026, %v3034
      %v3227 = vmax.f32 %v3027, %v3035
      %v3228 = vmax.f32 %v3028, %v3036
      %v3229 = vmax.f32 %v3029, %v3037
      %v3230 = vmax.f32 %v3030, %v3038
      %v3231 = vmax.f32 %v3031, %v3039
      %v3232 = vmax.f32 %v3032, %v3040
      %v3233 = vmax.f32 %v3033, %v3041
      %v3234 = vmax.f32 %v3042, %v3050
      %v3235 = vmax.f32 %v3043, %v3051
      %v3236 = vmax.f32 %v3044, %v3052
      %v3237 = vmax.f32 %v3045, %v3053
      %v3238 = vmax.f32 %v3046, %v3054
      %v3239 = vmax.f32 %v3047, %v3055
      %v3240 = vmax.f32 %v3048, %v3056
      %v3241 = vmax.f32 %v3049, %v3057
      %v3242 = vmax.f32 %v3058, %v3066
      %v3243 = vmax.f32 %v3059, %v3067
      %v3244 = vmax.f32 %v3060, %v3068
      %v3245 = vmax.f32 %v3061, %v3069
      %v3246 = vmax.f32 %v3062, %v3070
      %v3247 = vmax.f32 %v3063, %v3071
      %v3248 = vmax.f32 %v3064, %v3072
      %v3249 = vmax.f32 %v3065, %v3073
      %v3250 = vmax.f32 %v3074, %v3082
      %v3251 = vmax.f32 %v3075, %v3083
      %v3252 = vmax.f32 %v3076, %v3084
      %v3253 = vmax.f32 %v3077, %v3085
      %v3254 = vmax.f32 %v3078, %v3086
      %v3255 = vmax.f32 %v3079, %v3087
      %v3256 = vmax.f32 %v3080, %v3088
      %v3257 = vmax.f32 %v3081, %v3089
      %v3258 = vmax.f32 %v3090, %v3098
      %v3259 = vmax.f32 %v3091, %v3099
      %v3260 = vmax.f32 %v3092, %v3100
      %v3261 = vmax.f32 %v3093, %v3101
      %v3262 = vmax.f32 %v3094, %v3102
      %v3263 = vmax.f32 %v3095, %v3103
      %v3264 = vmax.f32 %v3096, %v3104
      %v3265 = vmax.f32 %v3097, %v3105
      %v3266 = vmax.f32 %v3106, %v3114
      %v3267 = vmax.f32 %v3107, %v3115
      %v3268 = vmax.f32 %v3108, %v3116
      %v3269 = vmax.f32 %v3109, %v3117
      %v3270 = vmax.f32 %v3110, %v3118
      %v3271 = vmax.f32 %v3111, %v3119
      %v3272 = vmax.f32 %v3112, %v3120
      %v3273 = vmax.f32 %v3113, %v3121
      %v3274 = vmax.f32 %v3122, %v3130
      %v3275 = vmax.f32 %v3123, %v3131
      %v3276 = vmax.f32 %v3124, %v3132
      %v3277 = vmax.f32 %v3125, %v3133
      %v3278 = vmax.f32 %v3126, %v3134
      %v3279 = vmax.f32 %v3127, %v3135
      %v3280 = vmax.f32 %v3128, %v3136
      %v3281 = vmax.f32 %v3129, %v3137
      %v3282 = vmax.f32 %v3138, %v3146
      %v3283 = vmax.f32 %v3139, %v3147
      %v3284 = vmax.f32 %v3140, %v3148
      %v3285 = vmax.f32 %v3141, %v3149
      %v3286 = vmax.f32 %v3142, %v3150
      %v3287 = vmax.f32 %v3143, %v3151
      %v3288 = vmax.f32 %v3144, %v3152
      %v3289 = vmax.f32 %v3145, %v3153
      %v3290 = vmax.f32 %v3154, %v3162
      %v3291 = vmax.f32 %v3155, %v3163
      %v3292 = vmax.f32 %v3156, %v3164
      %v3293 = vmax.f32 %v3157, %v3165
      %v3294 = vmax.f32 %v3158, %v3166
      %v3295 = vmax.f32 %v3159, %v3167
      %v3296 = vmax.f32 %v3160, %v3168
      %v3297 = vmax.f32 %v3161, %v3169
      %v3298 = vmax.f32 %v3170, %v3178
      %v3299 = vmax.f32 %v3171, %v3179
      %v3300 = vmax.f32 %v3172, %v3180
      %v3301 = vmax.f32 %v3173, %v3181
      %v3302 = vmax.f32 %v3174, %v3182
      %v3303 = vmax.f32 %v3175, %v3183
      %v3304 = vmax.f32 %v3176, %v3184
      %v3305 = vmax.f32 %v3177, %v3185
      %v3306 = vmax.f32 %v3186, %v3194
      %v3307 = vmax.f32 %v3187, %v3195
      %v3308 = vmax.f32 %v3188, %v3196
      %v3309 = vmax.f32 %v3189, %v3197
      %v3310 = vmax.f32 %v3190, %v3198
      %v3311 = vmax.f32 %v3191, %v3199
      %v3312 = vmax.f32 %v3192, %v3200
      %v3313 = vmax.f32 %v3193, %v3201
      %v3314 = vmax.f32 %v3202, %v3210
      %v3315 = vmax.f32 %v3203, %v3211
      %v3316 = vmax.f32 %v3204, %v3212
      %v3317 = vmax.f32 %v3205, %v3213
      %v3318 = vmax.f32 %v3206, %v3214
      %v3319 = vmax.f32 %v3207, %v3215
      %v3320 = vmax.f32 %v3208, %v3216
      %v3321 = vmax.f32 %v3209, %v3217
      %v3322 = vld [vmem:[%s3] sm:$0xff]
      %v3323 = vld [vmem:[%s3 + $0x8] sm:$0xff]
      %v3324 = vld [vmem:[%s3 + $0x10] sm:$0xff]
      %v3325 = vld [vmem:[%s3 + $0x18] sm:$0xff]
      %v3326 = vld [vmem:[%s3 + $0x20] sm:$0xff]
      %v3327 = vld [vmem:[%s3 + $0x28] sm:$0xff]
      %v3328 = vld [vmem:[%s3 + $0x30] sm:$0xff]
      %v3329 = vld [vmem:[%s3 + $0x38] sm:$0xff]
      %v3330 = vld [vmem:[%s3 + $0x40] sm:$0xff]
      %v3331 = vld [vmem:[%s3 + $0x48] sm:$0xff]
      %v3332 = vld [vmem:[%s3 + $0x50] sm:$0xff]
      %v3333 = vld [vmem:[%s3 + $0x58] sm:$0xff]
      %v3334 = vld [vmem:[%s3 + $0x60] sm:$0xff]
      %v3335 = vld [vmem:[%s3 + $0x68] sm:$0xff]
      %v3336 = vld [vmem:[%s3 + $0x70] sm:$0xff]
      %v3337 = vld [vmem:[%s3 + $0x78] sm:$0xff]
      %v3338 = vld [vmem:[%s3 + $0x80] sm:$0xff]
      %v3339 = vld [vmem:[%s3 + $0x88] sm:$0xff]
      %v3340 = vld [vmem:[%s3 + $0x90] sm:$0xff]
      %v3341 = vld [vmem:[%s3 + $0x98] sm:$0xff]
      %v3342 = vld [vmem:[%s3 + $0xa0] sm:$0xff]
      %v3343 = vld [vmem:[%s3 + $0xa8] sm:$0xff]
      %v3344 = vld [vmem:[%s3 + $0xb0] sm:$0xff]
      %v3345 = vld [vmem:[%s3 + $0xb8] sm:$0xff]
      %vm3346 = vcmask 523264
      %v3348 = vsel %vm3346, %v3219, 0
      %v3351 = vsel %vm3346, %v3221, 0
      %v3354 = vsel %vm3346, %v3223, 0
      %v3357 = vsel %vm3346, %v3225, 0
      %v3360 = vsel %vm3346, %v3227, 0
      %v3363 = vsel %vm3346, %v3229, 0
      %v3366 = vsel %vm3346, %v3231, 0
      %v3369 = vsel %vm3346, %v3233, 0
      %v3372 = vsel %vm3346, %v3235, 0
      %v3375 = vsel %vm3346, %v3237, 0
      %v3378 = vsel %vm3346, %v3239, 0
      %v3381 = vsel %vm3346, %v3241, 0
      %v3384 = vsel %vm3346, %v3243, 0
      %v3387 = vsel %vm3346, %v3245, 0
      %v3390 = vsel %vm3346, %v3247, 0
      %v3393 = vsel %vm3346, %v3249, 0
      %v3396 = vsel %vm3346, %v3251, 0
      %v3399 = vsel %vm3346, %v3253, 0
      %v3402 = vsel %vm3346, %v3255, 0
      %v3405 = vsel %vm3346, %v3257, 0
      %v3408 = vsel %vm3346, %v3259, 0
      %v3411 = vsel %vm3346, %v3261, 0
      %v3414 = vsel %vm3346, %v3263, 0
      %v3417 = vsel %vm3346, %v3265, 0
      %v3420 = vsel %vm3346, %v3267, 0
      %v3423 = vsel %vm3346, %v3269, 0
      %v3426 = vsel %vm3346, %v3271, 0
      %v3429 = vsel %vm3346, %v3273, 0
      %v3432 = vsel %vm3346, %v3275, 0
      %v3435 = vsel %vm3346, %v3277, 0
      %v3438 = vsel %vm3346, %v3279, 0
      %v3441 = vsel %vm3346, %v3281, 0
      %v3444 = vsel %vm3346, %v3283, 0
      %v3447 = vsel %vm3346, %v3285, 0
      %v3450 = vsel %vm3346, %v3287, 0
      %v3453 = vsel %vm3346, %v3289, 0
      %v3456 = vsel %vm3346, %v3291, 0
      %v3459 = vsel %vm3346, %v3293, 0
      %v3462 = vsel %vm3346, %v3295, 0
      %v3465 = vsel %vm3346, %v3297, 0
      %v3468 = vsel %vm3346, %v3299, 0
      %v3471 = vsel %vm3346, %v3301, 0
      %v3474 = vsel %vm3346, %v3303, 0
      %v3477 = vsel %vm3346, %v3305, 0
      %v3480 = vsel %vm3346, %v3307, 0
      %v3483 = vsel %vm3346, %v3309, 0
      %v3486 = vsel %vm3346, %v3311, 0
      %v3489 = vsel %vm3346, %v3313, 0
      %v3492 = vsel %vm3346, %v3315, 0
      %v3495 = vsel %vm3346, %v3317, 0
      %v3498 = vsel %vm3346, %v3319, 0
      %v3501 = vsel %vm3346, %v3321, 0
      %3503 = vmatprep.subr.mxu0 0.0
      %3504 = vmatpush1.msra.mxu0 %v3322
      %3505 = vmatprep.subr.mxu0 0.0
      %3506 = vmatpush1.msra.mxu0 %v3323
      %3507 = vmatprep.subr.mxu0 0.0
      %3508 = vmatpush1.msra.mxu0 %v3324
      %3509 = vmatprep.subr.mxu0 0.0
      %3510 = vmatpush1.msra.mxu0 %v3325
      %3511 = vmatprep.subr.mxu0 0.0
      %3512 = vmatpush1.msra.mxu0 %v3326
      %3513 = vmatprep.subr.mxu0 0.0
      %3514 = vmatpush1.msra.mxu0 %v3327
      %3515 = vmatprep.subr.mxu0 0.0
      %3516 = vmatpush1.msra.mxu0 %v3328
      %3517 = vmatprep.subr.mxu0 0.0
      %3518 = vmatpush1.msra.mxu0 %v3329
      %3519 = vmatprep.subr.mxu0 0.0
      %3520 = vmatpush1.msra.mxu0 %v3330
      %3521 = vmatprep.subr.mxu0 0.0
      %3522 = vmatpush1.msra.mxu0 %v3331
      %3523 = vmatprep.subr.mxu0 0.0
      %3524 = vmatpush1.msra.mxu0 %v3332
      %3525 = vmatprep.subr.mxu0 0.0
      %3526 = vmatpush1.msra.mxu0 %v3333
      %3527 = vmatprep.subr.mxu0 0.0
      %3528 = vmatpush1.msra.mxu0 %v3334
      %3529 = vmatprep.subr.mxu0 0.0
      %3530 = vmatpush1.msra.mxu0 %v3335
      %3531 = vmatprep.subr.mxu0 0.0
      %3532 = vmatpush1.msra.mxu0 %v3336
      %3533 = vmatprep.subr.mxu0 0.0
      %3534 = vmatpush1.msra.mxu0 %v3337
      %3535 = vmatprep.subr.mxu0 0.0
      %3536 = vmatpush1.msra.mxu0 %v3338
      %3537 = vmatprep.subr.mxu0 0.0
      %3538 = vmatpush1.msra.mxu0 %v3339
      %3539 = vmatprep.subr.mxu0 0.0
      %3540 = vmatpush1.msra.mxu0 %v3340
      %3541 = vmatprep.subr.mxu0 0.0
      %3542 = vmatpush1.msra.mxu0 %v3341
      %3543 = vmatprep.subr.mxu0 0.0
      %3544 = vmatpush1.msra.mxu0 %v3342
      %3545 = vmatprep.subr.mxu0 0.0
      %3546 = vmatpush1.msra.mxu0 %v3343
      %3547 = vmatprep.subr.mxu0 0.0
      %3548 = vmatpush1.msra.mxu0 %v3344
      %3549 = vmatprep.subr.mxu0 0.0
      %3550 = vmatpush1.msra.mxu0 %v3345
      %3551 = vmatprep.subr.mxu0 0.0
      %3552 = vmatpush1.msra.mxu0 0.0
      %3553 = vmatprep.subr.mxu0 0.0
      %3554 = vmatpush1.msra.mxu0 0.0
      %3555 = vmatprep.subr.mxu0 0.0
      %3556 = vmatpush1.msra.mxu0 0.0
      %3557 = vmatprep.subr.mxu0 0.0
      %3558 = vmatpush1.msra.mxu0 0.0
      %3559 = vmatprep.subr.mxu0 0.0
      %3560 = vmatpush1.msra.mxu0 0.0
      %3561 = vmatprep.subr.mxu0 0.0
      %3562 = vmatpush1.msra.mxu0 0.0
      %3563 = vmatprep.subr.mxu0 0.0
      %3564 = vmatpush1.msra.mxu0 0.0
      %3565 = vmatprep.subr.mxu0 0.0
      %3566 = vmatpush1.msra.mxu0 0.0
      %3567 = vmatprep.mubr.f32.mxu0 %v3348
      %3568 = vmatmul.mubr.f32.gmra.mrb[0].mxu0 %v3218
      %v3569 = vpop.f32.mrb[0].mxu0
      %v3570 = vadd.f32 0.0, %v3569
      %v3571 = vpop.f32.mrb[0].mxu0
      %3572 = vmatprep.mubr.f32.mxu0 %v3351
      %3573 = vmatmul.mubr.f32.gmra.mrb[0].mxu0 %v3220
      %v3574 = vpop.f32.mrb[0].mxu0
      %v3575 = vadd.f32 0.0, %v3574
      %v3576 = vpop.f32.mrb[0].mxu0
      %3577 = vmatprep.mubr.f32.mxu0 %v3354
      %3578 = vmatmul.mubr.f32.gmra.mrb[0].mxu0 %v3222
      %v3579 = vpop.f32.mrb[0].mxu0
      %v3580 = vadd.f32 0.0, %v3579
      %v3581 = vpop.f32.mrb[0].mxu0
      %3582 = vmatprep.mubr.f32.mxu0 %v3357
      %3583 = vmatmul.mubr.f32.gmra.mrb[0].mxu0 %v3224
      %v3584 = vpop.f32.mrb[0].mxu0
      %v3585 = vadd.f32 0.0, %v3584
      %v3586 = vpop.f32.mrb[0].mxu0
      %3587 = vmatprep.mubr.f32.mxu0 %v3360
      %3588 = vmatmul.mubr.f32.gmra.mrb[0].mxu0 %v3226
      %v3589 = vpop.f32.mrb[0].mxu0
      %v3590 = vadd.f32 0.0, %v3589
      %v3591 = vpop.f32.mrb[0].mxu0
      %3592 = vmatprep.mubr.f32.mxu0 %v3363
      %3593 = vmatmul.mubr.f32.gmra.mrb[0].mxu0 %v3228
      %v3594 = vpop.f32.mrb[0].mxu0
      %v3595 = vadd.f32 0.0, %v3594
      %v3596 = vpop.f32.mrb[0].mxu0
      %3597 = vmatprep.mubr.f32.mxu0 %v3366
      %3598 = vmatmul.mubr.f32.gmra.mrb[0].mxu0 %v3230
      %v3599 = vpop.f32.mrb[0].mxu0
      %v3600 = vadd.f32 0.0, %v3599
      %v3601 = vpop.f32.mrb[0].mxu0
      %3602 = vmatprep.mubr.f32.mxu0 %v3369
      %3603 = vmatmul.mubr.f32.gmra.mrb[0].mxu0 %v3232
      %v3604 = vpop.f32.mrb[0].mxu0
      %v3605 = vadd.f32 0.0, %v3604
      %v3606 = vpop.f32.mrb[0].mxu0
      %3607 = vmatprep.mubr.f32.mxu0 %v3372
      %3608 = vmatmul.mubr.f32.gmra.mrb[0].mxu0 %v3234
      %v3609 = vpop.f32.mrb[0].mxu0
      %v3610 = vadd.f32 0.0, %v3609
      %v3611 = vpop.f32.mrb[0].mxu0
      %3612 = vmatprep.mubr.f32.mxu0 %v3375
      %3613 = vmatmul.mubr.f32.gmra.mrb[0].mxu0 %v3236
      %v3614 = vpop.f32.mrb[0].mxu0
      %v3615 = vadd.f32 0.0, %v3614
      %v3616 = vpop.f32.mrb[0].mxu0
      %3617 = vmatprep.mubr.f32.mxu0 %v3378
      %3618 = vmatmul.mubr.f32.gmra.mrb[0].mxu0 %v3238
      %v3619 = vpop.f32.mrb[0].mxu0
      %v3620 = vadd.f32 0.0, %v3619
      %v3621 = vpop.f32.mrb[0].mxu0
      %3622 = vmatprep.mubr.f32.mxu0 %v3381
      %3623 = vmatmul.mubr.f32.gmra.mrb[0].mxu0 %v3240
      %v3624 = vpop.f32.mrb[0].mxu0
      %v3625 = vadd.f32 0.0, %v3624
      %v3626 = vpop.f32.mrb[0].mxu0
      %3627 = vmatprep.mubr.f32.mxu0 %v3384
      %3628 = vmatmul.mubr.f32.gmra.mrb[0].mxu0 %v3242
      %v3629 = vpop.f32.mrb[0].mxu0
      %v3630 = vadd.f32 0.0, %v3629
      %v3631 = vpop.f32.mrb[0].mxu0
      %3632 = vmatprep.mubr.f32.mxu0 %v3387
      %3633 = vmatmul.mubr.f32.gmra.mrb[0].mxu0 %v3244
      %v3634 = vpop.f32.mrb[0].mxu0
      %v3635 = vadd.f32 0.0, %v3634
      %v3636 = vpop.f32.mrb[0].mxu0
      %3637 = vmatprep.mubr.f32.mxu0 %v3390
      %3638 = vmatmul.mubr.f32.gmra.mrb[0].mxu0 %v3246
      %v3639 = vpop.f32.mrb[0].mxu0
      %v3640 = vadd.f32 0.0, %v3639
      %v3641 = vpop.f32.mrb[0].mxu0
      %3642 = vmatprep.mubr.f32.mxu0 %v3393
      %3643 = vmatmul.mubr.f32.gmra.mrb[0].mxu0 %v3248
      %v3644 = vpop.f32.mrb[0].mxu0
      %v3645 = vadd.f32 0.0, %v3644
      %v3646 = vpop.f32.mrb[0].mxu0
      %3647 = vmatprep.mubr.f32.mxu0 %v3396
      %3648 = vmatmul.mubr.f32.gmra.mrb[0].mxu0 %v3250
      %v3649 = vpop.f32.mrb[0].mxu0
      %v3650 = vadd.f32 0.0, %v3649
      %v3651 = vpop.f32.mrb[0].mxu0
      %3652 = vmatprep.mubr.f32.mxu0 %v3399
      %3653 = vmatmul.mubr.f32.gmra.mrb[0].mxu0 %v3252
      %v3654 = vpop.f32.mrb[0].mxu0
      %v3655 = vadd.f32 0.0, %v3654
      %v3656 = vpop.f32.mrb[0].mxu0
      %3657 = vmatprep.mubr.f32.mxu0 %v3402
      %3658 = vmatmul.mubr.f32.gmra.mrb[0].mxu0 %v3254
      %v3659 = vpop.f32.mrb[0].mxu0
      %v3660 = vadd.f32 0.0, %v3659
      %v3661 = vpop.f32.mrb[0].mxu0
      %3662 = vmatprep.mubr.f32.mxu0 %v3405
      %3663 = vmatmul.mubr.f32.gmra.mrb[0].mxu0 %v3256
      %v3664 = vpop.f32.mrb[0].mxu0
      %v3665 = vadd.f32 0.0, %v3664
      %v3666 = vpop.f32.mrb[0].mxu0
      %3667 = vmatprep.mubr.f32.mxu0 %v3408
      %3668 = vmatmul.mubr.f32.gmra.mrb[0].mxu0 %v3258
      %v3669 = vpop.f32.mrb[0].mxu0
      %v3670 = vadd.f32 0.0, %v3669
      %v3671 = vpop.f32.mrb[0].mxu0
      %3672 = vmatprep.mubr.f32.mxu0 %v3411
      %3673 = vmatmul.mubr.f32.gmra.mrb[0].mxu0 %v3260
      %v3674 = vpop.f32.mrb[0].mxu0
      %v3675 = vadd.f32 0.0, %v3674
      %v3676 = vpop.f32.mrb[0].mxu0
      %3677 = vmatprep.mubr.f32.mxu0 %v3414
      %3678 = vmatmul.mubr.f32.gmra.mrb[0].mxu0 %v3262
      %v3679 = vpop.f32.mrb[0].mxu0
      %v3680 = vadd.f32 0.0, %v3679
      %v3681 = vpop.f32.mrb[0].mxu0
      %3682 = vmatprep.mubr.f32.mxu0 %v3417
      %3683 = vmatmul.mubr.f32.gmra.mrb[0].mxu0 %v3264
      %v3684 = vpop.f32.mrb[0].mxu0
      %v3685 = vadd.f32 0.0, %v3684
      %v3686 = vpop.f32.mrb[0].mxu0
      %3687 = vmatprep.mubr.f32.mxu0 %v3420
      %3688 = vmatmul.mubr.f32.gmra.mrb[0].mxu0 %v3266
      %v3689 = vpop.f32.mrb[0].mxu0
      %v3690 = vadd.f32 0.0, %v3689
      %v3691 = vpop.f32.mrb[0].mxu0
      %3692 = vmatprep.mubr.f32.mxu0 %v3423
      %3693 = vmatmul.mubr.f32.gmra.mrb[0].mxu0 %v3268
      %v3694 = vpop.f32.mrb[0].mxu0
      %v3695 = vadd.f32 0.0, %v3694
      %v3696 = vpop.f32.mrb[0].mxu0
      %3697 = vmatprep.mubr.f32.mxu0 %v3426
      %3698 = vmatmul.mubr.f32.gmra.mrb[0].mxu0 %v3270
      %v3699 = vpop.f32.mrb[0].mxu0
      %v3700 = vadd.f32 0.0, %v3699
      %v3701 = vpop.f32.mrb[0].mxu0
      %3702 = vmatprep.mubr.f32.mxu0 %v3429
      %3703 = vmatmul.mubr.f32.gmra.mrb[0].mxu0 %v3272
      %v3704 = vpop.f32.mrb[0].mxu0
      %v3705 = vadd.f32 0.0, %v3704
      %v3706 = vpop.f32.mrb[0].mxu0
      %3707 = vmatprep.mubr.f32.mxu0 %v3432
      %3708 = vmatmul.mubr.f32.gmra.mrb[0].mxu0 %v3274
      %v3709 = vpop.f32.mrb[0].mxu0
      %v3710 = vadd.f32 0.0, %v3709
      %v3711 = vpop.f32.mrb[0].mxu0
      %3712 = vmatprep.mubr.f32.mxu0 %v3435
      %3713 = vmatmul.mubr.f32.gmra.mrb[0].mxu0 %v3276
      %v3714 = vpop.f32.mrb[0].mxu0
      %v3715 = vadd.f32 0.0, %v3714
      %v3716 = vpop.f32.mrb[0].mxu0
      %3717 = vmatprep.mubr.f32.mxu0 %v3438
      %3718 = vmatmul.mubr.f32.gmra.mrb[0].mxu0 %v3278
      %v3719 = vpop.f32.mrb[0].mxu0
      %v3720 = vadd.f32 0.0, %v3719
      %v3721 = vpop.f32.mrb[0].mxu0
      %3722 = vmatprep.mubr.f32.mxu0 %v3441
      %3723 = vmatmul.mubr.f32.gmra.mrb[0].mxu0 %v3280
      %v3724 = vpop.f32.mrb[0].mxu0
      %v3725 = vadd.f32 0.0, %v3724
      %v3726 = vpop.f32.mrb[0].mxu0
      %3727 = vmatprep.mubr.f32.mxu0 %v3444
      %3728 = vmatmul.mubr.f32.gmra.mrb[0].mxu0 %v3282
      %v3729 = vpop.f32.mrb[0].mxu0
      %v3730 = vadd.f32 0.0, %v3729
      %v3731 = vpop.f32.mrb[0].mxu0
      %3732 = vmatprep.mubr.f32.mxu0 %v3447
      %3733 = vmatmul.mubr.f32.gmra.mrb[0].mxu0 %v3284
      %v3734 = vpop.f32.mrb[0].mxu0
      %v3735 = vadd.f32 0.0, %v3734
      %v3736 = vpop.f32.mrb[0].mxu0
      %3737 = vmatprep.mubr.f32.mxu0 %v3450
      %3738 = vmatmul.mubr.f32.gmra.mrb[0].mxu0 %v3286
      %v3739 = vpop.f32.mrb[0].mxu0
      %v3740 = vadd.f32 0.0, %v3739
      %v3741 = vpop.f32.mrb[0].mxu0
      %3742 = vmatprep.mubr.f32.mxu0 %v3453
      %3743 = vmatmul.mubr.f32.gmra.mrb[0].mxu0 %v3288
      %v3744 = vpop.f32.mrb[0].mxu0
      %v3745 = vadd.f32 0.0, %v3744
      %v3746 = vpop.f32.mrb[0].mxu0
      %3747 = vmatprep.mubr.f32.mxu0 %v3456
      %3748 = vmatmul.mubr.f32.gmra.mrb[0].mxu0 %v3290
      %v3749 = vpop.f32.mrb[0].mxu0
      %v3750 = vadd.f32 0.0, %v3749
      %v3751 = vpop.f32.mrb[0].mxu0
      %3752 = vmatprep.mubr.f32.mxu0 %v3459
      %3753 = vmatmul.mubr.f32.gmra.mrb[0].mxu0 %v3292
      %v3754 = vpop.f32.mrb[0].mxu0
      %v3755 = vadd.f32 0.0, %v3754
      %v3756 = vpop.f32.mrb[0].mxu0
      %3757 = vmatprep.mubr.f32.mxu0 %v3462
      %3758 = vmatmul.mubr.f32.gmra.mrb[0].mxu0 %v3294
      %v3759 = vpop.f32.mrb[0].mxu0
      %v3760 = vadd.f32 0.0, %v3759
      %v3761 = vpop.f32.mrb[0].mxu0
      %3762 = vmatprep.mubr.f32.mxu0 %v3465
      %3763 = vmatmul.mubr.f32.gmra.mrb[0].mxu0 %v3296
      %v3764 = vpop.f32.mrb[0].mxu0
      %v3765 = vadd.f32 0.0, %v3764
      %v3766 = vpop.f32.mrb[0].mxu0
      %3767 = vmatprep.mubr.f32.mxu0 %v3468
      %3768 = vmatmul.mubr.f32.gmra.mrb[0].mxu0 %v3298
      %v3769 = vpop.f32.mrb[0].mxu0
      %v3770 = vadd.f32 0.0, %v3769
      %v3771 = vpop.f32.mrb[0].mxu0
      %3772 = vmatprep.mubr.f32.mxu0 %v3471
      %3773 = vmatmul.mubr.f32.gmra.mrb[0].mxu0 %v3300
      %v3774 = vpop.f32.mrb[0].mxu0
      %v3775 = vadd.f32 0.0, %v3774
      %v3776 = vpop.f32.mrb[0].mxu0
      %3777 = vmatprep.mubr.f32.mxu0 %v3474
      %3778 = vmatmul.mubr.f32.gmra.mrb[0].mxu0 %v3302
      %v3779 = vpop.f32.mrb[0].mxu0
      %v3780 = vadd.f32 0.0, %v3779
      %v3781 = vpop.f32.mrb[0].mxu0
      %3782 = vmatprep.mubr.f32.mxu0 %v3477
      %3783 = vmatmul.mubr.f32.gmra.mrb[0].mxu0 %v3304
      %v3784 = vpop.f32.mrb[0].mxu0
      %v3785 = vadd.f32 0.0, %v3784
      %v3786 = vpop.f32.mrb[0].mxu0
      %3787 = vmatprep.mubr.f32.mxu0 %v3480
      %3788 = vmatmul.mubr.f32.gmra.mrb[0].mxu0 %v3306
      %v3789 = vpop.f32.mrb[0].mxu0
      %v3790 = vadd.f32 0.0, %v3789
      %v3791 = vpop.f32.mrb[0].mxu0
      %3792 = vmatprep.mubr.f32.mxu0 %v3483
      %3793 = vmatmul.mubr.f32.gmra.mrb[0].mxu0 %v3308
      %v3794 = vpop.f32.mrb[0].mxu0
      %v3795 = vadd.f32 0.0, %v3794
      %v3796 = vpop.f32.mrb[0].mxu0
      %3797 = vmatprep.mubr.f32.mxu0 %v3486
      %3798 = vmatmul.mubr.f32.gmra.mrb[0].mxu0 %v3310
      %v3799 = vpop.f32.mrb[0].mxu0
      %v3800 = vadd.f32 0.0, %v3799
      %v3801 = vpop.f32.mrb[0].mxu0
      %3802 = vmatprep.mubr.f32.mxu0 %v3489
      %3803 = vmatmul.mubr.f32.gmra.mrb[0].mxu0 %v3312
      %v3804 = vpop.f32.mrb[0].mxu0
      %v3805 = vadd.f32 0.0, %v3804
      %v3806 = vpop.f32.mrb[0].mxu0
      %3807 = vmatprep.mubr.f32.mxu0 %v3492
      %3808 = vmatmul.mubr.f32.gmra.mrb[0].mxu0 %v3314
      %v3809 = vpop.f32.mrb[0].mxu0
      %v3810 = vadd.f32 0.0, %v3809
      %v3811 = vpop.f32.mrb[0].mxu0
      %3812 = vmatprep.mubr.f32.mxu0 %v3495
      %3813 = vmatmul.mubr.f32.gmra.mrb[0].mxu0 %v3316
      %v3814 = vpop.f32.mrb[0].mxu0
      %v3815 = vadd.f32 0.0, %v3814
      %v3816 = vpop.f32.mrb[0].mxu0
      %3817 = vmatprep.mubr.f32.mxu0 %v3498
      %3818 = vmatmul.mubr.f32.gmra.mrb[0].mxu0 %v3318
      %v3819 = vpop.f32.mrb[0].mxu0
      %v3820 = vadd.f32 0.0, %v3819
      %v3821 = vpop.f32.mrb[0].mxu0
      %3822 = vmatprep.mubr.f32.mxu0 %v3501
      %3823 = vmatmul.mubr.f32.gmra.mrb[0].mxu0 %v3320
      %v3824 = vpop.f32.mrb[0].mxu0
      %v3825 = vadd.f32 0.0, %v3824
      %v3826 = vpop.f32.mrb[0].mxu0
      %3827 = vdwg.mxu0
      %v3828 = vld [vmem:[%s4] sm:$0xff]
      %v3829 = vld [vmem:[%s4 + $0x8] sm:$0xff]
      %v3830 = vld [vmem:[%s4 + $0x10] sm:$0xff]
      %v3831 = vld [vmem:[%s4 + $0x18] sm:$0xff]
      %v3832 = vld [vmem:[%s4 + $0x20] sm:$0xff]
      %v3833 = vld [vmem:[%s4 + $0x28] sm:$0xff]
      %v3834 = vld [vmem:[%s4 + $0x30] sm:$0xff]
      %v3835 = vld [vmem:[%s4 + $0x38] sm:$0xff]
      %v3836 = vld [vmem:[%s4 + $0x40] sm:$0xff]
      %v3837 = vld [vmem:[%s4 + $0x48] sm:$0xff]
      %v3838 = vld [vmem:[%s4 + $0x50] sm:$0xff]
      %v3839 = vld [vmem:[%s4 + $0x58] sm:$0xff]
      %v3840 = vld [vmem:[%s4 + $0x60] sm:$0xff]
      %v3841 = vld [vmem:[%s4 + $0x68] sm:$0xff]
      %v3842 = vld [vmem:[%s4 + $0x70] sm:$0xff]
      %v3843 = vld [vmem:[%s4 + $0x78] sm:$0xff]
      %v3844 = vld [vmem:[%s4 + $0x80] sm:$0xff]
      %v3845 = vld [vmem:[%s4 + $0x88] sm:$0xff]
      %v3846 = vld [vmem:[%s4 + $0x90] sm:$0xff]
      %v3847 = vld [vmem:[%s4 + $0x98] sm:$0xff]
      %v3848 = vld [vmem:[%s4 + $0xa0] sm:$0xff]
      %v3849 = vld [vmem:[%s4 + $0xa8] sm:$0xff]
      %v3850 = vld [vmem:[%s4 + $0xb0] sm:$0xff]
      %v3851 = vld [vmem:[%s4 + $0xb8] sm:$0xff]
      %3852 = vmatprep.subr.mxu0 0.0
      %3853 = vmatpush1.msra.mxu0 %v3828
      %3854 = vmatprep.subr.mxu0 0.0
      %3855 = vmatpush1.msra.mxu0 %v3829
      %3856 = vmatprep.subr.mxu0 0.0
      %3857 = vmatpush1.msra.mxu0 %v3830
      %3858 = vmatprep.subr.mxu0 0.0
      %3859 = vmatpush1.msra.mxu0 %v3831
      %3860 = vmatprep.subr.mxu0 0.0
      %3861 = vmatpush1.msra.mxu0 %v3832
      %3862 = vmatprep.subr.mxu0 0.0
      %3863 = vmatpush1.msra.mxu0 %v3833
      %3864 = vmatprep.subr.mxu0 0.0
      %3865 = vmatpush1.msra.mxu0 %v3834
      %3866 = vmatprep.subr.mxu0 0.0
      %3867 = vmatpush1.msra.mxu0 %v3835
      %3868 = vmatprep.subr.mxu0 0.0
      %3869 = vmatpush1.msra.mxu0 %v3836
      %3870 = vmatprep.subr.mxu0 0.0
      %3871 = vmatpush1.msra.mxu0 %v3837
      %3872 = vmatprep.subr.mxu0 0.0
      %3873 = vmatpush1.msra.mxu0 %v3838
      %3874 = vmatprep.subr.mxu0 0.0
      %3875 = vmatpush1.msra.mxu0 %v3839
      %3876 = vmatprep.subr.mxu0 0.0
      %3877 = vmatpush1.msra.mxu0 %v3840
      %3878 = vmatprep.subr.mxu0 0.0
      %3879 = vmatpush1.msra.mxu0 %v3841
      %3880 = vmatprep.subr.mxu0 0.0
      %3881 = vmatpush1.msra.mxu0 %v3842
      %3882 = vmatprep.subr.mxu0 0.0
      %3883 = vmatpush1.msra.mxu0 %v3843
      %3884 = vmatprep.subr.mxu0 0.0
      %3885 = vmatpush1.msra.mxu0 %v3844
      %3886 = vmatprep.subr.mxu0 0.0
      %3887 = vmatpush1.msra.mxu0 %v3845
      %3888 = vmatprep.subr.mxu0 0.0
      %3889 = vmatpush1.msra.mxu0 %v3846
      %3890 = vmatprep.subr.mxu0 0.0
      %3891 = vmatpush1.msra.mxu0 %v3847
      %3892 = vmatprep.subr.mxu0 0.0
      %3893 = vmatpush1.msra.mxu0 %v3848
      %3894 = vmatprep.subr.mxu0 0.0
      %3895 = vmatpush1.msra.mxu0 %v3849
      %3896 = vmatprep.subr.mxu0 0.0
      %3897 = vmatpush1.msra.mxu0 %v3850
      %3898 = vmatprep.subr.mxu0 0.0
      %3899 = vmatpush1.msra.mxu0 %v3851
      %3900 = vmatprep.subr.mxu0 0.0
      %3901 = vmatpush1.msra.mxu0 0.0
      %3902 = vmatprep.subr.mxu0 0.0
      %3903 = vmatpush1.msra.mxu0 0.0
      %3904 = vmatprep.subr.mxu0 0.0
      %3905 = vmatpush1.msra.mxu0 0.0
      %3906 = vmatprep.subr.mxu0 0.0
      %3907 = vmatpush1.msra.mxu0 0.0
      %3908 = vmatprep.subr.mxu0 0.0
      %3909 = vmatpush1.msra.mxu0 0.0
      %3910 = vmatprep.subr.mxu0 0.0
      %3911 = vmatpush1.msra.mxu0 0.0
      %3912 = vmatprep.subr.mxu0 0.0
      %3913 = vmatpush1.msra.mxu0 0.0
      %3914 = vmatprep.subr.mxu0 0.0
      %3915 = vmatpush1.msra.mxu0 0.0
      %3916 = vmatprep.mubr.f32.mxu0 %v3348
      %3917 = vmatmul.mubr.f32.gmra.mrb[0].mxu0 %v3218
      %v3918 = vpop.f32.mrb[0].mxu0
      %v3919 = vadd.f32 0.0, %v3918
      %v3920 = vpop.f32.mrb[0].mxu0
      %3921 = vmatprep.mubr.f32.mxu0 %v3351
      %3922 = vmatmul.mubr.f32.gmra.mrb[0].mxu0 %v3220
      %v3923 = vpop.f32.mrb[0].mxu0
      %v3924 = vadd.f32 0.0, %v3923
      %v3925 = vpop.f32.mrb[0].mxu0
      %3926 = vmatprep.mubr.f32.mxu0 %v3354
      %3927 = vmatmul.mubr.f32.gmra.mrb[0].mxu0 %v3222
      %v3928 = vpop.f32.mrb[0].mxu0
      %v3929 = vadd.f32 0.0, %v3928
      %v3930 = vpop.f32.mrb[0].mxu0
      %3931 = vmatprep.mubr.f32.mxu0 %v3357
      %3932 = vmatmul.mubr.f32.gmra.mrb[0].mxu0 %v3224
      %v3933 = vpop.f32.mrb[0].mxu0
      %v3934 = vadd.f32 0.0, %v3933
      %v3935 = vpop.f32.mrb[0].mxu0
      %3936 = vmatprep.mubr.f32.mxu0 %v3360
      %3937 = vmatmul.mubr.f32.gmra.mrb[0].mxu0 %v3226
      %v3938 = vpop.f32.mrb[0].mxu0
      %v3939 = vadd.f32 0.0, %v3938
      %v3940 = vpop.f32.mrb[0].mxu0
      %3941 = vmatprep.mubr.f32.mxu0 %v3363
      %3942 = vmatmul.mubr.f32.gmra.mrb[0].mxu0 %v3228
      %v3943 = vpop.f32.mrb[0].mxu0
      %v3944 = vadd.f32 0.0, %v3943
      %v3945 = vpop.f32.mrb[0].mxu0
      %3946 = vmatprep.mubr.f32.mxu0 %v3366
      %3947 = vmatmul.mubr.f32.gmra.mrb[0].mxu0 %v3230
      %v3948 = vpop.f32.mrb[0].mxu0
      %v3949 = vadd.f32 0.0, %v3948
      %v3950 = vpop.f32.mrb[0].mxu0
      %3951 = vmatprep.mubr.f32.mxu0 %v3369
      %3952 = vmatmul.mubr.f32.gmra.mrb[0].mxu0 %v3232
      %v3953 = vpop.f32.mrb[0].mxu0
      %v3954 = vadd.f32 0.0, %v3953
      %v3955 = vpop.f32.mrb[0].mxu0
      %3956 = vmatprep.mubr.f32.mxu0 %v3372
      %3957 = vmatmul.mubr.f32.gmra.mrb[0].mxu0 %v3234
      %v3958 = vpop.f32.mrb[0].mxu0
      %v3959 = vadd.f32 0.0, %v3958
      %v3960 = vpop.f32.mrb[0].mxu0
      %3961 = vmatprep.mubr.f32.mxu0 %v3375
      %3962 = vmatmul.mubr.f32.gmra.mrb[0].mxu0 %v3236
      %v3963 = vpop.f32.mrb[0].mxu0
      %v3964 = vadd.f32 0.0, %v3963
      %v3965 = vpop.f32.mrb[0].mxu0
      %3966 = vmatprep.mubr.f32.mxu0 %v3378
      %3967 = vmatmul.mubr.f32.gmra.mrb[0].mxu0 %v3238
      %v3968 = vpop.f32.mrb[0].mxu0
      %v3969 = vadd.f32 0.0, %v3968
      %v3970 = vpop.f32.mrb[0].mxu0
      %3971 = vmatprep.mubr.f32.mxu0 %v3381
      %3972 = vmatmul.mubr.f32.gmra.mrb[0].mxu0 %v3240
      %v3973 = vpop.f32.mrb[0].mxu0
      %v3974 = vadd.f32 0.0, %v3973
      %v3975 = vpop.f32.mrb[0].mxu0
      %3976 = vmatprep.mubr.f32.mxu0 %v3384
      %3977 = vmatmul.mubr.f32.gmra.mrb[0].mxu0 %v3242
      %v3978 = vpop.f32.mrb[0].mxu0
      %v3979 = vadd.f32 0.0, %v3978
      %v3980 = vpop.f32.mrb[0].mxu0
      %3981 = vmatprep.mubr.f32.mxu0 %v3387
      %3982 = vmatmul.mubr.f32.gmra.mrb[0].mxu0 %v3244
      %v3983 = vpop.f32.mrb[0].mxu0
      %v3984 = vadd.f32 0.0, %v3983
      %v3985 = vpop.f32.mrb[0].mxu0
      %3986 = vmatprep.mubr.f32.mxu0 %v3390
      %3987 = vmatmul.mubr.f32.gmra.mrb[0].mxu0 %v3246
      %v3988 = vpop.f32.mrb[0].mxu0
      %v3989 = vadd.f32 0.0, %v3988
      %v3990 = vpop.f32.mrb[0].mxu0
      %3991 = vmatprep.mubr.f32.mxu0 %v3393
      %3992 = vmatmul.mubr.f32.gmra.mrb[0].mxu0 %v3248
      %v3993 = vpop.f32.mrb[0].mxu0
      %v3994 = vadd.f32 0.0, %v3993
      %v3995 = vpop.f32.mrb[0].mxu0
      %3996 = vmatprep.mubr.f32.mxu0 %v3396
      %3997 = vmatmul.mubr.f32.gmra.mrb[0].mxu0 %v3250
      %v3998 = vpop.f32.mrb[0].mxu0
      %v3999 = vadd.f32 0.0, %v3998
      %v4000 = vpop.f32.mrb[0].mxu0
      %4001 = vmatprep.mubr.f32.mxu0 %v3399
      %4002 = vmatmul.mubr.f32.gmra.mrb[0].mxu0 %v3252
      %v4003 = vpop.f32.mrb[0].mxu0
      %v4004 = vadd.f32 0.0, %v4003
      %v4005 = vpop.f32.mrb[0].mxu0
      %4006 = vmatprep.mubr.f32.mxu0 %v3402
      %4007 = vmatmul.mubr.f32.gmra.mrb[0].mxu0 %v3254
      %v4008 = vpop.f32.mrb[0].mxu0
      %v4009 = vadd.f32 0.0, %v4008
      %v4010 = vpop.f32.mrb[0].mxu0
      %4011 = vmatprep.mubr.f32.mxu0 %v3405
      %4012 = vmatmul.mubr.f32.gmra.mrb[0].mxu0 %v3256
      %v4013 = vpop.f32.mrb[0].mxu0
      %v4014 = vadd.f32 0.0, %v4013
      %v4015 = vpop.f32.mrb[0].mxu0
      %4016 = vmatprep.mubr.f32.mxu0 %v3408
      %4017 = vmatmul.mubr.f32.gmra.mrb[0].mxu0 %v3258
      %v4018 = vpop.f32.mrb[0].mxu0
      %v4019 = vadd.f32 0.0, %v4018
      %v4020 = vpop.f32.mrb[0].mxu0
      %4021 = vmatprep.mubr.f32.mxu0 %v3411
      %4022 = vmatmul.mubr.f32.gmra.mrb[0].mxu0 %v3260
      %v4023 = vpop.f32.mrb[0].mxu0
      %v4024 = vadd.f32 0.0, %v4023
      %v4025 = vpop.f32.mrb[0].mxu0
      %4026 = vmatprep.mubr.f32.mxu0 %v3414
      %4027 = vmatmul.mubr.f32.gmra.mrb[0].mxu0 %v3262
      %v4028 = vpop.f32.mrb[0].mxu0
      %v4029 = vadd.f32 0.0, %v4028
      %v4030 = vpop.f32.mrb[0].mxu0
      %4031 = vmatprep.mubr.f32.mxu0 %v3417
      %4032 = vmatmul.mubr.f32.gmra.mrb[0].mxu0 %v3264
      %v4033 = vpop.f32.mrb[0].mxu0
      %v4034 = vadd.f32 0.0, %v4033
      %v4035 = vpop.f32.mrb[0].mxu0
      %4036 = vmatprep.mubr.f32.mxu0 %v3420
      %4037 = vmatmul.mubr.f32.gmra.mrb[0].mxu0 %v3266
      %v4038 = vpop.f32.mrb[0].mxu0
      %v4039 = vadd.f32 0.0, %v4038
      %v4040 = vpop.f32.mrb[0].mxu0
      %4041 = vmatprep.mubr.f32.mxu0 %v3423
      %4042 = vmatmul.mubr.f32.gmra.mrb[0].mxu0 %v3268
      %v4043 = vpop.f32.mrb[0].mxu0
      %v4044 = vadd.f32 0.0, %v4043
      %v4045 = vpop.f32.mrb[0].mxu0
      %4046 = vmatprep.mubr.f32.mxu0 %v3426
      %4047 = vmatmul.mubr.f32.gmra.mrb[0].mxu0 %v3270
      %v4048 = vpop.f32.mrb[0].mxu0
      %v4049 = vadd.f32 0.0, %v4048
      %v4050 = vpop.f32.mrb[0].mxu0
      %4051 = vmatprep.mubr.f32.mxu0 %v3429
      %4052 = vmatmul.mubr.f32.gmra.mrb[0].mxu0 %v3272
      %v4053 = vpop.f32.mrb[0].mxu0
      %v4054 = vadd.f32 0.0, %v4053
      %v4055 = vpop.f32.mrb[0].mxu0
      %4056 = vmatprep.mubr.f32.mxu0 %v3432
      %4057 = vmatmul.mubr.f32.gmra.mrb[0].mxu0 %v3274
      %v4058 = vpop.f32.mrb[0].mxu0
      %v4059 = vadd.f32 0.0, %v4058
      %v4060 = vpop.f32.mrb[0].mxu0
      %4061 = vmatprep.mubr.f32.mxu0 %v3435
      %4062 = vmatmul.mubr.f32.gmra.mrb[0].mxu0 %v3276
      %v4063 = vpop.f32.mrb[0].mxu0
      %v4064 = vadd.f32 0.0, %v4063
      %v4065 = vpop.f32.mrb[0].mxu0
      %4066 = vmatprep.mubr.f32.mxu0 %v3438
      %4067 = vmatmul.mubr.f32.gmra.mrb[0].mxu0 %v3278
      %v4068 = vpop.f32.mrb[0].mxu0
      %v4069 = vadd.f32 0.0, %v4068
      %v4070 = vpop.f32.mrb[0].mxu0
      %4071 = vmatprep.mubr.f32.mxu0 %v3441
      %4072 = vmatmul.mubr.f32.gmra.mrb[0].mxu0 %v3280
      %v4073 = vpop.f32.mrb[0].mxu0
      %v4074 = vadd.f32 0.0, %v4073
      %v4075 = vpop.f32.mrb[0].mxu0
      %4076 = vmatprep.mubr.f32.mxu0 %v3444
      %4077 = vmatmul.mubr.f32.gmra.mrb[0].mxu0 %v3282
      %v4078 = vpop.f32.mrb[0].mxu0
      %v4079 = vadd.f32 0.0, %v4078
      %v4080 = vpop.f32.mrb[0].mxu0
      %4081 = vmatprep.mubr.f32.mxu0 %v3447
      %4082 = vmatmul.mubr.f32.gmra.mrb[0].mxu0 %v3284
      %v4083 = vpop.f32.mrb[0].mxu0
      %v4084 = vadd.f32 0.0, %v4083
      %v4085 = vpop.f32.mrb[0].mxu0
      %4086 = vmatprep.mubr.f32.mxu0 %v3450
      %4087 = vmatmul.mubr.f32.gmra.mrb[0].mxu0 %v3286
      %v4088 = vpop.f32.mrb[0].mxu0
      %v4089 = vadd.f32 0.0, %v4088
      %v4090 = vpop.f32.mrb[0].mxu0
      %4091 = vmatprep.mubr.f32.mxu0 %v3453
      %4092 = vmatmul.mubr.f32.gmra.mrb[0].mxu0 %v3288
      %v4093 = vpop.f32.mrb[0].mxu0
      %v4094 = vadd.f32 0.0, %v4093
      %v4095 = vpop.f32.mrb[0].mxu0
      %4096 = vmatprep.mubr.f32.mxu0 %v3456
      %4097 = vmatmul.mubr.f32.gmra.mrb[0].mxu0 %v3290
      %v4098 = vpop.f32.mrb[0].mxu0
      %v4099 = vadd.f32 0.0, %v4098
      %v4100 = vpop.f32.mrb[0].mxu0
      %4101 = vmatprep.mubr.f32.mxu0 %v3459
      %4102 = vmatmul.mubr.f32.gmra.mrb[0].mxu0 %v3292
      %v4103 = vpop.f32.mrb[0].mxu0
      %v4104 = vadd.f32 0.0, %v4103
      %v4105 = vpop.f32.mrb[0].mxu0
      %4106 = vmatprep.mubr.f32.mxu0 %v3462
      %4107 = vmatmul.mubr.f32.gmra.mrb[0].mxu0 %v3294
      %v4108 = vpop.f32.mrb[0].mxu0
      %v4109 = vadd.f32 0.0, %v4108
      %v4110 = vpop.f32.mrb[0].mxu0
      %4111 = vmatprep.mubr.f32.mxu0 %v3465
      %4112 = vmatmul.mubr.f32.gmra.mrb[0].mxu0 %v3296
      %v4113 = vpop.f32.mrb[0].mxu0
      %v4114 = vadd.f32 0.0, %v4113
      %v4115 = vpop.f32.mrb[0].mxu0
      %4116 = vmatprep.mubr.f32.mxu0 %v3468
      %4117 = vmatmul.mubr.f32.gmra.mrb[0].mxu0 %v3298
      %v4118 = vpop.f32.mrb[0].mxu0
      %v4119 = vadd.f32 0.0, %v4118
      %v4120 = vpop.f32.mrb[0].mxu0
      %4121 = vmatprep.mubr.f32.mxu0 %v3471
      %4122 = vmatmul.mubr.f32.gmra.mrb[0].mxu0 %v3300
      %v4123 = vpop.f32.mrb[0].mxu0
      %v4124 = vadd.f32 0.0, %v4123
      %v4125 = vpop.f32.mrb[0].mxu0
      %4126 = vmatprep.mubr.f32.mxu0 %v3474
      %4127 = vmatmul.mubr.f32.gmra.mrb[0].mxu0 %v3302
      %v4128 = vpop.f32.mrb[0].mxu0
      %v4129 = vadd.f32 0.0, %v4128
      %v4130 = vpop.f32.mrb[0].mxu0
      %4131 = vmatprep.mubr.f32.mxu0 %v3477
      %4132 = vmatmul.mubr.f32.gmra.mrb[0].mxu0 %v3304
      %v4133 = vpop.f32.mrb[0].mxu0
      %v4134 = vadd.f32 0.0, %v4133
      %v4135 = vpop.f32.mrb[0].mxu0
      %4136 = vmatprep.mubr.f32.mxu0 %v3480
      %4137 = vmatmul.mubr.f32.gmra.mrb[0].mxu0 %v3306
      %v4138 = vpop.f32.mrb[0].mxu0
      %v4139 = vadd.f32 0.0, %v4138
      %v4140 = vpop.f32.mrb[0].mxu0
      %4141 = vmatprep.mubr.f32.mxu0 %v3483
      %4142 = vmatmul.mubr.f32.gmra.mrb[0].mxu0 %v3308
      %v4143 = vpop.f32.mrb[0].mxu0
      %v4144 = vadd.f32 0.0, %v4143
      %v4145 = vpop.f32.mrb[0].mxu0
      %4146 = vmatprep.mubr.f32.mxu0 %v3486
      %4147 = vmatmul.mubr.f32.gmra.mrb[0].mxu0 %v3310
      %v4148 = vpop.f32.mrb[0].mxu0
      %v4149 = vadd.f32 0.0, %v4148
      %v4150 = vpop.f32.mrb[0].mxu0
      %4151 = vmatprep.mubr.f32.mxu0 %v3489
      %4152 = vmatmul.mubr.f32.gmra.mrb[0].mxu0 %v3312
      %v4153 = vpop.f32.mrb[0].mxu0
      %v4154 = vadd.f32 0.0, %v4153
      %v4155 = vpop.f32.mrb[0].mxu0
      %4156 = vmatprep.mubr.f32.mxu0 %v3492
      %4157 = vmatmul.mubr.f32.gmra.mrb[0].mxu0 %v3314
      %v4158 = vpop.f32.mrb[0].mxu0
      %v4159 = vadd.f32 0.0, %v4158
      %v4160 = vpop.f32.mrb[0].mxu0
      %4161 = vmatprep.mubr.f32.mxu0 %v3495
      %4162 = vmatmul.mubr.f32.gmra.mrb[0].mxu0 %v3316
      %v4163 = vpop.f32.mrb[0].mxu0
      %v4164 = vadd.f32 0.0, %v4163
      %v4165 = vpop.f32.mrb[0].mxu0
      %4166 = vmatprep.mubr.f32.mxu0 %v3498
      %4167 = vmatmul.mubr.f32.gmra.mrb[0].mxu0 %v3318
      %v4168 = vpop.f32.mrb[0].mxu0
      %v4169 = vadd.f32 0.0, %v4168
      %v4170 = vpop.f32.mrb[0].mxu0
      %4171 = vmatprep.mubr.f32.mxu0 %v3501
      %4172 = vmatmul.mubr.f32.gmra.mrb[0].mxu0 %v3320
      %v4173 = vpop.f32.mrb[0].mxu0
      %v4174 = vadd.f32 0.0, %v4173
      %v4175 = vpop.f32.mrb[0].mxu0
      %4176 = vdwg.mxu0
      %v4177 = vmax.f32 %v3570, %v3919
      %v4178 = vmax.f32 %v3575, %v3924
      %v4179 = vmax.f32 %v3580, %v3929
      %v4180 = vmax.f32 %v3585, %v3934
      %v4181 = vmax.f32 %v3590, %v3939
      %v4182 = vmax.f32 %v3595, %v3944
      %v4183 = vmax.f32 %v3600, %v3949
      %v4184 = vmax.f32 %v3605, %v3954
      %v4185 = vmax.f32 %v3610, %v3959
      %v4186 = vmax.f32 %v3615, %v3964
      %v4187 = vmax.f32 %v3620, %v3969
      %v4188 = vmax.f32 %v3625, %v3974
      %v4189 = vmax.f32 %v3630, %v3979
      %v4190 = vmax.f32 %v3635, %v3984
      %v4191 = vmax.f32 %v3640, %v3989
      %v4192 = vmax.f32 %v3645, %v3994
      %v4193 = vmax.f32 %v3650, %v3999
      %v4194 = vmax.f32 %v3655, %v4004
      %v4195 = vmax.f32 %v3660, %v4009
      %v4196 = vmax.f32 %v3665, %v4014
      %v4197 = vmax.f32 %v3670, %v4019
      %v4198 = vmax.f32 %v3675, %v4024
      %v4199 = vmax.f32 %v3680, %v4029
      %v4200 = vmax.f32 %v3685, %v4034
      %v4201 = vmax.f32 %v3690, %v4039
      %v4202 = vmax.f32 %v3695, %v4044
      %v4203 = vmax.f32 %v3700, %v4049
      %v4204 = vmax.f32 %v3705, %v4054
      %v4205 = vmax.f32 %v3710, %v4059
      %v4206 = vmax.f32 %v3715, %v4064
      %v4207 = vmax.f32 %v3720, %v4069
      %v4208 = vmax.f32 %v3725, %v4074
      %v4209 = vmax.f32 %v3730, %v4079
      %v4210 = vmax.f32 %v3735, %v4084
      %v4211 = vmax.f32 %v3740, %v4089
      %v4212 = vmax.f32 %v3745, %v4094
      %v4213 = vmax.f32 %v3750, %v4099
      %v4214 = vmax.f32 %v3755, %v4104
      %v4215 = vmax.f32 %v3760, %v4109
      %v4216 = vmax.f32 %v3765, %v4114
      %v4217 = vmax.f32 %v3770, %v4119
      %v4218 = vmax.f32 %v3775, %v4124
      %v4219 = vmax.f32 %v3780, %v4129
      %v4220 = vmax.f32 %v3785, %v4134
      %v4221 = vmax.f32 %v3790, %v4139
      %v4222 = vmax.f32 %v3795, %v4144
      %v4223 = vmax.f32 %v3800, %v4149
      %v4224 = vmax.f32 %v3805, %v4154
      %v4225 = vmax.f32 %v3810, %v4159
      %v4226 = vmax.f32 %v3815, %v4164
      %v4227 = vmax.f32 %v3820, %v4169
      %v4228 = vmax.f32 %v3825, %v4174
      %v4229 = vpack.c.bf16 %v4178, %v4177
      %v4230 = vpack.c.bf16 %v4180, %v4179
      %v4231 = vpack.c.bf16 %v4182, %v4181
      %v4232 = vpack.c.bf16 %v4184, %v4183
      %v4233 = vpack.c.bf16 %v4186, %v4185
      %v4234 = vpack.c.bf16 %v4188, %v4187
      %v4235 = vpack.c.bf16 %v4190, %v4189
      %v4236 = vpack.c.bf16 %v4192, %v4191
      %v4237 = vpack.c.bf16 %v4194, %v4193
      %v4238 = vpack.c.bf16 %v4196, %v4195
      %v4239 = vpack.c.bf16 %v4198, %v4197
      %v4240 = vpack.c.bf16 %v4200, %v4199
      %v4241 = vpack.c.bf16 %v4202, %v4201
      %v4242 = vpack.c.bf16 %v4204, %v4203
      %v4243 = vpack.c.bf16 %v4206, %v4205
      %v4244 = vpack.c.bf16 %v4208, %v4207
      %v4245 = vpack.c.bf16 %v4210, %v4209
      %v4246 = vpack.c.bf16 %v4212, %v4211
      %v4247 = vpack.c.bf16 %v4214, %v4213
      %v4248 = vpack.c.bf16 %v4216, %v4215
      %v4249 = vpack.c.bf16 %v4218, %v4217
      %v4250 = vpack.c.bf16 %v4220, %v4219
      %v4251 = vpack.c.bf16 %v4222, %v4221
      %v4252 = vpack.c.bf16 %v4224, %v4223
      %v4253 = vpack.c.bf16 %v4226, %v4225
      %v4254 = vpack.c.bf16 %v4228, %v4227
      %v4255 = vld [vmem:[%s5] sm:$0xff]
      %v4256 = vld [vmem:[%s5 + $0x8] sm:$0xff]
      %v4257 = vld [vmem:[%s5 + $0x10] sm:$0xff]
      %v4258 = vld [vmem:[%s5 + $0x18] sm:$0xff]
      %v4259 = vld [vmem:[%s5 + $0x20] sm:$0xff]
      %v4260 = vld [vmem:[%s5 + $0x28] sm:$0xff]
      %v4261 = vld [vmem:[%s5 + $0x30] sm:$0xff]
      %v4262 = vld [vmem:[%s5 + $0x38] sm:$0xff]
      %v4263 = vld [vmem:[%s5 + $0x40] sm:$0xff]
      %v4264 = vld [vmem:[%s5 + $0x48] sm:$0xff]
      %v4265 = vld [vmem:[%s5 + $0x50] sm:$0xff]
      %v4266 = vld [vmem:[%s5 + $0x58] sm:$0xff]
      %s4267 = scalar_lea.vmem %s5, 96
      %v4268 = vld [vmem:[%s4267] sm:$0xff]
      %v4269 = vld [vmem:[%s4267 + $0x8] sm:$0xff]
      %v4270 = vld [vmem:[%s4267 + $0x10] sm:$0xff]
      %v4271 = vld [vmem:[%s4267 + $0x18] sm:$0xff]
      %v4272 = vld [vmem:[%s4267 + $0x20] sm:$0xff]
      %v4273 = vld [vmem:[%s4267 + $0x28] sm:$0xff]
      %v4274 = vld [vmem:[%s4267 + $0x30] sm:$0xff]
      %v4275 = vld [vmem:[%s4267 + $0x38] sm:$0xff]
      %v4276 = vld [vmem:[%s4267 + $0x40] sm:$0xff]
      %v4277 = vld [vmem:[%s4267 + $0x48] sm:$0xff]
      %v4278 = vld [vmem:[%s4267 + $0x50] sm:$0xff]
      %v4279 = vld [vmem:[%s4267 + $0x58] sm:$0xff]
      %v4292 = vunpack.c.l.b16 %v4268
      %v4293 = vunpack.c.h.b16 %v4268
      %v4294 = vunpack.c.l.b16 %v4269
      %v4295 = vunpack.c.h.b16 %v4269
      %v4296 = vunpack.c.l.b16 %v4270
      %v4297 = vunpack.c.h.b16 %v4270
      %v4298 = vunpack.c.l.b16 %v4271
      %v4299 = vunpack.c.h.b16 %v4271
      %v4300 = vunpack.c.l.b16 %v4272
      %v4301 = vunpack.c.h.b16 %v4272
      %v4302 = vunpack.c.l.b16 %v4273
      %v4303 = vunpack.c.h.b16 %v4273
      %v4304 = vunpack.c.l.b16 %v4274
      %v4305 = vunpack.c.h.b16 %v4274
      %v4306 = vunpack.c.l.b16 %v4275
      %v4307 = vunpack.c.h.b16 %v4275
      %v4308 = vunpack.c.l.b16 %v4276
      %v4309 = vunpack.c.h.b16 %v4276
      %v4310 = vunpack.c.l.b16 %v4277
      %v4311 = vunpack.c.h.b16 %v4277
      %v4312 = vunpack.c.l.b16 %v4278
      %v4313 = vunpack.c.h.b16 %v4278
      %v4314 = vunpack.c.l.b16 %v4279
      %v4315 = vunpack.c.h.b16 %v4279
      %v4316 = vpack.c.b16 %v4294, %v4292
      %v4317 = vpack.c.b16 %v4295, %v4293
      %v4318 = vpack.c.b16 %v4298, %v4296
      %v4319 = vpack.c.b16 %v4299, %v4297
      %v4320 = vpack.c.b16 %v4302, %v4300
      %v4321 = vpack.c.b16 %v4303, %v4301
      %v4322 = vpack.c.b16 %v4306, %v4304
      %v4323 = vpack.c.b16 %v4307, %v4305
      %v4324 = vpack.c.b16 %v4310, %v4308
      %v4325 = vpack.c.b16 %v4311, %v4309
      %v4326 = vpack.c.b16 %v4314, %v4312
      %v4327 = vpack.c.b16 %v4315, %v4313
      %vm4340 = vcmask 785408
      %v4342 = vsel %vm4340, %v4231, 0
      %v4345 = vsel %vm4340, %v4232, 0
      %v4348 = vsel %vm4340, %v4233, 0
      %v4351 = vsel %vm4340, %v4234, 0
      %v4354 = vsel %vm4340, %v4235, 0
      %v4357 = vsel %vm4340, %v4236, 0
      %v4360 = vsel %vm4340, %v4237, 0
      %v4363 = vsel %vm4340, %v4238, 0
      %v4366 = vsel %vm4340, %v4239, 0
      %v4369 = vsel %vm4340, %v4240, 0
      %v4372 = vsel %vm4340, %v4241, 0
      %v4375 = vsel %vm4340, %v4242, 0
      %v4378 = vsel %vm4340, %v4243, 0
      %v4381 = vsel %vm4340, %v4244, 0
      %v4384 = vsel %vm4340, %v4245, 0
      %v4387 = vsel %vm4340, %v4246, 0
      %v4390 = vsel %vm4340, %v4247, 0
      %v4393 = vsel %vm4340, %v4248, 0
      %v4396 = vsel %vm4340, %v4249, 0
      %v4399 = vsel %vm4340, %v4250, 0
      %v4402 = vsel %vm4340, %v4251, 0
      %v4405 = vsel %vm4340, %v4252, 0
      %4407 = vmatprep.subr.bf16.mxu0 %v4317
      %4408 = vmatpush1.bf16.msra.mxu0 %v4316
      %4409 = vmatprep.subr.bf16.mxu0 %v4319
      %4410 = vmatpush1.bf16.msra.mxu0 %v4318
      %4411 = vmatprep.subr.bf16.mxu0 %v4321
      %4412 = vmatpush1.bf16.msra.mxu0 %v4320
      %4413 = vmatprep.subr.bf16.mxu0 %v4323
      %4414 = vmatpush1.bf16.msra.mxu0 %v4322
      %4415 = vmatprep.subr.bf16.mxu0 %v4325
      %4416 = vmatpush1.bf16.msra.mxu0 %v4324
      %4417 = vmatprep.subr.bf16.mxu0 %v4327
      %4418 = vmatpush1.bf16.msra.mxu0 %v4326
      %4419 = vmatprep.subr.bf16.mxu0 0
      %4420 = vmatpush1.bf16.msra.mxu0 0
      %4421 = vmatprep.subr.bf16.mxu0 0
      %4422 = vmatpush1.bf16.msra.mxu0 0
      %4423 = vmatprep.subr.bf16.mxu0 0
      %4424 = vmatpush1.bf16.msra.mxu0 0
      %4425 = vmatprep.subr.bf16.mxu0 0
      %4426 = vmatpush1.bf16.msra.mxu0 0
      %4427 = vmatprep.subr.bf16.mxu0 0
      %4428 = vmatpush1.bf16.msra.mxu0 0
      %4429 = vmatprep.subr.bf16.mxu0 0
      %4430 = vmatpush1.bf16.msra.mxu0 0
      %4431 = vmatprep.subr.bf16.mxu0 0
      %4432 = vmatpush1.bf16.msra.mxu0 0
      %4433 = vmatprep.subr.bf16.mxu0 0
      %4434 = vmatpush1.bf16.msra.mxu0 0
      %4435 = vmatprep.subr.bf16.mxu0 0
      %4436 = vmatpush1.bf16.msra.mxu0 0
      %4437 = vmatprep.subr.bf16.mxu0 0
      %4438 = vmatpush1.bf16.msra.mxu0 0
      %4439 = vmatprep.mubr.bf16.mxu0 0
      %4440 = vmatmul.mubr.bf16.gmra.mrb[0].mxu0 %v4342
      %v4441 = vpop.f32.mrb[0].mxu0
      %v4442 = vadd.f32 0.0, %v4441
      %v4443 = vpop.f32.mrb[0].mxu0
      %v4444 = vadd.f32 0.0, %v4443
      %v4445 = vpop.f32.mrb[0].mxu0
      %v4446 = vadd.f32 0.0, %v4445
      %v4447 = vpop.f32.mrb[0].mxu0
      %v4448 = vadd.f32 0.0, %v4447
      %4449 = vmatprep.mubr.bf16.mxu0 0
      %4450 = vmatmul.mubr.bf16.gmra.mrb[0].mxu0 %v4345
      %v4451 = vpop.f32.mrb[0].mxu0
      %v4452 = vadd.f32 0.0, %v4451
      %v4453 = vpop.f32.mrb[0].mxu0
      %v4454 = vadd.f32 0.0, %v4453
      %v4455 = vpop.f32.mrb[0].mxu0
      %v4456 = vadd.f32 0.0, %v4455
      %v4457 = vpop.f32.mrb[0].mxu0
      %v4458 = vadd.f32 0.0, %v4457
      %4459 = vmatprep.mubr.bf16.mxu0 0
      %4460 = vmatmul.mubr.bf16.gmra.mrb[0].mxu0 %v4348
      %v4461 = vpop.f32.mrb[0].mxu0
      %v4462 = vadd.f32 0.0, %v4461
      %v4463 = vpop.f32.mrb[0].mxu0
      %v4464 = vadd.f32 0.0, %v4463
      %v4465 = vpop.f32.mrb[0].mxu0
      %v4466 = vadd.f32 0.0, %v4465
      %v4467 = vpop.f32.mrb[0].mxu0
      %v4468 = vadd.f32 0.0, %v4467
      %4469 = vmatprep.mubr.bf16.mxu0 0
      %4470 = vmatmul.mubr.bf16.gmra.mrb[0].mxu0 %v4351
      %v4471 = vpop.f32.mrb[0].mxu0
      %v4472 = vadd.f32 0.0, %v4471
      %v4473 = vpop.f32.mrb[0].mxu0
      %v4474 = vadd.f32 0.0, %v4473
      %v4475 = vpop.f32.mrb[0].mxu0
      %v4476 = vadd.f32 0.0, %v4475
      %v4477 = vpop.f32.mrb[0].mxu0
      %v4478 = vadd.f32 0.0, %v4477
      %4479 = vmatprep.mubr.bf16.mxu0 0
      %4480 = vmatmul.mubr.bf16.gmra.mrb[0].mxu0 %v4354
      %v4481 = vpop.f32.mrb[0].mxu0
      %v4482 = vadd.f32 0.0, %v4481
      %v4483 = vpop.f32.mrb[0].mxu0
      %v4484 = vadd.f32 0.0, %v4483
      %v4485 = vpop.f32.mrb[0].mxu0
      %v4486 = vadd.f32 0.0, %v4485
      %v4487 = vpop.f32.mrb[0].mxu0
      %v4488 = vadd.f32 0.0, %v4487
      %4489 = vmatprep.mubr.bf16.mxu0 0
      %4490 = vmatmul.mubr.bf16.gmra.mrb[0].mxu0 %v4357
      %v4491 = vpop.f32.mrb[0].mxu0
      %v4492 = vadd.f32 0.0, %v4491
      %v4493 = vpop.f32.mrb[0].mxu0
      %v4494 = vadd.f32 0.0, %v4493
      %v4495 = vpop.f32.mrb[0].mxu0
      %v4496 = vadd.f32 0.0, %v4495
      %v4497 = vpop.f32.mrb[0].mxu0
      %v4498 = vadd.f32 0.0, %v4497
      %4499 = vmatprep.mubr.bf16.mxu0 0
      %4500 = vmatmul.mubr.bf16.gmra.mrb[0].mxu0 %v4360
      %v4501 = vpop.f32.mrb[0].mxu0
      %v4502 = vadd.f32 0.0, %v4501
      %v4503 = vpop.f32.mrb[0].mxu0
      %v4504 = vadd.f32 0.0, %v4503
      %v4505 = vpop.f32.mrb[0].mxu0
      %v4506 = vadd.f32 0.0, %v4505
      %v4507 = vpop.f32.mrb[0].mxu0
      %v4508 = vadd.f32 0.0, %v4507
      %4509 = vmatprep.mubr.bf16.mxu0 0
      %4510 = vmatmul.mubr.bf16.gmra.mrb[0].mxu0 %v4363
      %v4511 = vpop.f32.mrb[0].mxu0
      %v4512 = vadd.f32 0.0, %v4511
      %v4513 = vpop.f32.mrb[0].mxu0
      %v4514 = vadd.f32 0.0, %v4513
      %v4515 = vpop.f32.mrb[0].mxu0
      %v4516 = vadd.f32 0.0, %v4515
      %v4517 = vpop.f32.mrb[0].mxu0
      %v4518 = vadd.f32 0.0, %v4517
      %4519 = vmatprep.mubr.bf16.mxu0 0
      %4520 = vmatmul.mubr.bf16.gmra.mrb[0].mxu0 %v4366
      %v4521 = vpop.f32.mrb[0].mxu0
      %v4522 = vadd.f32 0.0, %v4521
      %v4523 = vpop.f32.mrb[0].mxu0
      %v4524 = vadd.f32 0.0, %v4523
      %v4525 = vpop.f32.mrb[0].mxu0
      %v4526 = vadd.f32 0.0, %v4525
      %v4527 = vpop.f32.mrb[0].mxu0
      %v4528 = vadd.f32 0.0, %v4527
      %4529 = vmatprep.mubr.bf16.mxu0 0
      %4530 = vmatmul.mubr.bf16.gmra.mrb[0].mxu0 %v4369
      %v4531 = vpop.f32.mrb[0].mxu0
      %v4532 = vadd.f32 0.0, %v4531
      %v4533 = vpop.f32.mrb[0].mxu0
      %v4534 = vadd.f32 0.0, %v4533
      %v4535 = vpop.f32.mrb[0].mxu0
      %v4536 = vadd.f32 0.0, %v4535
      %v4537 = vpop.f32.mrb[0].mxu0
      %v4538 = vadd.f32 0.0, %v4537
      %4539 = vmatprep.mubr.bf16.mxu0 0
      %4540 = vmatmul.mubr.bf16.gmra.mrb[0].mxu0 %v4372
      %v4541 = vpop.f32.mrb[0].mxu0
      %v4542 = vadd.f32 0.0, %v4541
      %v4543 = vpop.f32.mrb[0].mxu0
      %v4544 = vadd.f32 0.0, %v4543
      %v4545 = vpop.f32.mrb[0].mxu0
      %v4546 = vadd.f32 0.0, %v4545
      %v4547 = vpop.f32.mrb[0].mxu0
      %v4548 = vadd.f32 0.0, %v4547
      %4549 = vmatprep.mubr.bf16.mxu0 0
      %4550 = vmatmul.mubr.bf16.gmra.mrb[0].mxu0 %v4375
      %v4551 = vpop.f32.mrb[0].mxu0
      %v4552 = vadd.f32 0.0, %v4551
      %v4553 = vpop.f32.mrb[0].mxu0
      %v4554 = vadd.f32 0.0, %v4553
      %v4555 = vpop.f32.mrb[0].mxu0
      %v4556 = vadd.f32 0.0, %v4555
      %v4557 = vpop.f32.mrb[0].mxu0
      %v4558 = vadd.f32 0.0, %v4557
      %4559 = vmatprep.mubr.bf16.mxu0 0
      %4560 = vmatmul.mubr.bf16.gmra.mrb[0].mxu0 %v4378
      %v4561 = vpop.f32.mrb[0].mxu0
      %v4562 = vadd.f32 0.0, %v4561
      %v4563 = vpop.f32.mrb[0].mxu0
      %v4564 = vadd.f32 0.0, %v4563
      %v4565 = vpop.f32.mrb[0].mxu0
      %v4566 = vadd.f32 0.0, %v4565
      %v4567 = vpop.f32.mrb[0].mxu0
      %v4568 = vadd.f32 0.0, %v4567
      %4569 = vmatprep.mubr.bf16.mxu0 0
      %4570 = vmatmul.mubr.bf16.gmra.mrb[0].mxu0 %v4381
      %v4571 = vpop.f32.mrb[0].mxu0
      %v4572 = vadd.f32 0.0, %v4571
      %v4573 = vpop.f32.mrb[0].mxu0
      %v4574 = vadd.f32 0.0, %v4573
      %v4575 = vpop.f32.mrb[0].mxu0
      %v4576 = vadd.f32 0.0, %v4575
      %v4577 = vpop.f32.mrb[0].mxu0
      %v4578 = vadd.f32 0.0, %v4577
      %4579 = vmatprep.mubr.bf16.mxu0 0
      %4580 = vmatmul.mubr.bf16.gmra.mrb[0].mxu0 %v4384
      %v4581 = vpop.f32.mrb[0].mxu0
      %v4582 = vadd.f32 0.0, %v4581
      %v4583 = vpop.f32.mrb[0].mxu0
      %v4584 = vadd.f32 0.0, %v4583
      %v4585 = vpop.f32.mrb[0].mxu0
      %v4586 = vadd.f32 0.0, %v4585
      %v4587 = vpop.f32.mrb[0].mxu0
      %v4588 = vadd.f32 0.0, %v4587
      %4589 = vmatprep.mubr.bf16.mxu0 0
      %4590 = vmatmul.mubr.bf16.gmra.mrb[0].mxu0 %v4387
      %v4591 = vpop.f32.mrb[0].mxu0
      %v4592 = vadd.f32 0.0, %v4591
      %v4593 = vpop.f32.mrb[0].mxu0
      %v4594 = vadd.f32 0.0, %v4593
      %v4595 = vpop.f32.mrb[0].mxu0
      %v4596 = vadd.f32 0.0, %v4595
      %v4597 = vpop.f32.mrb[0].mxu0
      %v4598 = vadd.f32 0.0, %v4597
      %4599 = vmatprep.mubr.bf16.mxu0 0
      %4600 = vmatmul.mubr.bf16.gmra.mrb[0].mxu0 %v4390
      %v4601 = vpop.f32.mrb[0].mxu0
      %v4602 = vadd.f32 0.0, %v4601
      %v4603 = vpop.f32.mrb[0].mxu0
      %v4604 = vadd.f32 0.0, %v4603
      %v4605 = vpop.f32.mrb[0].mxu0
      %v4606 = vadd.f32 0.0, %v4605
      %v4607 = vpop.f32.mrb[0].mxu0
      %v4608 = vadd.f32 0.0, %v4607
      %4609 = vmatprep.mubr.bf16.mxu0 0
      %4610 = vmatmul.mubr.bf16.gmra.mrb[0].mxu0 %v4393
      %v4611 = vpop.f32.mrb[0].mxu0
      %v4612 = vadd.f32 0.0, %v4611
      %v4613 = vpop.f32.mrb[0].mxu0
      %v4614 = vadd.f32 0.0, %v4613
      %v4615 = vpop.f32.mrb[0].mxu0
      %v4616 = vadd.f32 0.0, %v4615
      %v4617 = vpop.f32.mrb[0].mxu0
      %v4618 = vadd.f32 0.0, %v4617
      %4619 = vmatprep.mubr.bf16.mxu0 0
      %4620 = vmatmul.mubr.bf16.gmra.mrb[0].mxu0 %v4396
      %v4621 = vpop.f32.mrb[0].mxu0
      %v4622 = vadd.f32 0.0, %v4621
      %v4623 = vpop.f32.mrb[0].mxu0
      %v4624 = vadd.f32 0.0, %v4623
      %v4625 = vpop.f32.mrb[0].mxu0
      %v4626 = vadd.f32 0.0, %v4625
      %v4627 = vpop.f32.mrb[0].mxu0
      %v4628 = vadd.f32 0.0, %v4627
      %4629 = vmatprep.mubr.bf16.mxu0 0
      %4630 = vmatmul.mubr.bf16.gmra.mrb[0].mxu0 %v4399
      %v4631 = vpop.f32.mrb[0].mxu0
      %v4632 = vadd.f32 0.0, %v4631
      %v4633 = vpop.f32.mrb[0].mxu0
      %v4634 = vadd.f32 0.0, %v4633
      %v4635 = vpop.f32.mrb[0].mxu0
      %v4636 = vadd.f32 0.0, %v4635
      %v4637 = vpop.f32.mrb[0].mxu0
      %v4638 = vadd.f32 0.0, %v4637
      %4639 = vmatprep.mubr.bf16.mxu0 0
      %4640 = vmatmul.mubr.bf16.gmra.mrb[0].mxu0 %v4402
      %v4641 = vpop.f32.mrb[0].mxu0
      %v4642 = vpop.f32.mrb[0].mxu0
      %v4643 = vpop.f32.mrb[0].mxu0
      %v4644 = vpop.f32.mrb[0].mxu0
      %4645 = vmatprep.mubr.bf16.mxu0 0
      %4646 = vmatmul.mubr.bf16.gmra.mrb[0].mxu0 %v4405
      %v4647 = vpop.f32.mrb[0].mxu0
      %v4648 = vpop.f32.mrb[0].mxu0
      %v4649 = vpop.f32.mrb[0].mxu0
      %v4650 = vpop.f32.mrb[0].mxu0
      %4651 = vdwg.mxu0
      %v4664 = vunpack.c.l.b16 %v4255
      %v4665 = vunpack.c.h.b16 %v4255
      %v4666 = vunpack.c.l.b16 %v4256
      %v4667 = vunpack.c.h.b16 %v4256
      %v4668 = vunpack.c.l.b16 %v4257
      %v4669 = vunpack.c.h.b16 %v4257
      %v4670 = vunpack.c.l.b16 %v4258
      %v4671 = vunpack.c.h.b16 %v4258
      %v4672 = vunpack.c.l.b16 %v4259
      %v4673 = vunpack.c.h.b16 %v4259
      %v4674 = vunpack.c.l.b16 %v4260
      %v4675 = vunpack.c.h.b16 %v4260
      %v4676 = vunpack.c.l.b16 %v4261
      %v4677 = vunpack.c.h.b16 %v4261
      %v4678 = vunpack.c.l.b16 %v4262
      %v4679 = vunpack.c.h.b16 %v4262
      %v4680 = vunpack.c.l.b16 %v4263
      %v4681 = vunpack.c.h.b16 %v4263
      %v4682 = vunpack.c.l.b16 %v4264
      %v4683 = vunpack.c.h.b16 %v4264
      %v4684 = vunpack.c.l.b16 %v4265
      %v4685 = vunpack.c.h.b16 %v4265
      %v4686 = vunpack.c.l.b16 %v4266
      %v4687 = vunpack.c.h.b16 %v4266
      %v4688 = vpack.c.b16 %v4666, %v4664
      %v4689 = vpack.c.b16 %v4667, %v4665
      %v4690 = vpack.c.b16 %v4670, %v4668
      %v4691 = vpack.c.b16 %v4671, %v4669
      %v4692 = vpack.c.b16 %v4674, %v4672
      %v4693 = vpack.c.b16 %v4675, %v4673
      %v4694 = vpack.c.b16 %v4678, %v4676
      %v4695 = vpack.c.b16 %v4679, %v4677
      %v4696 = vpack.c.b16 %v4682, %v4680
      %v4697 = vpack.c.b16 %v4683, %v4681
      %v4698 = vpack.c.b16 %v4686, %v4684
      %v4699 = vpack.c.b16 %v4687, %v4685
      %v4713 = vsel %vm4340, %v4229, 0
      %v4716 = vsel %vm4340, %v4230, 0
      %4718 = vmatprep.subr.bf16.mxu0 %v4689
      %4719 = vmatpush1.bf16.msra.mxu0 %v4688
      %4720 = vmatprep.subr.bf16.mxu0 %v4691
      %4721 = vmatpush1.bf16.msra.mxu0 %v4690
      %4722 = vmatprep.subr.bf16.mxu0 %v4693
      %4723 = vmatpush1.bf16.msra.mxu0 %v4692
      %4724 = vmatprep.subr.bf16.mxu0 %v4695
      %4725 = vmatpush1.bf16.msra.mxu0 %v4694
      %4726 = vmatprep.subr.bf16.mxu0 %v4697
      %4727 = vmatpush1.bf16.msra.mxu0 %v4696
      %4728 = vmatprep.subr.bf16.mxu0 %v4699
      %4729 = vmatpush1.bf16.msra.mxu0 %v4698
      %4730 = vmatprep.subr.bf16.mxu0 0
      %4731 = vmatpush1.bf16.msra.mxu0 0
      %4732 = vmatprep.subr.bf16.mxu0 0
      %4733 = vmatpush1.bf16.msra.mxu0 0
      %4734 = vmatprep.subr.bf16.mxu0 0
      %4735 = vmatpush1.bf16.msra.mxu0 0
      %4736 = vmatprep.subr.bf16.mxu0 0
      %4737 = vmatpush1.bf16.msra.mxu0 0
      %4738 = vmatprep.subr.bf16.mxu0 0
      %4739 = vmatpush1.bf16.msra.mxu0 0
      %4740 = vmatprep.subr.bf16.mxu0 0
      %4741 = vmatpush1.bf16.msra.mxu0 0
      %4742 = vmatprep.subr.bf16.mxu0 0
      %4743 = vmatpush1.bf16.msra.mxu0 0
      %4744 = vmatprep.subr.bf16.mxu0 0
      %4745 = vmatpush1.bf16.msra.mxu0 0
      %4746 = vmatprep.subr.bf16.mxu0 0
      %4747 = vmatpush1.bf16.msra.mxu0 0
      %4748 = vmatprep.subr.bf16.mxu0 0
      %4749 = vmatpush1.bf16.msra.mxu0 0
      %4750 = vmatprep.mubr.bf16.mxu0 0
      %4751 = vmatmul.mubr.bf16.gmra.mrb[0].mxu0 %v4713
      %v4752 = vpop.f32.mrb[0].mxu0
      %v4753 = vadd.f32 %v4442, %v4752
      %v4754 = vpop.f32.mrb[0].mxu0
      %v4755 = vadd.f32 %v4444, %v4754
      %v4756 = vpop.f32.mrb[0].mxu0
      %v4757 = vadd.f32 %v4446, %v4756
      %v4758 = vpop.f32.mrb[0].mxu0
      %v4759 = vadd.f32 %v4448, %v4758
      %4760 = vmatprep.mubr.bf16.mxu0 0
      %4761 = vmatmul.mubr.bf16.gmra.mrb[0].mxu0 %v4716
      %v4762 = vpop.f32.mrb[0].mxu0
      %v4763 = vadd.f32 %v4452, %v4762
      %v4764 = vpop.f32.mrb[0].mxu0
      %v4765 = vadd.f32 %v4454, %v4764
      %v4766 = vpop.f32.mrb[0].mxu0
      %v4767 = vadd.f32 %v4456, %v4766
      %v4768 = vpop.f32.mrb[0].mxu0
      %v4769 = vadd.f32 %v4458, %v4768
      %4770 = vmatprep.mubr.bf16.mxu0 0
      %4771 = vmatmul.mubr.bf16.gmra.mrb[0].mxu0 %v4342
      %v4772 = vpop.f32.mrb[0].mxu0
      %v4773 = vadd.f32 %v4462, %v4772
      %v4774 = vpop.f32.mrb[0].mxu0
      %v4775 = vadd.f32 %v4464, %v4774
      %v4776 = vpop.f32.mrb[0].mxu0
      %v4777 = vadd.f32 %v4466, %v4776
      %v4778 = vpop.f32.mrb[0].mxu0
      %v4779 = vadd.f32 %v4468, %v4778
      %4780 = vmatprep.mubr.bf16.mxu0 0
      %4781 = vmatmul.mubr.bf16.gmra.mrb[0].mxu0 %v4345
      %v4782 = vpop.f32.mrb[0].mxu0
      %v4783 = vadd.f32 %v4472, %v4782
      %v4784 = vpop.f32.mrb[0].mxu0
      %v4785 = vadd.f32 %v4474, %v4784
      %v4786 = vpop.f32.mrb[0].mxu0
      %v4787 = vadd.f32 %v4476, %v4786
      %v4788 = vpop.f32.mrb[0].mxu0
      %v4789 = vadd.f32 %v4478, %v4788
      %4790 = vmatprep.mubr.bf16.mxu0 0
      %4791 = vmatmul.mubr.bf16.gmra.mrb[0].mxu0 %v4348
      %v4792 = vpop.f32.mrb[0].mxu0
      %v4793 = vadd.f32 %v4482, %v4792
      %v4794 = vpop.f32.mrb[0].mxu0
      %v4795 = vadd.f32 %v4484, %v4794
      %v4796 = vpop.f32.mrb[0].mxu0
      %v4797 = vadd.f32 %v4486, %v4796
      %v4798 = vpop.f32.mrb[0].mxu0
      %v4799 = vadd.f32 %v4488, %v4798
      %4800 = vmatprep.mubr.bf16.mxu0 0
      %4801 = vmatmul.mubr.bf16.gmra.mrb[0].mxu0 %v4351
      %v4802 = vpop.f32.mrb[0].mxu0
      %v4803 = vadd.f32 %v4492, %v4802
      %v4804 = vpop.f32.mrb[0].mxu0
      %v4805 = vadd.f32 %v4494, %v4804
      %v4806 = vpop.f32.mrb[0].mxu0
      %v4807 = vadd.f32 %v4496, %v4806
      %v4808 = vpop.f32.mrb[0].mxu0
      %v4809 = vadd.f32 %v4498, %v4808
      %4810 = vmatprep.mubr.bf16.mxu0 0
      %4811 = vmatmul.mubr.bf16.gmra.mrb[0].mxu0 %v4354
      %v4812 = vpop.f32.mrb[0].mxu0
      %v4813 = vadd.f32 %v4502, %v4812
      %v4814 = vpop.f32.mrb[0].mxu0
      %v4815 = vadd.f32 %v4504, %v4814
      %v4816 = vpop.f32.mrb[0].mxu0
      %v4817 = vadd.f32 %v4506, %v4816
      %v4818 = vpop.f32.mrb[0].mxu0
      %v4819 = vadd.f32 %v4508, %v4818
      %4820 = vmatprep.mubr.bf16.mxu0 0
      %4821 = vmatmul.mubr.bf16.gmra.mrb[0].mxu0 %v4357
      %v4822 = vpop.f32.mrb[0].mxu0
      %v4823 = vadd.f32 %v4512, %v4822
      %v4824 = vpop.f32.mrb[0].mxu0
      %v4825 = vadd.f32 %v4514, %v4824
      %v4826 = vpop.f32.mrb[0].mxu0
      %v4827 = vadd.f32 %v4516, %v4826
      %v4828 = vpop.f32.mrb[0].mxu0
      %v4829 = vadd.f32 %v4518, %v4828
      %4830 = vmatprep.mubr.bf16.mxu0 0
      %4831 = vmatmul.mubr.bf16.gmra.mrb[0].mxu0 %v4360
      %v4832 = vpop.f32.mrb[0].mxu0
      %v4833 = vadd.f32 %v4522, %v4832
      %v4834 = vpop.f32.mrb[0].mxu0
      %v4835 = vadd.f32 %v4524, %v4834
      %v4836 = vpop.f32.mrb[0].mxu0
      %v4837 = vadd.f32 %v4526, %v4836
      %v4838 = vpop.f32.mrb[0].mxu0
      %v4839 = vadd.f32 %v4528, %v4838
      %4840 = vmatprep.mubr.bf16.mxu0 0
      %4841 = vmatmul.mubr.bf16.gmra.mrb[0].mxu0 %v4363
      %v4842 = vpop.f32.mrb[0].mxu0
      %v4843 = vadd.f32 %v4532, %v4842
      %v4844 = vpop.f32.mrb[0].mxu0
      %v4845 = vadd.f32 %v4534, %v4844
      %v4846 = vpop.f32.mrb[0].mxu0
      %v4847 = vadd.f32 %v4536, %v4846
      %v4848 = vpop.f32.mrb[0].mxu0
      %v4849 = vadd.f32 %v4538, %v4848
      %4850 = vmatprep.mubr.bf16.mxu0 0
      %4851 = vmatmul.mubr.bf16.gmra.mrb[0].mxu0 %v4366
      %v4852 = vpop.f32.mrb[0].mxu0
      %v4853 = vadd.f32 %v4542, %v4852
      %v4854 = vpop.f32.mrb[0].mxu0
      %v4855 = vadd.f32 %v4544, %v4854
      %v4856 = vpop.f32.mrb[0].mxu0
      %v4857 = vadd.f32 %v4546, %v4856
      %v4858 = vpop.f32.mrb[0].mxu0
      %v4859 = vadd.f32 %v4548, %v4858
      %4860 = vmatprep.mubr.bf16.mxu0 0
      %4861 = vmatmul.mubr.bf16.gmra.mrb[0].mxu0 %v4369
      %v4862 = vpop.f32.mrb[0].mxu0
      %v4863 = vadd.f32 %v4552, %v4862
      %v4864 = vpop.f32.mrb[0].mxu0
      %v4865 = vadd.f32 %v4554, %v4864
      %v4866 = vpop.f32.mrb[0].mxu0
      %v4867 = vadd.f32 %v4556, %v4866
      %v4868 = vpop.f32.mrb[0].mxu0
      %v4869 = vadd.f32 %v4558, %v4868
      %4870 = vmatprep.mubr.bf16.mxu0 0
      %4871 = vmatmul.mubr.bf16.gmra.mrb[0].mxu0 %v4372
      %v4872 = vpop.f32.mrb[0].mxu0
      %v4873 = vadd.f32 %v4562, %v4872
      %v4874 = vpop.f32.mrb[0].mxu0
      %v4875 = vadd.f32 %v4564, %v4874
      %v4876 = vpop.f32.mrb[0].mxu0
      %v4877 = vadd.f32 %v4566, %v4876
      %v4878 = vpop.f32.mrb[0].mxu0
      %v4879 = vadd.f32 %v4568, %v4878
      %4880 = vmatprep.mubr.bf16.mxu0 0
      %4881 = vmatmul.mubr.bf16.gmra.mrb[0].mxu0 %v4375
      %v4882 = vpop.f32.mrb[0].mxu0
      %v4883 = vadd.f32 %v4572, %v4882
      %v4884 = vpop.f32.mrb[0].mxu0
      %v4885 = vadd.f32 %v4574, %v4884
      %v4886 = vpop.f32.mrb[0].mxu0
      %v4887 = vadd.f32 %v4576, %v4886
      %v4888 = vpop.f32.mrb[0].mxu0
      %v4889 = vadd.f32 %v4578, %v4888
      %4890 = vmatprep.mubr.bf16.mxu0 0
      %4891 = vmatmul.mubr.bf16.gmra.mrb[0].mxu0 %v4378
      %v4892 = vpop.f32.mrb[0].mxu0
      %v4893 = vadd.f32 %v4582, %v4892
      %v4894 = vpop.f32.mrb[0].mxu0
      %v4895 = vadd.f32 %v4584, %v4894
      %v4896 = vpop.f32.mrb[0].mxu0
      %v4897 = vadd.f32 %v4586, %v4896
      %v4898 = vpop.f32.mrb[0].mxu0
      %v4899 = vadd.f32 %v4588, %v4898
      %4900 = vmatprep.mubr.bf16.mxu0 0
      %4901 = vmatmul.mubr.bf16.gmra.mrb[0].mxu0 %v4381
      %v4902 = vpop.f32.mrb[0].mxu0
      %v4903 = vadd.f32 %v4592, %v4902
      %v4904 = vpop.f32.mrb[0].mxu0
      %v4905 = vadd.f32 %v4594, %v4904
      %v4906 = vpop.f32.mrb[0].mxu0
      %v4907 = vadd.f32 %v4596, %v4906
      %v4908 = vpop.f32.mrb[0].mxu0
      %v4909 = vadd.f32 %v4598, %v4908
      %4910 = vmatprep.mubr.bf16.mxu0 0
      %4911 = vmatmul.mubr.bf16.gmra.mrb[0].mxu0 %v4384
      %v4912 = vpop.f32.mrb[0].mxu0
      %v4913 = vadd.f32 %v4602, %v4912
      %v4914 = vpop.f32.mrb[0].mxu0
      %v4915 = vadd.f32 %v4604, %v4914
      %v4916 = vpop.f32.mrb[0].mxu0
      %v4917 = vadd.f32 %v4606, %v4916
      %v4918 = vpop.f32.mrb[0].mxu0
      %v4919 = vadd.f32 %v4608, %v4918
      %4920 = vmatprep.mubr.bf16.mxu0 0
      %4921 = vmatmul.mubr.bf16.gmra.mrb[0].mxu0 %v4387
      %v4922 = vpop.f32.mrb[0].mxu0
      %v4923 = vadd.f32 %v4612, %v4922
      %v4924 = vpop.f32.mrb[0].mxu0
      %v4925 = vadd.f32 %v4614, %v4924
      %v4926 = vpop.f32.mrb[0].mxu0
      %v4927 = vadd.f32 %v4616, %v4926
      %v4928 = vpop.f32.mrb[0].mxu0
      %v4929 = vadd.f32 %v4618, %v4928
      %4930 = vmatprep.mubr.bf16.mxu0 0
      %4931 = vmatmul.mubr.bf16.gmra.mrb[0].mxu0 %v4390
      %v4932 = vpop.f32.mrb[0].mxu0
      %v4933 = vadd.f32 %v4622, %v4932
      %v4934 = vpop.f32.mrb[0].mxu0
      %v4935 = vadd.f32 %v4624, %v4934
      %v4936 = vpop.f32.mrb[0].mxu0
      %v4937 = vadd.f32 %v4626, %v4936
      %v4938 = vpop.f32.mrb[0].mxu0
      %v4939 = vadd.f32 %v4628, %v4938
      %4940 = vmatprep.mubr.bf16.mxu0 0
      %4941 = vmatmul.mubr.bf16.gmra.mrb[0].mxu0 %v4393
      %v4942 = vpop.f32.mrb[0].mxu0
      %v4943 = vadd.f32 %v4632, %v4942
      %v4944 = vpop.f32.mrb[0].mxu0
      %v4945 = vadd.f32 %v4634, %v4944
      %v4946 = vpop.f32.mrb[0].mxu0
      %v4947 = vadd.f32 %v4636, %v4946
      %v4948 = vpop.f32.mrb[0].mxu0
      %v4949 = vadd.f32 %v4638, %v4948
      %4950 = vmatprep.mubr.bf16.mxu0 0
      %4951 = vmatmul.mubr.bf16.gmra.mrb[0].mxu0 %v4396
      %v4952 = vpop.f32.mrb[0].mxu0
      %v4953 = vpop.f32.mrb[0].mxu0
      %v4954 = vpop.f32.mrb[0].mxu0
      %v4955 = vpop.f32.mrb[0].mxu0
      %4956 = vmatprep.mubr.bf16.mxu0 0
      %4957 = vmatmul.mubr.bf16.gmra.mrb[0].mxu0 %v4399
      %v4958 = vpop.f32.mrb[0].mxu0
      %v4959 = vpop.f32.mrb[0].mxu0
      %v4960 = vpop.f32.mrb[0].mxu0
      %v4961 = vpop.f32.mrb[0].mxu0
      %4962 = vdwg.mxu0
      %s4963 = scalar_lea.vmem %s5, 192
      %v4964 = vld [vmem:[%s4963] sm:$0xff]
      %v4965 = vld [vmem:[%s4963 + $0x8] sm:$0xff]
      %v4966 = vld [vmem:[%s4963 + $0x10] sm:$0xff]
      %v4967 = vld [vmem:[%s4963 + $0x18] sm:$0xff]
      %v4968 = vld [vmem:[%s4963 + $0x20] sm:$0xff]
      %v4969 = vld [vmem:[%s4963 + $0x28] sm:$0xff]
      %v4970 = vld [vmem:[%s4963 + $0x30] sm:$0xff]
      %v4971 = vld [vmem:[%s4963 + $0x38] sm:$0xff]
      %v4972 = vld [vmem:[%s4963 + $0x40] sm:$0xff]
      %v4973 = vld [vmem:[%s4963 + $0x48] sm:$0xff]
      %v4974 = vld [vmem:[%s4963 + $0x50] sm:$0xff]
      %v4975 = vld [vmem:[%s4963 + $0x58] sm:$0xff]
      %v4988 = vunpack.c.l.b16 %v4964
      %v4989 = vunpack.c.h.b16 %v4964
      %v4990 = vunpack.c.l.b16 %v4965
      %v4991 = vunpack.c.h.b16 %v4965
      %v4992 = vunpack.c.l.b16 %v4966
      %v4993 = vunpack.c.h.b16 %v4966
      %v4994 = vunpack.c.l.b16 %v4967
      %v4995 = vunpack.c.h.b16 %v4967
      %v4996 = vunpack.c.l.b16 %v4968
      %v4997 = vunpack.c.h.b16 %v4968
      %v4998 = vunpack.c.l.b16 %v4969
      %v4999 = vunpack.c.h.b16 %v4969
      %v5000 = vunpack.c.l.b16 %v4970
      %v5001 = vunpack.c.h.b16 %v4970
      %v5002 = vunpack.c.l.b16 %v4971
      %v5003 = vunpack.c.h.b16 %v4971
      %v5004 = vunpack.c.l.b16 %v4972
      %v5005 = vunpack.c.h.b16 %v4972
      %v5006 = vunpack.c.l.b16 %v4973
      %v5007 = vunpack.c.h.b16 %v4973
      %v5008 = vunpack.c.l.b16 %v4974
      %v5009 = vunpack.c.h.b16 %v4974
      %v5010 = vunpack.c.l.b16 %v4975
      %v5011 = vunpack.c.h.b16 %v4975
      %v5012 = vpack.c.b16 %v4990, %v4988
      %v5013 = vpack.c.b16 %v4991, %v4989
      %v5014 = vpack.c.b16 %v4994, %v4992
      %v5015 = vpack.c.b16 %v4995, %v4993
      %v5016 = vpack.c.b16 %v4998, %v4996
      %v5017 = vpack.c.b16 %v4999, %v4997
      %v5018 = vpack.c.b16 %v5002, %v5000
      %v5019 = vpack.c.b16 %v5003, %v5001
      %v5020 = vpack.c.b16 %v5006, %v5004
      %v5021 = vpack.c.b16 %v5007, %v5005
      %v5022 = vpack.c.b16 %v5010, %v5008
      %v5023 = vpack.c.b16 %v5011, %v5009
      %v5037 = vsel %vm4340, %v4253, 0
      %v5040 = vsel %vm4340, %v4254, 0
      %5042 = vmatprep.subr.bf16.mxu0 %v5013
      %5043 = vmatpush1.bf16.msra.mxu0 %v5012
      %5044 = vmatprep.subr.bf16.mxu0 %v5015
      %5045 = vmatpush1.bf16.msra.mxu0 %v5014
      %5046 = vmatprep.subr.bf16.mxu0 %v5017
      %5047 = vmatpush1.bf16.msra.mxu0 %v5016
      %5048 = vmatprep.subr.bf16.mxu0 %v5019
      %5049 = vmatpush1.bf16.msra.mxu0 %v5018
      %5050 = vmatprep.subr.bf16.mxu0 %v5021
      %5051 = vmatpush1.bf16.msra.mxu0 %v5020
      %5052 = vmatprep.subr.bf16.mxu0 %v5023
      %5053 = vmatpush1.bf16.msra.mxu0 %v5022
      %5054 = vmatprep.subr.bf16.mxu0 0
      %5055 = vmatpush1.bf16.msra.mxu0 0
      %5056 = vmatprep.subr.bf16.mxu0 0
      %5057 = vmatpush1.bf16.msra.mxu0 0
      %5058 = vmatprep.subr.bf16.mxu0 0
      %5059 = vmatpush1.bf16.msra.mxu0 0
      %5060 = vmatprep.subr.bf16.mxu0 0
      %5061 = vmatpush1.bf16.msra.mxu0 0
      %5062 = vmatprep.subr.bf16.mxu0 0
      %5063 = vmatpush1.bf16.msra.mxu0 0
      %5064 = vmatprep.subr.bf16.mxu0 0
      %5065 = vmatpush1.bf16.msra.mxu0 0
      %5066 = vmatprep.subr.bf16.mxu0 0
      %5067 = vmatpush1.bf16.msra.mxu0 0
      %5068 = vmatprep.subr.bf16.mxu0 0
      %5069 = vmatpush1.bf16.msra.mxu0 0
      %5070 = vmatprep.subr.bf16.mxu0 0
      %5071 = vmatpush1.bf16.msra.mxu0 0
      %5072 = vmatprep.subr.bf16.mxu0 0
      %5073 = vmatpush1.bf16.msra.mxu0 0
      %5074 = vmatprep.mubr.bf16.mxu0 0
      %5075 = vmatmul.mubr.bf16.gmra.mrb[0].mxu0 %v4348
      %v5076 = vpop.f32.mrb[0].mxu0
      %v5077 = vadd.f32 0.0, %v5076
      %v5078 = vpop.f32.mrb[0].mxu0
      %v5079 = vadd.f32 0.0, %v5078
      %v5080 = vpop.f32.mrb[0].mxu0
      %v5081 = vadd.f32 0.0, %v5080
      %v5082 = vpop.f32.mrb[0].mxu0
      %v5083 = vadd.f32 0.0, %v5082
      %5084 = vmatprep.mubr.bf16.mxu0 0
      %5085 = vmatmul.mubr.bf16.gmra.mrb[0].mxu0 %v4351
      %v5086 = vpop.f32.mrb[0].mxu0
      %v5087 = vadd.f32 0.0, %v5086
      %v5088 = vpop.f32.mrb[0].mxu0
      %v5089 = vadd.f32 0.0, %v5088
      %v5090 = vpop.f32.mrb[0].mxu0
      %v5091 = vadd.f32 0.0, %v5090
      %v5092 = vpop.f32.mrb[0].mxu0
      %v5093 = vadd.f32 0.0, %v5092
      %5094 = vmatprep.mubr.bf16.mxu0 0
      %5095 = vmatmul.mubr.bf16.gmra.mrb[0].mxu0 %v4354
      %v5096 = vpop.f32.mrb[0].mxu0
      %v5097 = vadd.f32 0.0, %v5096
      %v5098 = vpop.f32.mrb[0].mxu0
      %v5099 = vadd.f32 0.0, %v5098
      %v5100 = vpop.f32.mrb[0].mxu0
      %v5101 = vadd.f32 0.0, %v5100
      %v5102 = vpop.f32.mrb[0].mxu0
      %v5103 = vadd.f32 0.0, %v5102
      %5104 = vmatprep.mubr.bf16.mxu0 0
      %5105 = vmatmul.mubr.bf16.gmra.mrb[0].mxu0 %v4357
      %v5106 = vpop.f32.mrb[0].mxu0
      %v5107 = vadd.f32 0.0, %v5106
      %v5108 = vpop.f32.mrb[0].mxu0
      %v5109 = vadd.f32 0.0, %v5108
      %v5110 = vpop.f32.mrb[0].mxu0
      %v5111 = vadd.f32 0.0, %v5110
      %v5112 = vpop.f32.mrb[0].mxu0
      %v5113 = vadd.f32 0.0, %v5112
      %5114 = vmatprep.mubr.bf16.mxu0 0
      %5115 = vmatmul.mubr.bf16.gmra.mrb[0].mxu0 %v4360
      %v5116 = vpop.f32.mrb[0].mxu0
      %v5117 = vadd.f32 0.0, %v5116
      %v5118 = vpop.f32.mrb[0].mxu0
      %v5119 = vadd.f32 0.0, %v5118
      %v5120 = vpop.f32.mrb[0].mxu0
      %v5121 = vadd.f32 0.0, %v5120
      %v5122 = vpop.f32.mrb[0].mxu0
      %v5123 = vadd.f32 0.0, %v5122
      %5124 = vmatprep.mubr.bf16.mxu0 0
      %5125 = vmatmul.mubr.bf16.gmra.mrb[0].mxu0 %v4363
      %v5126 = vpop.f32.mrb[0].mxu0
      %v5127 = vadd.f32 0.0, %v5126
      %v5128 = vpop.f32.mrb[0].mxu0
      %v5129 = vadd.f32 0.0, %v5128
      %v5130 = vpop.f32.mrb[0].mxu0
      %v5131 = vadd.f32 0.0, %v5130
      %v5132 = vpop.f32.mrb[0].mxu0
      %v5133 = vadd.f32 0.0, %v5132
      %5134 = vmatprep.mubr.bf16.mxu0 0
      %5135 = vmatmul.mubr.bf16.gmra.mrb[0].mxu0 %v4366
      %v5136 = vpop.f32.mrb[0].mxu0
      %v5137 = vadd.f32 0.0, %v5136
      %v5138 = vpop.f32.mrb[0].mxu0
      %v5139 = vadd.f32 0.0, %v5138
      %v5140 = vpop.f32.mrb[0].mxu0
      %v5141 = vadd.f32 0.0, %v5140
      %v5142 = vpop.f32.mrb[0].mxu0
      %v5143 = vadd.f32 0.0, %v5142
      %5144 = vmatprep.mubr.bf16.mxu0 0
      %5145 = vmatmul.mubr.bf16.gmra.mrb[0].mxu0 %v4369
      %v5146 = vpop.f32.mrb[0].mxu0
      %v5147 = vadd.f32 0.0, %v5146
      %v5148 = vpop.f32.mrb[0].mxu0
      %v5149 = vadd.f32 0.0, %v5148
      %v5150 = vpop.f32.mrb[0].mxu0
      %v5151 = vadd.f32 0.0, %v5150
      %v5152 = vpop.f32.mrb[0].mxu0
      %v5153 = vadd.f32 0.0, %v5152
      %5154 = vmatprep.mubr.bf16.mxu0 0
      %5155 = vmatmul.mubr.bf16.gmra.mrb[0].mxu0 %v4372
      %v5156 = vpop.f32.mrb[0].mxu0
      %v5157 = vadd.f32 0.0, %v5156
      %v5158 = vpop.f32.mrb[0].mxu0
      %v5159 = vadd.f32 0.0, %v5158
      %v5160 = vpop.f32.mrb[0].mxu0
      %v5161 = vadd.f32 0.0, %v5160
      %v5162 = vpop.f32.mrb[0].mxu0
      %v5163 = vadd.f32 0.0, %v5162
      %5164 = vmatprep.mubr.bf16.mxu0 0
      %5165 = vmatmul.mubr.bf16.gmra.mrb[0].mxu0 %v4375
      %v5166 = vpop.f32.mrb[0].mxu0
      %v5167 = vadd.f32 0.0, %v5166
      %v5168 = vpop.f32.mrb[0].mxu0
      %v5169 = vadd.f32 0.0, %v5168
      %v5170 = vpop.f32.mrb[0].mxu0
      %v5171 = vadd.f32 0.0, %v5170
      %v5172 = vpop.f32.mrb[0].mxu0
      %v5173 = vadd.f32 0.0, %v5172
      %5174 = vmatprep.mubr.bf16.mxu0 0
      %5175 = vmatmul.mubr.bf16.gmra.mrb[0].mxu0 %v4378
      %v5176 = vpop.f32.mrb[0].mxu0
      %v5177 = vadd.f32 0.0, %v5176
      %v5178 = vpop.f32.mrb[0].mxu0
      %v5179 = vadd.f32 0.0, %v5178
      %v5180 = vpop.f32.mrb[0].mxu0
      %v5181 = vadd.f32 0.0, %v5180
      %v5182 = vpop.f32.mrb[0].mxu0
      %v5183 = vadd.f32 0.0, %v5182
      %5184 = vmatprep.mubr.bf16.mxu0 0
      %5185 = vmatmul.mubr.bf16.gmra.mrb[0].mxu0 %v4381
      %v5186 = vpop.f32.mrb[0].mxu0
      %v5187 = vadd.f32 0.0, %v5186
      %v5188 = vpop.f32.mrb[0].mxu0
      %v5189 = vadd.f32 0.0, %v5188
      %v5190 = vpop.f32.mrb[0].mxu0
      %v5191 = vadd.f32 0.0, %v5190
      %v5192 = vpop.f32.mrb[0].mxu0
      %v5193 = vadd.f32 0.0, %v5192
      %5194 = vmatprep.mubr.bf16.mxu0 0
      %5195 = vmatmul.mubr.bf16.gmra.mrb[0].mxu0 %v4384
      %v5196 = vpop.f32.mrb[0].mxu0
      %v5197 = vadd.f32 0.0, %v5196
      %v5198 = vpop.f32.mrb[0].mxu0
      %v5199 = vadd.f32 0.0, %v5198
      %v5200 = vpop.f32.mrb[0].mxu0
      %v5201 = vadd.f32 0.0, %v5200
      %v5202 = vpop.f32.mrb[0].mxu0
      %v5203 = vadd.f32 0.0, %v5202
      %5204 = vmatprep.mubr.bf16.mxu0 0
      %5205 = vmatmul.mubr.bf16.gmra.mrb[0].mxu0 %v4387
      %v5206 = vpop.f32.mrb[0].mxu0
      %v5207 = vadd.f32 0.0, %v5206
      %v5208 = vpop.f32.mrb[0].mxu0
      %v5209 = vadd.f32 0.0, %v5208
      %v5210 = vpop.f32.mrb[0].mxu0
      %v5211 = vadd.f32 0.0, %v5210
      %v5212 = vpop.f32.mrb[0].mxu0
      %v5213 = vadd.f32 0.0, %v5212
      %5214 = vmatprep.mubr.bf16.mxu0 0
      %5215 = vmatmul.mubr.bf16.gmra.mrb[0].mxu0 %v4390
      %v5216 = vpop.f32.mrb[0].mxu0
      %v5217 = vadd.f32 0.0, %v5216
      %v5218 = vpop.f32.mrb[0].mxu0
      %v5219 = vadd.f32 0.0, %v5218
      %v5220 = vpop.f32.mrb[0].mxu0
      %v5221 = vadd.f32 0.0, %v5220
      %v5222 = vpop.f32.mrb[0].mxu0
      %v5223 = vadd.f32 0.0, %v5222
      %5224 = vmatprep.mubr.bf16.mxu0 0
      %5225 = vmatmul.mubr.bf16.gmra.mrb[0].mxu0 %v4393
      %v5226 = vpop.f32.mrb[0].mxu0
      %v5227 = vadd.f32 0.0, %v5226
      %v5228 = vpop.f32.mrb[0].mxu0
      %v5229 = vadd.f32 0.0, %v5228
      %v5230 = vpop.f32.mrb[0].mxu0
      %v5231 = vadd.f32 0.0, %v5230
      %v5232 = vpop.f32.mrb[0].mxu0
      %v5233 = vadd.f32 0.0, %v5232
      %5234 = vmatprep.mubr.bf16.mxu0 0
      %5235 = vmatmul.mubr.bf16.gmra.mrb[0].mxu0 %v4396
      %v5236 = vpop.f32.mrb[0].mxu0
      %v5237 = vadd.f32 0.0, %v5236
      %v5238 = vpop.f32.mrb[0].mxu0
      %v5239 = vadd.f32 0.0, %v5238
      %v5240 = vpop.f32.mrb[0].mxu0
      %v5241 = vadd.f32 0.0, %v5240
      %v5242 = vpop.f32.mrb[0].mxu0
      %v5243 = vadd.f32 0.0, %v5242
      %5244 = vmatprep.mubr.bf16.mxu0 0
      %5245 = vmatmul.mubr.bf16.gmra.mrb[0].mxu0 %v4399
      %v5246 = vpop.f32.mrb[0].mxu0
      %v5247 = vadd.f32 0.0, %v5246
      %v5248 = vpop.f32.mrb[0].mxu0
      %v5249 = vadd.f32 0.0, %v5248
      %v5250 = vpop.f32.mrb[0].mxu0
      %v5251 = vadd.f32 0.0, %v5250
      %v5252 = vpop.f32.mrb[0].mxu0
      %v5253 = vadd.f32 0.0, %v5252
      %5254 = vmatprep.mubr.bf16.mxu0 0
      %5255 = vmatmul.mubr.bf16.gmra.mrb[0].mxu0 %v4402
      %v5256 = vpop.f32.mrb[0].mxu0
      %v5257 = vadd.f32 0.0, %v5256
      %v5258 = vpop.f32.mrb[0].mxu0
      %v5259 = vadd.f32 0.0, %v5258
      %v5260 = vpop.f32.mrb[0].mxu0
      %v5261 = vadd.f32 0.0, %v5260
      %v5262 = vpop.f32.mrb[0].mxu0
      %v5263 = vadd.f32 0.0, %v5262
      %5264 = vmatprep.mubr.bf16.mxu0 0
      %5265 = vmatmul.mubr.bf16.gmra.mrb[0].mxu0 %v4405
      %v5266 = vpop.f32.mrb[0].mxu0
      %v5267 = vadd.f32 0.0, %v5266
      %v5268 = vpop.f32.mrb[0].mxu0
      %v5269 = vadd.f32 0.0, %v5268
      %v5270 = vpop.f32.mrb[0].mxu0
      %v5271 = vadd.f32 0.0, %v5270
      %v5272 = vpop.f32.mrb[0].mxu0
      %v5273 = vadd.f32 0.0, %v5272
      %5274 = vmatprep.mubr.bf16.mxu0 0
      %5275 = vmatmul.mubr.bf16.gmra.mrb[0].mxu0 %v5037
      %v5276 = vpop.f32.mrb[0].mxu0
      %v5277 = vpop.f32.mrb[0].mxu0
      %v5278 = vpop.f32.mrb[0].mxu0
      %v5279 = vpop.f32.mrb[0].mxu0
      %5280 = vmatprep.mubr.bf16.mxu0 0
      %5281 = vmatmul.mubr.bf16.gmra.mrb[0].mxu0 %v5040
      %v5282 = vpop.f32.mrb[0].mxu0
      %v5283 = vpop.f32.mrb[0].mxu0
      %v5284 = vpop.f32.mrb[0].mxu0
      %v5285 = vpop.f32.mrb[0].mxu0
      %5286 = vdwg.mxu0
      %v5287 = vadd.f32 %v4753, %v5077
      %v5288 = vadd.f32 %v4755, %v5079
      %v5289 = vadd.f32 %v4757, %v5081
      %v5290 = vadd.f32 %v4759, %v5083
      %v5291 = vadd.f32 %v4763, %v5087
      %v5292 = vadd.f32 %v4765, %v5089
      %v5293 = vadd.f32 %v4767, %v5091
      %v5294 = vadd.f32 %v4769, %v5093
      %v5295 = vadd.f32 %v4773, %v5097
      %v5296 = vadd.f32 %v4775, %v5099
      %v5297 = vadd.f32 %v4777, %v5101
      %v5298 = vadd.f32 %v4779, %v5103
      %v5299 = vadd.f32 %v4783, %v5107
      %v5300 = vadd.f32 %v4785, %v5109
      %v5301 = vadd.f32 %v4787, %v5111
      %v5302 = vadd.f32 %v4789, %v5113
      %v5303 = vadd.f32 %v4793, %v5117
      %v5304 = vadd.f32 %v4795, %v5119
      %v5305 = vadd.f32 %v4797, %v5121
      %v5306 = vadd.f32 %v4799, %v5123
      %v5307 = vadd.f32 %v4803, %v5127
      %v5308 = vadd.f32 %v4805, %v5129
      %v5309 = vadd.f32 %v4807, %v5131
      %v5310 = vadd.f32 %v4809, %v5133
      %v5311 = vadd.f32 %v4813, %v5137
      %v5312 = vadd.f32 %v4815, %v5139
      %v5313 = vadd.f32 %v4817, %v5141
      %v5314 = vadd.f32 %v4819, %v5143
      %v5315 = vadd.f32 %v4823, %v5147
      %v5316 = vadd.f32 %v4825, %v5149
      %v5317 = vadd.f32 %v4827, %v5151
      %v5318 = vadd.f32 %v4829, %v5153
      %v5319 = vadd.f32 %v4833, %v5157
      %v5320 = vadd.f32 %v4835, %v5159
      %v5321 = vadd.f32 %v4837, %v5161
      %v5322 = vadd.f32 %v4839, %v5163
      %v5323 = vadd.f32 %v4843, %v5167
      %v5324 = vadd.f32 %v4845, %v5169
      %v5325 = vadd.f32 %v4847, %v5171
      %v5326 = vadd.f32 %v4849, %v5173
      %v5327 = vadd.f32 %v4853, %v5177
      %v5328 = vadd.f32 %v4855, %v5179
      %v5329 = vadd.f32 %v4857, %v5181
      %v5330 = vadd.f32 %v4859, %v5183
      %v5331 = vadd.f32 %v4863, %v5187
      %v5332 = vadd.f32 %v4865, %v5189
      %v5333 = vadd.f32 %v4867, %v5191
      %v5334 = vadd.f32 %v4869, %v5193
      %v5335 = vadd.f32 %v4873, %v5197
      %v5336 = vadd.f32 %v4875, %v5199
      %v5337 = vadd.f32 %v4877, %v5201
      %v5338 = vadd.f32 %v4879, %v5203
      %v5339 = vadd.f32 %v4883, %v5207
      %v5340 = vadd.f32 %v4885, %v5209
      %v5341 = vadd.f32 %v4887, %v5211
      %v5342 = vadd.f32 %v4889, %v5213
      %v5343 = vadd.f32 %v4893, %v5217
      %v5344 = vadd.f32 %v4895, %v5219
      %v5345 = vadd.f32 %v4897, %v5221
      %v5346 = vadd.f32 %v4899, %v5223
      %v5347 = vadd.f32 %v4903, %v5227
      %v5348 = vadd.f32 %v4905, %v5229
      %v5349 = vadd.f32 %v4907, %v5231
      %v5350 = vadd.f32 %v4909, %v5233
      %v5351 = vadd.f32 %v4913, %v5237
      %v5352 = vadd.f32 %v4915, %v5239
      %v5353 = vadd.f32 %v4917, %v5241
      %v5354 = vadd.f32 %v4919, %v5243
      %v5355 = vadd.f32 %v4923, %v5247
      %v5356 = vadd.f32 %v4925, %v5249
      %v5357 = vadd.f32 %v4927, %v5251
      %v5358 = vadd.f32 %v4929, %v5253
      %v5359 = vadd.f32 %v4933, %v5257
      %v5360 = vadd.f32 %v4935, %v5259
      %v5361 = vadd.f32 %v4937, %v5261
      %v5362 = vadd.f32 %v4939, %v5263
      %v5363 = vadd.f32 %v4943, %v5267
      %v5364 = vadd.f32 %v4945, %v5269
      %v5365 = vadd.f32 %v4947, %v5271
      %v5366 = vadd.f32 %v4949, %v5273
      %v5367 = vld [vmem:[%s6] sm:$0x3]
      %v5369 = vlaneseq
      %v5370 = vshrl.u32 %v5369, 7
      %v5371 = vsub.s32 0, %v5370
      %v5372 = vrot.slane %v5367, %v5371
      %v5373 = vlaneseq
      %v5374 = vshrl.u32 %v5373, 7
      %v5375 = vsub.s32 1, %v5374
      %v5376 = vrot.slane %v5367, %v5375
      %v5379 = vadd.f32 %v5287, %v5372
      %v5380 = vadd.f32 %v5288, %v5376
      %v5381 = vadd.f32 %v5289, %v5372
      %v5382 = vadd.f32 %v5290, %v5376
      %v5383 = vadd.f32 %v5291, %v5372
      %v5384 = vadd.f32 %v5292, %v5376
      %v5385 = vadd.f32 %v5293, %v5372
      %v5386 = vadd.f32 %v5294, %v5376
      %v5387 = vadd.f32 %v5295, %v5372
      %v5388 = vadd.f32 %v5296, %v5376
      %v5389 = vadd.f32 %v5297, %v5372
      %v5390 = vadd.f32 %v5298, %v5376
      %v5391 = vadd.f32 %v5299, %v5372
      %v5392 = vadd.f32 %v5300, %v5376
      %v5393 = vadd.f32 %v5301, %v5372
      %v5394 = vadd.f32 %v5302, %v5376
      %v5395 = vadd.f32 %v5303, %v5372
      %v5396 = vadd.f32 %v5304, %v5376
      %v5397 = vadd.f32 %v5305, %v5372
      %v5398 = vadd.f32 %v5306, %v5376
      %v5399 = vadd.f32 %v5307, %v5372
      %v5400 = vadd.f32 %v5308, %v5376
      %v5401 = vadd.f32 %v5309, %v5372
      %v5402 = vadd.f32 %v5310, %v5376
      %v5403 = vadd.f32 %v5311, %v5372
      %v5404 = vadd.f32 %v5312, %v5376
      %v5405 = vadd.f32 %v5313, %v5372
      %v5406 = vadd.f32 %v5314, %v5376
      %v5407 = vadd.f32 %v5315, %v5372
      %v5408 = vadd.f32 %v5316, %v5376
      %v5409 = vadd.f32 %v5317, %v5372
      %v5410 = vadd.f32 %v5318, %v5376
      %v5411 = vadd.f32 %v5319, %v5372
      %v5412 = vadd.f32 %v5320, %v5376
      %v5413 = vadd.f32 %v5321, %v5372
      %v5414 = vadd.f32 %v5322, %v5376
      %v5415 = vadd.f32 %v5323, %v5372
      %v5416 = vadd.f32 %v5324, %v5376
      %v5417 = vadd.f32 %v5325, %v5372
      %v5418 = vadd.f32 %v5326, %v5376
      %v5419 = vadd.f32 %v5327, %v5372
      %v5420 = vadd.f32 %v5328, %v5376
      %v5421 = vadd.f32 %v5329, %v5372
      %v5422 = vadd.f32 %v5330, %v5376
      %v5423 = vadd.f32 %v5331, %v5372
      %v5424 = vadd.f32 %v5332, %v5376
      %v5425 = vadd.f32 %v5333, %v5372
      %v5426 = vadd.f32 %v5334, %v5376
      %v5427 = vadd.f32 %v5335, %v5372
      %v5428 = vadd.f32 %v5336, %v5376
      %v5429 = vadd.f32 %v5337, %v5372
      %v5430 = vadd.f32 %v5338, %v5376
      %v5431 = vadd.f32 %v5339, %v5372
      %v5432 = vadd.f32 %v5340, %v5376
      %v5433 = vadd.f32 %v5341, %v5372
      %v5434 = vadd.f32 %v5342, %v5376
      %v5435 = vadd.f32 %v5343, %v5372
      %v5436 = vadd.f32 %v5344, %v5376
      %v5437 = vadd.f32 %v5345, %v5372
      %v5438 = vadd.f32 %v5346, %v5376
      %v5439 = vadd.f32 %v5347, %v5372
      %v5440 = vadd.f32 %v5348, %v5376
      %v5441 = vadd.f32 %v5349, %v5372
      %v5442 = vadd.f32 %v5350, %v5376
      %v5443 = vadd.f32 %v5351, %v5372
      %v5444 = vadd.f32 %v5352, %v5376
      %v5445 = vadd.f32 %v5353, %v5372
      %v5446 = vadd.f32 %v5354, %v5376
      %v5447 = vadd.f32 %v5355, %v5372
      %v5448 = vadd.f32 %v5356, %v5376
      %v5449 = vadd.f32 %v5357, %v5372
      %v5450 = vadd.f32 %v5358, %v5376
      %v5451 = vadd.f32 %v5359, %v5372
      %v5452 = vadd.f32 %v5360, %v5376
      %v5453 = vadd.f32 %v5361, %v5372
      %v5454 = vadd.f32 %v5362, %v5376
      %v5455 = vadd.f32 %v5363, %v5372
      %v5456 = vadd.f32 %v5364, %v5376
      %v5457 = vadd.f32 %v5365, %v5372
      %v5458 = vadd.f32 %v5366, %v5376
      %v5459 = vmax.f32 %v5379, 0.0
      %v5460 = vmax.f32 %v5380, 0.0
      %v5461 = vmax.f32 %v5381, 0.0
      %v5462 = vmax.f32 %v5382, 0.0
      %v5463 = vmax.f32 %v5383, 0.0
      %v5464 = vmax.f32 %v5384, 0.0
      %v5465 = vmax.f32 %v5385, 0.0
      %v5466 = vmax.f32 %v5386, 0.0
      %v5467 = vmax.f32 %v5387, 0.0
      %v5468 = vmax.f32 %v5388, 0.0
      %v5469 = vmax.f32 %v5389, 0.0
      %v5470 = vmax.f32 %v5390, 0.0
      %v5471 = vmax.f32 %v5391, 0.0
      %v5472 = vmax.f32 %v5392, 0.0
      %v5473 = vmax.f32 %v5393, 0.0
      %v5474 = vmax.f32 %v5394, 0.0
      %v5475 = vmax.f32 %v5395, 0.0
      %v5476 = vmax.f32 %v5396, 0.0
      %v5477 = vmax.f32 %v5397, 0.0
      %v5478 = vmax.f32 %v5398, 0.0
      %v5479 = vmax.f32 %v5399, 0.0
      %v5480 = vmax.f32 %v5400, 0.0
      %v5481 = vmax.f32 %v5401, 0.0
      %v5482 = vmax.f32 %v5402, 0.0
      %v5483 = vmax.f32 %v5403, 0.0
      %v5484 = vmax.f32 %v5404, 0.0
      %v5485 = vmax.f32 %v5405, 0.0
      %v5486 = vmax.f32 %v5406, 0.0
      %v5487 = vmax.f32 %v5407, 0.0
      %v5488 = vmax.f32 %v5408, 0.0
      %v5489 = vmax.f32 %v5409, 0.0
      %v5490 = vmax.f32 %v5410, 0.0
      %v5491 = vmax.f32 %v5411, 0.0
      %v5492 = vmax.f32 %v5412, 0.0
      %v5493 = vmax.f32 %v5413, 0.0
      %v5494 = vmax.f32 %v5414, 0.0
      %v5495 = vmax.f32 %v5415, 0.0
      %v5496 = vmax.f32 %v5416, 0.0
      %v5497 = vmax.f32 %v5417, 0.0
      %v5498 = vmax.f32 %v5418, 0.0
      %v5499 = vmax.f32 %v5419, 0.0
      %v5500 = vmax.f32 %v5420, 0.0
      %v5501 = vmax.f32 %v5421, 0.0
      %v5502 = vmax.f32 %v5422, 0.0
      %v5503 = vmax.f32 %v5423, 0.0
      %v5504 = vmax.f32 %v5424, 0.0
      %v5505 = vmax.f32 %v5425, 0.0
      %v5506 = vmax.f32 %v5426, 0.0
      %v5507 = vmax.f32 %v5427, 0.0
      %v5508 = vmax.f32 %v5428, 0.0
      %v5509 = vmax.f32 %v5429, 0.0
      %v5510 = vmax.f32 %v5430, 0.0
      %v5511 = vmax.f32 %v5431, 0.0
      %v5512 = vmax.f32 %v5432, 0.0
      %v5513 = vmax.f32 %v5433, 0.0
      %v5514 = vmax.f32 %v5434, 0.0
      %v5515 = vmax.f32 %v5435, 0.0
      %v5516 = vmax.f32 %v5436, 0.0
      %v5517 = vmax.f32 %v5437, 0.0
      %v5518 = vmax.f32 %v5438, 0.0
      %v5519 = vmax.f32 %v5439, 0.0
      %v5520 = vmax.f32 %v5440, 0.0
      %v5521 = vmax.f32 %v5441, 0.0
      %v5522 = vmax.f32 %v5442, 0.0
      %v5523 = vmax.f32 %v5443, 0.0
      %v5524 = vmax.f32 %v5444, 0.0
      %v5525 = vmax.f32 %v5445, 0.0
      %v5526 = vmax.f32 %v5446, 0.0
      %v5527 = vmax.f32 %v5447, 0.0
      %v5528 = vmax.f32 %v5448, 0.0
      %v5529 = vmax.f32 %v5449, 0.0
      %v5530 = vmax.f32 %v5450, 0.0
      %v5531 = vmax.f32 %v5451, 0.0
      %v5532 = vmax.f32 %v5452, 0.0
      %v5533 = vmax.f32 %v5453, 0.0
      %v5534 = vmax.f32 %v5454, 0.0
      %v5535 = vmax.f32 %v5455, 0.0
      %v5536 = vmax.f32 %v5456, 0.0
      %v5537 = vmax.f32 %v5457, 0.0
      %v5538 = vmax.f32 %v5458, 0.0
      %v5539 = vmax.f32 %v5459, %v5467
      %v5540 = vmax.f32 %v5460, %v5468
      %v5541 = vmax.f32 %v5461, %v5469
      %v5542 = vmax.f32 %v5462, %v5470
      %v5543 = vmax.f32 %v5463, %v5471
      %v5544 = vmax.f32 %v5464, %v5472
      %v5545 = vmax.f32 %v5465, %v5473
      %v5546 = vmax.f32 %v5466, %v5474
      %v5547 = vmax.f32 %v5475, %v5483
      %v5548 = vmax.f32 %v5476, %v5484
      %v5549 = vmax.f32 %v5477, %v5485
      %v5550 = vmax.f32 %v5478, %v5486
      %v5551 = vmax.f32 %v5479, %v5487
      %v5552 = vmax.f32 %v5480, %v5488
      %v5553 = vmax.f32 %v5481, %v5489
      %v5554 = vmax.f32 %v5482, %v5490
      %v5555 = vmax.f32 %v5491, %v5499
      %v5556 = vmax.f32 %v5492, %v5500
      %v5557 = vmax.f32 %v5493, %v5501
      %v5558 = vmax.f32 %v5494, %v5502
      %v5559 = vmax.f32 %v5495, %v5503
      %v5560 = vmax.f32 %v5496, %v5504
      %v5561 = vmax.f32 %v5497, %v5505
      %v5562 = vmax.f32 %v5498, %v5506
      %v5563 = vmax.f32 %v5507, %v5515
      %v5564 = vmax.f32 %v5508, %v5516
      %v5565 = vmax.f32 %v5509, %v5517
      %v5566 = vmax.f32 %v5510, %v5518
      %v5567 = vmax.f32 %v5511, %v5519
      %v5568 = vmax.f32 %v5512, %v5520
      %v5569 = vmax.f32 %v5513, %v5521
      %v5570 = vmax.f32 %v5514, %v5522
      %v5571 = vmax.f32 %v5523, %v5531
      %v5572 = vmax.f32 %v5524, %v5532
      %v5573 = vmax.f32 %v5525, %v5533
      %v5574 = vmax.f32 %v5526, %v5534
      %v5575 = vmax.f32 %v5527, %v5535
      %v5576 = vmax.f32 %v5528, %v5536
      %v5577 = vmax.f32 %v5529, %v5537
      %v5578 = vmax.f32 %v5530, %v5538
      %v5579 = vld [vmem:[%s7] sm:$0xff]
      %v5580 = vld [vmem:[%s7 + $0x8] sm:$0xff]
      %v5581 = vld [vmem:[%s7 + $0x10] sm:$0xff]
      %v5582 = vld [vmem:[%s7 + $0x18] sm:$0xff]
      %v5583 = vld [vmem:[%s7 + $0x20] sm:$0xff]
      %v5584 = vld [vmem:[%s7 + $0x28] sm:$0xff]
      %v5585 = vld [vmem:[%s7 + $0x30] sm:$0xff]
      %v5586 = vld [vmem:[%s7 + $0x38] sm:$0xff]
      %v5587 = vld [vmem:[%s7 + $0x40] sm:$0xff]
      %v5588 = vld [vmem:[%s7 + $0x48] sm:$0xff]
      %v5589 = vld [vmem:[%s7 + $0x50] sm:$0xff]
      %v5590 = vld [vmem:[%s7 + $0x58] sm:$0xff]
      %v5591 = vld [vmem:[%s7 + $0x60] sm:$0xff]
      %v5592 = vld [vmem:[%s7 + $0x68] sm:$0xff]
      %v5593 = vld [vmem:[%s7 + $0x70] sm:$0xff]
      %v5594 = vld [vmem:[%s7 + $0x78] sm:$0xff]
      %v5595 = vld [vmem:[%s7 + $0x80] sm:$0xff]
      %v5596 = vld [vmem:[%s7 + $0x88] sm:$0xff]
      %v5597 = vld [vmem:[%s7 + $0x90] sm:$0xff]
      %v5598 = vld [vmem:[%s7 + $0x98] sm:$0xff]
      %v5599 = vld [vmem:[%s7 + $0xa0] sm:$0xff]
      %v5600 = vld [vmem:[%s7 + $0xa8] sm:$0xff]
      %v5601 = vld [vmem:[%s7 + $0xb0] sm:$0xff]
      %v5602 = vld [vmem:[%s7 + $0xb8] sm:$0xff]
      %v5603 = vld [vmem:[%s7 + $0xc0] sm:$0xff]
      %v5604 = vld [vmem:[%s7 + $0xc8] sm:$0xff]
      %v5605 = vld [vmem:[%s7 + $0xd0] sm:$0xff]
      %v5606 = vld [vmem:[%s7 + $0xd8] sm:$0xff]
      %v5607 = vld [vmem:[%s7 + $0xe0] sm:$0xff]
      %v5608 = vld [vmem:[%s7 + $0xe8] sm:$0xff]
      %v5609 = vld [vmem:[%s7 + $0xf0] sm:$0xff]
      %v5610 = vld [vmem:[%s7 + $0xf8] sm:$0xff]
      %5611 = vmatprep.subr.mxu0 0.0
      %5612 = vmatpush1.msra.mxu0 %v5579
      %5613 = vmatprep.subr.mxu0 0.0
      %5614 = vmatpush1.msra.mxu0 %v5580
      %5615 = vmatprep.subr.mxu0 0.0
      %5616 = vmatpush1.msra.mxu0 %v5581
      %5617 = vmatprep.subr.mxu0 0.0
      %5618 = vmatpush1.msra.mxu0 %v5582
      %5619 = vmatprep.subr.mxu0 0.0
      %5620 = vmatpush1.msra.mxu0 %v5583
      %5621 = vmatprep.subr.mxu0 0.0
      %5622 = vmatpush1.msra.mxu0 %v5584
      %5623 = vmatprep.subr.mxu0 0.0
      %5624 = vmatpush1.msra.mxu0 %v5585
      %5625 = vmatprep.subr.mxu0 0.0
      %5626 = vmatpush1.msra.mxu0 %v5586
      %5627 = vmatprep.subr.mxu0 0.0
      %5628 = vmatpush1.msra.mxu0 %v5587
      %5629 = vmatprep.subr.mxu0 0.0
      %5630 = vmatpush1.msra.mxu0 %v5588
      %5631 = vmatprep.subr.mxu0 0.0
      %5632 = vmatpush1.msra.mxu0 %v5589
      %5633 = vmatprep.subr.mxu0 0.0
      %5634 = vmatpush1.msra.mxu0 %v5590
      %5635 = vmatprep.subr.mxu0 0.0
      %5636 = vmatpush1.msra.mxu0 %v5591
      %5637 = vmatprep.subr.mxu0 0.0
      %5638 = vmatpush1.msra.mxu0 %v5592
      %5639 = vmatprep.subr.mxu0 0.0
      %5640 = vmatpush1.msra.mxu0 %v5593
      %5641 = vmatprep.subr.mxu0 0.0
      %5642 = vmatpush1.msra.mxu0 %v5594
      %5643 = vmatprep.subr.mxu0 0.0
      %5644 = vmatpush1.msra.mxu0 %v5595
      %5645 = vmatprep.subr.mxu0 0.0
      %5646 = vmatpush1.msra.mxu0 %v5596
      %5647 = vmatprep.subr.mxu0 0.0
      %5648 = vmatpush1.msra.mxu0 %v5597
      %5649 = vmatprep.subr.mxu0 0.0
      %5650 = vmatpush1.msra.mxu0 %v5598
      %5651 = vmatprep.subr.mxu0 0.0
      %5652 = vmatpush1.msra.mxu0 %v5599
      %5653 = vmatprep.subr.mxu0 0.0
      %5654 = vmatpush1.msra.mxu0 %v5600
      %5655 = vmatprep.subr.mxu0 0.0
      %5656 = vmatpush1.msra.mxu0 %v5601
      %5657 = vmatprep.subr.mxu0 0.0
      %5658 = vmatpush1.msra.mxu0 %v5602
      %5659 = vmatprep.subr.mxu0 0.0
      %5660 = vmatpush1.msra.mxu0 %v5603
      %5661 = vmatprep.subr.mxu0 0.0
      %5662 = vmatpush1.msra.mxu0 %v5604
      %5663 = vmatprep.subr.mxu0 0.0
      %5664 = vmatpush1.msra.mxu0 %v5605
      %5665 = vmatprep.subr.mxu0 0.0
      %5666 = vmatpush1.msra.mxu0 %v5606
      %5667 = vmatprep.subr.mxu0 0.0
      %5668 = vmatpush1.msra.mxu0 %v5607
      %5669 = vmatprep.subr.mxu0 0.0
      %5670 = vmatpush1.msra.mxu0 %v5608
      %5671 = vmatprep.subr.mxu0 0.0
      %5672 = vmatpush1.msra.mxu0 %v5609
      %5673 = vmatprep.subr.mxu0 0.0
      %5674 = vmatpush1.msra.mxu0 %v5610
      %5675 = vmatprep.mubr.f32.mxu0 %v5540
      %5676 = vmatmul.mubr.f32.gmra.mrb[0].mxu0 %v5539
      %v5677 = vpop.f32.mrb[0].mxu0
      %v5678 = vadd.f32 0.0, %v5677
      %v5679 = vpop.f32.mrb[0].mxu0
      %5680 = vmatprep.mubr.f32.mxu0 %v5542
      %5681 = vmatmul.mubr.f32.gmra.mrb[0].mxu0 %v5541
      %v5682 = vpop.f32.mrb[0].mxu0
      %v5683 = vadd.f32 0.0, %v5682
      %v5684 = vpop.f32.mrb[0].mxu0
      %5685 = vmatprep.mubr.f32.mxu0 %v5544
      %5686 = vmatmul.mubr.f32.gmra.mrb[0].mxu0 %v5543
      %v5687 = vpop.f32.mrb[0].mxu0
      %v5688 = vadd.f32 0.0, %v5687
      %v5689 = vpop.f32.mrb[0].mxu0
      %5690 = vmatprep.mubr.f32.mxu0 %v5546
      %5691 = vmatmul.mubr.f32.gmra.mrb[0].mxu0 %v5545
      %v5692 = vpop.f32.mrb[0].mxu0
      %v5693 = vadd.f32 0.0, %v5692
      %v5694 = vpop.f32.mrb[0].mxu0
      %5695 = vmatprep.mubr.f32.mxu0 %v5548
      %5696 = vmatmul.mubr.f32.gmra.mrb[0].mxu0 %v5547
      %v5697 = vpop.f32.mrb[0].mxu0
      %v5698 = vadd.f32 0.0, %v5697
      %v5699 = vpop.f32.mrb[0].mxu0
      %5700 = vmatprep.mubr.f32.mxu0 %v5550
      %5701 = vmatmul.mubr.f32.gmra.mrb[0].mxu0 %v5549
      %v5702 = vpop.f32.mrb[0].mxu0
      %v5703 = vadd.f32 0.0, %v5702
      %v5704 = vpop.f32.mrb[0].mxu0
      %5705 = vmatprep.mubr.f32.mxu0 %v5552
      %5706 = vmatmul.mubr.f32.gmra.mrb[0].mxu0 %v5551
      %v5707 = vpop.f32.mrb[0].mxu0
      %v5708 = vadd.f32 0.0, %v5707
      %v5709 = vpop.f32.mrb[0].mxu0
      %5710 = vmatprep.mubr.f32.mxu0 %v5554
      %5711 = vmatmul.mubr.f32.gmra.mrb[0].mxu0 %v5553
      %v5712 = vpop.f32.mrb[0].mxu0
      %v5713 = vadd.f32 0.0, %v5712
      %v5714 = vpop.f32.mrb[0].mxu0
      %5715 = vmatprep.mubr.f32.mxu0 %v5556
      %5716 = vmatmul.mubr.f32.gmra.mrb[0].mxu0 %v5555
      %v5717 = vpop.f32.mrb[0].mxu0
      %v5718 = vadd.f32 0.0, %v5717
      %v5719 = vpop.f32.mrb[0].mxu0
      %5720 = vmatprep.mubr.f32.mxu0 %v5558
      %5721 = vmatmul.mubr.f32.gmra.mrb[0].mxu0 %v5557
      %v5722 = vpop.f32.mrb[0].mxu0
      %v5723 = vadd.f32 0.0, %v5722
      %v5724 = vpop.f32.mrb[0].mxu0
      %5725 = vmatprep.mubr.f32.mxu0 %v5560
      %5726 = vmatmul.mubr.f32.gmra.mrb[0].mxu0 %v5559
      %v5727 = vpop.f32.mrb[0].mxu0
      %v5728 = vadd.f32 0.0, %v5727
      %v5729 = vpop.f32.mrb[0].mxu0
      %5730 = vmatprep.mubr.f32.mxu0 %v5562
      %5731 = vmatmul.mubr.f32.gmra.mrb[0].mxu0 %v5561
      %v5732 = vpop.f32.mrb[0].mxu0
      %v5733 = vadd.f32 0.0, %v5732
      %v5734 = vpop.f32.mrb[0].mxu0
      %5735 = vmatprep.mubr.f32.mxu0 %v5564
      %5736 = vmatmul.mubr.f32.gmra.mrb[0].mxu0 %v5563
      %v5737 = vpop.f32.mrb[0].mxu0
      %v5738 = vadd.f32 0.0, %v5737
      %v5739 = vpop.f32.mrb[0].mxu0
      %5740 = vmatprep.mubr.f32.mxu0 %v5566
      %5741 = vmatmul.mubr.f32.gmra.mrb[0].mxu0 %v5565
      %v5742 = vpop.f32.mrb[0].mxu0
      %v5743 = vadd.f32 0.0, %v5742
      %v5744 = vpop.f32.mrb[0].mxu0
      %5745 = vmatprep.mubr.f32.mxu0 %v5568
      %5746 = vmatmul.mubr.f32.gmra.mrb[0].mxu0 %v5567
      %v5747 = vpop.f32.mrb[0].mxu0
      %v5748 = vadd.f32 0.0, %v5747
      %v5749 = vpop.f32.mrb[0].mxu0
      %5750 = vmatprep.mubr.f32.mxu0 %v5570
      %5751 = vmatmul.mubr.f32.gmra.mrb[0].mxu0 %v5569
      %v5752 = vpop.f32.mrb[0].mxu0
      %v5753 = vadd.f32 0.0, %v5752
      %v5754 = vpop.f32.mrb[0].mxu0
      %5755 = vmatprep.mubr.f32.mxu0 %v5572
      %5756 = vmatmul.mubr.f32.gmra.mrb[0].mxu0 %v5571
      %v5757 = vpop.f32.mrb[0].mxu0
      %v5758 = vadd.f32 0.0, %v5757
      %v5759 = vpop.f32.mrb[0].mxu0
      %5760 = vmatprep.mubr.f32.mxu0 %v5574
      %5761 = vmatmul.mubr.f32.gmra.mrb[0].mxu0 %v5573
      %v5762 = vpop.f32.mrb[0].mxu0
      %v5763 = vadd.f32 0.0, %v5762
      %v5764 = vpop.f32.mrb[0].mxu0
      %5765 = vmatprep.mubr.f32.mxu0 %v5576
      %5766 = vmatmul.mubr.f32.gmra.mrb[0].mxu0 %v5575
      %v5767 = vpop.f32.mrb[0].mxu0
      %v5768 = vadd.f32 0.0, %v5767
      %v5769 = vpop.f32.mrb[0].mxu0
      %5770 = vmatprep.mubr.f32.mxu0 %v5578
      %5771 = vmatmul.mubr.f32.gmra.mrb[0].mxu0 %v5577
      %v5772 = vpop.f32.mrb[0].mxu0
      %v5773 = vadd.f32 0.0, %v5772
      %v5774 = vpop.f32.mrb[0].mxu0
      %5775 = vdwg.mxu0
      %v5776 = vld [vmem:[%s8] sm:$0xff]
      %v5777 = vld [vmem:[%s8 + $0x8] sm:$0xff]
      %v5778 = vld [vmem:[%s8 + $0x10] sm:$0xff]
      %v5779 = vld [vmem:[%s8 + $0x18] sm:$0xff]
      %v5780 = vld [vmem:[%s8 + $0x20] sm:$0xff]
      %v5781 = vld [vmem:[%s8 + $0x28] sm:$0xff]
      %v5782 = vld [vmem:[%s8 + $0x30] sm:$0xff]
      %v5783 = vld [vmem:[%s8 + $0x38] sm:$0xff]
      %v5784 = vld [vmem:[%s8 + $0x40] sm:$0xff]
      %v5785 = vld [vmem:[%s8 + $0x48] sm:$0xff]
      %v5786 = vld [vmem:[%s8 + $0x50] sm:$0xff]
      %v5787 = vld [vmem:[%s8 + $0x58] sm:$0xff]
      %v5788 = vld [vmem:[%s8 + $0x60] sm:$0xff]
      %v5789 = vld [vmem:[%s8 + $0x68] sm:$0xff]
      %v5790 = vld [vmem:[%s8 + $0x70] sm:$0xff]
      %v5791 = vld [vmem:[%s8 + $0x78] sm:$0xff]
      %v5792 = vld [vmem:[%s8 + $0x80] sm:$0xff]
      %v5793 = vld [vmem:[%s8 + $0x88] sm:$0xff]
      %v5794 = vld [vmem:[%s8 + $0x90] sm:$0xff]
      %v5795 = vld [vmem:[%s8 + $0x98] sm:$0xff]
      %v5796 = vld [vmem:[%s8 + $0xa0] sm:$0xff]
      %v5797 = vld [vmem:[%s8 + $0xa8] sm:$0xff]
      %v5798 = vld [vmem:[%s8 + $0xb0] sm:$0xff]
      %v5799 = vld [vmem:[%s8 + $0xb8] sm:$0xff]
      %v5800 = vld [vmem:[%s8 + $0xc0] sm:$0xff]
      %v5801 = vld [vmem:[%s8 + $0xc8] sm:$0xff]
      %v5802 = vld [vmem:[%s8 + $0xd0] sm:$0xff]
      %v5803 = vld [vmem:[%s8 + $0xd8] sm:$0xff]
      %v5804 = vld [vmem:[%s8 + $0xe0] sm:$0xff]
      %v5805 = vld [vmem:[%s8 + $0xe8] sm:$0xff]
      %v5806 = vld [vmem:[%s8 + $0xf0] sm:$0xff]
      %v5807 = vld [vmem:[%s8 + $0xf8] sm:$0xff]
      %5808 = vmatprep.subr.mxu0 0.0
      %5809 = vmatpush1.msra.mxu0 %v5776
      %5810 = vmatprep.subr.mxu0 0.0
      %5811 = vmatpush1.msra.mxu0 %v5777
      %5812 = vmatprep.subr.mxu0 0.0
      %5813 = vmatpush1.msra.mxu0 %v5778
      %5814 = vmatprep.subr.mxu0 0.0
      %5815 = vmatpush1.msra.mxu0 %v5779
      %5816 = vmatprep.subr.mxu0 0.0
      %5817 = vmatpush1.msra.mxu0 %v5780
      %5818 = vmatprep.subr.mxu0 0.0
      %5819 = vmatpush1.msra.mxu0 %v5781
      %5820 = vmatprep.subr.mxu0 0.0
      %5821 = vmatpush1.msra.mxu0 %v5782
      %5822 = vmatprep.subr.mxu0 0.0
      %5823 = vmatpush1.msra.mxu0 %v5783
      %5824 = vmatprep.subr.mxu0 0.0
      %5825 = vmatpush1.msra.mxu0 %v5784
      %5826 = vmatprep.subr.mxu0 0.0
      %5827 = vmatpush1.msra.mxu0 %v5785
      %5828 = vmatprep.subr.mxu0 0.0
      %5829 = vmatpush1.msra.mxu0 %v5786
      %5830 = vmatprep.subr.mxu0 0.0
      %5831 = vmatpush1.msra.mxu0 %v5787
      %5832 = vmatprep.subr.mxu0 0.0
      %5833 = vmatpush1.msra.mxu0 %v5788
      %5834 = vmatprep.subr.mxu0 0.0
      %5835 = vmatpush1.msra.mxu0 %v5789
      %5836 = vmatprep.subr.mxu0 0.0
      %5837 = vmatpush1.msra.mxu0 %v5790
      %5838 = vmatprep.subr.mxu0 0.0
      %5839 = vmatpush1.msra.mxu0 %v5791
      %5840 = vmatprep.subr.mxu0 0.0
      %5841 = vmatpush1.msra.mxu0 %v5792
      %5842 = vmatprep.subr.mxu0 0.0
      %5843 = vmatpush1.msra.mxu0 %v5793
      %5844 = vmatprep.subr.mxu0 0.0
      %5845 = vmatpush1.msra.mxu0 %v5794
      %5846 = vmatprep.subr.mxu0 0.0
      %5847 = vmatpush1.msra.mxu0 %v5795
      %5848 = vmatprep.subr.mxu0 0.0
      %5849 = vmatpush1.msra.mxu0 %v5796
      %5850 = vmatprep.subr.mxu0 0.0
      %5851 = vmatpush1.msra.mxu0 %v5797
      %5852 = vmatprep.subr.mxu0 0.0
      %5853 = vmatpush1.msra.mxu0 %v5798
      %5854 = vmatprep.subr.mxu0 0.0
      %5855 = vmatpush1.msra.mxu0 %v5799
      %5856 = vmatprep.subr.mxu0 0.0
      %5857 = vmatpush1.msra.mxu0 %v5800
      %5858 = vmatprep.subr.mxu0 0.0
      %5859 = vmatpush1.msra.mxu0 %v5801
      %5860 = vmatprep.subr.mxu0 0.0
      %5861 = vmatpush1.msra.mxu0 %v5802
      %5862 = vmatprep.subr.mxu0 0.0
      %5863 = vmatpush1.msra.mxu0 %v5803
      %5864 = vmatprep.subr.mxu0 0.0
      %5865 = vmatpush1.msra.mxu0 %v5804
      %5866 = vmatprep.subr.mxu0 0.0
      %5867 = vmatpush1.msra.mxu0 %v5805
      %5868 = vmatprep.subr.mxu0 0.0
      %5869 = vmatpush1.msra.mxu0 %v5806
      %5870 = vmatprep.subr.mxu0 0.0
      %5871 = vmatpush1.msra.mxu0 %v5807
      %5872 = vmatprep.mubr.f32.mxu0 %v5540
      %5873 = vmatmul.mubr.f32.gmra.mrb[0].mxu0 %v5539
      %v5874 = vpop.f32.mrb[0].mxu0
      %v5875 = vadd.f32 0.0, %v5874
      %v5876 = vpop.f32.mrb[0].mxu0
      %5877 = vmatprep.mubr.f32.mxu0 %v5542
      %5878 = vmatmul.mubr.f32.gmra.mrb[0].mxu0 %v5541
      %v5879 = vpop.f32.mrb[0].mxu0
      %v5880 = vadd.f32 0.0, %v5879
      %v5881 = vpop.f32.mrb[0].mxu0
      %5882 = vmatprep.mubr.f32.mxu0 %v5544
      %5883 = vmatmul.mubr.f32.gmra.mrb[0].mxu0 %v5543
      %v5884 = vpop.f32.mrb[0].mxu0
      %v5885 = vadd.f32 0.0, %v5884
      %v5886 = vpop.f32.mrb[0].mxu0
      %5887 = vmatprep.mubr.f32.mxu0 %v5546
      %5888 = vmatmul.mubr.f32.gmra.mrb[0].mxu0 %v5545
      %v5889 = vpop.f32.mrb[0].mxu0
      %v5890 = vadd.f32 0.0, %v5889
      %v5891 = vpop.f32.mrb[0].mxu0
      %5892 = vmatprep.mubr.f32.mxu0 %v5548
      %5893 = vmatmul.mubr.f32.gmra.mrb[0].mxu0 %v5547
      %v5894 = vpop.f32.mrb[0].mxu0
      %v5895 = vadd.f32 0.0, %v5894
      %v5896 = vpop.f32.mrb[0].mxu0
      %5897 = vmatprep.mubr.f32.mxu0 %v5550
      %5898 = vmatmul.mubr.f32.gmra.mrb[0].mxu0 %v5549
      %v5899 = vpop.f32.mrb[0].mxu0
      %v5900 = vadd.f32 0.0, %v5899
      %v5901 = vpop.f32.mrb[0].mxu0
      %5902 = vmatprep.mubr.f32.mxu0 %v5552
      %5903 = vmatmul.mubr.f32.gmra.mrb[0].mxu0 %v5551
      %v5904 = vpop.f32.mrb[0].mxu0
      %v5905 = vadd.f32 0.0, %v5904
      %v5906 = vpop.f32.mrb[0].mxu0
      %5907 = vmatprep.mubr.f32.mxu0 %v5554
      %5908 = vmatmul.mubr.f32.gmra.mrb[0].mxu0 %v5553
      %v5909 = vpop.f32.mrb[0].mxu0
      %v5910 = vadd.f32 0.0, %v5909
      %v5911 = vpop.f32.mrb[0].mxu0
      %5912 = vmatprep.mubr.f32.mxu0 %v5556
      %5913 = vmatmul.mubr.f32.gmra.mrb[0].mxu0 %v5555
      %v5914 = vpop.f32.mrb[0].mxu0
      %v5915 = vadd.f32 0.0, %v5914
      %v5916 = vpop.f32.mrb[0].mxu0
      %5917 = vmatprep.mubr.f32.mxu0 %v5558
      %5918 = vmatmul.mubr.f32.gmra.mrb[0].mxu0 %v5557
      %v5919 = vpop.f32.mrb[0].mxu0
      %v5920 = vadd.f32 0.0, %v5919
      %v5921 = vpop.f32.mrb[0].mxu0
      %5922 = vmatprep.mubr.f32.mxu0 %v5560
      %5923 = vmatmul.mubr.f32.gmra.mrb[0].mxu0 %v5559
      %v5924 = vpop.f32.mrb[0].mxu0
      %v5925 = vadd.f32 0.0, %v5924
      %v5926 = vpop.f32.mrb[0].mxu0
      %5927 = vmatprep.mubr.f32.mxu0 %v5562
      %5928 = vmatmul.mubr.f32.gmra.mrb[0].mxu0 %v5561
      %v5929 = vpop.f32.mrb[0].mxu0
      %v5930 = vadd.f32 0.0, %v5929
      %v5931 = vpop.f32.mrb[0].mxu0
      %5932 = vmatprep.mubr.f32.mxu0 %v5564
      %5933 = vmatmul.mubr.f32.gmra.mrb[0].mxu0 %v5563
      %v5934 = vpop.f32.mrb[0].mxu0
      %v5935 = vadd.f32 0.0, %v5934
      %v5936 = vpop.f32.mrb[0].mxu0
      %5937 = vmatprep.mubr.f32.mxu0 %v5566
      %5938 = vmatmul.mubr.f32.gmra.mrb[0].mxu0 %v5565
      %v5939 = vpop.f32.mrb[0].mxu0
      %v5940 = vadd.f32 0.0, %v5939
      %v5941 = vpop.f32.mrb[0].mxu0
      %5942 = vmatprep.mubr.f32.mxu0 %v5568
      %5943 = vmatmul.mubr.f32.gmra.mrb[0].mxu0 %v5567
      %v5944 = vpop.f32.mrb[0].mxu0
      %v5945 = vadd.f32 0.0, %v5944
      %v5946 = vpop.f32.mrb[0].mxu0
      %5947 = vmatprep.mubr.f32.mxu0 %v5570
      %5948 = vmatmul.mubr.f32.gmra.mrb[0].mxu0 %v5569
      %v5949 = vpop.f32.mrb[0].mxu0
      %v5950 = vadd.f32 0.0, %v5949
      %v5951 = vpop.f32.mrb[0].mxu0
      %5952 = vmatprep.mubr.f32.mxu0 %v5572
      %5953 = vmatmul.mubr.f32.gmra.mrb[0].mxu0 %v5571
      %v5954 = vpop.f32.mrb[0].mxu0
      %v5955 = vadd.f32 0.0, %v5954
      %v5956 = vpop.f32.mrb[0].mxu0
      %5957 = vmatprep.mubr.f32.mxu0 %v5574
      %5958 = vmatmul.mubr.f32.gmra.mrb[0].mxu0 %v5573
      %v5959 = vpop.f32.mrb[0].mxu0
      %v5960 = vadd.f32 0.0, %v5959
      %v5961 = vpop.f32.mrb[0].mxu0
      %5962 = vmatprep.mubr.f32.mxu0 %v5576
      %5963 = vmatmul.mubr.f32.gmra.mrb[0].mxu0 %v5575
      %v5964 = vpop.f32.mrb[0].mxu0
      %v5965 = vadd.f32 0.0, %v5964
      %v5966 = vpop.f32.mrb[0].mxu0
      %5967 = vmatprep.mubr.f32.mxu0 %v5578
      %5968 = vmatmul.mubr.f32.gmra.mrb[0].mxu0 %v5577
      %v5969 = vpop.f32.mrb[0].mxu0
      %v5970 = vadd.f32 0.0, %v5969
      %v5971 = vpop.f32.mrb[0].mxu0
      %5972 = vdwg.mxu0
      %v5973 = vmax.f32 %v5678, %v5875
      %v5974 = vmax.f32 %v5683, %v5880
      %v5975 = vmax.f32 %v5688, %v5885
      %v5976 = vmax.f32 %v5693, %v5890
      %v5977 = vmax.f32 %v5698, %v5895
      %v5978 = vmax.f32 %v5703, %v5900
      %v5979 = vmax.f32 %v5708, %v5905
      %v5980 = vmax.f32 %v5713, %v5910
      %v5981 = vmax.f32 %v5718, %v5915
      %v5982 = vmax.f32 %v5723, %v5920
      %v5983 = vmax.f32 %v5728, %v5925
      %v5984 = vmax.f32 %v5733, %v5930
      %v5985 = vmax.f32 %v5738, %v5935
      %v5986 = vmax.f32 %v5743, %v5940
      %v5987 = vmax.f32 %v5748, %v5945
      %v5988 = vmax.f32 %v5753, %v5950
      %v5989 = vmax.f32 %v5758, %v5955
      %v5990 = vmax.f32 %v5763, %v5960
      %v5991 = vmax.f32 %v5768, %v5965
      %v5992 = vmax.f32 %v5773, %v5970
      %v5993 = vpack.c.bf16 %v5974, %v5973
      %v5994 = vpack.c.bf16 %v5976, %v5975
      %v5995 = vpack.c.bf16 %v5978, %v5977
      %v5996 = vpack.c.bf16 %v5980, %v5979
      %v5997 = vpack.c.bf16 %v5982, %v5981
      %v5998 = vpack.c.bf16 %v5984, %v5983
      %v5999 = vpack.c.bf16 %v5986, %v5985
      %v6000 = vpack.c.bf16 %v5988, %v5987
      %v6001 = vpack.c.bf16 %v5990, %v5989
      %v6002 = vpack.c.bf16 %v5992, %v5991
      %v6003 = vld [vmem:[%s10] sm:$0x1]
      %v6004 = vld [vmem:[%s9] sm:$0xf]
      %v6005 = vld [vmem:[%s9 + $0x4] sm:$0xf]
      %v6006 = vld [vmem:[%s9 + $0x8] sm:$0xf]
      %v6007 = vld [vmem:[%s9 + $0xc] sm:$0xf]
      %v6008 = vld [vmem:[%s9 + $0x10] sm:$0xf]
      %v6009 = vld [vmem:[%s9 + $0x14] sm:$0xf]
      %v6010 = vld [vmem:[%s9 + $0x18] sm:$0xf]
      %v6011 = vld [vmem:[%s9 + $0x1c] sm:$0xf]
      %v6012 = vld [vmem:[%s9 + $0x20] sm:$0xf]
      %v6013 = vld [vmem:[%s9 + $0x24] sm:$0xf]
      %v6014 = vld [vmem:[%s9 + $0x28] sm:$0xf]
      %v6015 = vld [vmem:[%s9 + $0x2c] sm:$0xf]
      %v6016 = vld [vmem:[%s9 + $0x30] sm:$0xf]
      %v6017 = vld [vmem:[%s9 + $0x34] sm:$0xf]
      %v6018 = vld [vmem:[%s9 + $0x38] sm:$0xf]
      %v6019 = vld [vmem:[%s9 + $0x3c] sm:$0xf]
      %v6036 = vunpack.c.l.b16 %v6004
      %v6037 = vunpack.c.l.b16 %v6005
      %v6038 = vunpack.c.l.b16 %v6006
      %v6039 = vunpack.c.l.b16 %v6007
      %v6040 = vunpack.c.l.b16 %v6008
      %v6041 = vunpack.c.l.b16 %v6009
      %v6042 = vunpack.c.l.b16 %v6010
      %v6043 = vunpack.c.l.b16 %v6011
      %v6044 = vunpack.c.l.b16 %v6012
      %v6045 = vunpack.c.l.b16 %v6013
      %v6046 = vunpack.c.l.b16 %v6014
      %v6047 = vunpack.c.l.b16 %v6015
      %v6048 = vunpack.c.l.b16 %v6016
      %v6049 = vunpack.c.l.b16 %v6017
      %v6050 = vunpack.c.l.b16 %v6018
      %v6051 = vunpack.c.l.b16 %v6019
      %v6052 = vpack.c.b16 %v6037, %v6036
      %v6053 = vpack.c.b16 %v6039, %v6038
      %v6054 = vpack.c.b16 %v6041, %v6040
      %v6055 = vpack.c.b16 %v6043, %v6042
      %v6056 = vpack.c.b16 %v6045, %v6044
      %v6057 = vpack.c.b16 %v6047, %v6046
      %v6058 = vpack.c.b16 %v6049, %v6048
      %v6059 = vpack.c.b16 %v6051, %v6050
      %6068 = vmatprep.subr.bf16.mxu0 0
      %6069 = vmatpush1.bf16.msra.mxu0 %v6052
      %6070 = vmatprep.subr.bf16.mxu0 0
      %6071 = vmatpush1.bf16.msra.mxu0 %v6053
      %6072 = vmatprep.subr.bf16.mxu0 0
      %6073 = vmatpush1.bf16.msra.mxu0 %v6054
      %6074 = vmatprep.subr.bf16.mxu0 0
      %6075 = vmatpush1.bf16.msra.mxu0 %v6055
      %6076 = vmatprep.subr.bf16.mxu0 0
      %6077 = vmatpush1.bf16.msra.mxu0 %v6056
      %6078 = vmatprep.subr.bf16.mxu0 0
      %6079 = vmatpush1.bf16.msra.mxu0 %v6057
      %6080 = vmatprep.subr.bf16.mxu0 0
      %6081 = vmatpush1.bf16.msra.mxu0 %v6058
      %6082 = vmatprep.subr.bf16.mxu0 0
      %6083 = vmatpush1.bf16.msra.mxu0 %v6059
      %6084 = vmatprep.subr.bf16.mxu0 0
      %6085 = vmatpush1.bf16.msra.mxu0 0
      %6086 = vmatprep.subr.bf16.mxu0 0
      %6087 = vmatpush1.bf16.msra.mxu0 0
      %6088 = vmatprep.subr.bf16.mxu0 0
      %6089 = vmatpush1.bf16.msra.mxu0 0
      %6090 = vmatprep.subr.bf16.mxu0 0
      %6091 = vmatpush1.bf16.msra.mxu0 0
      %6092 = vmatprep.subr.bf16.mxu0 0
      %6093 = vmatpush1.bf16.msra.mxu0 0
      %6094 = vmatprep.subr.bf16.mxu0 0
      %6095 = vmatpush1.bf16.msra.mxu0 0
      %6096 = vmatprep.subr.bf16.mxu0 0
      %6097 = vmatpush1.bf16.msra.mxu0 0
      %6098 = vmatprep.subr.bf16.mxu0 0
      %6099 = vmatpush1.bf16.msra.mxu0 0
      %6100 = vmatprep.mubr.bf16.mxu0 0
      %6101 = vmatmul.mubr.bf16.gmra.mrb[0].mxu0 %v5993
      %v6102 = vpop.f32.mrb[0].mxu0
      %v6103 = vadd.f32 0.0, %v6102
      %v6104 = vpop.f32.mrb[0].mxu0
      %v6105 = vpop.f32.mrb[0].mxu0
      %v6106 = vadd.f32 0.0, %v6105
      %v6107 = vpop.f32.mrb[0].mxu0
      %6108 = vmatprep.mubr.bf16.mxu0 0
      %6109 = vmatmul.mubr.bf16.gmra.mrb[0].mxu0 %v5994
      %v6110 = vpop.f32.mrb[0].mxu0
      %v6111 = vadd.f32 0.0, %v6110
      %v6112 = vpop.f32.mrb[0].mxu0
      %v6113 = vpop.f32.mrb[0].mxu0
      %v6114 = vadd.f32 0.0, %v6113
      %v6115 = vpop.f32.mrb[0].mxu0
      %6116 = vdwg.mxu0
      %v6118 = vlaneseq
      %v6119 = vshrl.u32 %v6118, 7
      %v6120 = vsub.s32 0, %v6119
      %v6121 = vrot.slane %v6003, %v6120
      %v6123 = vadd.f32 %v6121, %v6103
      %v6124 = vadd.f32 %v6121, %v6106
      %v6125 = vadd.f32 %v6121, %v6111
      %v6126 = vadd.f32 %v6121, %v6114
      %s6127 = scalar_lea.vmem %s9, 64
      %v6128 = vld [vmem:[%s6127] sm:$0xf]
      %v6129 = vld [vmem:[%s6127 + $0x4] sm:$0xf]
      %v6130 = vld [vmem:[%s6127 + $0x8] sm:$0xf]
      %v6131 = vld [vmem:[%s6127 + $0xc] sm:$0xf]
      %v6132 = vld [vmem:[%s6127 + $0x10] sm:$0xf]
      %v6133 = vld [vmem:[%s6127 + $0x14] sm:$0xf]
      %v6134 = vld [vmem:[%s6127 + $0x18] sm:$0xf]
      %v6135 = vld [vmem:[%s6127 + $0x1c] sm:$0xf]
      %v6136 = vld [vmem:[%s6127 + $0x20] sm:$0xf]
      %v6137 = vld [vmem:[%s6127 + $0x24] sm:$0xf]
      %v6138 = vld [vmem:[%s6127 + $0x28] sm:$0xf]
      %v6139 = vld [vmem:[%s6127 + $0x2c] sm:$0xf]
      %v6140 = vld [vmem:[%s6127 + $0x30] sm:$0xf]
      %v6141 = vld [vmem:[%s6127 + $0x34] sm:$0xf]
      %v6142 = vld [vmem:[%s6127 + $0x38] sm:$0xf]
      %v6143 = vld [vmem:[%s6127 + $0x3c] sm:$0xf]
      %v6160 = vunpack.c.l.b16 %v6128
      %v6161 = vunpack.c.l.b16 %v6129
      %v6162 = vunpack.c.l.b16 %v6130
      %v6163 = vunpack.c.l.b16 %v6131
      %v6164 = vunpack.c.l.b16 %v6132
      %v6165 = vunpack.c.l.b16 %v6133
      %v6166 = vunpack.c.l.b16 %v6134
      %v6167 = vunpack.c.l.b16 %v6135
      %v6168 = vunpack.c.l.b16 %v6136
      %v6169 = vunpack.c.l.b16 %v6137
      %v6170 = vunpack.c.l.b16 %v6138
      %v6171 = vunpack.c.l.b16 %v6139
      %v6172 = vunpack.c.l.b16 %v6140
      %v6173 = vunpack.c.l.b16 %v6141
      %v6174 = vunpack.c.l.b16 %v6142
      %v6175 = vunpack.c.l.b16 %v6143
      %v6176 = vpack.c.b16 %v6161, %v6160
      %v6177 = vpack.c.b16 %v6163, %v6162
      %v6178 = vpack.c.b16 %v6165, %v6164
      %v6179 = vpack.c.b16 %v6167, %v6166
      %v6180 = vpack.c.b16 %v6169, %v6168
      %v6181 = vpack.c.b16 %v6171, %v6170
      %v6182 = vpack.c.b16 %v6173, %v6172
      %v6183 = vpack.c.b16 %v6175, %v6174
      %6192 = vmatprep.subr.bf16.mxu0 0
      %6193 = vmatpush1.bf16.msra.mxu0 %v6176
      %6194 = vmatprep.subr.bf16.mxu0 0
      %6195 = vmatpush1.bf16.msra.mxu0 %v6177
      %6196 = vmatprep.subr.bf16.mxu0 0
      %6197 = vmatpush1.bf16.msra.mxu0 %v6178
      %6198 = vmatprep.subr.bf16.mxu0 0
      %6199 = vmatpush1.bf16.msra.mxu0 %v6179
      %6200 = vmatprep.subr.bf16.mxu0 0
      %6201 = vmatpush1.bf16.msra.mxu0 %v6180
      %6202 = vmatprep.subr.bf16.mxu0 0
      %6203 = vmatpush1.bf16.msra.mxu0 %v6181
      %6204 = vmatprep.subr.bf16.mxu0 0
      %6205 = vmatpush1.bf16.msra.mxu0 %v6182
      %6206 = vmatprep.subr.bf16.mxu0 0
      %6207 = vmatpush1.bf16.msra.mxu0 %v6183
      %6208 = vmatprep.subr.bf16.mxu0 0
      %6209 = vmatpush1.bf16.msra.mxu0 0
      %6210 = vmatprep.subr.bf16.mxu0 0
      %6211 = vmatpush1.bf16.msra.mxu0 0
      %6212 = vmatprep.subr.bf16.mxu0 0
      %6213 = vmatpush1.bf16.msra.mxu0 0
      %6214 = vmatprep.subr.bf16.mxu0 0
      %6215 = vmatpush1.bf16.msra.mxu0 0
      %6216 = vmatprep.subr.bf16.mxu0 0
      %6217 = vmatpush1.bf16.msra.mxu0 0
      %6218 = vmatprep.subr.bf16.mxu0 0
      %6219 = vmatpush1.bf16.msra.mxu0 0
      %6220 = vmatprep.subr.bf16.mxu0 0
      %6221 = vmatpush1.bf16.msra.mxu0 0
      %6222 = vmatprep.subr.bf16.mxu0 0
      %6223 = vmatpush1.bf16.msra.mxu0 0
      %6224 = vmatprep.mubr.bf16.mxu0 0
      %6225 = vmatmul.mubr.bf16.gmra.mrb[0].mxu0 %v5995
      %v6226 = vpop.f32.mrb[0].mxu0
      %v6227 = vadd.f32 0.0, %v6226
      %v6228 = vpop.f32.mrb[0].mxu0
      %v6229 = vpop.f32.mrb[0].mxu0
      %v6230 = vadd.f32 0.0, %v6229
      %v6231 = vpop.f32.mrb[0].mxu0
      %6232 = vmatprep.mubr.bf16.mxu0 0
      %6233 = vmatmul.mubr.bf16.gmra.mrb[0].mxu0 %v5996
      %v6234 = vpop.f32.mrb[0].mxu0
      %v6235 = vadd.f32 0.0, %v6234
      %v6236 = vpop.f32.mrb[0].mxu0
      %v6237 = vpop.f32.mrb[0].mxu0
      %v6238 = vadd.f32 0.0, %v6237
      %v6239 = vpop.f32.mrb[0].mxu0
      %6240 = vdwg.mxu0
      %v6241 = vadd.f32 %v6123, %v6227
      %v6242 = vadd.f32 %v6124, %v6230
      %v6243 = vadd.f32 %v6125, %v6235
      %v6244 = vadd.f32 %v6126, %v6238
      %s6245 = scalar_lea.vmem %s9, 128
      %v6246 = vld [vmem:[%s6245] sm:$0xf]
      %v6247 = vld [vmem:[%s6245 + $0x4] sm:$0xf]
      %v6248 = vld [vmem:[%s6245 + $0x8] sm:$0xf]
      %v6249 = vld [vmem:[%s6245 + $0xc] sm:$0xf]
      %v6250 = vld [vmem:[%s6245 + $0x10] sm:$0xf]
      %v6251 = vld [vmem:[%s6245 + $0x14] sm:$0xf]
      %v6252 = vld [vmem:[%s6245 + $0x18] sm:$0xf]
      %v6253 = vld [vmem:[%s6245 + $0x1c] sm:$0xf]
      %v6254 = vld [vmem:[%s6245 + $0x20] sm:$0xf]
      %v6255 = vld [vmem:[%s6245 + $0x24] sm:$0xf]
      %v6256 = vld [vmem:[%s6245 + $0x28] sm:$0xf]
      %v6257 = vld [vmem:[%s6245 + $0x2c] sm:$0xf]
      %v6258 = vld [vmem:[%s6245 + $0x30] sm:$0xf]
      %v6259 = vld [vmem:[%s6245 + $0x34] sm:$0xf]
      %v6260 = vld [vmem:[%s6245 + $0x38] sm:$0xf]
      %v6261 = vld [vmem:[%s6245 + $0x3c] sm:$0xf]
      %v6278 = vunpack.c.l.b16 %v6246
      %v6279 = vunpack.c.l.b16 %v6247
      %v6280 = vunpack.c.l.b16 %v6248
      %v6281 = vunpack.c.l.b16 %v6249
      %v6282 = vunpack.c.l.b16 %v6250
      %v6283 = vunpack.c.l.b16 %v6251
      %v6284 = vunpack.c.l.b16 %v6252
      %v6285 = vunpack.c.l.b16 %v6253
      %v6286 = vunpack.c.l.b16 %v6254
      %v6287 = vunpack.c.l.b16 %v6255
      %v6288 = vunpack.c.l.b16 %v6256
      %v6289 = vunpack.c.l.b16 %v6257
      %v6290 = vunpack.c.l.b16 %v6258
      %v6291 = vunpack.c.l.b16 %v6259
      %v6292 = vunpack.c.l.b16 %v6260
      %v6293 = vunpack.c.l.b16 %v6261
      %v6294 = vpack.c.b16 %v6279, %v6278
      %v6295 = vpack.c.b16 %v6281, %v6280
      %v6296 = vpack.c.b16 %v6283, %v6282
      %v6297 = vpack.c.b16 %v6285, %v6284
      %v6298 = vpack.c.b16 %v6287, %v6286
      %v6299 = vpack.c.b16 %v6289, %v6288
      %v6300 = vpack.c.b16 %v6291, %v6290
      %v6301 = vpack.c.b16 %v6293, %v6292
      %6310 = vmatprep.subr.bf16.mxu0 0
      %6311 = vmatpush1.bf16.msra.mxu0 %v6294
      %6312 = vmatprep.subr.bf16.mxu0 0
      %6313 = vmatpush1.bf16.msra.mxu0 %v6295
      %6314 = vmatprep.subr.bf16.mxu0 0
      %6315 = vmatpush1.bf16.msra.mxu0 %v6296
      %6316 = vmatprep.subr.bf16.mxu0 0
      %6317 = vmatpush1.bf16.msra.mxu0 %v6297
      %6318 = vmatprep.subr.bf16.mxu0 0
      %6319 = vmatpush1.bf16.msra.mxu0 %v6298
      %6320 = vmatprep.subr.bf16.mxu0 0
      %6321 = vmatpush1.bf16.msra.mxu0 %v6299
      %6322 = vmatprep.subr.bf16.mxu0 0
      %6323 = vmatpush1.bf16.msra.mxu0 %v6300
      %6324 = vmatprep.subr.bf16.mxu0 0
      %6325 = vmatpush1.bf16.msra.mxu0 %v6301
      %6326 = vmatprep.subr.bf16.mxu0 0
      %6327 = vmatpush1.bf16.msra.mxu0 0
      %6328 = vmatprep.subr.bf16.mxu0 0
      %6329 = vmatpush1.bf16.msra.mxu0 0
      %6330 = vmatprep.subr.bf16.mxu0 0
      %6331 = vmatpush1.bf16.msra.mxu0 0
      %6332 = vmatprep.subr.bf16.mxu0 0
      %6333 = vmatpush1.bf16.msra.mxu0 0
      %6334 = vmatprep.subr.bf16.mxu0 0
      %6335 = vmatpush1.bf16.msra.mxu0 0
      %6336 = vmatprep.subr.bf16.mxu0 0
      %6337 = vmatpush1.bf16.msra.mxu0 0
      %6338 = vmatprep.subr.bf16.mxu0 0
      %6339 = vmatpush1.bf16.msra.mxu0 0
      %6340 = vmatprep.subr.bf16.mxu0 0
      %6341 = vmatpush1.bf16.msra.mxu0 0
      %6342 = vmatprep.mubr.bf16.mxu0 0
      %6343 = vmatmul.mubr.bf16.gmra.mrb[0].mxu0 %v5997
      %v6344 = vpop.f32.mrb[0].mxu0
      %v6345 = vadd.f32 0.0, %v6344
      %v6346 = vpop.f32.mrb[0].mxu0
      %v6347 = vpop.f32.mrb[0].mxu0
      %v6348 = vadd.f32 0.0, %v6347
      %v6349 = vpop.f32.mrb[0].mxu0
      %6350 = vmatprep.mubr.bf16.mxu0 0
      %6351 = vmatmul.mubr.bf16.gmra.mrb[0].mxu0 %v5998
      %v6352 = vpop.f32.mrb[0].mxu0
      %v6353 = vadd.f32 0.0, %v6352
      %v6354 = vpop.f32.mrb[0].mxu0
      %v6355 = vpop.f32.mrb[0].mxu0
      %v6356 = vadd.f32 0.0, %v6355
      %v6357 = vpop.f32.mrb[0].mxu0
      %6358 = vdwg.mxu0
      %v6359 = vadd.f32 %v6241, %v6345
      %v6360 = vadd.f32 %v6242, %v6348
      %v6361 = vadd.f32 %v6243, %v6353
      %v6362 = vadd.f32 %v6244, %v6356
      %s6363 = scalar_lea.vmem %s9, 192
      %v6364 = vld [vmem:[%s6363] sm:$0xf]
      %v6365 = vld [vmem:[%s6363 + $0x4] sm:$0xf]
      %v6366 = vld [vmem:[%s6363 + $0x8] sm:$0xf]
      %v6367 = vld [vmem:[%s6363 + $0xc] sm:$0xf]
      %v6368 = vld [vmem:[%s6363 + $0x10] sm:$0xf]
      %v6369 = vld [vmem:[%s6363 + $0x14] sm:$0xf]
      %v6370 = vld [vmem:[%s6363 + $0x18] sm:$0xf]
      %v6371 = vld [vmem:[%s6363 + $0x1c] sm:$0xf]
      %v6372 = vld [vmem:[%s6363 + $0x20] sm:$0xf]
      %v6373 = vld [vmem:[%s6363 + $0x24] sm:$0xf]
      %v6374 = vld [vmem:[%s6363 + $0x28] sm:$0xf]
      %v6375 = vld [vmem:[%s6363 + $0x2c] sm:$0xf]
      %v6376 = vld [vmem:[%s6363 + $0x30] sm:$0xf]
      %v6377 = vld [vmem:[%s6363 + $0x34] sm:$0xf]
      %v6378 = vld [vmem:[%s6363 + $0x38] sm:$0xf]
      %v6379 = vld [vmem:[%s6363 + $0x3c] sm:$0xf]
      %v6396 = vunpack.c.l.b16 %v6364
      %v6397 = vunpack.c.l.b16 %v6365
      %v6398 = vunpack.c.l.b16 %v6366
      %v6399 = vunpack.c.l.b16 %v6367
      %v6400 = vunpack.c.l.b16 %v6368
      %v6401 = vunpack.c.l.b16 %v6369
      %v6402 = vunpack.c.l.b16 %v6370
      %v6403 = vunpack.c.l.b16 %v6371
      %v6404 = vunpack.c.l.b16 %v6372
      %v6405 = vunpack.c.l.b16 %v6373
      %v6406 = vunpack.c.l.b16 %v6374
      %v6407 = vunpack.c.l.b16 %v6375
      %v6408 = vunpack.c.l.b16 %v6376
      %v6409 = vunpack.c.l.b16 %v6377
      %v6410 = vunpack.c.l.b16 %v6378
      %v6411 = vunpack.c.l.b16 %v6379
      %v6412 = vpack.c.b16 %v6397, %v6396
      %v6413 = vpack.c.b16 %v6399, %v6398
      %v6414 = vpack.c.b16 %v6401, %v6400
      %v6415 = vpack.c.b16 %v6403, %v6402
      %v6416 = vpack.c.b16 %v6405, %v6404
      %v6417 = vpack.c.b16 %v6407, %v6406
      %v6418 = vpack.c.b16 %v6409, %v6408
      %v6419 = vpack.c.b16 %v6411, %v6410
      %6428 = vmatprep.subr.bf16.mxu0 0
      %6429 = vmatpush1.bf16.msra.mxu0 %v6412
      %6430 = vmatprep.subr.bf16.mxu0 0
      %6431 = vmatpush1.bf16.msra.mxu0 %v6413
      %6432 = vmatprep.subr.bf16.mxu0 0
      %6433 = vmatpush1.bf16.msra.mxu0 %v6414
      %6434 = vmatprep.subr.bf16.mxu0 0
      %6435 = vmatpush1.bf16.msra.mxu0 %v6415
      %6436 = vmatprep.subr.bf16.mxu0 0
      %6437 = vmatpush1.bf16.msra.mxu0 %v6416
      %6438 = vmatprep.subr.bf16.mxu0 0
      %6439 = vmatpush1.bf16.msra.mxu0 %v6417
      %6440 = vmatprep.subr.bf16.mxu0 0
      %6441 = vmatpush1.bf16.msra.mxu0 %v6418
      %6442 = vmatprep.subr.bf16.mxu0 0
      %6443 = vmatpush1.bf16.msra.mxu0 %v6419
      %6444 = vmatprep.subr.bf16.mxu0 0
      %6445 = vmatpush1.bf16.msra.mxu0 0
      %6446 = vmatprep.subr.bf16.mxu0 0
      %6447 = vmatpush1.bf16.msra.mxu0 0
      %6448 = vmatprep.subr.bf16.mxu0 0
      %6449 = vmatpush1.bf16.msra.mxu0 0
      %6450 = vmatprep.subr.bf16.mxu0 0
      %6451 = vmatpush1.bf16.msra.mxu0 0
      %6452 = vmatprep.subr.bf16.mxu0 0
      %6453 = vmatpush1.bf16.msra.mxu0 0
      %6454 = vmatprep.subr.bf16.mxu0 0
      %6455 = vmatpush1.bf16.msra.mxu0 0
      %6456 = vmatprep.subr.bf16.mxu0 0
      %6457 = vmatpush1.bf16.msra.mxu0 0
      %6458 = vmatprep.subr.bf16.mxu0 0
      %6459 = vmatpush1.bf16.msra.mxu0 0
      %6460 = vmatprep.mubr.bf16.mxu0 0
      %6461 = vmatmul.mubr.bf16.gmra.mrb[0].mxu0 %v5999
      %v6462 = vpop.f32.mrb[0].mxu0
      %v6463 = vadd.f32 0.0, %v6462
      %v6464 = vpop.f32.mrb[0].mxu0
      %v6465 = vpop.f32.mrb[0].mxu0
      %v6466 = vadd.f32 0.0, %v6465
      %v6467 = vpop.f32.mrb[0].mxu0
      %6468 = vmatprep.mubr.bf16.mxu0 0
      %6469 = vmatmul.mubr.bf16.gmra.mrb[0].mxu0 %v6000
      %v6470 = vpop.f32.mrb[0].mxu0
      %v6471 = vadd.f32 0.0, %v6470
      %v6472 = vpop.f32.mrb[0].mxu0
      %v6473 = vpop.f32.mrb[0].mxu0
      %v6474 = vadd.f32 0.0, %v6473
      %v6475 = vpop.f32.mrb[0].mxu0
      %6476 = vdwg.mxu0
      %v6477 = vadd.f32 %v6359, %v6463
      %v6478 = vadd.f32 %v6360, %v6466
      %v6479 = vadd.f32 %v6361, %v6471
      %v6480 = vadd.f32 %v6362, %v6474
      %s6481 = scalar_lea.vmem %s9, 256
      %v6482 = vld [vmem:[%s6481] sm:$0xf]
      %v6483 = vld [vmem:[%s6481 + $0x4] sm:$0xf]
      %v6484 = vld [vmem:[%s6481 + $0x8] sm:$0xf]
      %v6485 = vld [vmem:[%s6481 + $0xc] sm:$0xf]
      %v6486 = vld [vmem:[%s6481 + $0x10] sm:$0xf]
      %v6487 = vld [vmem:[%s6481 + $0x14] sm:$0xf]
      %v6488 = vld [vmem:[%s6481 + $0x18] sm:$0xf]
      %v6489 = vld [vmem:[%s6481 + $0x1c] sm:$0xf]
      %v6490 = vld [vmem:[%s6481 + $0x20] sm:$0xf]
      %v6491 = vld [vmem:[%s6481 + $0x24] sm:$0xf]
      %v6492 = vld [vmem:[%s6481 + $0x28] sm:$0xf]
      %v6493 = vld [vmem:[%s6481 + $0x2c] sm:$0xf]
      %v6494 = vld [vmem:[%s6481 + $0x30] sm:$0xf]
      %v6495 = vld [vmem:[%s6481 + $0x34] sm:$0xf]
      %v6496 = vld [vmem:[%s6481 + $0x38] sm:$0xf]
      %v6497 = vld [vmem:[%s6481 + $0x3c] sm:$0xf]
      %v6514 = vunpack.c.l.b16 %v6482
      %v6515 = vunpack.c.l.b16 %v6483
      %v6516 = vunpack.c.l.b16 %v6484
      %v6517 = vunpack.c.l.b16 %v6485
      %v6518 = vunpack.c.l.b16 %v6486
      %v6519 = vunpack.c.l.b16 %v6487
      %v6520 = vunpack.c.l.b16 %v6488
      %v6521 = vunpack.c.l.b16 %v6489
      %v6522 = vunpack.c.l.b16 %v6490
      %v6523 = vunpack.c.l.b16 %v6491
      %v6524 = vunpack.c.l.b16 %v6492
      %v6525 = vunpack.c.l.b16 %v6493
      %v6526 = vunpack.c.l.b16 %v6494
      %v6527 = vunpack.c.l.b16 %v6495
      %v6528 = vunpack.c.l.b16 %v6496
      %v6529 = vunpack.c.l.b16 %v6497
      %v6530 = vpack.c.b16 %v6515, %v6514
      %v6531 = vpack.c.b16 %v6517, %v6516
      %v6532 = vpack.c.b16 %v6519, %v6518
      %v6533 = vpack.c.b16 %v6521, %v6520
      %v6534 = vpack.c.b16 %v6523, %v6522
      %v6535 = vpack.c.b16 %v6525, %v6524
      %v6536 = vpack.c.b16 %v6527, %v6526
      %v6537 = vpack.c.b16 %v6529, %v6528
      %6546 = vmatprep.subr.bf16.mxu0 0
      %6547 = vmatpush1.bf16.msra.mxu0 %v6530
      %6548 = vmatprep.subr.bf16.mxu0 0
      %6549 = vmatpush1.bf16.msra.mxu0 %v6531
      %6550 = vmatprep.subr.bf16.mxu0 0
      %6551 = vmatpush1.bf16.msra.mxu0 %v6532
      %6552 = vmatprep.subr.bf16.mxu0 0
      %6553 = vmatpush1.bf16.msra.mxu0 %v6533
      %6554 = vmatprep.subr.bf16.mxu0 0
      %6555 = vmatpush1.bf16.msra.mxu0 %v6534
      %6556 = vmatprep.subr.bf16.mxu0 0
      %6557 = vmatpush1.bf16.msra.mxu0 %v6535
      %6558 = vmatprep.subr.bf16.mxu0 0
      %6559 = vmatpush1.bf16.msra.mxu0 %v6536
      %6560 = vmatprep.subr.bf16.mxu0 0
      %6561 = vmatpush1.bf16.msra.mxu0 %v6537
      %6562 = vmatprep.subr.bf16.mxu0 0
      %6563 = vmatpush1.bf16.msra.mxu0 0
      %6564 = vmatprep.subr.bf16.mxu0 0
      %6565 = vmatpush1.bf16.msra.mxu0 0
      %6566 = vmatprep.subr.bf16.mxu0 0
      %6567 = vmatpush1.bf16.msra.mxu0 0
      %6568 = vmatprep.subr.bf16.mxu0 0
      %6569 = vmatpush1.bf16.msra.mxu0 0
      %6570 = vmatprep.subr.bf16.mxu0 0
      %6571 = vmatpush1.bf16.msra.mxu0 0
      %6572 = vmatprep.subr.bf16.mxu0 0
      %6573 = vmatpush1.bf16.msra.mxu0 0
      %6574 = vmatprep.subr.bf16.mxu0 0
      %6575 = vmatpush1.bf16.msra.mxu0 0
      %6576 = vmatprep.subr.bf16.mxu0 0
      %6577 = vmatpush1.bf16.msra.mxu0 0
      %6578 = vmatprep.mubr.bf16.mxu0 0
      %6579 = vmatmul.mubr.bf16.gmra.mrb[0].mxu0 %v6001
      %v6580 = vpop.f32.mrb[0].mxu0
      %v6581 = vadd.f32 0.0, %v6580
      %v6582 = vpop.f32.mrb[0].mxu0
      %v6583 = vpop.f32.mrb[0].mxu0
      %v6584 = vadd.f32 0.0, %v6583
      %v6585 = vpop.f32.mrb[0].mxu0
      %6586 = vmatprep.mubr.bf16.mxu0 0
      %6587 = vmatmul.mubr.bf16.gmra.mrb[0].mxu0 %v6002
      %v6588 = vpop.f32.mrb[0].mxu0
      %v6589 = vadd.f32 0.0, %v6588
      %v6590 = vpop.f32.mrb[0].mxu0
      %v6591 = vpop.f32.mrb[0].mxu0
      %v6592 = vadd.f32 0.0, %v6591
      %v6593 = vpop.f32.mrb[0].mxu0
      %6594 = vdwg.mxu0
      %v6595 = vadd.f32 %v6477, %v6581
      %v6596 = vadd.f32 %v6478, %v6584
      %v6597 = vadd.f32 %v6479, %v6589
      %v6598 = vadd.f32 %v6480, %v6592
      %v6599 = vmax.f32 %v6595, 0.0
      %v6600 = vmax.f32 %v6596, 0.0
      %v6601 = vmax.f32 %v6597, 0.0
      %v6602 = vmax.f32 %v6598, 0.0
      %v6603 = vpack.c.bf16 %v6600, %v6599
      %v6604 = vpack.c.bf16 %v6602, %v6601
      %v6605 = vld [vmem:[%s11] sm:$0xf]
      %v6606 = vld [vmem:[%s11 + $0x4] sm:$0xf]
      %v6607 = vld [vmem:[%s11 + $0x8] sm:$0xf]
      %v6608 = vld [vmem:[%s11 + $0xc] sm:$0xf]
      %v6609 = vld [vmem:[%s11 + $0x10] sm:$0xf]
      %v6610 = vld [vmem:[%s11 + $0x14] sm:$0xf]
      %v6611 = vld [vmem:[%s11 + $0x18] sm:$0xf]
      %v6612 = vld [vmem:[%s11 + $0x1c] sm:$0xf]
      %v6613 = vld [vmem:[%s11 + $0x20] sm:$0xf]
      %v6614 = vld [vmem:[%s11 + $0x24] sm:$0xf]
      %v6615 = vld [vmem:[%s11 + $0x28] sm:$0xf]
      %v6616 = vld [vmem:[%s11 + $0x2c] sm:$0xf]
      %v6617 = vld [vmem:[%s11 + $0x30] sm:$0xf]
      %v6618 = vld [vmem:[%s11 + $0x34] sm:$0xf]
      %v6619 = vld [vmem:[%s11 + $0x38] sm:$0xf]
      %v6620 = vld [vmem:[%s12] sm:$0x1]
      %v6622 = vlaneseq
      %v6623 = vshrl.u32 %v6622, 7
      %v6624 = vsub.s32 0, %v6623
      %v6625 = vrot.slane %v6620, %v6624
      %v6642 = vunpack.c.l.b16 %v6605
      %v6643 = vunpack.c.l.b16 %v6606
      %v6644 = vunpack.c.l.b16 %v6607
      %v6645 = vunpack.c.l.b16 %v6608
      %v6646 = vunpack.c.l.b16 %v6609
      %v6647 = vunpack.c.l.b16 %v6610
      %v6648 = vunpack.c.l.b16 %v6611
      %v6649 = vunpack.c.l.b16 %v6612
      %v6650 = vunpack.c.l.b16 %v6613
      %v6651 = vunpack.c.l.b16 %v6614
      %v6652 = vunpack.c.l.b16 %v6615
      %v6653 = vunpack.c.l.b16 %v6616
      %v6654 = vunpack.c.l.b16 %v6617
      %v6655 = vunpack.c.l.b16 %v6618
      %v6656 = vunpack.c.l.b16 %v6619
      %v6657 = vpack.c.b16 %v6643, %v6642
      %v6658 = vpack.c.b16 %v6645, %v6644
      %v6659 = vpack.c.b16 %v6647, %v6646
      %v6660 = vpack.c.b16 %v6649, %v6648
      %v6661 = vpack.c.b16 %v6651, %v6650
      %v6662 = vpack.c.b16 %v6653, %v6652
      %v6663 = vpack.c.b16 %v6655, %v6654
      %v6664 = vpack.c.b16 %v6656, %v6656
      %vm6672 = vcmask 982016
      %v6674 = vsel %vm6672, %v6603, 0
      %v6677 = vsel %vm6672, %v6604, 0
      %vm6679 = vcmask 1043456
      %v6681 = vsel %vm6679, %v6664, 0
      %6683 = vmatprep.subr.bf16.mxu0 0
      %6684 = vmatpush1.bf16.msra.mxu0 %v6657
      %6685 = vmatprep.subr.bf16.mxu0 0
      %6686 = vmatpush1.bf16.msra.mxu0 %v6658
      %6687 = vmatprep.subr.bf16.mxu0 0
      %6688 = vmatpush1.bf16.msra.mxu0 %v6659
      %6689 = vmatprep.subr.bf16.mxu0 0
      %6690 = vmatpush1.bf16.msra.mxu0 %v6660
      %6691 = vmatprep.subr.bf16.mxu0 0
      %6692 = vmatpush1.bf16.msra.mxu0 %v6661
      %6693 = vmatprep.subr.bf16.mxu0 0
      %6694 = vmatpush1.bf16.msra.mxu0 %v6662
      %6695 = vmatprep.subr.bf16.mxu0 0
      %6696 = vmatpush1.bf16.msra.mxu0 %v6663
      %6697 = vmatprep.subr.bf16.mxu0 0
      %6698 = vmatpush1.bf16.msra.mxu0 %v6681
      %6699 = vmatprep.subr.bf16.mxu0 0
      %6700 = vmatpush1.bf16.msra.mxu0 0
      %6701 = vmatprep.subr.bf16.mxu0 0
      %6702 = vmatpush1.bf16.msra.mxu0 0
      %6703 = vmatprep.subr.bf16.mxu0 0
      %6704 = vmatpush1.bf16.msra.mxu0 0
      %6705 = vmatprep.subr.bf16.mxu0 0
      %6706 = vmatpush1.bf16.msra.mxu0 0
      %6707 = vmatprep.subr.bf16.mxu0 0
      %6708 = vmatpush1.bf16.msra.mxu0 0
      %6709 = vmatprep.subr.bf16.mxu0 0
      %6710 = vmatpush1.bf16.msra.mxu0 0
      %6711 = vmatprep.subr.bf16.mxu0 0
      %6712 = vmatpush1.bf16.msra.mxu0 0
      %6713 = vmatprep.subr.bf16.mxu0 0
      %6714 = vmatpush1.bf16.msra.mxu0 0
      %6715 = vmatprep.mubr.bf16.mxu0 0
      %6716 = vmatmul.mubr.bf16.gmra.mrb[0].mxu0 %v6674
      %v6717 = vpop.f32.mrb[0].mxu0
      %v6718 = vadd.f32 %v6625, %v6717
      %v6719 = vpop.f32.mrb[0].mxu0
      %v6720 = vpop.f32.mrb[0].mxu0
      %v6721 = vadd.f32 %v6625, %v6720
      %v6722 = vpop.f32.mrb[0].mxu0
      %6723 = vmatprep.mubr.bf16.mxu0 0
      %6724 = vmatmul.mubr.bf16.gmra.mrb[0].mxu0 %v6677
      %v6725 = vpop.f32.mrb[0].mxu0
      %v6726 = vadd.f32 %v6625, %v6725
      %v6727 = vpop.f32.mrb[0].mxu0
      %v6728 = vpop.f32.mrb[0].mxu0
      %v6729 = vadd.f32 %v6625, %v6728
      %v6730 = vpop.f32.mrb[0].mxu0
      %6731 = vdwg.mxu0
      %v6732 = vmax.f32 %v6718, 0.0
      %v6733 = vmax.f32 %v6721, 0.0
      %v6734 = vmax.f32 %v6726, 0.0
      %v6735 = vmax.f32 %v6729, 0.0
      %v6736 = vpack.c.bf16 %v6733, %v6732
      %v6737 = vpack.c.bf16 %v6735, %v6734
      %v6738 = vld [vmem:[%s13] sm:$0xf]
      %v6739 = vld [vmem:[%s13 + $0x4] sm:$0xf]
      %v6740 = vld [vmem:[%s13 + $0x8] sm:$0xf]
      %v6741 = vld [vmem:[%s13 + $0xc] sm:$0xf]
      %v6742 = vld [vmem:[%s13 + $0x10] sm:$0xf]
      %v6743 = vld [vmem:[%s13 + $0x14] sm:$0xf]
      %v6744 = vld [vmem:[%s13 + $0x18] sm:$0xf]
      %v6745 = vld [vmem:[%s13 + $0x1c] sm:$0xf]
      %v6746 = vld [vmem:[%s13 + $0x20] sm:$0xf]
      %v6747 = vld [vmem:[%s13 + $0x24] sm:$0xf]
      %v6748 = vld [vmem:[%s13 + $0x28] sm:$0x3]
      %v6749 = vld [vmem:[%s14] sm:$0x1]
      %v6751 = vlaneseq
      %v6752 = vshrl.u32 %v6751, 7
      %v6753 = vsub.s32 0, %v6752
      %v6754 = vrot.slane %v6749, %v6753
      %v6767 = vunpack.c.l.b16 %v6738
      %v6768 = vunpack.c.l.b16 %v6739
      %v6769 = vunpack.c.l.b16 %v6740
      %v6770 = vunpack.c.l.b16 %v6741
      %v6771 = vunpack.c.l.b16 %v6742
      %v6772 = vunpack.c.l.b16 %v6743
      %v6773 = vunpack.c.l.b16 %v6744
      %v6774 = vunpack.c.l.b16 %v6745
      %v6775 = vunpack.c.l.b16 %v6746
      %v6776 = vunpack.c.l.b16 %v6747
      %v6777 = vunpack.c.l.b16 %v6748
      %v6778 = vpack.c.b16 %v6768, %v6767
      %v6779 = vpack.c.b16 %v6770, %v6769
      %v6780 = vpack.c.b16 %v6772, %v6771
      %v6781 = vpack.c.b16 %v6774, %v6773
      %v6782 = vpack.c.b16 %v6776, %v6775
      %v6783 = vpack.c.b16 %v6777, %v6777
      %vm6789 = vcmask 687104
      %v6791 = vsel %vm6789, %v6736, 0
      %v6794 = vsel %vm6789, %v6737, 0
      %vm6796 = vcmask 1041408
      %v6798 = vsel %vm6796, %v6783, 0
      %6800 = vmatprep.subr.bf16.mxu0 0
      %6801 = vmatpush1.bf16.msra.mxu0 %v6778
      %6802 = vmatprep.subr.bf16.mxu0 0
      %6803 = vmatpush1.bf16.msra.mxu0 %v6779
      %6804 = vmatprep.subr.bf16.mxu0 0
      %6805 = vmatpush1.bf16.msra.mxu0 %v6780
      %6806 = vmatprep.subr.bf16.mxu0 0
      %6807 = vmatpush1.bf16.msra.mxu0 %v6781
      %6808 = vmatprep.subr.bf16.mxu0 0
      %6809 = vmatpush1.bf16.msra.mxu0 %v6782
      %6810 = vmatprep.subr.bf16.mxu0 0
      %6811 = vmatpush1.bf16.msra.mxu0 %v6798
      %6812 = vmatprep.subr.bf16.mxu0 0
      %6813 = vmatpush1.bf16.msra.mxu0 0
      %6814 = vmatprep.subr.bf16.mxu0 0
      %6815 = vmatpush1.bf16.msra.mxu0 0
      %6816 = vmatprep.subr.bf16.mxu0 0
      %6817 = vmatpush1.bf16.msra.mxu0 0
      %6818 = vmatprep.subr.bf16.mxu0 0
      %6819 = vmatpush1.bf16.msra.mxu0 0
      %6820 = vmatprep.subr.bf16.mxu0 0
      %6821 = vmatpush1.bf16.msra.mxu0 0
      %6822 = vmatprep.subr.bf16.mxu0 0
      %6823 = vmatpush1.bf16.msra.mxu0 0
      %6824 = vmatprep.subr.bf16.mxu0 0
      %6825 = vmatpush1.bf16.msra.mxu0 0
      %6826 = vmatprep.subr.bf16.mxu0 0
      %6827 = vmatpush1.bf16.msra.mxu0 0
      %6828 = vmatprep.subr.bf16.mxu0 0
      %6829 = vmatpush1.bf16.msra.mxu0 0
      %6830 = vmatprep.subr.bf16.mxu0 0
      %6831 = vmatpush1.bf16.msra.mxu0 0
      %6832 = vmatprep.mubr.bf16.mxu0 0
      %6833 = vmatmul.mubr.bf16.gmra.mrb[0].mxu0 %v6791
      %v6834 = vpop.f32.mrb[0].mxu0
      %v6835 = vadd.f32 %v6754, %v6834
      %v6836 = vpop.f32.mrb[0].mxu0
      %v6837 = vpop.f32.mrb[0].mxu0
      %v6838 = vadd.f32 %v6754, %v6837
      %v6839 = vpop.f32.mrb[0].mxu0
      %6840 = vmatprep.mubr.bf16.mxu0 0
      %6841 = vmatmul.mubr.bf16.gmra.mrb[0].mxu0 %v6794
      %v6842 = vpop.f32.mrb[0].mxu0
      %v6843 = vadd.f32 %v6754, %v6842
      %v6844 = vpop.f32.mrb[0].mxu0
      %v6845 = vpop.f32.mrb[0].mxu0
      %v6846 = vadd.f32 %v6754, %v6845
      %v6847 = vpop.f32.mrb[0].mxu0
      %6848 = vdwg.mxu0
      %vm6849 = vcmask 80896
      %v6850 = vsel %vm6849, %v6835, -inf
      %6851 = vmax.xlane.f32.xlu0 %v6850
      %v6852 = vpop.xlane.xlu0 %6851
      %v6853 = vsel %vm6849, %v6838, -inf
      %6854 = vmax.xlane.f32.xlu0 %v6853
      %v6855 = vpop.xlane.xlu0 %6854
      %v6856 = vsel %vm6849, %v6843, -inf
      %6857 = vmax.xlane.f32.xlu0 %v6856
      %v6858 = vpop.xlane.xlu0 %6857
      %v6859 = vsel %vm6849, %v6846, -inf
      %6860 = vmax.xlane.f32.xlu0 %v6859
      %v6861 = vpop.xlane.xlu0 %6860
      %v6862 = vsub.f32 %v6835, %v6852
      %v6863 = vsub.f32 %v6838, %v6855
      %v6864 = vsub.f32 %v6843, %v6858
      %v6865 = vsub.f32 %v6846, %v6861
      %v6866 = vmul.f32 %v6862, 1.442695
      %v6867 = vpow.pop %v6866
      %v6868 = vmul.f32 %v6863, 1.442695
      %v6869 = vpow.pop %v6868
      %v6870 = vmul.f32 %v6864, 1.442695
      %v6871 = vpow.pop %v6870
      %v6872 = vmul.f32 %v6865, 1.442695
      %v6873 = vpow.pop %v6872
      %v6874 = vsel %vm6849, %v6867, 0.0
      %6875 = vadd.xlane.f32.xlu0 %v6874
      %v6876 = vpop.xlane.xlu0 %6875
      %v6877 = vsel %vm6849, %v6869, 0.0
      %6878 = vadd.xlane.f32.xlu0 %v6877
      %v6879 = vpop.xlane.xlu0 %6878
      %v6880 = vsel %vm6849, %v6871, 0.0
      %6881 = vadd.xlane.f32.xlu0 %v6880
      %v6882 = vpop.xlane.xlu0 %6881
      %v6883 = vsel %vm6849, %v6873, 0.0
      %6884 = vadd.xlane.f32.xlu0 %v6883
      %v6885 = vpop.xlane.xlu0 %6884
      %v6886 = vlog2.pop %v6876
      %v6887 = vmul.f32 %v6886, 0.6931472
      %v6888 = vlog2.pop %v6879
      %v6889 = vmul.f32 %v6888, 0.6931472
      %v6890 = vlog2.pop %v6882
      %v6891 = vmul.f32 %v6890, 0.6931472
      %v6892 = vlog2.pop %v6885
      %v6893 = vmul.f32 %v6892, 0.6931472
      %v6894 = vsub.f32 %v6862, %v6887
      %v6895 = vsub.f32 %v6863, %v6889
      %v6896 = vsub.f32 %v6864, %v6891
      %v6897 = vsub.f32 %v6865, %v6893
      %6898 = vst.msk [vmem:[%s496] sm:$0xff] %vm6849, %v6894
      %6899 = vst.msk [vmem:[%s496 + $0x8] sm:$0xff] %vm6849, %v6895
      %6900 = vst.msk [vmem:[%s496 + $0x10] sm:$0xff] %vm6849, %v6896
      %6901 = vst.msk [vmem:[%s496 + $0x18] sm:$0xff] %vm6849, %v6897
      %s6902 = smul.u32 4, %s26
      %p6903 = scmp.lt.s32.totalorder %s6902, 7
      %s6904 = scalar_select %p6903, %s6902, 7
      %s6905 = smul.addr %s6904, 8
      %s6906 = scalar_lea.vmem %s15, %s6905
      // Predicated region
      $region81: #{forward.1} parent=79 // pred_check
        %p6907 = pneg %p364
      $region82: #{forward.1} parent=79 // pred_check_branch
        %6909 = sbr.rel (%p6907) target = $region84
      $region83: #{forward.1} parent=79 // pred_region
        %s6910 = smul.u32 4, %s26
      $region84: #{forward.1} parent=79 // pred_fallthru
        _
    $region80: #{forward.1} parent=5 // pred_fallthru
      _
    %p6911 = scmp.le.s32.totalorder 2, %s21
    // Predicated region
    $region85: #{forward.1} parent=5 // pred_check
      %p6912 = pneg %p6911
    $region86: #{forward.1} parent=5 // pred_check_branch
      %6914 = sbr.rel (%p6912) target = $region88
    $region87: #{forward.1} parent=5 // pred_region
      %s6915 = ssub.s32 %s21, 2
      // Predicated region
      $region89: #{forward.1} parent=87 // pred_check
        %p6916 = pneg %p370
      $region90: #{forward.1} parent=87 // pred_check_branch
        %6918 = sbr.rel (%p6916) target = $region92
      $region91: #{forward.1} parent=87 // pred_region
        %s6919 = smul.u32 4, %s27
        %p6920 = scmp.lt.s32.totalorder %s6919, 7
        %s6921 = scalar_select %p6920, %s6919, 7
        %s6922 = smul.addr %s6921, 8
        %s6923 = scalar_lea.vmem %s15, %s6922
      $region92: #{forward.1} parent=87 // pred_fallthru
        _
    $region88: #{forward.1} parent=5 // pred_fallthru
      _
  $region6: #{forward.1} parent=0 // loop_footer
    %s25 = sadd.s32 1, %s21
  $region7: #{forward.1} parent=0 // loop_footer_branch
    %20 = sbr.rel target = $region3
  $region8: #{forward.1} parent=0 // loop_exit
    _

</llo_original>
